<compile_context>
chip_gen: v6e
topology: v6e:2x2x1
jax: 0.10.0
libtpu: 0.0.40
codegen_flags: <defaults>
</compile_context>

<pallas_src>
import functools

import jax
import jax.numpy as jnp
from jax import lax
from jax.experimental import pallas as pl
from jax.experimental.pallas import tpu as pltpu

TILE_LANES = 128   # lane width: output-channel dim padded to this (lane-dense stores)
SUBLANES = 8       # contraction (K) dim padded to this


def _round_up(n, m):
    return ((n + m - 1) // m) * m


_COMPILER_PARAMS = pltpu.CompilerParams(vmem_limit_bytes=32 * 1024 * 1024)
_VMEM_SPEC = pl.BlockSpec(memory_space=pltpu.MemorySpace.VMEM)


# ----------------------------- Pallas kernels ------------------------------ #

def _conv_bn_relu_kernel(a_ref, w_ref, g_ref, b_ref, o_ref, *, inv_rows):
    """Fused im2col-matmul + training-mode BatchNorm2d + ReLU (single block).

    a: (M, Kp) bf16 im2col rows, w: (Kp, Np) bf16, g/b: (1, Np) f32.
    Zero-padded K columns contribute nothing; zero-padded output channels
    (zero weights / gamma / beta) stay exactly zero.
    """
    y = jnp.dot(a_ref[...], w_ref[...], preferred_element_type=jnp.float32)
    mean = jnp.sum(y, axis=0, keepdims=True) * inv_rows
    d = y - mean
    var = jnp.sum(d * d, axis=0, keepdims=True) * inv_rows   # biased, shifted (no cancellation)
    scale = g_ref[...] * lax.rsqrt(var + 1e-5)
    o_ref[...] = jnp.maximum(d * scale + b_ref[...], 0.0)


def _matmul_bias_kernel(a_ref, b_ref, bias_ref, o_ref):
    """(M, Kp) @ (Kp, Np) + bias; bf16 operands, f32 accumulate, single block."""
    o_ref[...] = (jnp.dot(a_ref[...], b_ref[...], preferred_element_type=jnp.float32)
                  + bias_ref[...])


def _maxpool_kernel(x_ref, o_ref):
    """2x2 / stride-2 max pool. x: (N*H/2, 2, W/2, 2, C) free reshape of NHWC."""
    x = x_ref[...]
    a = jnp.maximum(x[:, 0], x[:, 1])                         # pool along H (major dim)
    o_ref[...] = jnp.maximum(a[:, :, 0, :], a[:, :, 1, :])    # pool along W (sublane dim)


# ------------------------------ kernel wrappers ----------------------------- #

def conv3x3_bn_relu(x, w, gamma, beta):
    """x: (N,H,W,C_store) NHWC (possibly channel-padded); w: (Cout, Cin, 3, 3).

    Returns (N, H, W, Np), Np = round_up(Cout, 128); real channels in [:Cout],
    padded channels are exactly zero.
    """
    N, H, W, _ = x.shape
    cout, cin = w.shape[0], w.shape[1]
    M, K = N * H * W, 9 * cin
    Kp, Np = _round_up(K, SUBLANES), _round_up(cout, TILE_LANES)

    xs = x[..., :cin].astype(jnp.bfloat16)
    xp = jnp.pad(xs, ((0, 0), (1, 1), (1, 1), (0, 0)))
    # TODO(synk): at larger H/W, build the 9 taps inside the kernel (shifted
    # pl.ds reads of the padded input) instead of materializing im2col in HBM.
    patches = [xp[:, kh:kh + H, kw:kw + W, :] for kh in range(3) for kw in range(3)]
    a = jnp.concatenate(patches, axis=-1).reshape(M, K)
    a = jnp.pad(a, ((0, 0), (0, Kp - K)))

    b = jnp.transpose(w, (2, 3, 1, 0)).reshape(K, cout).astype(jnp.bfloat16)
    b = jnp.pad(b, ((0, Kp - K), (0, Np - cout)))
    g = jnp.pad(gamma.astype(jnp.float32), (0, Np - cout)).reshape(1, Np)
    bb = jnp.pad(beta.astype(jnp.float32), (0, Np - cout)).reshape(1, Np)

    # TODO(synk): single full-array block per call (all layers fit VMEM at this
    # size); larger N*H*W would need an M-grid plus a two-pass BN reduction.
    out = pl.pallas_call(
        functools.partial(_conv_bn_relu_kernel, inv_rows=1.0 / M),
        out_shape=jax.ShapeDtypeStruct((M, Np), jnp.float32),
        in_specs=[_VMEM_SPEC] * 4,
        out_specs=_VMEM_SPEC,
        compiler_params=_COMPILER_PARAMS,
    )(a, b, g, bb)
    return out.reshape(N, H, W, Np)


def _matmul_bias(a, b, bias):
    """a: (M, K); b: (K, Nout); bias: (Nout,).  Returns lane-padded (M, Np) f32."""
    M, K = a.shape
    nout = b.shape[1]
    Kp, Np = _round_up(K, SUBLANES), _round_up(nout, TILE_LANES)
    ap = jnp.pad(a.astype(jnp.bfloat16), ((0, 0), (0, Kp - K)))
    bp = jnp.pad(b.astype(jnp.bfloat16), ((0, Kp - K), (0, Np - nout)))
    biasp = jnp.pad(bias.astype(jnp.float32), (0, Np - nout)).reshape(1, Np)
    return pl.pallas_call(
        _matmul_bias_kernel,
        out_shape=jax.ShapeDtypeStruct((M, Np), jnp.float32),
        in_specs=[_VMEM_SPEC] * 3,
        out_specs=_VMEM_SPEC,
        compiler_params=_COMPILER_PARAMS,
    )(ap, bp, biasp)


def maxpool2x2(x):
    """x: (N,H,W,C) -> (N,H//2,W//2,C); single in-kernel 4-way max, one read/write."""
    N, H, W, C = x.shape
    xr = x.reshape(N * H // 2, 2, W // 2, 2, C)   # free row-major reshape (H, W even)
    out = pl.pallas_call(
        _maxpool_kernel,
        out_shape=jax.ShapeDtypeStruct((N * H // 2, W // 2, C), x.dtype),
        in_specs=[_VMEM_SPEC],
        out_specs=_VMEM_SPEC,
        compiler_params=_COMPILER_PARAMS,
    )(xr)
    return out.reshape(N, H // 2, W // 2, C)


# --------------------------- conv building blocks --------------------------- #

def double_conv(x, p):
    x = conv3x3_bn_relu(x, p["w1"], p["g1"], p["b1"])
    x = conv3x3_bn_relu(x, p["w2"], p["g2"], p["b2"])
    return x


def conv_transpose2x2(x, w, bias):
    """x: (N,H,W,C_store); w: PyTorch layout (Cin, Cout, 2, 2); stride 2."""
    N, H, W, _ = x.shape
    cin, cout = w.shape[0], w.shape[1]
    a = x[..., :cin].reshape(N * H * W, cin)
    b = jnp.transpose(w, (0, 2, 3, 1)).reshape(cin, 4 * cout)  # cols ordered (kh, kw, co)
    y = _matmul_bias(a, b, jnp.tile(bias, 4))[:, :4 * cout]
    # TODO(synk): at larger resolutions, scatter the 4 (kh,kw) column groups via
    # an output index_map instead of this 6-D reshape/transpose.
    y = y.reshape(N, H, W, 2, 2, cout)
    y = jnp.transpose(y, (0, 1, 3, 2, 4, 5)).reshape(N, 2 * H, 2 * W, cout)
    return y


def conv1x1(x, w, bias):
    """x: (N,H,W,C_store); w: PyTorch layout (Cout, Cin, 1, 1); with bias."""
    N, H, W, _ = x.shape
    cout, cin = w.shape[0], w.shape[1]
    a = x[..., :cin].reshape(N * H * W, cin)
    b = w.reshape(cout, cin).T
    y = _matmul_bias(a, b, bias)[:, :cout]
    return y.reshape(N, H, W, cout)


# ------------------------------ GeneratorNet ------------------------------- #

def generator_forward(params, x_nchw):
    x = jnp.transpose(x_nchw, (0, 2, 3, 1)).astype(jnp.float32)  # NCHW -> NHWC
    skips = []
    for p in params["downs"]:
        x = double_conv(x, p)                       # (N,H,W,128): real channels [:Cout]
        skips.append((x, p["w2"].shape[0]))
        x = maxpool2x2(x)
    x = double_conv(x, params["bottleneck"])
    skips = skips[::-1]
    for (skip, c_skip), up in zip(skips, params["ups"]):
        x = conv_transpose2x2(x, up["wt"], up["bt"])
        # TODO(synk): TF.resize branch is unreachable when spatial dims divide by 16.
        x = jnp.concatenate([skip[..., :c_skip], x], axis=-1)   # torch.cat((skip, x), dim=1)
        x = double_conv(x, up["dc"])
    x = conv1x1(x, params["final_w"], params["final_b"])
    return jnp.transpose(x, (0, 3, 1, 2))           # NHWC -> NCHW


def init_params(key, in_channels=3, out_channels=1, features=(8, 16, 32, 64)):
    keys = iter(jax.random.split(key, 128))

    def nrm(shape, s=0.1):
        return s * jax.random.normal(next(keys), shape, jnp.float32)

    def dconv(cin, cout):
        return {
            "w1": nrm((cout, cin, 3, 3)),
            "g1": 1.0 + nrm((cout,)),
            "b1": nrm((cout,)),
            "w2": nrm((cout, cout, 3, 3)),
            "g2": 1.0 + nrm((cout,)),
            "b2": nrm((cout,)),
        }

    params = {"downs": [], "ups": []}
    cin = in_channels
    for f in features:
        params["downs"].append(dconv(cin, f))
        cin = f
    params["bottleneck"] = dconv(features[-1], features[-1] * 2)
    for f in reversed(features):
        params["ups"].append({
            "wt": nrm((f * 2, f, 2, 2)),   # ConvTranspose2d weight (Cin, Cout, 2, 2)
            "bt": nrm((f,)),
            "dc": dconv(f * 2, f),
        })
    params["final_w"] = nrm((out_channels, features[0], 1, 1))
    params["final_b"] = nrm((out_channels,))
    return params


if __name__ == "__main__":
    key = jax.random.PRNGKey(0)
    pkey, xkey = jax.random.split(key)
    params = init_params(pkey, in_channels=3, out_channels=1, features=(8, 16, 32, 64))
    x = jax.random.normal(xkey, (2, 3, 16, 16), jnp.float32)  # NCHW, like PyTorch

    fwd = jax.jit(functools.partial(generator_forward, params))
    out = fwd(x)
    jax.block_until_ready(out)
    assert out.shape == (2, 1, 16, 16), out.shape
    print("KERNEL_OK")
</pallas_src>

<mosaic_0001>
module attributes {stable_mosaic.version = 11 : i64} {
  func.func @_conv_bn_relu_kernel(%arg0: memref<512x32xbf16, #tpu.memory_space<vmem>>, %arg1: memref<32x128xbf16, #tpu.memory_space<vmem>>, %arg2: memref<1x128xf32, #tpu.memory_space<vmem>>, %arg3: memref<1x128xf32, #tpu.memory_space<vmem>>, %arg4: memref<512x128xf32, #tpu.memory_space<vmem>>) attributes {dimension_semantics = [], scalar_prefetch = 0 : i64, scratch_operands = 0 : i64, tpu.core_type = #tpu.core_type<tc>} {
    %c0 = arith.constant 0 : index
    %c0_0 = arith.constant 0 : index
    %0 = vector.load %arg0[%c0, %c0_0] : memref<512x32xbf16, #tpu.memory_space<vmem>>, vector<512x32xbf16>
    %c0_1 = arith.constant 0 : index
    %c0_2 = arith.constant 0 : index
    %1 = vector.load %arg1[%c0_1, %c0_2] : memref<32x128xbf16, #tpu.memory_space<vmem>>, vector<32x128xbf16>
    %cst = arith.constant dense<0.000000e+00> : vector<512x128xf32>
    %2 = tpu.matmul %0, %1, %cst {dimension_numbers = #tpu.dot_dimension_numbers<[1], [0], [0], [1], [0, 0, 1, 1], [], []>} : vector<512x32xbf16>, vector<32x128xbf16>, vector<512x128xf32> -> vector<512x128xf32>
    %cst_3 = arith.constant dense<0.000000e+00> : vector<128xf32>
    %3 = vector.multi_reduction <add>, %2, %cst_3 [0] : vector<512x128xf32> to vector<128xf32>
    %4 = vector.shape_cast %3 : vector<128xf32> to vector<1x128xf32>
    %cst_4 = arith.constant 0.001953125 : f32
    %5 = vector.broadcast %cst_4 : f32 to vector<1x128xf32>
    %6 = arith.mulf %4, %5 : vector<1x128xf32>
    %7 = vector.broadcast %6 : vector<1x128xf32> to vector<512x128xf32>
    %8 = arith.subf %2, %7 : vector<512x128xf32>
    %9 = arith.mulf %8, %8 : vector<512x128xf32>
    %cst_5 = arith.constant dense<0.000000e+00> : vector<128xf32>
    %10 = vector.multi_reduction <add>, %9, %cst_5 [0] : vector<512x128xf32> to vector<128xf32>
    %11 = vector.shape_cast %10 : vector<128xf32> to vector<1x128xf32>
    %cst_6 = arith.constant 0.001953125 : f32
    %12 = vector.broadcast %cst_6 : f32 to vector<1x128xf32>
    %13 = arith.mulf %11, %12 : vector<1x128xf32>
    %c0_7 = arith.constant 0 : index
    %c0_8 = arith.constant 0 : index
    %14 = vector.load %arg2[%c0_7, %c0_8] : memref<1x128xf32, #tpu.memory_space<vmem>>, vector<1x128xf32>
    %cst_9 = arith.constant 9.99999974E-6 : f32
    %15 = vector.broadcast %cst_9 : f32 to vector<1x128xf32>
    %16 = arith.addf %13, %15 : vector<1x128xf32>
    %17 = math.rsqrt %16 : vector<1x128xf32>
    %18 = arith.mulf %14, %17 : vector<1x128xf32>
    %19 = vector.broadcast %18 : vector<1x128xf32> to vector<512x128xf32>
    %20 = arith.mulf %8, %19 : vector<512x128xf32>
    %c0_10 = arith.constant 0 : index
    %c0_11 = arith.constant 0 : index
    %21 = vector.load %arg3[%c0_10, %c0_11] : memref<1x128xf32, #tpu.memory_space<vmem>>, vector<1x128xf32>
    %22 = vector.broadcast %21 : vector<1x128xf32> to vector<512x128xf32>
    %23 = arith.addf %20, %22 : vector<512x128xf32>
    %cst_12 = arith.constant 0.000000e+00 : f32
    %24 = vector.broadcast %cst_12 : f32 to vector<512x128xf32>
    %25 = arith.maximumf %23, %24 : vector<512x128xf32>
    %c0_13 = arith.constant 0 : index
    %c0_14 = arith.constant 0 : index
    %26 = vector.load %arg4[%c0_13, %c0_14] : memref<512x128xf32, #tpu.memory_space<vmem>>, vector<512x128xf32>
    tpu.vector_store %arg4[%c0_13, %c0_14], %25 {strides = array<i32>} : memref<512x128xf32, #tpu.memory_space<vmem>>, vector<512x128xf32>,
    return
  }
}

module attributes {stable_mosaic.version = 11 : i64} {
  func.func @_conv_bn_relu_kernel(%arg0: memref<512x72xbf16, #tpu.memory_space<vmem>>, %arg1: memref<72x128xbf16, #tpu.memory_space<vmem>>, %arg2: memref<1x128xf32, #tpu.memory_space<vmem>>, %arg3: memref<1x128xf32, #tpu.memory_space<vmem>>, %arg4: memref<512x128xf32, #tpu.memory_space<vmem>>) attributes {dimension_semantics = [], scalar_prefetch = 0 : i64, scratch_operands = 0 : i64, tpu.core_type = #tpu.core_type<tc>} {
    %c0 = arith.constant 0 : index
    %c0_0 = arith.constant 0 : index
    %0 = vector.load %arg0[%c0, %c0_0] : memref<512x72xbf16, #tpu.memory_space<vmem>>, vector<512x72xbf16>
    %c0_1 = arith.constant 0 : index
    %c0_2 = arith.constant 0 : index
    %1 = vector.load %arg1[%c0_1, %c0_2] : memref<72x128xbf16, #tpu.memory_space<vmem>>, vector<72x128xbf16>
    %cst = arith.constant dense<0.000000e+00> : vector<512x128xf32>
    %2 = tpu.matmul %0, %1, %cst {dimension_numbers = #tpu.dot_dimension_numbers<[1], [0], [0], [1], [0, 0, 1, 1], [], []>} : vector<512x72xbf16>, vector<72x128xbf16>, vector<512x128xf32> -> vector<512x128xf32>
    %cst_3 = arith.constant dense<0.000000e+00> : vector<128xf32>
    %3 = vector.multi_reduction <add>, %2, %cst_3 [0] : vector<512x128xf32> to vector<128xf32>
    %4 = vector.shape_cast %3 : vector<128xf32> to vector<1x128xf32>
    %cst_4 = arith.constant 0.001953125 : f32
    %5 = vector.broadcast %cst_4 : f32 to vector<1x128xf32>
    %6 = arith.mulf %4, %5 : vector<1x128xf32>
    %7 = vector.broadcast %6 : vector<1x128xf32> to vector<512x128xf32>
    %8 = arith.subf %2, %7 : vector<512x128xf32>
    %9 = arith.mulf %8, %8 : vector<512x128xf32>
    %cst_5 = arith.constant dense<0.000000e+00> : vector<128xf32>
    %10 = vector.multi_reduction <add>, %9, %cst_5 [0] : vector<512x128xf32> to vector<128xf32>
    %11 = vector.shape_cast %10 : vector<128xf32> to vector<1x128xf32>
    %cst_6 = arith.constant 0.001953125 : f32
    %12 = vector.broadcast %cst_6 : f32 to vector<1x128xf32>
    %13 = arith.mulf %11, %12 : vector<1x128xf32>
    %c0_7 = arith.constant 0 : index
    %c0_8 = arith.constant 0 : index
    %14 = vector.load %arg2[%c0_7, %c0_8] : memref<1x128xf32, #tpu.memory_space<vmem>>, vector<1x128xf32>
    %cst_9 = arith.constant 9.99999974E-6 : f32
    %15 = vector.broadcast %cst_9 : f32 to vector<1x128xf32>
    %16 = arith.addf %13, %15 : vector<1x128xf32>
    %17 = math.rsqrt %16 : vector<1x128xf32>
    %18 = arith.mulf %14, %17 : vector<1x128xf32>
    %19 = vector.broadcast %18 : vector<1x128xf32> to vector<512x128xf32>
    %20 = arith.mulf %8, %19 : vector<512x128xf32>
    %c0_10 = arith.constant 0 : index
    %c0_11 = arith.constant 0 : index
    %21 = vector.load %arg3[%c0_10, %c0_11] : memref<1x128xf32, #tpu.memory_space<vmem>>, vector<1x128xf32>
    %22 = vector.broadcast %21 : vector<1x128xf32> to vector<512x128xf32>
    %23 = arith.addf %20, %22 : vector<512x128xf32>
    %cst_12 = arith.constant 0.000000e+00 : f32
    %24 = vector.broadcast %cst_12 : f32 to vector<512x128xf32>
    %25 = arith.maximumf %23, %24 : vector<512x128xf32>
    %c0_13 = arith.constant 0 : index
    %c0_14 = arith.constant 0 : index
    %26 = vector.load %arg4[%c0_13, %c0_14] : memref<512x128xf32, #tpu.memory_space<vmem>>, vector<512x128xf32>
    tpu.vector_store %arg4[%c0_13, %c0_14], %25 {strides = array<i32>} : memref<512x128xf32, #tpu.memory_space<vmem>>, vector<512x128xf32>,
    return
  }
}

module attributes {stable_mosaic.version = 11 : i64} {
  func.func @_maxpool_kernel(%arg0: memref<16x2x8x2x128xf32, #tpu.memory_space<vmem>>, %arg1: memref<16x8x128xf32, #tpu.memory_space<vmem>>) attributes {dimension_semantics = [], scalar_prefetch = 0 : i64, scratch_operands = 0 : i64, tpu.core_type = #tpu.core_type<tc>} {
    %c0 = arith.constant 0 : index
    %c0_0 = arith.constant 0 : index
    %c0_1 = arith.constant 0 : index
    %c0_2 = arith.constant 0 : index
    %c0_3 = arith.constant 0 : index
    %0 = vector.load %arg0[%c0, %c0_0, %c0_1, %c0_2, %c0_3] : memref<16x2x8x2x128xf32, #tpu.memory_space<vmem>>, vector<16x2x8x2x128xf32>
    %1 = vector.extract_strided_slice %0 {offsets = [0, 0, 0, 0, 0], sizes = [16, 1, 8, 2, 128], strides = [1, 1, 1, 1, 1]} : vector<16x2x8x2x128xf32> to vector<16x1x8x2x128xf32>
    %2 = vector.shape_cast %1 : vector<16x1x8x2x128xf32> to vector<16x8x2x128xf32>
    %3 = vector.extract_strided_slice %0 {offsets = [0, 1, 0, 0, 0], sizes = [16, 1, 8, 2, 128], strides = [1, 1, 1, 1, 1]} : vector<16x2x8x2x128xf32> to vector<16x1x8x2x128xf32>
    %4 = vector.shape_cast %3 : vector<16x1x8x2x128xf32> to vector<16x8x2x128xf32>
    %5 = arith.maximumf %2, %4 : vector<16x8x2x128xf32>
    %6 = vector.extract_strided_slice %5 {offsets = [0, 0, 0, 0], sizes = [16, 8, 1, 128], strides = [1, 1, 1, 1]} : vector<16x8x2x128xf32> to vector<16x8x1x128xf32>
    %7 = vector.shape_cast %6 : vector<16x8x1x128xf32> to vector<16x8x128xf32>
    %8 = vector.extract_strided_slice %5 {offsets = [0, 0, 1, 0], sizes = [16, 8, 1, 128], strides = [1, 1, 1, 1]} : vector<16x8x2x128xf32> to vector<16x8x1x128xf32>
    %9 = vector.shape_cast %8 : vector<16x8x1x128xf32> to vector<16x8x128xf32>
    %10 = arith.maximumf %7, %9 : vector<16x8x128xf32>
    %c0_4 = arith.constant 0 : index
    %c0_5 = arith.constant 0 : index
    %c0_6 = arith.constant 0 : index
    %11 = vector.load %arg1[%c0_4, %c0_5, %c0_6] : memref<16x8x128xf32, #tpu.memory_space<vmem>>, vector<16x8x128xf32>
    tpu.vector_store %arg1[%c0_4, %c0_5, %c0_6], %10 {strides = array<i32>} : memref<16x8x128xf32, #tpu.memory_space<vmem>>, vector<16x8x128xf32>,
    return
  }
}

module attributes {stable_mosaic.version = 11 : i64} {
  func.func @_conv_bn_relu_kernel(%arg0: memref<128x72xbf16, #tpu.memory_space<vmem>>, %arg1: memref<72x128xbf16, #tpu.memory_space<vmem>>, %arg2: memref<1x128xf32, #tpu.memory_space<vmem>>, %arg3: memref<1x128xf32, #tpu.memory_space<vmem>>, %arg4: memref<128x128xf32, #tpu.memory_space<vmem>>) attributes {dimension_semantics = [], scalar_prefetch = 0 : i64, scratch_operands = 0 : i64, tpu.core_type = #tpu.core_type<tc>} {
    %c0 = arith.constant 0 : index
    %c0_0 = arith.constant 0 : index
    %0 = vector.load %arg0[%c0, %c0_0] : memref<128x72xbf16, #tpu.memory_space<vmem>>, vector<128x72xbf16>
    %c0_1 = arith.constant 0 : index
    %c0_2 = arith.constant 0 : index
    %1 = vector.load %arg1[%c0_1, %c0_2] : memref<72x128xbf16, #tpu.memory_space<vmem>>, vector<72x128xbf16>
    %cst = arith.constant dense<0.000000e+00> : vector<128x128xf32>
    %2 = tpu.matmul %0, %1, %cst {dimension_numbers = #tpu.dot_dimension_numbers<[1], [0], [0], [1], [0, 0, 1, 1], [], []>} : vector<128x72xbf16>, vector<72x128xbf16>, vector<128x128xf32> -> vector<128x128xf32>
    %cst_3 = arith.constant dense<0.000000e+00> : vector<128xf32>
    %3 = vector.multi_reduction <add>, %2, %cst_3 [0] : vector<128x128xf32> to vector<128xf32>
    %4 = vector.shape_cast %3 : vector<128xf32> to vector<1x128xf32>
    %cst_4 = arith.constant 7.812500e-03 : f32
    %5 = vector.broadcast %cst_4 : f32 to vector<1x128xf32>
    %6 = arith.mulf %4, %5 : vector<1x128xf32>
    %7 = vector.broadcast %6 : vector<1x128xf32> to vector<128x128xf32>
    %8 = arith.subf %2, %7 : vector<128x128xf32>
    %9 = arith.mulf %8, %8 : vector<128x128xf32>
    %cst_5 = arith.constant dense<0.000000e+00> : vector<128xf32>
    %10 = vector.multi_reduction <add>, %9, %cst_5 [0] : vector<128x128xf32> to vector<128xf32>
    %11 = vector.shape_cast %10 : vector<128xf32> to vector<1x128xf32>
    %cst_6 = arith.constant 7.812500e-03 : f32
    %12 = vector.broadcast %cst_6 : f32 to vector<1x128xf32>
    %13 = arith.mulf %11, %12 : vector<1x128xf32>
    %c0_7 = arith.constant 0 : index
    %c0_8 = arith.constant 0 : index
    %14 = vector.load %arg2[%c0_7, %c0_8] : memref<1x128xf32, #tpu.memory_space<vmem>>, vector<1x128xf32>
    %cst_9 = arith.constant 9.99999974E-6 : f32
    %15 = vector.broadcast %cst_9 : f32 to vector<1x128xf32>
    %16 = arith.addf %13, %15 : vector<1x128xf32>
    %17 = math.rsqrt %16 : vector<1x128xf32>
    %18 = arith.mulf %14, %17 : vector<1x128xf32>
    %19 = vector.broadcast %18 : vector<1x128xf32> to vector<128x128xf32>
    %20 = arith.mulf %8, %19 : vector<128x128xf32>
    %c0_10 = arith.constant 0 : index
    %c0_11 = arith.constant 0 : index
    %21 = vector.load %arg3[%c0_10, %c0_11] : memref<1x128xf32, #tpu.memory_space<vmem>>, vector<1x128xf32>
    %22 = vector.broadcast %21 : vector<1x128xf32> to vector<128x128xf32>
    %23 = arith.addf %20, %22 : vector<128x128xf32>
    %cst_12 = arith.constant 0.000000e+00 : f32
    %24 = vector.broadcast %cst_12 : f32 to vector<128x128xf32>
    %25 = arith.maximumf %23, %24 : vector<128x128xf32>
    %c0_13 = arith.constant 0 : index
    %c0_14 = arith.constant 0 : index
    %26 = vector.load %arg4[%c0_13, %c0_14] : memref<128x128xf32, #tpu.memory_space<vmem>>, vector<128x128xf32>
    tpu.vector_store %arg4[%c0_13, %c0_14], %25 {strides = array<i32>} : memref<128x128xf32, #tpu.memory_space<vmem>>, vector<128x128xf32>,
    return
  }
}

module attributes {stable_mosaic.version = 11 : i64} {
  func.func @_maxpool_kernel(%arg0: memref<8x2x4x2x128xf32, #tpu.memory_space<vmem>>, %arg1: memref<8x4x128xf32, #tpu.memory_space<vmem>>) attributes {dimension_semantics = [], scalar_prefetch = 0 : i64, scratch_operands = 0 : i64, tpu.core_type = #tpu.core_type<tc>} {
    %c0 = arith.constant 0 : index
    %c0_0 = arith.constant 0 : index
    %c0_1 = arith.constant 0 : index
    %c0_2 = arith.constant 0 : index
    %c0_3 = arith.constant 0 : index
    %0 = vector.load %arg0[%c0, %c0_0, %c0_1, %c0_2, %c0_3] : memref<8x2x4x2x128xf32, #tpu.memory_space<vmem>>, vector<8x2x4x2x128xf32>
    %1 = vector.extract_strided_slice %0 {offsets = [0, 0, 0, 0, 0], sizes = [8, 1, 4, 2, 128], strides = [1, 1, 1, 1, 1]} : vector<8x2x4x2x128xf32> to vector<8x1x4x2x128xf32>
    %2 = vector.shape_cast %1 : vector<8x1x4x2x128xf32> to vector<8x4x2x128xf32>
    %3 = vector.extract_strided_slice %0 {offsets = [0, 1, 0, 0, 0], sizes = [8, 1, 4, 2, 128], strides = [1, 1, 1, 1, 1]} : vector<8x2x4x2x128xf32> to vector<8x1x4x2x128xf32>
    %4 = vector.shape_cast %3 : vector<8x1x4x2x128xf32> to vector<8x4x2x128xf32>
    %5 = arith.maximumf %2, %4 : vector<8x4x2x128xf32>
    %6 = vector.extract_strided_slice %5 {offsets = [0, 0, 0, 0], sizes = [8, 4, 1, 128], strides = [1, 1, 1, 1]} : vector<8x4x2x128xf32> to vector<8x4x1x128xf32>
    %7 = vector.shape_cast %6 : vector<8x4x1x128xf32> to vector<8x4x128xf32>
    %8 = vector.extract_strided_slice %5 {offsets = [0, 0, 1, 0], sizes = [8, 4, 1, 128], strides = [1, 1, 1, 1]} : vector<8x4x2x128xf32> to vector<8x4x1x128xf32>
    %9 = vector.shape_cast %8 : vector<8x4x1x128xf32> to vector<8x4x128xf32>
    %10 = arith.maximumf %7, %9 : vector<8x4x128xf32>
    %c0_4 = arith.constant 0 : index
    %c0_5 = arith.constant 0 : index
    %c0_6 = arith.constant 0 : index
    %11 = vector.load %arg1[%c0_4, %c0_5, %c0_6] : memref<8x4x128xf32, #tpu.memory_space<vmem>>, vector<8x4x128xf32>
    tpu.vector_store %arg1[%c0_4, %c0_5, %c0_6], %10 {strides = array<i32>} : memref<8x4x128xf32, #tpu.memory_space<vmem>>, vector<8x4x128xf32>,
    return
  }
}

module attributes {stable_mosaic.version = 11 : i64} {
  func.func @_conv_bn_relu_kernel(%arg0: memref<128x144xbf16, #tpu.memory_space<vmem>>, %arg1: memref<144x128xbf16, #tpu.memory_space<vmem>>, %arg2: memref<1x128xf32, #tpu.memory_space<vmem>>, %arg3: memref<1x128xf32, #tpu.memory_space<vmem>>, %arg4: memref<128x128xf32, #tpu.memory_space<vmem>>) attributes {dimension_semantics = [], scalar_prefetch = 0 : i64, scratch_operands = 0 : i64, tpu.core_type = #tpu.core_type<tc>} {
    %c0 = arith.constant 0 : index
    %c0_0 = arith.constant 0 : index
    %0 = vector.load %arg0[%c0, %c0_0] : memref<128x144xbf16, #tpu.memory_space<vmem>>, vector<128x144xbf16>
    %c0_1 = arith.constant 0 : index
    %c0_2 = arith.constant 0 : index
    %1 = vector.load %arg1[%c0_1, %c0_2] : memref<144x128xbf16, #tpu.memory_space<vmem>>, vector<144x128xbf16>
    %cst = arith.constant dense<0.000000e+00> : vector<128x128xf32>
    %2 = tpu.matmul %0, %1, %cst {dimension_numbers = #tpu.dot_dimension_numbers<[1], [0], [0], [1], [0, 0, 1, 1], [], []>} : vector<128x144xbf16>, vector<144x128xbf16>, vector<128x128xf32> -> vector<128x128xf32>
    %cst_3 = arith.constant dense<0.000000e+00> : vector<128xf32>
    %3 = vector.multi_reduction <add>, %2, %cst_3 [0] : vector<128x128xf32> to vector<128xf32>
    %4 = vector.shape_cast %3 : vector<128xf32> to vector<1x128xf32>
    %cst_4 = arith.constant 7.812500e-03 : f32
    %5 = vector.broadcast %cst_4 : f32 to vector<1x128xf32>
    %6 = arith.mulf %4, %5 : vector<1x128xf32>
    %7 = vector.broadcast %6 : vector<1x128xf32> to vector<128x128xf32>
    %8 = arith.subf %2, %7 : vector<128x128xf32>
    %9 = arith.mulf %8, %8 : vector<128x128xf32>
    %cst_5 = arith.constant dense<0.000000e+00> : vector<128xf32>
    %10 = vector.multi_reduction <add>, %9, %cst_5 [0] : vector<128x128xf32> to vector<128xf32>
    %11 = vector.shape_cast %10 : vector<128xf32> to vector<1x128xf32>
    %cst_6 = arith.constant 7.812500e-03 : f32
    %12 = vector.broadcast %cst_6 : f32 to vector<1x128xf32>
    %13 = arith.mulf %11, %12 : vector<1x128xf32>
    %c0_7 = arith.constant 0 : index
    %c0_8 = arith.constant 0 : index
    %14 = vector.load %arg2[%c0_7, %c0_8] : memref<1x128xf32, #tpu.memory_space<vmem>>, vector<1x128xf32>
    %cst_9 = arith.constant 9.99999974E-6 : f32
    %15 = vector.broadcast %cst_9 : f32 to vector<1x128xf32>
    %16 = arith.addf %13, %15 : vector<1x128xf32>
    %17 = math.rsqrt %16 : vector<1x128xf32>
    %18 = arith.mulf %14, %17 : vector<1x128xf32>
    %19 = vector.broadcast %18 : vector<1x128xf32> to vector<128x128xf32>
    %20 = arith.mulf %8, %19 : vector<128x128xf32>
    %c0_10 = arith.constant 0 : index
    %c0_11 = arith.constant 0 : index
    %21 = vector.load %arg3[%c0_10, %c0_11] : memref<1x128xf32, #tpu.memory_space<vmem>>, vector<1x128xf32>
    %22 = vector.broadcast %21 : vector<1x128xf32> to vector<128x128xf32>
    %23 = arith.addf %20, %22 : vector<128x128xf32>
    %cst_12 = arith.constant 0.000000e+00 : f32
    %24 = vector.broadcast %cst_12 : f32 to vector<128x128xf32>
    %25 = arith.maximumf %23, %24 : vector<128x128xf32>
    %c0_13 = arith.constant 0 : index
    %c0_14 = arith.constant 0 : index
    %26 = vector.load %arg4[%c0_13, %c0_14] : memref<128x128xf32, #tpu.memory_space<vmem>>, vector<128x128xf32>
    tpu.vector_store %arg4[%c0_13, %c0_14], %25 {strides = array<i32>} : memref<128x128xf32, #tpu.memory_space<vmem>>, vector<128x128xf32>,
    return
  }
}

module attributes {stable_mosaic.version = 11 : i64} {
  func.func @_conv_bn_relu_kernel(%arg0: memref<32x144xbf16, #tpu.memory_space<vmem>>, %arg1: memref<144x128xbf16, #tpu.memory_space<vmem>>, %arg2: memref<1x128xf32, #tpu.memory_space<vmem>>, %arg3: memref<1x128xf32, #tpu.memory_space<vmem>>, %arg4: memref<32x128xf32, #tpu.memory_space<vmem>>) attributes {dimension_semantics = [], scalar_prefetch = 0 : i64, scratch_operands = 0 : i64, tpu.core_type = #tpu.core_type<tc>} {
    %c0 = arith.constant 0 : index
    %c0_0 = arith.constant 0 : index
    %0 = vector.load %arg0[%c0, %c0_0] : memref<32x144xbf16, #tpu.memory_space<vmem>>, vector<32x144xbf16>
    %c0_1 = arith.constant 0 : index
    %c0_2 = arith.constant 0 : index
    %1 = vector.load %arg1[%c0_1, %c0_2] : memref<144x128xbf16, #tpu.memory_space<vmem>>, vector<144x128xbf16>
    %cst = arith.constant dense<0.000000e+00> : vector<32x128xf32>
    %2 = tpu.matmul %0, %1, %cst {dimension_numbers = #tpu.dot_dimension_numbers<[1], [0], [0], [1], [0, 0, 1, 1], [], []>} : vector<32x144xbf16>, vector<144x128xbf16>, vector<32x128xf32> -> vector<32x128xf32>
    %cst_3 = arith.constant dense<0.000000e+00> : vector<128xf32>
    %3 = vector.multi_reduction <add>, %2, %cst_3 [0] : vector<32x128xf32> to vector<128xf32>
    %4 = vector.shape_cast %3 : vector<128xf32> to vector<1x128xf32>
    %cst_4 = arith.constant 3.125000e-02 : f32
    %5 = vector.broadcast %cst_4 : f32 to vector<1x128xf32>
    %6 = arith.mulf %4, %5 : vector<1x128xf32>
    %7 = vector.broadcast %6 : vector<1x128xf32> to vector<32x128xf32>
    %8 = arith.subf %2, %7 : vector<32x128xf32>
    %9 = arith.mulf %8, %8 : vector<32x128xf32>
    %cst_5 = arith.constant dense<0.000000e+00> : vector<128xf32>
    %10 = vector.multi_reduction <add>, %9, %cst_5 [0] : vector<32x128xf32> to vector<128xf32>
    %11 = vector.shape_cast %10 : vector<128xf32> to vector<1x128xf32>
    %cst_6 = arith.constant 3.125000e-02 : f32
    %12 = vector.broadcast %cst_6 : f32 to vector<1x128xf32>
    %13 = arith.mulf %11, %12 : vector<1x128xf32>
    %c0_7 = arith.constant 0 : index
    %c0_8 = arith.constant 0 : index
    %14 = vector.load %arg2[%c0_7, %c0_8] : memref<1x128xf32, #tpu.memory_space<vmem>>, vector<1x128xf32>
    %cst_9 = arith.constant 9.99999974E-6 : f32
    %15 = vector.broadcast %cst_9 : f32 to vector<1x128xf32>
    %16 = arith.addf %13, %15 : vector<1x128xf32>
    %17 = math.rsqrt %16 : vector<1x128xf32>
    %18 = arith.mulf %14, %17 : vector<1x128xf32>
    %19 = vector.broadcast %18 : vector<1x128xf32> to vector<32x128xf32>
    %20 = arith.mulf %8, %19 : vector<32x128xf32>
    %c0_10 = arith.constant 0 : index
    %c0_11 = arith.constant 0 : index
    %21 = vector.load %arg3[%c0_10, %c0_11] : memref<1x128xf32, #tpu.memory_space<vmem>>, vector<1x128xf32>
    %22 = vector.broadcast %21 : vector<1x128xf32> to vector<32x128xf32>
    %23 = arith.addf %20, %22 : vector<32x128xf32>
    %cst_12 = arith.constant 0.000000e+00 : f32
    %24 = vector.broadcast %cst_12 : f32 to vector<32x128xf32>
    %25 = arith.maximumf %23, %24 : vector<32x128xf32>
    %c0_13 = arith.constant 0 : index
    %c0_14 = arith.constant 0 : index
    %26 = vector.load %arg4[%c0_13, %c0_14] : memref<32x128xf32, #tpu.memory_space<vmem>>, vector<32x128xf32>
    tpu.vector_store %arg4[%c0_13, %c0_14], %25 {strides = array<i32>} : memref<32x128xf32, #tpu.memory_space<vmem>>, vector<32x128xf32>,
    return
  }
}

module attributes {stable_mosaic.version = 11 : i64} {
  func.func @_maxpool_kernel(%arg0: memref<4x2x2x2x128xf32, #tpu.memory_space<vmem>>, %arg1: memref<4x2x128xf32, #tpu.memory_space<vmem>>) attributes {dimension_semantics = [], scalar_prefetch = 0 : i64, scratch_operands = 0 : i64, tpu.core_type = #tpu.core_type<tc>} {
    %c0 = arith.constant 0 : index
    %c0_0 = arith.constant 0 : index
    %c0_1 = arith.constant 0 : index
    %c0_2 = arith.constant 0 : index
    %c0_3 = arith.constant 0 : index
    %0 = vector.load %arg0[%c0, %c0_0, %c0_1, %c0_2, %c0_3] : memref<4x2x2x2x128xf32, #tpu.memory_space<vmem>>, vector<4x2x2x2x128xf32>
    %1 = vector.extract_strided_slice %0 {offsets = [0, 0, 0, 0, 0], sizes = [4, 1, 2, 2, 128], strides = [1, 1, 1, 1, 1]} : vector<4x2x2x2x128xf32> to vector<4x1x2x2x128xf32>
    %2 = vector.shape_cast %1 : vector<4x1x2x2x128xf32> to vector<4x2x2x128xf32>
    %3 = vector.extract_strided_slice %0 {offsets = [0, 1, 0, 0, 0], sizes = [4, 1, 2, 2, 128], strides = [1, 1, 1, 1, 1]} : vector<4x2x2x2x128xf32> to vector<4x1x2x2x128xf32>
    %4 = vector.shape_cast %3 : vector<4x1x2x2x128xf32> to vector<4x2x2x128xf32>
    %5 = arith.maximumf %2, %4 : vector<4x2x2x128xf32>
    %6 = vector.extract_strided_slice %5 {offsets = [0, 0, 0, 0], sizes = [4, 2, 1, 128], strides = [1, 1, 1, 1]} : vector<4x2x2x128xf32> to vector<4x2x1x128xf32>
    %7 = vector.shape_cast %6 : vector<4x2x1x128xf32> to vector<4x2x128xf32>
    %8 = vector.extract_strided_slice %5 {offsets = [0, 0, 1, 0], sizes = [4, 2, 1, 128], strides = [1, 1, 1, 1]} : vector<4x2x2x128xf32> to vector<4x2x1x128xf32>
    %9 = vector.shape_cast %8 : vector<4x2x1x128xf32> to vector<4x2x128xf32>
    %10 = arith.maximumf %7, %9 : vector<4x2x128xf32>
    %c0_4 = arith.constant 0 : index
    %c0_5 = arith.constant 0 : index
    %c0_6 = arith.constant 0 : index
    %11 = vector.load %arg1[%c0_4, %c0_5, %c0_6] : memref<4x2x128xf32, #tpu.memory_space<vmem>>, vector<4x2x128xf32>
    tpu.vector_store %arg1[%c0_4, %c0_5, %c0_6], %10 {strides = array<i32>} : memref<4x2x128xf32, #tpu.memory_space<vmem>>, vector<4x2x128xf32>,
    return
  }
}

module attributes {stable_mosaic.version = 11 : i64} {
  func.func @_conv_bn_relu_kernel(%arg0: memref<32x288xbf16, #tpu.memory_space<vmem>>, %arg1: memref<288x128xbf16, #tpu.memory_space<vmem>>, %arg2: memref<1x128xf32, #tpu.memory_space<vmem>>, %arg3: memref<1x128xf32, #tpu.memory_space<vmem>>, %arg4: memref<32x128xf32, #tpu.memory_space<vmem>>) attributes {dimension_semantics = [], scalar_prefetch = 0 : i64, scratch_operands = 0 : i64, tpu.core_type = #tpu.core_type<tc>} {
    %c0 = arith.constant 0 : index
    %c0_0 = arith.constant 0 : index
    %0 = vector.load %arg0[%c0, %c0_0] : memref<32x288xbf16, #tpu.memory_space<vmem>>, vector<32x288xbf16>
    %c0_1 = arith.constant 0 : index
    %c0_2 = arith.constant 0 : index
    %1 = vector.load %arg1[%c0_1, %c0_2] : memref<288x128xbf16, #tpu.memory_space<vmem>>, vector<288x128xbf16>
    %cst = arith.constant dense<0.000000e+00> : vector<32x128xf32>
    %2 = tpu.matmul %0, %1, %cst {dimension_numbers = #tpu.dot_dimension_numbers<[1], [0], [0], [1], [0, 0, 1, 1], [], []>} : vector<32x288xbf16>, vector<288x128xbf16>, vector<32x128xf32> -> vector<32x128xf32>
    %cst_3 = arith.constant dense<0.000000e+00> : vector<128xf32>
    %3 = vector.multi_reduction <add>, %2, %cst_3 [0] : vector<32x128xf32> to vector<128xf32>
    %4 = vector.shape_cast %3 : vector<128xf32> to vector<1x128xf32>
    %cst_4 = arith.constant 3.125000e-02 : f32
    %5 = vector.broadcast %cst_4 : f32 to vector<1x128xf32>
    %6 = arith.mulf %4, %5 : vector<1x128xf32>
    %7 = vector.broadcast %6 : vector<1x128xf32> to vector<32x128xf32>
    %8 = arith.subf %2, %7 : vector<32x128xf32>
    %9 = arith.mulf %8, %8 : vector<32x128xf32>
    %cst_5 = arith.constant dense<0.000000e+00> : vector<128xf32>
    %10 = vector.multi_reduction <add>, %9, %cst_5 [0] : vector<32x128xf32> to vector<128xf32>
    %11 = vector.shape_cast %10 : vector<128xf32> to vector<1x128xf32>
    %cst_6 = arith.constant 3.125000e-02 : f32
    %12 = vector.broadcast %cst_6 : f32 to vector<1x128xf32>
    %13 = arith.mulf %11, %12 : vector<1x128xf32>
    %c0_7 = arith.constant 0 : index
    %c0_8 = arith.constant 0 : index
    %14 = vector.load %arg2[%c0_7, %c0_8] : memref<1x128xf32, #tpu.memory_space<vmem>>, vector<1x128xf32>
    %cst_9 = arith.constant 9.99999974E-6 : f32
    %15 = vector.broadcast %cst_9 : f32 to vector<1x128xf32>
    %16 = arith.addf %13, %15 : vector<1x128xf32>
    %17 = math.rsqrt %16 : vector<1x128xf32>
    %18 = arith.mulf %14, %17 : vector<1x128xf32>
    %19 = vector.broadcast %18 : vector<1x128xf32> to vector<32x128xf32>
    %20 = arith.mulf %8, %19 : vector<32x128xf32>
    %c0_10 = arith.constant 0 : index
    %c0_11 = arith.constant 0 : index
    %21 = vector.load %arg3[%c0_10, %c0_11] : memref<1x128xf32, #tpu.memory_space<vmem>>, vector<1x128xf32>
    %22 = vector.broadcast %21 : vector<1x128xf32> to vector<32x128xf32>
    %23 = arith.addf %20, %22 : vector<32x128xf32>
    %cst_12 = arith.constant 0.000000e+00 : f32
    %24 = vector.broadcast %cst_12 : f32 to vector<32x128xf32>
    %25 = arith.maximumf %23, %24 : vector<32x128xf32>
    %c0_13 = arith.constant 0 : index
    %c0_14 = arith.constant 0 : index
    %26 = vector.load %arg4[%c0_13, %c0_14] : memref<32x128xf32, #tpu.memory_space<vmem>>, vector<32x128xf32>
    tpu.vector_store %arg4[%c0_13, %c0_14], %25 {strides = array<i32>} : memref<32x128xf32, #tpu.memory_space<vmem>>, vector<32x128xf32>,
    return
  }
}

module attributes {stable_mosaic.version = 11 : i64} {
  func.func @_conv_bn_relu_kernel(%arg0: memref<8x288xbf16, #tpu.memory_space<vmem>>, %arg1: memref<288x128xbf16, #tpu.memory_space<vmem>>, %arg2: memref<1x128xf32, #tpu.memory_space<vmem>>, %arg3: memref<1x128xf32, #tpu.memory_space<vmem>>, %arg4: memref<8x128xf32, #tpu.memory_space<vmem>>) attributes {dimension_semantics = [], scalar_prefetch = 0 : i64, scratch_operands = 0 : i64, tpu.core_type = #tpu.core_type<tc>} {
    %c0 = arith.constant 0 : index
    %c0_0 = arith.constant 0 : index
    %0 = vector.load %arg0[%c0, %c0_0] : memref<8x288xbf16, #tpu.memory_space<vmem>>, vector<8x288xbf16>
    %c0_1 = arith.constant 0 : index
    %c0_2 = arith.constant 0 : index
    %1 = vector.load %arg1[%c0_1, %c0_2] : memref<288x128xbf16, #tpu.memory_space<vmem>>, vector<288x128xbf16>
    %cst = arith.constant dense<0.000000e+00> : vector<8x128xf32>
    %2 = tpu.matmul %0, %1, %cst {dimension_numbers = #tpu.dot_dimension_numbers<[1], [0], [0], [1], [0, 0, 1, 1], [], []>} : vector<8x288xbf16>, vector<288x128xbf16>, vector<8x128xf32> -> vector<8x128xf32>
    %cst_3 = arith.constant dense<0.000000e+00> : vector<128xf32>
    %3 = vector.multi_reduction <add>, %2, %cst_3 [0] : vector<8x128xf32> to vector<128xf32>
    %4 = vector.shape_cast %3 : vector<128xf32> to vector<1x128xf32>
    %cst_4 = arith.constant 1.250000e-01 : f32
    %5 = vector.broadcast %cst_4 : f32 to vector<1x128xf32>
    %6 = arith.mulf %4, %5 : vector<1x128xf32>
    %7 = vector.broadcast %6 : vector<1x128xf32> to vector<8x128xf32>
    %8 = arith.subf %2, %7 : vector<8x128xf32>
    %9 = arith.mulf %8, %8 : vector<8x128xf32>
    %cst_5 = arith.constant dense<0.000000e+00> : vector<128xf32>
    %10 = vector.multi_reduction <add>, %9, %cst_5 [0] : vector<8x128xf32> to vector<128xf32>
    %11 = vector.shape_cast %10 : vector<128xf32> to vector<1x128xf32>
    %cst_6 = arith.constant 1.250000e-01 : f32
    %12 = vector.broadcast %cst_6 : f32 to vector<1x128xf32>
    %13 = arith.mulf %11, %12 : vector<1x128xf32>
    %c0_7 = arith.constant 0 : index
    %c0_8 = arith.constant 0 : index
    %14 = vector.load %arg2[%c0_7, %c0_8] : memref<1x128xf32, #tpu.memory_space<vmem>>, vector<1x128xf32>
    %cst_9 = arith.constant 9.99999974E-6 : f32
    %15 = vector.broadcast %cst_9 : f32 to vector<1x128xf32>
    %16 = arith.addf %13, %15 : vector<1x128xf32>
    %17 = math.rsqrt %16 : vector<1x128xf32>
    %18 = arith.mulf %14, %17 : vector<1x128xf32>
    %19 = vector.broadcast %18 : vector<1x128xf32> to vector<8x128xf32>
    %20 = arith.mulf %8, %19 : vector<8x128xf32>
    %c0_10 = arith.constant 0 : index
    %c0_11 = arith.constant 0 : index
    %21 = vector.load %arg3[%c0_10, %c0_11] : memref<1x128xf32, #tpu.memory_space<vmem>>, vector<1x128xf32>
    %22 = vector.broadcast %21 : vector<1x128xf32> to vector<8x128xf32>
    %23 = arith.addf %20, %22 : vector<8x128xf32>
    %cst_12 = arith.constant 0.000000e+00 : f32
    %24 = vector.broadcast %cst_12 : f32 to vector<8x128xf32>
    %25 = arith.maximumf %23, %24 : vector<8x128xf32>
    %c0_13 = arith.constant 0 : index
    %c0_14 = arith.constant 0 : index
    %26 = vector.load %arg4[%c0_13, %c0_14] : memref<8x128xf32, #tpu.memory_space<vmem>>, vector<8x128xf32>
    tpu.vector_store %arg4[%c0_13, %c0_14], %25 {strides = array<i32>} : memref<8x128xf32, #tpu.memory_space<vmem>>, vector<8x128xf32>,
    return
  }
}

module attributes {stable_mosaic.version = 11 : i64} {
  func.func @_conv_bn_relu_kernel(%arg0: memref<8x576xbf16, #tpu.memory_space<vmem>>, %arg1: memref<576x128xbf16, #tpu.memory_space<vmem>>, %arg2: memref<1x128xf32, #tpu.memory_space<vmem>>, %arg3: memref<1x128xf32, #tpu.memory_space<vmem>>, %arg4: memref<8x128xf32, #tpu.memory_space<vmem>>) attributes {dimension_semantics = [], scalar_prefetch = 0 : i64, scratch_operands = 0 : i64, tpu.core_type = #tpu.core_type<tc>} {
    %c0 = arith.constant 0 : index
    %c0_0 = arith.constant 0 : index
    %0 = vector.load %arg0[%c0, %c0_0] : memref<8x576xbf16, #tpu.memory_space<vmem>>, vector<8x576xbf16>
    %c0_1 = arith.constant 0 : index
    %c0_2 = arith.constant 0 : index
    %1 = vector.load %arg1[%c0_1, %c0_2] : memref<576x128xbf16, #tpu.memory_space<vmem>>, vector<576x128xbf16>
    %cst = arith.constant dense<0.000000e+00> : vector<8x128xf32>
    %2 = tpu.matmul %0, %1, %cst {dimension_numbers = #tpu.dot_dimension_numbers<[1], [0], [0], [1], [0, 0, 1, 1], [], []>} : vector<8x576xbf16>, vector<576x128xbf16>, vector<8x128xf32> -> vector<8x128xf32>
    %cst_3 = arith.constant dense<0.000000e+00> : vector<128xf32>
    %3 = vector.multi_reduction <add>, %2, %cst_3 [0] : vector<8x128xf32> to vector<128xf32>
    %4 = vector.shape_cast %3 : vector<128xf32> to vector<1x128xf32>
    %cst_4 = arith.constant 1.250000e-01 : f32
    %5 = vector.broadcast %cst_4 : f32 to vector<1x128xf32>
    %6 = arith.mulf %4, %5 : vector<1x128xf32>
    %7 = vector.broadcast %6 : vector<1x128xf32> to vector<8x128xf32>
    %8 = arith.subf %2, %7 : vector<8x128xf32>
    %9 = arith.mulf %8, %8 : vector<8x128xf32>
    %cst_5 = arith.constant dense<0.000000e+00> : vector<128xf32>
    %10 = vector.multi_reduction <add>, %9, %cst_5 [0] : vector<8x128xf32> to vector<128xf32>
    %11 = vector.shape_cast %10 : vector<128xf32> to vector<1x128xf32>
    %cst_6 = arith.constant 1.250000e-01 : f32
    %12 = vector.broadcast %cst_6 : f32 to vector<1x128xf32>
    %13 = arith.mulf %11, %12 : vector<1x128xf32>
    %c0_7 = arith.constant 0 : index
    %c0_8 = arith.constant 0 : index
    %14 = vector.load %arg2[%c0_7, %c0_8] : memref<1x128xf32, #tpu.memory_space<vmem>>, vector<1x128xf32>
    %cst_9 = arith.constant 9.99999974E-6 : f32
    %15 = vector.broadcast %cst_9 : f32 to vector<1x128xf32>
    %16 = arith.addf %13, %15 : vector<1x128xf32>
    %17 = math.rsqrt %16 : vector<1x128xf32>
    %18 = arith.mulf %14, %17 : vector<1x128xf32>
    %19 = vector.broadcast %18 : vector<1x128xf32> to vector<8x128xf32>
    %20 = arith.mulf %8, %19 : vector<8x128xf32>
    %c0_10 = arith.constant 0 : index
    %c0_11 = arith.constant 0 : index
    %21 = vector.load %arg3[%c0_10, %c0_11] : memref<1x128xf32, #tpu.memory_space<vmem>>, vector<1x128xf32>
    %22 = vector.broadcast %21 : vector<1x128xf32> to vector<8x128xf32>
    %23 = arith.addf %20, %22 : vector<8x128xf32>
    %cst_12 = arith.constant 0.000000e+00 : f32
    %24 = vector.broadcast %cst_12 : f32 to vector<8x128xf32>
    %25 = arith.maximumf %23, %24 : vector<8x128xf32>
    %c0_13 = arith.constant 0 : index
    %c0_14 = arith.constant 0 : index
    %26 = vector.load %arg4[%c0_13, %c0_14] : memref<8x128xf32, #tpu.memory_space<vmem>>, vector<8x128xf32>
    tpu.vector_store %arg4[%c0_13, %c0_14], %25 {strides = array<i32>} : memref<8x128xf32, #tpu.memory_space<vmem>>, vector<8x128xf32>,
    return
  }
}

module attributes {stable_mosaic.version = 11 : i64} {
  func.func @_maxpool_kernel(%arg0: memref<2x2x1x2x128xf32, #tpu.memory_space<vmem>>, %arg1: memref<2x1x128xf32, #tpu.memory_space<vmem>>) attributes {dimension_semantics = [], scalar_prefetch = 0 : i64, scratch_operands = 0 : i64, tpu.core_type = #tpu.core_type<tc>} {
    %c0 = arith.constant 0 : index
    %c0_0 = arith.constant 0 : index
    %c0_1 = arith.constant 0 : index
    %c0_2 = arith.constant 0 : index
    %c0_3 = arith.constant 0 : index
    %0 = vector.load %arg0[%c0, %c0_0, %c0_1, %c0_2, %c0_3] : memref<2x2x1x2x128xf32, #tpu.memory_space<vmem>>, vector<2x2x1x2x128xf32>
    %1 = vector.extract_strided_slice %0 {offsets = [0, 0, 0, 0, 0], sizes = [2, 1, 1, 2, 128], strides = [1, 1, 1, 1, 1]} : vector<2x2x1x2x128xf32> to vector<2x1x1x2x128xf32>
    %2 = vector.shape_cast %1 : vector<2x1x1x2x128xf32> to vector<2x1x2x128xf32>
    %3 = vector.extract_strided_slice %0 {offsets = [0, 1, 0, 0, 0], sizes = [2, 1, 1, 2, 128], strides = [1, 1, 1, 1, 1]} : vector<2x2x1x2x128xf32> to vector<2x1x1x2x128xf32>
    %4 = vector.shape_cast %3 : vector<2x1x1x2x128xf32> to vector<2x1x2x128xf32>
    %5 = arith.maximumf %2, %4 : vector<2x1x2x128xf32>
    %6 = vector.extract_strided_slice %5 {offsets = [0, 0, 0, 0], sizes = [2, 1, 1, 128], strides = [1, 1, 1, 1]} : vector<2x1x2x128xf32> to vector<2x1x1x128xf32>
    %7 = vector.shape_cast %6 : vector<2x1x1x128xf32> to vector<2x1x128xf32>
    %8 = vector.extract_strided_slice %5 {offsets = [0, 0, 1, 0], sizes = [2, 1, 1, 128], strides = [1, 1, 1, 1]} : vector<2x1x2x128xf32> to vector<2x1x1x128xf32>
    %9 = vector.shape_cast %8 : vector<2x1x1x128xf32> to vector<2x1x128xf32>
    %10 = arith.maximumf %7, %9 : vector<2x1x128xf32>
    %c0_4 = arith.constant 0 : index
    %c0_5 = arith.constant 0 : index
    %c0_6 = arith.constant 0 : index
    %11 = vector.load %arg1[%c0_4, %c0_5, %c0_6] : memref<2x1x128xf32, #tpu.memory_space<vmem>>, vector<2x1x128xf32>
    tpu.vector_store %arg1[%c0_4, %c0_5, %c0_6], %10 {strides = array<i32>} : memref<2x1x128xf32, #tpu.memory_space<vmem>>, vector<2x1x128xf32>,
    return
  }
}

module attributes {stable_mosaic.version = 11 : i64} {
  func.func @_conv_bn_relu_kernel(%arg0: memref<2x576xbf16, #tpu.memory_space<vmem>>, %arg1: memref<576x128xbf16, #tpu.memory_space<vmem>>, %arg2: memref<1x128xf32, #tpu.memory_space<vmem>>, %arg3: memref<1x128xf32, #tpu.memory_space<vmem>>, %arg4: memref<2x128xf32, #tpu.memory_space<vmem>>) attributes {dimension_semantics = [], scalar_prefetch = 0 : i64, scratch_operands = 0 : i64, tpu.core_type = #tpu.core_type<tc>} {
    %c0 = arith.constant 0 : index
    %c0_0 = arith.constant 0 : index
    %0 = vector.load %arg0[%c0, %c0_0] : memref<2x576xbf16, #tpu.memory_space<vmem>>, vector<2x576xbf16>
    %c0_1 = arith.constant 0 : index
    %c0_2 = arith.constant 0 : index
    %1 = vector.load %arg1[%c0_1, %c0_2] : memref<576x128xbf16, #tpu.memory_space<vmem>>, vector<576x128xbf16>
    %cst = arith.constant dense<0.000000e+00> : vector<2x128xf32>
    %2 = tpu.matmul %0, %1, %cst {dimension_numbers = #tpu.dot_dimension_numbers<[1], [0], [0], [1], [0, 0, 1, 1], [], []>} : vector<2x576xbf16>, vector<576x128xbf16>, vector<2x128xf32> -> vector<2x128xf32>
    %cst_3 = arith.constant dense<0.000000e+00> : vector<128xf32>
    %3 = vector.multi_reduction <add>, %2, %cst_3 [0] : vector<2x128xf32> to vector<128xf32>
    %4 = vector.shape_cast %3 : vector<128xf32> to vector<1x128xf32>
    %cst_4 = arith.constant 5.000000e-01 : f32
    %5 = vector.broadcast %cst_4 : f32 to vector<1x128xf32>
    %6 = arith.mulf %4, %5 : vector<1x128xf32>
    %7 = vector.broadcast %6 : vector<1x128xf32> to vector<2x128xf32>
    %8 = arith.subf %2, %7 : vector<2x128xf32>
    %9 = arith.mulf %8, %8 : vector<2x128xf32>
    %cst_5 = arith.constant dense<0.000000e+00> : vector<128xf32>
    %10 = vector.multi_reduction <add>, %9, %cst_5 [0] : vector<2x128xf32> to vector<128xf32>
    %11 = vector.shape_cast %10 : vector<128xf32> to vector<1x128xf32>
    %cst_6 = arith.constant 5.000000e-01 : f32
    %12 = vector.broadcast %cst_6 : f32 to vector<1x128xf32>
    %13 = arith.mulf %11, %12 : vector<1x128xf32>
    %c0_7 = arith.constant 0 : index
    %c0_8 = arith.constant 0 : index
    %14 = vector.load %arg2[%c0_7, %c0_8] : memref<1x128xf32, #tpu.memory_space<vmem>>, vector<1x128xf32>
    %cst_9 = arith.constant 9.99999974E-6 : f32
    %15 = vector.broadcast %cst_9 : f32 to vector<1x128xf32>
    %16 = arith.addf %13, %15 : vector<1x128xf32>
    %17 = math.rsqrt %16 : vector<1x128xf32>
    %18 = arith.mulf %14, %17 : vector<1x128xf32>
    %19 = vector.broadcast %18 : vector<1x128xf32> to vector<2x128xf32>
    %20 = arith.mulf %8, %19 : vector<2x128xf32>
    %c0_10 = arith.constant 0 : index
    %c0_11 = arith.constant 0 : index
    %21 = vector.load %arg3[%c0_10, %c0_11] : memref<1x128xf32, #tpu.memory_space<vmem>>, vector<1x128xf32>
    %22 = vector.broadcast %21 : vector<1x128xf32> to vector<2x128xf32>
    %23 = arith.addf %20, %22 : vector<2x128xf32>
    %cst_12 = arith.constant 0.000000e+00 : f32
    %24 = vector.broadcast %cst_12 : f32 to vector<2x128xf32>
    %25 = arith.maximumf %23, %24 : vector<2x128xf32>
    %c0_13 = arith.constant 0 : index
    %c0_14 = arith.constant 0 : index
    %26 = vector.load %arg4[%c0_13, %c0_14] : memref<2x128xf32, #tpu.memory_space<vmem>>, vector<2x128xf32>
    tpu.vector_store %arg4[%c0_13, %c0_14], %25 {strides = array<i32>} : memref<2x128xf32, #tpu.memory_space<vmem>>, vector<2x128xf32>,
    return
  }
}

module attributes {stable_mosaic.version = 11 : i64} {
  func.func @_conv_bn_relu_kernel(%arg0: memref<2x1152xbf16, #tpu.memory_space<vmem>>, %arg1: memref<1152x128xbf16, #tpu.memory_space<vmem>>, %arg2: memref<1x128xf32, #tpu.memory_space<vmem>>, %arg3: memref<1x128xf32, #tpu.memory_space<vmem>>, %arg4: memref<2x128xf32, #tpu.memory_space<vmem>>) attributes {dimension_semantics = [], scalar_prefetch = 0 : i64, scratch_operands = 0 : i64, tpu.core_type = #tpu.core_type<tc>} {
    %c0 = arith.constant 0 : index
    %c0_0 = arith.constant 0 : index
    %0 = vector.load %arg0[%c0, %c0_0] : memref<2x1152xbf16, #tpu.memory_space<vmem>>, vector<2x1152xbf16>
    %c0_1 = arith.constant 0 : index
    %c0_2 = arith.constant 0 : index
    %1 = vector.load %arg1[%c0_1, %c0_2] : memref<1152x128xbf16, #tpu.memory_space<vmem>>, vector<1152x128xbf16>
    %cst = arith.constant dense<0.000000e+00> : vector<2x128xf32>
    %2 = tpu.matmul %0, %1, %cst {dimension_numbers = #tpu.dot_dimension_numbers<[1], [0], [0], [1], [0, 0, 1, 1], [], []>} : vector<2x1152xbf16>, vector<1152x128xbf16>, vector<2x128xf32> -> vector<2x128xf32>
    %cst_3 = arith.constant dense<0.000000e+00> : vector<128xf32>
    %3 = vector.multi_reduction <add>, %2, %cst_3 [0] : vector<2x128xf32> to vector<128xf32>
    %4 = vector.shape_cast %3 : vector<128xf32> to vector<1x128xf32>
    %cst_4 = arith.constant 5.000000e-01 : f32
    %5 = vector.broadcast %cst_4 : f32 to vector<1x128xf32>
    %6 = arith.mulf %4, %5 : vector<1x128xf32>
    %7 = vector.broadcast %6 : vector<1x128xf32> to vector<2x128xf32>
    %8 = arith.subf %2, %7 : vector<2x128xf32>
    %9 = arith.mulf %8, %8 : vector<2x128xf32>
    %cst_5 = arith.constant dense<0.000000e+00> : vector<128xf32>
    %10 = vector.multi_reduction <add>, %9, %cst_5 [0] : vector<2x128xf32> to vector<128xf32>
    %11 = vector.shape_cast %10 : vector<128xf32> to vector<1x128xf32>
    %cst_6 = arith.constant 5.000000e-01 : f32
    %12 = vector.broadcast %cst_6 : f32 to vector<1x128xf32>
    %13 = arith.mulf %11, %12 : vector<1x128xf32>
    %c0_7 = arith.constant 0 : index
    %c0_8 = arith.constant 0 : index
    %14 = vector.load %arg2[%c0_7, %c0_8] : memref<1x128xf32, #tpu.memory_space<vmem>>, vector<1x128xf32>
    %cst_9 = arith.constant 9.99999974E-6 : f32
    %15 = vector.broadcast %cst_9 : f32 to vector<1x128xf32>
    %16 = arith.addf %13, %15 : vector<1x128xf32>
    %17 = math.rsqrt %16 : vector<1x128xf32>
    %18 = arith.mulf %14, %17 : vector<1x128xf32>
    %19 = vector.broadcast %18 : vector<1x128xf32> to vector<2x128xf32>
    %20 = arith.mulf %8, %19 : vector<2x128xf32>
    %c0_10 = arith.constant 0 : index
    %c0_11 = arith.constant 0 : index
    %21 = vector.load %arg3[%c0_10, %c0_11] : memref<1x128xf32, #tpu.memory_space<vmem>>, vector<1x128xf32>
    %22 = vector.broadcast %21 : vector<1x128xf32> to vector<2x128xf32>
    %23 = arith.addf %20, %22 : vector<2x128xf32>
    %cst_12 = arith.constant 0.000000e+00 : f32
    %24 = vector.broadcast %cst_12 : f32 to vector<2x128xf32>
    %25 = arith.maximumf %23, %24 : vector<2x128xf32>
    %c0_13 = arith.constant 0 : index
    %c0_14 = arith.constant 0 : index
    %26 = vector.load %arg4[%c0_13, %c0_14] : memref<2x128xf32, #tpu.memory_space<vmem>>, vector<2x128xf32>
    tpu.vector_store %arg4[%c0_13, %c0_14], %25 {strides = array<i32>} : memref<2x128xf32, #tpu.memory_space<vmem>>, vector<2x128xf32>,
    return
  }
}

module attributes {stable_mosaic.version = 11 : i64} {
  func.func @_matmul_bias_kernel(%arg0: memref<2x128xbf16, #tpu.memory_space<vmem>>, %arg1: memref<128x256xbf16, #tpu.memory_space<vmem>>, %arg2: memref<1x256xf32, #tpu.memory_space<vmem>>, %arg3: memref<2x256xf32, #tpu.memory_space<vmem>>) attributes {dimension_semantics = [], scalar_prefetch = 0 : i64, scratch_operands = 0 : i64, tpu.core_type = #tpu.core_type<tc>} {
    %c0 = arith.constant 0 : index
    %c0_0 = arith.constant 0 : index
    %0 = vector.load %arg0[%c0, %c0_0] : memref<2x128xbf16, #tpu.memory_space<vmem>>, vector<2x128xbf16>
    %c0_1 = arith.constant 0 : index
    %c0_2 = arith.constant 0 : index
    %1 = vector.load %arg1[%c0_1, %c0_2] : memref<128x256xbf16, #tpu.memory_space<vmem>>, vector<128x256xbf16>
    %cst = arith.constant dense<0.000000e+00> : vector<2x256xf32>
    %2 = tpu.matmul %0, %1, %cst {dimension_numbers = #tpu.dot_dimension_numbers<[1], [0], [0], [1], [0, 0, 1, 1], [], []>} : vector<2x128xbf16>, vector<128x256xbf16>, vector<2x256xf32> -> vector<2x256xf32>
    %c0_3 = arith.constant 0 : index
    %c0_4 = arith.constant 0 : index
    %3 = vector.load %arg2[%c0_3, %c0_4] : memref<1x256xf32, #tpu.memory_space<vmem>>, vector<1x256xf32>
    %4 = vector.broadcast %3 : vector<1x256xf32> to vector<2x256xf32>
    %5 = arith.addf %2, %4 : vector<2x256xf32>
    %c0_5 = arith.constant 0 : index
    %c0_6 = arith.constant 0 : index
    %6 = vector.load %arg3[%c0_5, %c0_6] : memref<2x256xf32, #tpu.memory_space<vmem>>, vector<2x256xf32>
    tpu.vector_store %arg3[%c0_5, %c0_6], %5 {strides = array<i32>} : memref<2x256xf32, #tpu.memory_space<vmem>>, vector<2x256xf32>,
    return
  }
}

module attributes {stable_mosaic.version = 11 : i64} {
  func.func @_conv_bn_relu_kernel(%arg0: memref<8x1152xbf16, #tpu.memory_space<vmem>>, %arg1: memref<1152x128xbf16, #tpu.memory_space<vmem>>, %arg2: memref<1x128xf32, #tpu.memory_space<vmem>>, %arg3: memref<1x128xf32, #tpu.memory_space<vmem>>, %arg4: memref<8x128xf32, #tpu.memory_space<vmem>>) attributes {dimension_semantics = [], scalar_prefetch = 0 : i64, scratch_operands = 0 : i64, tpu.core_type = #tpu.core_type<tc>} {
    %c0 = arith.constant 0 : index
    %c0_0 = arith.constant 0 : index
    %0 = vector.load %arg0[%c0, %c0_0] : memref<8x1152xbf16, #tpu.memory_space<vmem>>, vector<8x1152xbf16>
    %c0_1 = arith.constant 0 : index
    %c0_2 = arith.constant 0 : index
    %1 = vector.load %arg1[%c0_1, %c0_2] : memref<1152x128xbf16, #tpu.memory_space<vmem>>, vector<1152x128xbf16>
    %cst = arith.constant dense<0.000000e+00> : vector<8x128xf32>
    %2 = tpu.matmul %0, %1, %cst {dimension_numbers = #tpu.dot_dimension_numbers<[1], [0], [0], [1], [0, 0, 1, 1], [], []>} : vector<8x1152xbf16>, vector<1152x128xbf16>, vector<8x128xf32> -> vector<8x128xf32>
    %cst_3 = arith.constant dense<0.000000e+00> : vector<128xf32>
    %3 = vector.multi_reduction <add>, %2, %cst_3 [0] : vector<8x128xf32> to vector<128xf32>
    %4 = vector.shape_cast %3 : vector<128xf32> to vector<1x128xf32>
    %cst_4 = arith.constant 1.250000e-01 : f32
    %5 = vector.broadcast %cst_4 : f32 to vector<1x128xf32>
    %6 = arith.mulf %4, %5 : vector<1x128xf32>
    %7 = vector.broadcast %6 : vector<1x128xf32> to vector<8x128xf32>
    %8 = arith.subf %2, %7 : vector<8x128xf32>
    %9 = arith.mulf %8, %8 : vector<8x128xf32>
    %cst_5 = arith.constant dense<0.000000e+00> : vector<128xf32>
    %10 = vector.multi_reduction <add>, %9, %cst_5 [0] : vector<8x128xf32> to vector<128xf32>
    %11 = vector.shape_cast %10 : vector<128xf32> to vector<1x128xf32>
    %cst_6 = arith.constant 1.250000e-01 : f32
    %12 = vector.broadcast %cst_6 : f32 to vector<1x128xf32>
    %13 = arith.mulf %11, %12 : vector<1x128xf32>
    %c0_7 = arith.constant 0 : index
    %c0_8 = arith.constant 0 : index
    %14 = vector.load %arg2[%c0_7, %c0_8] : memref<1x128xf32, #tpu.memory_space<vmem>>, vector<1x128xf32>
    %cst_9 = arith.constant 9.99999974E-6 : f32
    %15 = vector.broadcast %cst_9 : f32 to vector<1x128xf32>
    %16 = arith.addf %13, %15 : vector<1x128xf32>
    %17 = math.rsqrt %16 : vector<1x128xf32>
    %18 = arith.mulf %14, %17 : vector<1x128xf32>
    %19 = vector.broadcast %18 : vector<1x128xf32> to vector<8x128xf32>
    %20 = arith.mulf %8, %19 : vector<8x128xf32>
    %c0_10 = arith.constant 0 : index
    %c0_11 = arith.constant 0 : index
    %21 = vector.load %arg3[%c0_10, %c0_11] : memref<1x128xf32, #tpu.memory_space<vmem>>, vector<1x128xf32>
    %22 = vector.broadcast %21 : vector<1x128xf32> to vector<8x128xf32>
    %23 = arith.addf %20, %22 : vector<8x128xf32>
    %cst_12 = arith.constant 0.000000e+00 : f32
    %24 = vector.broadcast %cst_12 : f32 to vector<8x128xf32>
    %25 = arith.maximumf %23, %24 : vector<8x128xf32>
    %c0_13 = arith.constant 0 : index
    %c0_14 = arith.constant 0 : index
    %26 = vector.load %arg4[%c0_13, %c0_14] : memref<8x128xf32, #tpu.memory_space<vmem>>, vector<8x128xf32>
    tpu.vector_store %arg4[%c0_13, %c0_14], %25 {strides = array<i32>} : memref<8x128xf32, #tpu.memory_space<vmem>>, vector<8x128xf32>,
    return
  }
}

module attributes {stable_mosaic.version = 11 : i64} {
  func.func @_matmul_bias_kernel(%arg0: memref<8x64xbf16, #tpu.memory_space<vmem>>, %arg1: memref<64x128xbf16, #tpu.memory_space<vmem>>, %arg2: memref<1x128xf32, #tpu.memory_space<vmem>>, %arg3: memref<8x128xf32, #tpu.memory_space<vmem>>) attributes {dimension_semantics = [], scalar_prefetch = 0 : i64, scratch_operands = 0 : i64, tpu.core_type = #tpu.core_type<tc>} {
    %c0 = arith.constant 0 : index
    %c0_0 = arith.constant 0 : index
    %0 = vector.load %arg0[%c0, %c0_0] : memref<8x64xbf16, #tpu.memory_space<vmem>>, vector<8x64xbf16>
    %c0_1 = arith.constant 0 : index
    %c0_2 = arith.constant 0 : index
    %1 = vector.load %arg1[%c0_1, %c0_2] : memref<64x128xbf16, #tpu.memory_space<vmem>>, vector<64x128xbf16>
    %cst = arith.constant dense<0.000000e+00> : vector<8x128xf32>
    %2 = tpu.matmul %0, %1, %cst {dimension_numbers = #tpu.dot_dimension_numbers<[1], [0], [0], [1], [0, 0, 1, 1], [], []>} : vector<8x64xbf16>, vector<64x128xbf16>, vector<8x128xf32> -> vector<8x128xf32>
    %c0_3 = arith.constant 0 : index
    %c0_4 = arith.constant 0 : index
    %3 = vector.load %arg2[%c0_3, %c0_4] : memref<1x128xf32, #tpu.memory_space<vmem>>, vector<1x128xf32>
    %4 = vector.broadcast %3 : vector<1x128xf32> to vector<8x128xf32>
    %5 = arith.addf %2, %4 : vector<8x128xf32>
    %c0_5 = arith.constant 0 : index
    %c0_6 = arith.constant 0 : index
    %6 = vector.load %arg3[%c0_5, %c0_6] : memref<8x128xf32, #tpu.memory_space<vmem>>, vector<8x128xf32>
    tpu.vector_store %arg3[%c0_5, %c0_6], %5 {strides = array<i32>} : memref<8x128xf32, #tpu.memory_space<vmem>>, vector<8x128xf32>,
    return
  }
}

module attributes {stable_mosaic.version = 11 : i64} {
  func.func @_conv_bn_relu_kernel(%arg0: memref<32x576xbf16, #tpu.memory_space<vmem>>, %arg1: memref<576x128xbf16, #tpu.memory_space<vmem>>, %arg2: memref<1x128xf32, #tpu.memory_space<vmem>>, %arg3: memref<1x128xf32, #tpu.memory_space<vmem>>, %arg4: memref<32x128xf32, #tpu.memory_space<vmem>>) attributes {dimension_semantics = [], scalar_prefetch = 0 : i64, scratch_operands = 0 : i64, tpu.core_type = #tpu.core_type<tc>} {
    %c0 = arith.constant 0 : index
    %c0_0 = arith.constant 0 : index
    %0 = vector.load %arg0[%c0, %c0_0] : memref<32x576xbf16, #tpu.memory_space<vmem>>, vector<32x576xbf16>
    %c0_1 = arith.constant 0 : index
    %c0_2 = arith.constant 0 : index
    %1 = vector.load %arg1[%c0_1, %c0_2] : memref<576x128xbf16, #tpu.memory_space<vmem>>, vector<576x128xbf16>
    %cst = arith.constant dense<0.000000e+00> : vector<32x128xf32>
    %2 = tpu.matmul %0, %1, %cst {dimension_numbers = #tpu.dot_dimension_numbers<[1], [0], [0], [1], [0, 0, 1, 1], [], []>} : vector<32x576xbf16>, vector<576x128xbf16>, vector<32x128xf32> -> vector<32x128xf32>
    %cst_3 = arith.constant dense<0.000000e+00> : vector<128xf32>
    %3 = vector.multi_reduction <add>, %2, %cst_3 [0] : vector<32x128xf32> to vector<128xf32>
    %4 = vector.shape_cast %3 : vector<128xf32> to vector<1x128xf32>
    %cst_4 = arith.constant 3.125000e-02 : f32
    %5 = vector.broadcast %cst_4 : f32 to vector<1x128xf32>
    %6 = arith.mulf %4, %5 : vector<1x128xf32>
    %7 = vector.broadcast %6 : vector<1x128xf32> to vector<32x128xf32>
    %8 = arith.subf %2, %7 : vector<32x128xf32>
    %9 = arith.mulf %8, %8 : vector<32x128xf32>
    %cst_5 = arith.constant dense<0.000000e+00> : vector<128xf32>
    %10 = vector.multi_reduction <add>, %9, %cst_5 [0] : vector<32x128xf32> to vector<128xf32>
    %11 = vector.shape_cast %10 : vector<128xf32> to vector<1x128xf32>
    %cst_6 = arith.constant 3.125000e-02 : f32
    %12 = vector.broadcast %cst_6 : f32 to vector<1x128xf32>
    %13 = arith.mulf %11, %12 : vector<1x128xf32>
    %c0_7 = arith.constant 0 : index
    %c0_8 = arith.constant 0 : index
    %14 = vector.load %arg2[%c0_7, %c0_8] : memref<1x128xf32, #tpu.memory_space<vmem>>, vector<1x128xf32>
    %cst_9 = arith.constant 9.99999974E-6 : f32
    %15 = vector.broadcast %cst_9 : f32 to vector<1x128xf32>
    %16 = arith.addf %13, %15 : vector<1x128xf32>
    %17 = math.rsqrt %16 : vector<1x128xf32>
    %18 = arith.mulf %14, %17 : vector<1x128xf32>
    %19 = vector.broadcast %18 : vector<1x128xf32> to vector<32x128xf32>
    %20 = arith.mulf %8, %19 : vector<32x128xf32>
    %c0_10 = arith.constant 0 : index
    %c0_11 = arith.constant 0 : index
    %21 = vector.load %arg3[%c0_10, %c0_11] : memref<1x128xf32, #tpu.memory_space<vmem>>, vector<1x128xf32>
    %22 = vector.broadcast %21 : vector<1x128xf32> to vector<32x128xf32>
    %23 = arith.addf %20, %22 : vector<32x128xf32>
    %cst_12 = arith.constant 0.000000e+00 : f32
    %24 = vector.broadcast %cst_12 : f32 to vector<32x128xf32>
    %25 = arith.maximumf %23, %24 : vector<32x128xf32>
    %c0_13 = arith.constant 0 : index
    %c0_14 = arith.constant 0 : index
    %26 = vector.load %arg4[%c0_13, %c0_14] : memref<32x128xf32, #tpu.memory_space<vmem>>, vector<32x128xf32>
    tpu.vector_store %arg4[%c0_13, %c0_14], %25 {strides = array<i32>} : memref<32x128xf32, #tpu.memory_space<vmem>>, vector<32x128xf32>,
    return
  }
}

module attributes {stable_mosaic.version = 11 : i64} {
  func.func @_matmul_bias_kernel(%arg0: memref<32x32xbf16, #tpu.memory_space<vmem>>, %arg1: memref<32x128xbf16, #tpu.memory_space<vmem>>, %arg2: memref<1x128xf32, #tpu.memory_space<vmem>>, %arg3: memref<32x128xf32, #tpu.memory_space<vmem>>) attributes {dimension_semantics = [], scalar_prefetch = 0 : i64, scratch_operands = 0 : i64, tpu.core_type = #tpu.core_type<tc>} {
    %c0 = arith.constant 0 : index
    %c0_0 = arith.constant 0 : index
    %0 = vector.load %arg0[%c0, %c0_0] : memref<32x32xbf16, #tpu.memory_space<vmem>>, vector<32x32xbf16>
    %c0_1 = arith.constant 0 : index
    %c0_2 = arith.constant 0 : index
    %1 = vector.load %arg1[%c0_1, %c0_2] : memref<32x128xbf16, #tpu.memory_space<vmem>>, vector<32x128xbf16>
    %cst = arith.constant dense<0.000000e+00> : vector<32x128xf32>
    %2 = tpu.matmul %0, %1, %cst {dimension_numbers = #tpu.dot_dimension_numbers<[1], [0], [0], [1], [0, 0, 1, 1], [], []>} : vector<32x32xbf16>, vector<32x128xbf16>, vector<32x128xf32> -> vector<32x128xf32>
    %c0_3 = arith.constant 0 : index
    %c0_4 = arith.constant 0 : index
    %3 = vector.load %arg2[%c0_3, %c0_4] : memref<1x128xf32, #tpu.memory_space<vmem>>, vector<1x128xf32>
    %4 = vector.broadcast %3 : vector<1x128xf32> to vector<32x128xf32>
    %5 = arith.addf %2, %4 : vector<32x128xf32>
    %c0_5 = arith.constant 0 : index
    %c0_6 = arith.constant 0 : index
    %6 = vector.load %arg3[%c0_5, %c0_6] : memref<32x128xf32, #tpu.memory_space<vmem>>, vector<32x128xf32>
    tpu.vector_store %arg3[%c0_5, %c0_6], %5 {strides = array<i32>} : memref<32x128xf32, #tpu.memory_space<vmem>>, vector<32x128xf32>,
    return
  }
}

module attributes {stable_mosaic.version = 11 : i64} {
  func.func @_conv_bn_relu_kernel(%arg0: memref<128x288xbf16, #tpu.memory_space<vmem>>, %arg1: memref<288x128xbf16, #tpu.memory_space<vmem>>, %arg2: memref<1x128xf32, #tpu.memory_space<vmem>>, %arg3: memref<1x128xf32, #tpu.memory_space<vmem>>, %arg4: memref<128x128xf32, #tpu.memory_space<vmem>>) attributes {dimension_semantics = [], scalar_prefetch = 0 : i64, scratch_operands = 0 : i64, tpu.core_type = #tpu.core_type<tc>} {
    %c0 = arith.constant 0 : index
    %c0_0 = arith.constant 0 : index
    %0 = vector.load %arg0[%c0, %c0_0] : memref<128x288xbf16, #tpu.memory_space<vmem>>, vector<128x288xbf16>
    %c0_1 = arith.constant 0 : index
    %c0_2 = arith.constant 0 : index
    %1 = vector.load %arg1[%c0_1, %c0_2] : memref<288x128xbf16, #tpu.memory_space<vmem>>, vector<288x128xbf16>
    %cst = arith.constant dense<0.000000e+00> : vector<128x128xf32>
    %2 = tpu.matmul %0, %1, %cst {dimension_numbers = #tpu.dot_dimension_numbers<[1], [0], [0], [1], [0, 0, 1, 1], [], []>} : vector<128x288xbf16>, vector<288x128xbf16>, vector<128x128xf32> -> vector<128x128xf32>
    %cst_3 = arith.constant dense<0.000000e+00> : vector<128xf32>
    %3 = vector.multi_reduction <add>, %2, %cst_3 [0] : vector<128x128xf32> to vector<128xf32>
    %4 = vector.shape_cast %3 : vector<128xf32> to vector<1x128xf32>
    %cst_4 = arith.constant 7.812500e-03 : f32
    %5 = vector.broadcast %cst_4 : f32 to vector<1x128xf32>
    %6 = arith.mulf %4, %5 : vector<1x128xf32>
    %7 = vector.broadcast %6 : vector<1x128xf32> to vector<128x128xf32>
    %8 = arith.subf %2, %7 : vector<128x128xf32>
    %9 = arith.mulf %8, %8 : vector<128x128xf32>
    %cst_5 = arith.constant dense<0.000000e+00> : vector<128xf32>
    %10 = vector.multi_reduction <add>, %9, %cst_5 [0] : vector<128x128xf32> to vector<128xf32>
    %11 = vector.shape_cast %10 : vector<128xf32> to vector<1x128xf32>
    %cst_6 = arith.constant 7.812500e-03 : f32
    %12 = vector.broadcast %cst_6 : f32 to vector<1x128xf32>
    %13 = arith.mulf %11, %12 : vector<1x128xf32>
    %c0_7 = arith.constant 0 : index
    %c0_8 = arith.constant 0 : index
    %14 = vector.load %arg2[%c0_7, %c0_8] : memref<1x128xf32, #tpu.memory_space<vmem>>, vector<1x128xf32>
    %cst_9 = arith.constant 9.99999974E-6 : f32
    %15 = vector.broadcast %cst_9 : f32 to vector<1x128xf32>
    %16 = arith.addf %13, %15 : vector<1x128xf32>
    %17 = math.rsqrt %16 : vector<1x128xf32>
    %18 = arith.mulf %14, %17 : vector<1x128xf32>
    %19 = vector.broadcast %18 : vector<1x128xf32> to vector<128x128xf32>
    %20 = arith.mulf %8, %19 : vector<128x128xf32>
    %c0_10 = arith.constant 0 : index
    %c0_11 = arith.constant 0 : index
    %21 = vector.load %arg3[%c0_10, %c0_11] : memref<1x128xf32, #tpu.memory_space<vmem>>, vector<1x128xf32>
    %22 = vector.broadcast %21 : vector<1x128xf32> to vector<128x128xf32>
    %23 = arith.addf %20, %22 : vector<128x128xf32>
    %cst_12 = arith.constant 0.000000e+00 : f32
    %24 = vector.broadcast %cst_12 : f32 to vector<128x128xf32>
    %25 = arith.maximumf %23, %24 : vector<128x128xf32>
    %c0_13 = arith.constant 0 : index
    %c0_14 = arith.constant 0 : index
    %26 = vector.load %arg4[%c0_13, %c0_14] : memref<128x128xf32, #tpu.memory_space<vmem>>, vector<128x128xf32>
    tpu.vector_store %arg4[%c0_13, %c0_14], %25 {strides = array<i32>} : memref<128x128xf32, #tpu.memory_space<vmem>>, vector<128x128xf32>,
    return
  }
}

module attributes {stable_mosaic.version = 11 : i64} {
  func.func @_matmul_bias_kernel(%arg0: memref<128x16xbf16, #tpu.memory_space<vmem>>, %arg1: memref<16x128xbf16, #tpu.memory_space<vmem>>, %arg2: memref<1x128xf32, #tpu.memory_space<vmem>>, %arg3: memref<128x128xf32, #tpu.memory_space<vmem>>) attributes {dimension_semantics = [], scalar_prefetch = 0 : i64, scratch_operands = 0 : i64, tpu.core_type = #tpu.core_type<tc>} {
    %c0 = arith.constant 0 : index
    %c0_0 = arith.constant 0 : index
    %0 = vector.load %arg0[%c0, %c0_0] : memref<128x16xbf16, #tpu.memory_space<vmem>>, vector<128x16xbf16>
    %c0_1 = arith.constant 0 : index
    %c0_2 = arith.constant 0 : index
    %1 = vector.load %arg1[%c0_1, %c0_2] : memref<16x128xbf16, #tpu.memory_space<vmem>>, vector<16x128xbf16>
    %cst = arith.constant dense<0.000000e+00> : vector<128x128xf32>
    %2 = tpu.matmul %0, %1, %cst {dimension_numbers = #tpu.dot_dimension_numbers<[1], [0], [0], [1], [0, 0, 1, 1], [], []>} : vector<128x16xbf16>, vector<16x128xbf16>, vector<128x128xf32> -> vector<128x128xf32>
    %c0_3 = arith.constant 0 : index
    %c0_4 = arith.constant 0 : index
    %3 = vector.load %arg2[%c0_3, %c0_4] : memref<1x128xf32, #tpu.memory_space<vmem>>, vector<1x128xf32>
    %4 = vector.broadcast %3 : vector<1x128xf32> to vector<128x128xf32>
    %5 = arith.addf %2, %4 : vector<128x128xf32>
    %c0_5 = arith.constant 0 : index
    %c0_6 = arith.constant 0 : index
    %6 = vector.load %arg3[%c0_5, %c0_6] : memref<128x128xf32, #tpu.memory_space<vmem>>, vector<128x128xf32>
    tpu.vector_store %arg3[%c0_5, %c0_6], %5 {strides = array<i32>} : memref<128x128xf32, #tpu.memory_space<vmem>>, vector<128x128xf32>,
    return
  }
}

module attributes {stable_mosaic.version = 11 : i64} {
  func.func @_conv_bn_relu_kernel(%arg0: memref<512x144xbf16, #tpu.memory_space<vmem>>, %arg1: memref<144x128xbf16, #tpu.memory_space<vmem>>, %arg2: memref<1x128xf32, #tpu.memory_space<vmem>>, %arg3: memref<1x128xf32, #tpu.memory_space<vmem>>, %arg4: memref<512x128xf32, #tpu.memory_space<vmem>>) attributes {dimension_semantics = [], scalar_prefetch = 0 : i64, scratch_operands = 0 : i64, tpu.core_type = #tpu.core_type<tc>} {
    %c0 = arith.constant 0 : index
    %c0_0 = arith.constant 0 : index
    %0 = vector.load %arg0[%c0, %c0_0] : memref<512x144xbf16, #tpu.memory_space<vmem>>, vector<512x144xbf16>
    %c0_1 = arith.constant 0 : index
    %c0_2 = arith.constant 0 : index
    %1 = vector.load %arg1[%c0_1, %c0_2] : memref<144x128xbf16, #tpu.memory_space<vmem>>, vector<144x128xbf16>
    %cst = arith.constant dense<0.000000e+00> : vector<512x128xf32>
    %2 = tpu.matmul %0, %1, %cst {dimension_numbers = #tpu.dot_dimension_numbers<[1], [0], [0], [1], [0, 0, 1, 1], [], []>} : vector<512x144xbf16>, vector<144x128xbf16>, vector<512x128xf32> -> vector<512x128xf32>
    %cst_3 = arith.constant dense<0.000000e+00> : vector<128xf32>
    %3 = vector.multi_reduction <add>, %2, %cst_3 [0] : vector<512x128xf32> to vector<128xf32>
    %4 = vector.shape_cast %3 : vector<128xf32> to vector<1x128xf32>
    %cst_4 = arith.constant 0.001953125 : f32
    %5 = vector.broadcast %cst_4 : f32 to vector<1x128xf32>
    %6 = arith.mulf %4, %5 : vector<1x128xf32>
    %7 = vector.broadcast %6 : vector<1x128xf32> to vector<512x128xf32>
    %8 = arith.subf %2, %7 : vector<512x128xf32>
    %9 = arith.mulf %8, %8 : vector<512x128xf32>
    %cst_5 = arith.constant dense<0.000000e+00> : vector<128xf32>
    %10 = vector.multi_reduction <add>, %9, %cst_5 [0] : vector<512x128xf32> to vector<128xf32>
    %11 = vector.shape_cast %10 : vector<128xf32> to vector<1x128xf32>
    %cst_6 = arith.constant 0.001953125 : f32
    %12 = vector.broadcast %cst_6 : f32 to vector<1x128xf32>
    %13 = arith.mulf %11, %12 : vector<1x128xf32>
    %c0_7 = arith.constant 0 : index
    %c0_8 = arith.constant 0 : index
    %14 = vector.load %arg2[%c0_7, %c0_8] : memref<1x128xf32, #tpu.memory_space<vmem>>, vector<1x128xf32>
    %cst_9 = arith.constant 9.99999974E-6 : f32
    %15 = vector.broadcast %cst_9 : f32 to vector<1x128xf32>
    %16 = arith.addf %13, %15 : vector<1x128xf32>
    %17 = math.rsqrt %16 : vector<1x128xf32>
    %18 = arith.mulf %14, %17 : vector<1x128xf32>
    %19 = vector.broadcast %18 : vector<1x128xf32> to vector<512x128xf32>
    %20 = arith.mulf %8, %19 : vector<512x128xf32>
    %c0_10 = arith.constant 0 : index
    %c0_11 = arith.constant 0 : index
    %21 = vector.load %arg3[%c0_10, %c0_11] : memref<1x128xf32, #tpu.memory_space<vmem>>, vector<1x128xf32>
    %22 = vector.broadcast %21 : vector<1x128xf32> to vector<512x128xf32>
    %23 = arith.addf %20, %22 : vector<512x128xf32>
    %cst_12 = arith.constant 0.000000e+00 : f32
    %24 = vector.broadcast %cst_12 : f32 to vector<512x128xf32>
    %25 = arith.maximumf %23, %24 : vector<512x128xf32>
    %c0_13 = arith.constant 0 : index
    %c0_14 = arith.constant 0 : index
    %26 = vector.load %arg4[%c0_13, %c0_14] : memref<512x128xf32, #tpu.memory_space<vmem>>, vector<512x128xf32>
    tpu.vector_store %arg4[%c0_13, %c0_14], %25 {strides = array<i32>} : memref<512x128xf32, #tpu.memory_space<vmem>>, vector<512x128xf32>,
    return
  }
}

module attributes {stable_mosaic.version = 11 : i64} {
  func.func @_matmul_bias_kernel(%arg0: memref<512x8xbf16, #tpu.memory_space<vmem>>, %arg1: memref<8x128xbf16, #tpu.memory_space<vmem>>, %arg2: memref<1x128xf32, #tpu.memory_space<vmem>>, %arg3: memref<512x128xf32, #tpu.memory_space<vmem>>) attributes {dimension_semantics = [], scalar_prefetch = 0 : i64, scratch_operands = 0 : i64, tpu.core_type = #tpu.core_type<tc>} {
    %c0 = arith.constant 0 : index
    %c0_0 = arith.constant 0 : index
    %0 = vector.load %arg0[%c0, %c0_0] : memref<512x8xbf16, #tpu.memory_space<vmem>>, vector<512x8xbf16>
    %c0_1 = arith.constant 0 : index
    %c0_2 = arith.constant 0 : index
    %1 = vector.load %arg1[%c0_1, %c0_2] : memref<8x128xbf16, #tpu.memory_space<vmem>>, vector<8x128xbf16>
    %cst = arith.constant dense<0.000000e+00> : vector<512x128xf32>
    %2 = tpu.matmul %0, %1, %cst {dimension_numbers = #tpu.dot_dimension_numbers<[1], [0], [0], [1], [0, 0, 1, 1], [], []>} : vector<512x8xbf16>, vector<8x128xbf16>, vector<512x128xf32> -> vector<512x128xf32>
    %c0_3 = arith.constant 0 : index
    %c0_4 = arith.constant 0 : index
    %3 = vector.load %arg2[%c0_3, %c0_4] : memref<1x128xf32, #tpu.memory_space<vmem>>, vector<1x128xf32>
    %4 = vector.broadcast %3 : vector<1x128xf32> to vector<512x128xf32>
    %5 = arith.addf %2, %4 : vector<512x128xf32>
    %c0_5 = arith.constant 0 : index
    %c0_6 = arith.constant 0 : index
    %6 = vector.load %arg3[%c0_5, %c0_6] : memref<512x128xf32, #tpu.memory_space<vmem>>, vector<512x128xf32>
    tpu.vector_store %arg3[%c0_5, %c0_6], %5 {strides = array<i32>} : memref<512x128xf32, #tpu.memory_space<vmem>>, vector<512x128xf32>,
    return
  }
}

</mosaic_0001>

<llo_original>
// kernel: tile.18
$region0: #{tile.18}
  #allocation0 [shape = 's32[1]{0}', space=sflag, size = 0x4, scoped, tag = 'scoped memory for tile.18']
  %s0 = inlined_call_operand.vmem [shape: f32[64], index: 0, kind: input, shape index: {}]
  %s1 = inlined_call_operand.vmem [shape: f32[4,64], index: 1, kind: output, shape index: {}]
  // Predicated region
  $region2: #{tile.18} parent=0 // pred_check
    _
  $region3: #{tile.18} parent=0 // pred_check_branch
    %3 = sbr.rel (0) target = $region5
  $region4: #{tile.18} parent=0 // pred_region
    _
  $region5: #{tile.18} parent=0 // pred_fallthru
    _
  %v4 = vld [vmem:[%s0] ss:$0 sm:$0xff]
  %5 = vst [vmem:[%s1] sm:$0xf] %v4

// kernel: tile.22
$region0: #{tile.22}
  #allocation0 [shape = 's32[1]{0}', space=sflag, size = 0x4, scoped, tag = 'scoped memory for tile.22']
  %s0 = inlined_call_operand.vmem [shape: f32[32], index: 0, kind: input, shape index: {}]
  %s1 = inlined_call_operand.vmem [shape: f32[4,32], index: 1, kind: output, shape index: {}]
  // Predicated region
  $region2: #{tile.22} parent=0 // pred_check
    _
  $region3: #{tile.22} parent=0 // pred_check_branch
    %3 = sbr.rel (0) target = $region5
  $region4: #{tile.22} parent=0 // pred_region
    _
  $region5: #{tile.22} parent=0 // pred_fallthru
    _
  %v4 = vld [vmem:[%s0] ss:$0 sm:$0xff]
  %5 = vst [vmem:[%s1] sm:$0xf] %v4

// kernel: tile.27
$region0: #{tile.27}
  %s0 = inlined_call_operand.vmem [shape: f32[4,16], index: 0, kind: input, shape index: {}]
  %s1 = inlined_call_operand.vmem [shape: f32[64], index: 1, kind: output, shape index: {}]
  $region1: #{tile.27} parent=0
    #allocation0 [shape = 'u8[4096]{0}', space=vmem, size = 0x1000, scoped, tag = 'scoped mem for output reshape']
    #allocation1 [shape = 'u8[4096]{0}', space=vmem, size = 0x1000, scoped, tag = 'scoped mem for input reshape']
    %s3 = sshll.u32 1, 4
    %s4 = ssub.s32 %s3, 1
    %v5 = vld [vmem:[%s0] sm:%s4]
    %6 = vst [vmem:[#allocation1] sm:%s4] %v5
    %v7 = vld [vmem:[#allocation1] sm:$0x1]
    %vm8 = vcmask 130048
    %9 = vst.msk [vmem:[#allocation0] sm:$0x1] %vm8, %v7
    %s10 = scalar_lea.vmem [#allocation1], 3
    %v11 = vld [vmem:[%s10] sm:$0x1]
    %12 = vrot.lane.b32.xlu0 %v11, 48
    %v13 = vpop.permute.xlu0 %12
    %vm14 = vcmask 523648
    %15 = vst.msk [vmem:[#allocation0] sm:$0x1] %vm14, %v13
    %s16 = scalar_lea.vmem [#allocation1], 2
    %v17 = vld [vmem:[%s16] sm:$0x1]
    %18 = vrot.lane.b32.xlu0 %v17, 32
    %v19 = vpop.permute.xlu0 %18
    %vm20 = vcmask 392448
    %21 = vst.msk [vmem:[#allocation0] sm:$0x1] %vm20, %v19
    %s22 = scalar_lea.vmem [#allocation1], 1
    %v23 = vld [vmem:[%s22] sm:$0x1]
    %24 = vrot.lane.b32.xlu0 %v23, 16
    %v25 = vpop.permute.xlu0 %24
    %vm26 = vcmask 261248
    %27 = vst.msk [vmem:[#allocation0] sm:$0x1] %vm26, %v25
    %s29 = sshll.u32 1, 1
    %s30 = ssub.s32 %s29, 1
    %v32 = vld [vmem:[#allocation0] sm:%s30]
    %s33 = sshll.u32 1, 1
    %s34 = ssub.s32 %s33, 1
    %35 = vst [vmem:[%s1] sm:%s34] %v32

// kernel: tile.26
$region0: #{tile.26}
  #allocation0 [shape = 's32[1]{0}', space=sflag, size = 0x4, scoped, tag = 'scoped memory for tile.26']
  %s0 = inlined_call_operand.vmem [shape: f32[16], index: 0, kind: input, shape index: {}]
  %s1 = inlined_call_operand.vmem [shape: f32[4,16], index: 1, kind: output, shape index: {}]
  // Predicated region
  $region2: #{tile.26} parent=0 // pred_check
    _
  $region3: #{tile.26} parent=0 // pred_check_branch
    %3 = sbr.rel (0) target = $region5
  $region4: #{tile.26} parent=0 // pred_region
    _
  $region5: #{tile.26} parent=0 // pred_fallthru
    _
  %v4 = vld [vmem:[%s0] ss:$0 sm:$0xff]
  %5 = vst [vmem:[%s1] sm:$0xf] %v4

// kernel: tile.30
$region0: #{tile.30}
  #allocation0 [shape = 's32[1]{0}', space=sflag, size = 0x4, scoped, tag = 'scoped memory for tile.30']
  %s0 = inlined_call_operand.vmem [shape: f32[8], index: 0, kind: input, shape index: {}]
  %s1 = inlined_call_operand.vmem [shape: f32[4,8], index: 1, kind: output, shape index: {}]
  // Predicated region
  $region2: #{tile.30} parent=0 // pred_check
    _
  $region3: #{tile.30} parent=0 // pred_check_branch
    %3 = sbr.rel (0) target = $region5
  $region4: #{tile.30} parent=0 // pred_region
    _
  $region5: #{tile.30} parent=0 // pred_fallthru
    _
  %v4 = vld [vmem:[%s0] ss:$0 sm:$0xff]
  %5 = vst [vmem:[%s1] sm:$0xf] %v4

// kernel: tile.31
$region0: #{tile.31}
  %s0 = inlined_call_operand.vmem [shape: f32[4,8], index: 0, kind: input, shape index: {}]
  %s1 = inlined_call_operand.vmem [shape: f32[32], index: 1, kind: output, shape index: {}]
  $region1: #{tile.31} parent=0
    #allocation0 [shape = 'u8[4096]{0}', space=vmem, size = 0x1000, scoped, tag = 'scoped mem for output reshape']
    #allocation1 [shape = 'u8[4096]{0}', space=vmem, size = 0x1000, scoped, tag = 'scoped mem for input reshape']
    %s3 = sshll.u32 1, 4
    %s4 = ssub.s32 %s3, 1
    %v5 = vld [vmem:[%s0] sm:%s4]
    %6 = vst [vmem:[#allocation1] sm:%s4] %v5
    %v7 = vld [vmem:[#allocation1] sm:$0x1]
    %vm8 = vcmask 64512
    %9 = vst.msk [vmem:[#allocation0] sm:$0x1] %vm8, %v7
    %s10 = scalar_lea.vmem [#allocation1], 3
    %v11 = vld [vmem:[%s10] sm:$0x1]
    %12 = vrot.lane.b32.xlu0 %v11, 24
    %v13 = vpop.permute.xlu0 %12
    %vm14 = vcmask 261312
    %15 = vst.msk [vmem:[#allocation0] sm:$0x1] %vm14, %v13
    %s16 = scalar_lea.vmem [#allocation1], 2
    %v17 = vld [vmem:[%s16] sm:$0x1]
    %18 = vrot.lane.b32.xlu0 %v17, 16
    %v19 = vpop.permute.xlu0 %18
    %vm20 = vcmask 195712
    %21 = vst.msk [vmem:[#allocation0] sm:$0x1] %vm20, %v19
    %s22 = scalar_lea.vmem [#allocation1], 1
    %v23 = vld [vmem:[%s22] sm:$0x1]
    %24 = vrot.lane.b32.xlu0 %v23, 8
    %v25 = vpop.permute.xlu0 %24
    %vm26 = vcmask 130112
    %27 = vst.msk [vmem:[#allocation0] sm:$0x1] %vm26, %v25
    %s29 = sshll.u32 1, 1
    %s30 = ssub.s32 %s29, 1
    %v32 = vld [vmem:[#allocation0] sm:%s30]
    %s33 = sshll.u32 1, 1
    %s34 = ssub.s32 %s33, 1
    %35 = vst [vmem:[%s1] sm:%s34] %v32

// kernel: generator_forward.27
$region0: #{generator_forward.27}
  #allocation0 [shape = 'u32[]', space=smem, size = 0x4, offset = 0x4, fixed_abs, tag = 'smem constant byte address 0x4 - core index']
  #allocation1 [shape = 'u32[144,128]{1,0:T(1,128)}', space=vmem, size = 0x12000, scoped, tag = 'internal scratch']
  %s0 = inlined_call_operand.vmem [shape: bf16[512,32], index: 0, kind: input, shape index: {}]
  %s1 = inlined_call_operand.vmem [shape: bf16[32,128], index: 1, kind: input, shape index: {}]
  %s2 = inlined_call_operand.vmem [shape: f32[1,128], index: 2, kind: input, shape index: {}]
  %s3 = inlined_call_operand.vmem [shape: f32[1,128], index: 3, kind: input, shape index: {}]
  %s4 = inlined_call_operand.vmem [shape: f32[512,128], index: 4, kind: output, shape index: {}]
  %s5 = sld [smem:[#allocation0]]
  $region26: #{generator_forward.27} parent=0
    _
  %s7 = ssub.s32 1, %s5
  %s8 = scalar_select 0, %s7, %s5
  // Predicated region
  $region2: #{generator_forward.27} parent=0 // pred_check
    _
  $region3: #{generator_forward.27} parent=0 // pred_check_branch
    %10 = sbr.rel (0) target = $region5
  $region4: #{generator_forward.27} parent=0 // pred_region
    _
  $region5: #{generator_forward.27} parent=0 // pred_fallthru
    _
  // Predicated region
  $region6: #{generator_forward.27} parent=0 // pred_check
    _
  $region7: #{generator_forward.27} parent=0 // pred_check_branch
    %12 = sbr.rel (0) target = $region9
  $region8: #{generator_forward.27} parent=0 // pred_region
    _
  $region9: #{generator_forward.27} parent=0 // pred_fallthru
    _
  // Predicated region
  $region10: #{generator_forward.27} parent=0 // pred_check
    _
  $region11: #{generator_forward.27} parent=0 // pred_check_branch
    %14 = sbr.rel (0) target = $region13
  $region12: #{generator_forward.27} parent=0 // pred_region
    _
  $region13: #{generator_forward.27} parent=0 // pred_fallthru
    _
  // Predicated region
  $region14: #{generator_forward.27} parent=0 // pred_check
    _
  $region15: #{generator_forward.27} parent=0 // pred_check_branch
    %16 = sbr.rel (0) target = $region17
  $region16: #{generator_forward.27} parent=0 // pred_region
    _
  $region17: #{generator_forward.27} parent=0 // pred_fallthru
    _
  %v18 = vld [vmem:[%s0] sm:$0xf]
  %v19 = vld [vmem:[%s0 + $0x4] sm:$0xf]
  %v20 = vld [vmem:[%s0 + $0x8] sm:$0xf]
  %v21 = vld [vmem:[%s0 + $0xc] sm:$0xf]
  %v22 = vld [vmem:[%s0 + $0x10] sm:$0xf]
  %v23 = vld [vmem:[%s0 + $0x14] sm:$0xf]
  %v24 = vld [vmem:[%s0 + $0x18] sm:$0xf]
  %v25 = vld [vmem:[%s0 + $0x1c] sm:$0xf]
  %v26 = vld [vmem:[%s0 + $0x20] sm:$0xf]
  %v27 = vld [vmem:[%s0 + $0x24] sm:$0xf]
  %v28 = vld [vmem:[%s0 + $0x28] sm:$0xf]
  %v29 = vld [vmem:[%s0 + $0x2c] sm:$0xf]
  %v30 = vld [vmem:[%s0 + $0x30] sm:$0xf]
  %v31 = vld [vmem:[%s0 + $0x34] sm:$0xf]
  %v32 = vld [vmem:[%s0 + $0x38] sm:$0xf]
  %v33 = vld [vmem:[%s0 + $0x3c] sm:$0xf]
  %v34 = vld [vmem:[%s0 + $0x40] sm:$0xf]
  %v35 = vld [vmem:[%s0 + $0x44] sm:$0xf]
  %v36 = vld [vmem:[%s0 + $0x48] sm:$0xf]
  %v37 = vld [vmem:[%s0 + $0x4c] sm:$0xf]
  %v38 = vld [vmem:[%s0 + $0x50] sm:$0xf]
  %v39 = vld [vmem:[%s0 + $0x54] sm:$0xf]
  %v40 = vld [vmem:[%s0 + $0x58] sm:$0xf]
  %v41 = vld [vmem:[%s0 + $0x5c] sm:$0xf]
  %v42 = vld [vmem:[%s0 + $0x60] sm:$0xf]
  %v43 = vld [vmem:[%s0 + $0x64] sm:$0xf]
  %v44 = vld [vmem:[%s0 + $0x68] sm:$0xf]
  %v45 = vld [vmem:[%s0 + $0x6c] sm:$0xf]
  %v46 = vld [vmem:[%s0 + $0x70] sm:$0xf]
  %v47 = vld [vmem:[%s0 + $0x74] sm:$0xf]
  %v48 = vld [vmem:[%s0 + $0x78] sm:$0xf]
  %v49 = vld [vmem:[%s0 + $0x7c] sm:$0xf]
  %v50 = vld [vmem:[%s0 + $0x80] sm:$0xf]
  %v51 = vld [vmem:[%s0 + $0x84] sm:$0xf]
  %v52 = vld [vmem:[%s0 + $0x88] sm:$0xf]
  %v53 = vld [vmem:[%s0 + $0x8c] sm:$0xf]
  %v54 = vld [vmem:[%s0 + $0x90] sm:$0xf]
  %v55 = vld [vmem:[%s0 + $0x94] sm:$0xf]
  %v56 = vld [vmem:[%s0 + $0x98] sm:$0xf]
  %v57 = vld [vmem:[%s0 + $0x9c] sm:$0xf]
  %v58 = vld [vmem:[%s0 + $0xa0] sm:$0xf]
  %v59 = vld [vmem:[%s0 + $0xa4] sm:$0xf]
  %v60 = vld [vmem:[%s0 + $0xa8] sm:$0xf]
  %v61 = vld [vmem:[%s0 + $0xac] sm:$0xf]
  %v62 = vld [vmem:[%s0 + $0xb0] sm:$0xf]
  %v63 = vld [vmem:[%s0 + $0xb4] sm:$0xf]
  %v64 = vld [vmem:[%s0 + $0xb8] sm:$0xf]
  %v65 = vld [vmem:[%s0 + $0xbc] sm:$0xf]
  %v66 = vld [vmem:[%s0 + $0xc0] sm:$0xf]
  %v67 = vld [vmem:[%s0 + $0xc4] sm:$0xf]
  %v68 = vld [vmem:[%s0 + $0xc8] sm:$0xf]
  %v69 = vld [vmem:[%s0 + $0xcc] sm:$0xf]
  %v70 = vld [vmem:[%s0 + $0xd0] sm:$0xf]
  %v71 = vld [vmem:[%s0 + $0xd4] sm:$0xf]
  %v72 = vld [vmem:[%s0 + $0xd8] sm:$0xf]
  %v73 = vld [vmem:[%s0 + $0xdc] sm:$0xf]
  %v74 = vld [vmem:[%s0 + $0xe0] sm:$0xf]
  %v75 = vld [vmem:[%s0 + $0xe4] sm:$0xf]
  %v76 = vld [vmem:[%s0 + $0xe8] sm:$0xf]
  %v77 = vld [vmem:[%s0 + $0xec] sm:$0xf]
  %v78 = vld [vmem:[%s0 + $0xf0] sm:$0xf]
  %v79 = vld [vmem:[%s0 + $0xf4] sm:$0xf]
  %v80 = vld [vmem:[%s0 + $0xf8] sm:$0xf]
  %v81 = vld [vmem:[%s0 + $0xfc] sm:$0xf]
  %v82 = vld [vmem:[%s1] sm:$0xf]
  %v83 = vld [vmem:[%s1 + $0x4] sm:$0xf]
  %v84 = vld [vmem:[%s1 + $0x8] sm:$0xf]
  %v85 = vld [vmem:[%s1 + $0xc] sm:$0xf]
  %v150 = vunpack.c.l.b16 %v18
  %v151 = vunpack.c.l.b16 %v19
  %v152 = vunpack.c.l.b16 %v20
  %v153 = vunpack.c.l.b16 %v21
  %v154 = vunpack.c.l.b16 %v22
  %v155 = vunpack.c.l.b16 %v23
  %v156 = vunpack.c.l.b16 %v24
  %v157 = vunpack.c.l.b16 %v25
  %v158 = vunpack.c.l.b16 %v26
  %v159 = vunpack.c.l.b16 %v27
  %v160 = vunpack.c.l.b16 %v28
  %v161 = vunpack.c.l.b16 %v29
  %v162 = vunpack.c.l.b16 %v30
  %v163 = vunpack.c.l.b16 %v31
  %v164 = vunpack.c.l.b16 %v32
  %v165 = vunpack.c.l.b16 %v33
  %v166 = vunpack.c.l.b16 %v34
  %v167 = vunpack.c.l.b16 %v35
  %v168 = vunpack.c.l.b16 %v36
  %v169 = vunpack.c.l.b16 %v37
  %v170 = vunpack.c.l.b16 %v38
  %v171 = vunpack.c.l.b16 %v39
  %v172 = vunpack.c.l.b16 %v40
  %v173 = vunpack.c.l.b16 %v41
  %v174 = vunpack.c.l.b16 %v42
  %v175 = vunpack.c.l.b16 %v43
  %v176 = vunpack.c.l.b16 %v44
  %v177 = vunpack.c.l.b16 %v45
  %v178 = vunpack.c.l.b16 %v46
  %v179 = vunpack.c.l.b16 %v47
  %v180 = vunpack.c.l.b16 %v48
  %v181 = vunpack.c.l.b16 %v49
  %v182 = vunpack.c.l.b16 %v50
  %v183 = vunpack.c.l.b16 %v51
  %v184 = vunpack.c.l.b16 %v52
  %v185 = vunpack.c.l.b16 %v53
  %v186 = vunpack.c.l.b16 %v54
  %v187 = vunpack.c.l.b16 %v55
  %v188 = vunpack.c.l.b16 %v56
  %v189 = vunpack.c.l.b16 %v57
  %v190 = vunpack.c.l.b16 %v58
  %v191 = vunpack.c.l.b16 %v59
  %v192 = vunpack.c.l.b16 %v60
  %v193 = vunpack.c.l.b16 %v61
  %v194 = vunpack.c.l.b16 %v62
  %v195 = vunpack.c.l.b16 %v63
  %v196 = vunpack.c.l.b16 %v64
  %v197 = vunpack.c.l.b16 %v65
  %v198 = vunpack.c.l.b16 %v66
  %v199 = vunpack.c.l.b16 %v67
  %v200 = vunpack.c.l.b16 %v68
  %v201 = vunpack.c.l.b16 %v69
  %v202 = vunpack.c.l.b16 %v70
  %v203 = vunpack.c.l.b16 %v71
  %v204 = vunpack.c.l.b16 %v72
  %v205 = vunpack.c.l.b16 %v73
  %v206 = vunpack.c.l.b16 %v74
  %v207 = vunpack.c.l.b16 %v75
  %v208 = vunpack.c.l.b16 %v76
  %v209 = vunpack.c.l.b16 %v77
  %v210 = vunpack.c.l.b16 %v78
  %v211 = vunpack.c.l.b16 %v79
  %v212 = vunpack.c.l.b16 %v80
  %v213 = vunpack.c.l.b16 %v81
  %v214 = vpack.c.b16 %v151, %v150
  %v215 = vpack.c.b16 %v153, %v152
  %v216 = vpack.c.b16 %v155, %v154
  %v217 = vpack.c.b16 %v157, %v156
  %v218 = vpack.c.b16 %v159, %v158
  %v219 = vpack.c.b16 %v161, %v160
  %v220 = vpack.c.b16 %v163, %v162
  %v221 = vpack.c.b16 %v165, %v164
  %v222 = vpack.c.b16 %v167, %v166
  %v223 = vpack.c.b16 %v169, %v168
  %v224 = vpack.c.b16 %v171, %v170
  %v225 = vpack.c.b16 %v173, %v172
  %v226 = vpack.c.b16 %v175, %v174
  %v227 = vpack.c.b16 %v177, %v176
  %v228 = vpack.c.b16 %v179, %v178
  %v229 = vpack.c.b16 %v181, %v180
  %v230 = vpack.c.b16 %v183, %v182
  %v231 = vpack.c.b16 %v185, %v184
  %v232 = vpack.c.b16 %v187, %v186
  %v233 = vpack.c.b16 %v189, %v188
  %v234 = vpack.c.b16 %v191, %v190
  %v235 = vpack.c.b16 %v193, %v192
  %v236 = vpack.c.b16 %v195, %v194
  %v237 = vpack.c.b16 %v197, %v196
  %v238 = vpack.c.b16 %v199, %v198
  %v239 = vpack.c.b16 %v201, %v200
  %v240 = vpack.c.b16 %v203, %v202
  %v241 = vpack.c.b16 %v205, %v204
  %v242 = vpack.c.b16 %v207, %v206
  %v243 = vpack.c.b16 %v209, %v208
  %v244 = vpack.c.b16 %v211, %v210
  %v245 = vpack.c.b16 %v213, %v212
  %v250 = vunpack.c.l.b16 %v82
  %v251 = vunpack.c.l.b16 %v83
  %v252 = vunpack.c.l.b16 %v84
  %v253 = vunpack.c.l.b16 %v85
  %v254 = vpack.c.b16 %v251, %v250
  %v255 = vpack.c.b16 %v253, %v252
  %vm258 = vcmask 261120
  %v260 = vsel %vm258, %v214, 0
  %v263 = vsel %vm258, %v215, 0
  %v266 = vsel %vm258, %v216, 0
  %v269 = vsel %vm258, %v217, 0
  %v272 = vsel %vm258, %v218, 0
  %v275 = vsel %vm258, %v219, 0
  %v278 = vsel %vm258, %v220, 0
  %v281 = vsel %vm258, %v221, 0
  %v284 = vsel %vm258, %v222, 0
  %v287 = vsel %vm258, %v223, 0
  %v290 = vsel %vm258, %v224, 0
  %v293 = vsel %vm258, %v225, 0
  %v296 = vsel %vm258, %v226, 0
  %v299 = vsel %vm258, %v227, 0
  %v302 = vsel %vm258, %v228, 0
  %v305 = vsel %vm258, %v229, 0
  %v308 = vsel %vm258, %v230, 0
  %v311 = vsel %vm258, %v231, 0
  %v314 = vsel %vm258, %v232, 0
  %v317 = vsel %vm258, %v233, 0
  %v320 = vsel %vm258, %v234, 0
  %v323 = vsel %vm258, %v235, 0
  %v326 = vsel %vm258, %v236, 0
  %v329 = vsel %vm258, %v237, 0
  %v332 = vsel %vm258, %v238, 0
  %v335 = vsel %vm258, %v239, 0
  %v338 = vsel %vm258, %v240, 0
  %v341 = vsel %vm258, %v241, 0
  %v344 = vsel %vm258, %v242, 0
  %v347 = vsel %vm258, %v243, 0
  %v350 = vsel %vm258, %v244, 0
  %v353 = vsel %vm258, %v245, 0
  %355 = vmatprep.subr.bf16.mxu0 0
  %356 = vmatpush1.bf16.msra.mxu0 0
  %357 = vmatprep.subr.bf16.mxu0 0
  %358 = vmatpush1.bf16.msra.mxu0 0
  %359 = vmatprep.subr.bf16.mxu0 0
  %360 = vmatpush1.bf16.msra.mxu0 0
  %361 = vmatprep.subr.bf16.mxu0 0
  %362 = vmatpush1.bf16.msra.mxu0 0
  %363 = vmatprep.subr.bf16.mxu0 0
  %364 = vmatpush1.bf16.msra.mxu0 0
  %365 = vmatprep.subr.bf16.mxu0 0
  %366 = vmatpush1.bf16.msra.mxu0 0
  %367 = vmatprep.subr.bf16.mxu0 0
  %368 = vmatpush1.bf16.msra.mxu0 %v255
  %369 = vmatprep.subr.bf16.mxu0 0
  %370 = vmatpush1.bf16.msra.mxu0 %v254
  %371 = vmatprep.subr.bf16.mxu0 0
  %372 = vmatpush2.bf16.msra.mxu0 0
  %373 = vmatprep.subr.bf16.mxu0 0
  %374 = vmatpush2.bf16.msra.mxu0 0
  %375 = vmatprep.subr.bf16.mxu0 0
  %376 = vmatpush2.bf16.msra.mxu0 0
  %377 = vmatprep.subr.bf16.mxu0 0
  %378 = vmatpush2.bf16.msra.mxu0 0
  %379 = vmatprep.subr.bf16.mxu0 0
  %380 = vmatpush2.bf16.msra.mxu0 0
  %381 = vmatprep.subr.bf16.mxu0 0
  %382 = vmatpush2.bf16.msra.mxu0 0
  %383 = vmatprep.subr.bf16.mxu0 0
  %384 = vmatpush2.bf16.msra.mxu0 0
  %385 = vmatprep.subr.bf16.mxu0 0
  %386 = vmatpush2.bf16.msra.mxu0 0
  %387 = vmatprep.mubr.bf16.mxu0 0
  %388 = vmatmul.mubr.bf16.gmra.mxu0 %v260
  %v389 = vpop.f32.mrf.mxu0
  %v390 = vadd.f32 0.0, %v389
  %v391 = vpop.f32.mrf.mxu0
  %v392 = vpop.f32.mrf.mxu0
  %v393 = vadd.f32 0.0, %v392
  %v394 = vpop.f32.mrf.mxu0
  %395 = vmatprep.mubr.bf16.mxu0 0
  %396 = vmatmul.mubr.bf16.gmra.mxu0 %v263
  %v397 = vpop.f32.mrf.mxu0
  %v398 = vadd.f32 0.0, %v397
  %v399 = vpop.f32.mrf.mxu0
  %v400 = vpop.f32.mrf.mxu0
  %v401 = vadd.f32 0.0, %v400
  %v402 = vpop.f32.mrf.mxu0
  %403 = vmatprep.mubr.bf16.mxu0 0
  %404 = vmatmul.mubr.bf16.gmra.mxu0 %v266
  %v405 = vpop.f32.mrf.mxu0
  %v406 = vadd.f32 0.0, %v405
  %v407 = vpop.f32.mrf.mxu0
  %v408 = vpop.f32.mrf.mxu0
  %v409 = vadd.f32 0.0, %v408
  %v410 = vpop.f32.mrf.mxu0
  %411 = vmatprep.mubr.bf16.mxu0 0
  %412 = vmatmul.mubr.bf16.gmra.mxu0 %v269
  %v413 = vpop.f32.mrf.mxu0
  %v414 = vadd.f32 0.0, %v413
  %v415 = vpop.f32.mrf.mxu0
  %v416 = vpop.f32.mrf.mxu0
  %v417 = vadd.f32 0.0, %v416
  %v418 = vpop.f32.mrf.mxu0
  %419 = vmatprep.mubr.bf16.mxu0 0
  %420 = vmatmul.mubr.bf16.gmra.mxu0 %v272
  %v421 = vpop.f32.mrf.mxu0
  %v422 = vadd.f32 0.0, %v421
  %v423 = vpop.f32.mrf.mxu0
  %v424 = vpop.f32.mrf.mxu0
  %v425 = vadd.f32 0.0, %v424
  %v426 = vpop.f32.mrf.mxu0
  %427 = vmatprep.mubr.bf16.mxu0 0
  %428 = vmatmul.mubr.bf16.gmra.mxu0 %v275
  %v429 = vpop.f32.mrf.mxu0
  %v430 = vadd.f32 0.0, %v429
  %v431 = vpop.f32.mrf.mxu0
  %v432 = vpop.f32.mrf.mxu0
  %v433 = vadd.f32 0.0, %v432
  %v434 = vpop.f32.mrf.mxu0
  %435 = vmatprep.mubr.bf16.mxu0 0
  %436 = vmatmul.mubr.bf16.gmra.mxu0 %v278
  %v437 = vpop.f32.mrf.mxu0
  %v438 = vadd.f32 0.0, %v437
  %v439 = vpop.f32.mrf.mxu0
  %v440 = vpop.f32.mrf.mxu0
  %v441 = vadd.f32 0.0, %v440
  %v442 = vpop.f32.mrf.mxu0
  %443 = vmatprep.mubr.bf16.mxu0 0
  %444 = vmatmul.mubr.bf16.gmra.mxu0 %v281
  %v445 = vpop.f32.mrf.mxu0
  %v446 = vadd.f32 0.0, %v445
  %v447 = vpop.f32.mrf.mxu0
  %v448 = vpop.f32.mrf.mxu0
  %v449 = vadd.f32 0.0, %v448
  %v450 = vpop.f32.mrf.mxu0
  %451 = vmatprep.mubr.bf16.mxu0 0
  %452 = vmatmul.mubr.bf16.gmra.mxu0 %v284
  %v453 = vpop.f32.mrf.mxu0
  %v454 = vadd.f32 0.0, %v453
  %v455 = vpop.f32.mrf.mxu0
  %v456 = vpop.f32.mrf.mxu0
  %v457 = vadd.f32 0.0, %v456
  %v458 = vpop.f32.mrf.mxu0
  %459 = vmatprep.mubr.bf16.mxu0 0
  %460 = vmatmul.mubr.bf16.gmra.mxu0 %v287
  %v461 = vpop.f32.mrf.mxu0
  %v462 = vadd.f32 0.0, %v461
  %v463 = vpop.f32.mrf.mxu0
  %v464 = vpop.f32.mrf.mxu0
  %v465 = vadd.f32 0.0, %v464
  %v466 = vpop.f32.mrf.mxu0
  %467 = vmatprep.mubr.bf16.mxu0 0
  %468 = vmatmul.mubr.bf16.gmra.mxu0 %v290
  %v469 = vpop.f32.mrf.mxu0
  %v470 = vadd.f32 0.0, %v469
  %v471 = vpop.f32.mrf.mxu0
  %v472 = vpop.f32.mrf.mxu0
  %v473 = vadd.f32 0.0, %v472
  %v474 = vpop.f32.mrf.mxu0
  %475 = vmatprep.mubr.bf16.mxu0 0
  %476 = vmatmul.mubr.bf16.gmra.mxu0 %v293
  %v477 = vpop.f32.mrf.mxu0
  %v478 = vadd.f32 0.0, %v477
  %v479 = vpop.f32.mrf.mxu0
  %v480 = vpop.f32.mrf.mxu0
  %v481 = vadd.f32 0.0, %v480
  %v482 = vpop.f32.mrf.mxu0
  %483 = vmatprep.mubr.bf16.mxu0 0
  %484 = vmatmul.mubr.bf16.gmra.mxu0 %v296
  %v485 = vpop.f32.mrf.mxu0
  %v486 = vadd.f32 0.0, %v485
  %v487 = vpop.f32.mrf.mxu0
  %v488 = vpop.f32.mrf.mxu0
  %v489 = vadd.f32 0.0, %v488
  %v490 = vpop.f32.mrf.mxu0
  %491 = vmatprep.mubr.bf16.mxu0 0
  %492 = vmatmul.mubr.bf16.gmra.mxu0 %v299
  %v493 = vpop.f32.mrf.mxu0
  %v494 = vadd.f32 0.0, %v493
  %v495 = vpop.f32.mrf.mxu0
  %v496 = vpop.f32.mrf.mxu0
  %v497 = vadd.f32 0.0, %v496
  %v498 = vpop.f32.mrf.mxu0
  %499 = vmatprep.mubr.bf16.mxu0 0
  %500 = vmatmul.mubr.bf16.gmra.mxu0 %v302
  %v501 = vpop.f32.mrf.mxu0
  %v502 = vadd.f32 0.0, %v501
  %v503 = vpop.f32.mrf.mxu0
  %v504 = vpop.f32.mrf.mxu0
  %v505 = vadd.f32 0.0, %v504
  %v506 = vpop.f32.mrf.mxu0
  %507 = vmatprep.mubr.bf16.mxu0 0
  %508 = vmatmul.mubr.bf16.gmra.mxu0 %v305
  %v509 = vpop.f32.mrf.mxu0
  %v510 = vadd.f32 0.0, %v509
  %v511 = vpop.f32.mrf.mxu0
  %v512 = vpop.f32.mrf.mxu0
  %v513 = vadd.f32 0.0, %v512
  %v514 = vpop.f32.mrf.mxu0
  %515 = vmatprep.mubr.bf16.mxu0 0
  %516 = vmatmul.mubr.bf16.gmra.mxu0 %v308
  %v517 = vpop.f32.mrf.mxu0
  %v518 = vadd.f32 0.0, %v517
  %v519 = vpop.f32.mrf.mxu0
  %v520 = vpop.f32.mrf.mxu0
  %v521 = vadd.f32 0.0, %v520
  %v522 = vpop.f32.mrf.mxu0
  %523 = vmatprep.mubr.bf16.mxu0 0
  %524 = vmatmul.mubr.bf16.gmra.mxu0 %v311
  %v525 = vpop.f32.mrf.mxu0
  %v526 = vadd.f32 0.0, %v525
  %v527 = vpop.f32.mrf.mxu0
  %v528 = vpop.f32.mrf.mxu0
  %v529 = vadd.f32 0.0, %v528
  %v530 = vpop.f32.mrf.mxu0
  %531 = vmatprep.mubr.bf16.mxu0 0
  %532 = vmatmul.mubr.bf16.gmra.mxu0 %v314
  %v533 = vpop.f32.mrf.mxu0
  %v534 = vadd.f32 0.0, %v533
  %v535 = vpop.f32.mrf.mxu0
  %v536 = vpop.f32.mrf.mxu0
  %v537 = vadd.f32 0.0, %v536
  %v538 = vpop.f32.mrf.mxu0
  %539 = vmatprep.mubr.bf16.mxu0 0
  %540 = vmatmul.mubr.bf16.gmra.mxu0 %v317
  %v541 = vpop.f32.mrf.mxu0
  %v542 = vadd.f32 0.0, %v541
  %v543 = vpop.f32.mrf.mxu0
  %v544 = vpop.f32.mrf.mxu0
  %v545 = vadd.f32 0.0, %v544
  %v546 = vpop.f32.mrf.mxu0
  %547 = vmatprep.mubr.bf16.mxu0 0
  %548 = vmatmul.mubr.bf16.gmra.mxu0 %v320
  %v549 = vpop.f32.mrf.mxu0
  %v550 = vadd.f32 0.0, %v549
  %v551 = vpop.f32.mrf.mxu0
  %v552 = vpop.f32.mrf.mxu0
  %v553 = vadd.f32 0.0, %v552
  %v554 = vpop.f32.mrf.mxu0
  %555 = vmatprep.mubr.bf16.mxu0 0
  %556 = vmatmul.mubr.bf16.gmra.mxu0 %v323
  %v557 = vpop.f32.mrf.mxu0
  %v558 = vadd.f32 0.0, %v557
  %v559 = vpop.f32.mrf.mxu0
  %v560 = vpop.f32.mrf.mxu0
  %v561 = vadd.f32 0.0, %v560
  %v562 = vpop.f32.mrf.mxu0
  %563 = vmatprep.mubr.bf16.mxu0 0
  %564 = vmatmul.mubr.bf16.gmra.mxu0 %v326
  %v565 = vpop.f32.mrf.mxu0
  %v566 = vadd.f32 0.0, %v565
  %v567 = vpop.f32.mrf.mxu0
  %v568 = vpop.f32.mrf.mxu0
  %v569 = vadd.f32 0.0, %v568
  %v570 = vpop.f32.mrf.mxu0
  %571 = vmatprep.mubr.bf16.mxu0 0
  %572 = vmatmul.mubr.bf16.gmra.mxu0 %v329
  %v573 = vpop.f32.mrf.mxu0
  %v574 = vadd.f32 0.0, %v573
  %v575 = vpop.f32.mrf.mxu0
  %v576 = vpop.f32.mrf.mxu0
  %v577 = vadd.f32 0.0, %v576
  %v578 = vpop.f32.mrf.mxu0
  %579 = vmatprep.mubr.bf16.mxu0 0
  %580 = vmatmul.mubr.bf16.gmra.mxu0 %v332
  %v581 = vpop.f32.mrf.mxu0
  %v582 = vadd.f32 0.0, %v581
  %v583 = vpop.f32.mrf.mxu0
  %v584 = vpop.f32.mrf.mxu0
  %v585 = vadd.f32 0.0, %v584
  %v586 = vpop.f32.mrf.mxu0
  %587 = vmatprep.mubr.bf16.mxu0 0
  %588 = vmatmul.mubr.bf16.gmra.mxu0 %v335
  %v589 = vpop.f32.mrf.mxu0
  %v590 = vadd.f32 0.0, %v589
  %v591 = vpop.f32.mrf.mxu0
  %v592 = vpop.f32.mrf.mxu0
  %v593 = vadd.f32 0.0, %v592
  %v594 = vpop.f32.mrf.mxu0
  %595 = vmatprep.mubr.bf16.mxu0 0
  %596 = vmatmul.mubr.bf16.gmra.mxu0 %v338
  %v597 = vpop.f32.mrf.mxu0
  %v598 = vadd.f32 0.0, %v597
  %v599 = vpop.f32.mrf.mxu0
  %v600 = vpop.f32.mrf.mxu0
  %v601 = vadd.f32 0.0, %v600
  %v602 = vpop.f32.mrf.mxu0
  %603 = vmatprep.mubr.bf16.mxu0 0
  %604 = vmatmul.mubr.bf16.gmra.mxu0 %v341
  %v605 = vpop.f32.mrf.mxu0
  %v606 = vadd.f32 0.0, %v605
  %v607 = vpop.f32.mrf.mxu0
  %v608 = vpop.f32.mrf.mxu0
  %v609 = vadd.f32 0.0, %v608
  %v610 = vpop.f32.mrf.mxu0
  %611 = vmatprep.mubr.bf16.mxu0 0
  %612 = vmatmul.mubr.bf16.gmra.mxu0 %v344
  %v613 = vpop.f32.mrf.mxu0
  %v614 = vadd.f32 0.0, %v613
  %v615 = vpop.f32.mrf.mxu0
  %v616 = vpop.f32.mrf.mxu0
  %v617 = vadd.f32 0.0, %v616
  %v618 = vpop.f32.mrf.mxu0
  %619 = vmatprep.mubr.bf16.mxu0 0
  %620 = vmatmul.mubr.bf16.gmra.mxu0 %v347
  %v621 = vpop.f32.mrf.mxu0
  %v622 = vadd.f32 0.0, %v621
  %v623 = vpop.f32.mrf.mxu0
  %v624 = vpop.f32.mrf.mxu0
  %v625 = vadd.f32 0.0, %v624
  %v626 = vpop.f32.mrf.mxu0
  %627 = vmatprep.mubr.bf16.mxu0 0
  %628 = vmatmul.mubr.bf16.gmra.mxu0 %v350
  %v629 = vpop.f32.mrf.mxu0
  %v630 = vadd.f32 0.0, %v629
  %v631 = vpop.f32.mrf.mxu0
  %v632 = vpop.f32.mrf.mxu0
  %v633 = vadd.f32 0.0, %v632
  %v634 = vpop.f32.mrf.mxu0
  %635 = vmatprep.mubr.bf16.mxu0 0
  %636 = vmatmul.mubr.bf16.gmra.mxu0 %v353
  %v637 = vpop.f32.mrf.mxu0
  %v638 = vadd.f32 0.0, %v637
  %v639 = vpop.f32.mrf.mxu0
  %v640 = vpop.f32.mrf.mxu0
  %v641 = vadd.f32 0.0, %v640
  %v642 = vpop.f32.mrf.mxu0
  %643 = vdwg.mxu0
  %v644 = vadd.f32 %v390, %v393
  %v645 = vadd.f32 %v644, %v398
  %v646 = vadd.f32 %v645, %v401
  %v647 = vadd.f32 %v646, %v406
  %v648 = vadd.f32 %v647, %v409
  %v649 = vadd.f32 %v648, %v414
  %v650 = vadd.f32 %v649, %v417
  %v651 = vadd.f32 %v650, %v422
  %v652 = vadd.f32 %v651, %v425
  %v653 = vadd.f32 %v652, %v430
  %v654 = vadd.f32 %v653, %v433
  %v655 = vadd.f32 %v654, %v438
  %v656 = vadd.f32 %v655, %v441
  %v657 = vadd.f32 %v656, %v446
  %v658 = vadd.f32 %v657, %v449
  %v659 = vadd.f32 %v658, %v454
  %v660 = vadd.f32 %v659, %v457
  %v661 = vadd.f32 %v660, %v462
  %v662 = vadd.f32 %v661, %v465
  %v663 = vadd.f32 %v662, %v470
  %v664 = vadd.f32 %v663, %v473
  %v665 = vadd.f32 %v664, %v478
  %v666 = vadd.f32 %v665, %v481
  %v667 = vadd.f32 %v666, %v486
  %v668 = vadd.f32 %v667, %v489
  %v669 = vadd.f32 %v668, %v494
  %v670 = vadd.f32 %v669, %v497
  %v671 = vadd.f32 %v670, %v502
  %v672 = vadd.f32 %v671, %v505
  %v673 = vadd.f32 %v672, %v510
  %v674 = vadd.f32 %v673, %v513
  %v675 = vadd.f32 %v674, %v518
  %v676 = vadd.f32 %v675, %v521
  %v677 = vadd.f32 %v676, %v526
  %v678 = vadd.f32 %v677, %v529
  %v679 = vadd.f32 %v678, %v534
  %v680 = vadd.f32 %v679, %v537
  %v681 = vadd.f32 %v680, %v542
  %v682 = vadd.f32 %v681, %v545
  %v683 = vadd.f32 %v682, %v550
  %v684 = vadd.f32 %v683, %v553
  %v685 = vadd.f32 %v684, %v558
  %v686 = vadd.f32 %v685, %v561
  %v687 = vadd.f32 %v686, %v566
  %v688 = vadd.f32 %v687, %v569
  %v689 = vadd.f32 %v688, %v574
  %v690 = vadd.f32 %v689, %v577
  %v691 = vadd.f32 %v690, %v582
  %v692 = vadd.f32 %v691, %v585
  %v693 = vadd.f32 %v692, %v590
  %v694 = vadd.f32 %v693, %v593
  %v695 = vadd.f32 %v694, %v598
  %v696 = vadd.f32 %v695, %v601
  %v697 = vadd.f32 %v696, %v606
  %v698 = vadd.f32 %v697, %v609
  %v699 = vadd.f32 %v698, %v614
  %v700 = vadd.f32 %v699, %v617
  %v701 = vadd.f32 %v700, %v622
  %v702 = vadd.f32 %v701, %v625
  %v703 = vadd.f32 %v702, %v630
  %v704 = vadd.f32 %v703, %v633
  %v705 = vadd.f32 %v704, %v638
  %v706 = vadd.f32 %v705, %v641
  %v707 = vrot.slane %v706, 4
  %v708 = vadd.f32 %v706, %v707
  %v709 = vrot.slane %v708, 2
  %v710 = vadd.f32 %v708, %v709
  %v711 = vrot.slane %v710, 1
  %v712 = vadd.f32 %v710, %v711
  %v713 = vmul.f32 %v712, 0.001953125
  %v714 = vsub.f32 %v390, %v713
  %v715 = vsub.f32 %v393, %v713
  %v716 = vsub.f32 %v398, %v713
  %v717 = vsub.f32 %v401, %v713
  %v718 = vsub.f32 %v406, %v713
  %v719 = vsub.f32 %v409, %v713
  %v720 = vsub.f32 %v414, %v713
  %v721 = vsub.f32 %v417, %v713
  %v722 = vsub.f32 %v422, %v713
  %v723 = vsub.f32 %v425, %v713
  %v724 = vsub.f32 %v430, %v713
  %v725 = vsub.f32 %v433, %v713
  %v726 = vsub.f32 %v438, %v713
  %v727 = vsub.f32 %v441, %v713
  %v728 = vsub.f32 %v446, %v713
  %v729 = vsub.f32 %v449, %v713
  %v730 = vsub.f32 %v454, %v713
  %v731 = vsub.f32 %v457, %v713
  %v732 = vsub.f32 %v462, %v713
  %v733 = vsub.f32 %v465, %v713
  %v734 = vsub.f32 %v470, %v713
  %v735 = vsub.f32 %v473, %v713
  %v736 = vsub.f32 %v478, %v713
  %v737 = vsub.f32 %v481, %v713
  %v738 = vsub.f32 %v486, %v713
  %v739 = vsub.f32 %v489, %v713
  %v740 = vsub.f32 %v494, %v713
  %v741 = vsub.f32 %v497, %v713
  %v742 = vsub.f32 %v502, %v713
  %v743 = vsub.f32 %v505, %v713
  %v744 = vsub.f32 %v510, %v713
  %v745 = vsub.f32 %v513, %v713
  %v746 = vsub.f32 %v518, %v713
  %v747 = vsub.f32 %v521, %v713
  %v748 = vsub.f32 %v526, %v713
  %v749 = vsub.f32 %v529, %v713
  %v750 = vsub.f32 %v534, %v713
  %v751 = vsub.f32 %v537, %v713
  %v752 = vsub.f32 %v542, %v713
  %v753 = vsub.f32 %v545, %v713
  %v754 = vsub.f32 %v550, %v713
  %v755 = vsub.f32 %v553, %v713
  %v756 = vsub.f32 %v558, %v713
  %v757 = vsub.f32 %v561, %v713
  %v758 = vsub.f32 %v566, %v713
  %v759 = vsub.f32 %v569, %v713
  %v760 = vsub.f32 %v574, %v713
  %v761 = vsub.f32 %v577, %v713
  %v762 = vsub.f32 %v582, %v713
  %v763 = vsub.f32 %v585, %v713
  %v764 = vsub.f32 %v590, %v713
  %v765 = vsub.f32 %v593, %v713
  %v766 = vsub.f32 %v598, %v713
  %v767 = vsub.f32 %v601, %v713
  %v768 = vsub.f32 %v606, %v713
  %v769 = vsub.f32 %v609, %v713
  %v770 = vsub.f32 %v614, %v713
  %v771 = vsub.f32 %v617, %v713
  %v772 = vsub.f32 %v622, %v713
  %v773 = vsub.f32 %v625, %v713
  %v774 = vsub.f32 %v630, %v713
  %v775 = vsub.f32 %v633, %v713
  %v776 = vsub.f32 %v638, %v713
  %v777 = vsub.f32 %v641, %v713
  %v778 = vmul.f32 %v714, %v714
  %v779 = vmul.f32 %v715, %v715
  %v780 = vmul.f32 %v716, %v716
  %v781 = vmul.f32 %v717, %v717
  %v782 = vmul.f32 %v718, %v718
  %v783 = vmul.f32 %v719, %v719
  %v784 = vmul.f32 %v720, %v720
  %v785 = vmul.f32 %v721, %v721
  %v786 = vmul.f32 %v722, %v722
  %v787 = vmul.f32 %v723, %v723
  %v788 = vmul.f32 %v724, %v724
  %v789 = vmul.f32 %v725, %v725
  %v790 = vmul.f32 %v726, %v726
  %v791 = vmul.f32 %v727, %v727
  %v792 = vmul.f32 %v728, %v728
  %v793 = vmul.f32 %v729, %v729
  %v794 = vmul.f32 %v730, %v730
  %v795 = vmul.f32 %v731, %v731
  %v796 = vmul.f32 %v732, %v732
  %v797 = vmul.f32 %v733, %v733
  %v798 = vmul.f32 %v734, %v734
  %v799 = vmul.f32 %v735, %v735
  %v800 = vmul.f32 %v736, %v736
  %v801 = vmul.f32 %v737, %v737
  %v802 = vmul.f32 %v738, %v738
  %v803 = vmul.f32 %v739, %v739
  %v804 = vmul.f32 %v740, %v740
  %v805 = vmul.f32 %v741, %v741
  %v806 = vmul.f32 %v742, %v742
  %v807 = vmul.f32 %v743, %v743
  %v808 = vmul.f32 %v744, %v744
  %v809 = vmul.f32 %v745, %v745
  %v810 = vmul.f32 %v746, %v746
  %v811 = vmul.f32 %v747, %v747
  %v812 = vmul.f32 %v748, %v748
  %v813 = vmul.f32 %v749, %v749
  %v814 = vmul.f32 %v750, %v750
  %v815 = vmul.f32 %v751, %v751
  %v816 = vmul.f32 %v752, %v752
  %v817 = vmul.f32 %v753, %v753
  %v818 = vmul.f32 %v754, %v754
  %v819 = vmul.f32 %v755, %v755
  %v820 = vmul.f32 %v756, %v756
  %v821 = vmul.f32 %v757, %v757
  %v822 = vmul.f32 %v758, %v758
  %v823 = vmul.f32 %v759, %v759
  %v824 = vmul.f32 %v760, %v760
  %v825 = vmul.f32 %v761, %v761
  %v826 = vmul.f32 %v762, %v762
  %v827 = vmul.f32 %v763, %v763
  %v828 = vmul.f32 %v764, %v764
  %v829 = vmul.f32 %v765, %v765
  %v830 = vmul.f32 %v766, %v766
  %v831 = vmul.f32 %v767, %v767
  %v832 = vmul.f32 %v768, %v768
  %v833 = vmul.f32 %v769, %v769
  %v834 = vmul.f32 %v770, %v770
  %v835 = vmul.f32 %v771, %v771
  %v836 = vmul.f32 %v772, %v772
  %v837 = vmul.f32 %v773, %v773
  %v838 = vmul.f32 %v774, %v774
  %v839 = vmul.f32 %v775, %v775
  %v840 = vmul.f32 %v776, %v776
  %v841 = vmul.f32 %v777, %v777
  %v842 = vadd.f32 %v778, %v779
  %v843 = vadd.f32 %v842, %v780
  %v844 = vadd.f32 %v843, %v781
  %v845 = vadd.f32 %v844, %v782
  %v846 = vadd.f32 %v845, %v783
  %v847 = vadd.f32 %v846, %v784
  %v848 = vadd.f32 %v847, %v785
  %v849 = vadd.f32 %v848, %v786
  %v850 = vadd.f32 %v849, %v787
  %v851 = vadd.f32 %v850, %v788
  %v852 = vadd.f32 %v851, %v789
  %v853 = vadd.f32 %v852, %v790
  %v854 = vadd.f32 %v853, %v791
  %v855 = vadd.f32 %v854, %v792
  %v856 = vadd.f32 %v855, %v793
  %v857 = vadd.f32 %v856, %v794
  %v858 = vadd.f32 %v857, %v795
  %v859 = vadd.f32 %v858, %v796
  %v860 = vadd.f32 %v859, %v797
  %v861 = vadd.f32 %v860, %v798
  %v862 = vadd.f32 %v861, %v799
  %v863 = vadd.f32 %v862, %v800
  %v864 = vadd.f32 %v863, %v801
  %v865 = vadd.f32 %v864, %v802
  %v866 = vadd.f32 %v865, %v803
  %v867 = vadd.f32 %v866, %v804
  %v868 = vadd.f32 %v867, %v805
  %v869 = vadd.f32 %v868, %v806
  %v870 = vadd.f32 %v869, %v807
  %v871 = vadd.f32 %v870, %v808
  %v872 = vadd.f32 %v871, %v809
  %v873 = vadd.f32 %v872, %v810
  %v874 = vadd.f32 %v873, %v811
  %v875 = vadd.f32 %v874, %v812
  %v876 = vadd.f32 %v875, %v813
  %v877 = vadd.f32 %v876, %v814
  %v878 = vadd.f32 %v877, %v815
  %v879 = vadd.f32 %v878, %v816
  %v880 = vadd.f32 %v879, %v817
  %v881 = vadd.f32 %v880, %v818
  %v882 = vadd.f32 %v881, %v819
  %v883 = vadd.f32 %v882, %v820
  %v884 = vadd.f32 %v883, %v821
  %v885 = vadd.f32 %v884, %v822
  %v886 = vadd.f32 %v885, %v823
  %v887 = vadd.f32 %v886, %v824
  %v888 = vadd.f32 %v887, %v825
  %v889 = vadd.f32 %v888, %v826
  %v890 = vadd.f32 %v889, %v827
  %v891 = vadd.f32 %v890, %v828
  %v892 = vadd.f32 %v891, %v829
  %v893 = vadd.f32 %v892, %v830
  %v894 = vadd.f32 %v893, %v831
  %v895 = vadd.f32 %v894, %v832
  %v896 = vadd.f32 %v895, %v833
  %v897 = vadd.f32 %v896, %v834
  %v898 = vadd.f32 %v897, %v835
  %v899 = vadd.f32 %v898, %v836
  %v900 = vadd.f32 %v899, %v837
  %v901 = vadd.f32 %v900, %v838
  %v902 = vadd.f32 %v901, %v839
  %v903 = vadd.f32 %v902, %v840
  %v904 = vadd.f32 %v903, %v841
  %v905 = vrot.slane %v904, 4
  %v906 = vadd.f32 %v904, %v905
  %v907 = vrot.slane %v906, 2
  %v908 = vadd.f32 %v906, %v907
  %v909 = vrot.slane %v908, 1
  %v910 = vadd.f32 %v908, %v909
  %v911 = vmul.f32 %v910, 0.001953125
  %v912 = vld [vmem:[%s2] sm:$0x1]
  %v913 = vadd.f32 %v911, 1e-05
  %v914 = vrsqrt.pop %v913
  %v915 = vmul.f32 %v912, %v914
  %v917 = vlaneseq
  %v918 = vshrl.u32 %v917, 7
  %v919 = vsub.s32 0, %v918
  %v920 = vrot.slane %v915, %v919
  %v922 = vmul.f32 %v714, %v920
  %v923 = vmul.f32 %v715, %v920
  %v924 = vmul.f32 %v716, %v920
  %v925 = vmul.f32 %v717, %v920
  %v926 = vmul.f32 %v718, %v920
  %v927 = vmul.f32 %v719, %v920
  %v928 = vmul.f32 %v720, %v920
  %v929 = vmul.f32 %v721, %v920
  %v930 = vmul.f32 %v722, %v920
  %v931 = vmul.f32 %v723, %v920
  %v932 = vmul.f32 %v724, %v920
  %v933 = vmul.f32 %v725, %v920
  %v934 = vmul.f32 %v726, %v920
  %v935 = vmul.f32 %v727, %v920
  %v936 = vmul.f32 %v728, %v920
  %v937 = vmul.f32 %v729, %v920
  %v938 = vmul.f32 %v730, %v920
  %v939 = vmul.f32 %v731, %v920
  %v940 = vmul.f32 %v732, %v920
  %v941 = vmul.f32 %v733, %v920
  %v942 = vmul.f32 %v734, %v920
  %v943 = vmul.f32 %v735, %v920
  %v944 = vmul.f32 %v736, %v920
  %v945 = vmul.f32 %v737, %v920
  %v946 = vmul.f32 %v738, %v920
  %v947 = vmul.f32 %v739, %v920
  %v948 = vmul.f32 %v740, %v920
  %v949 = vmul.f32 %v741, %v920
  %v950 = vmul.f32 %v742, %v920
  %v951 = vmul.f32 %v743, %v920
  %v952 = vmul.f32 %v744, %v920
  %v953 = vmul.f32 %v745, %v920
  %v954 = vmul.f32 %v746, %v920
  %v955 = vmul.f32 %v747, %v920
  %v956 = vmul.f32 %v748, %v920
  %v957 = vmul.f32 %v749, %v920
  %v958 = vmul.f32 %v750, %v920
  %v959 = vmul.f32 %v751, %v920
  %v960 = vmul.f32 %v752, %v920
  %v961 = vmul.f32 %v753, %v920
  %v962 = vmul.f32 %v754, %v920
  %v963 = vmul.f32 %v755, %v920
  %v964 = vmul.f32 %v756, %v920
  %v965 = vmul.f32 %v757, %v920
  %v966 = vmul.f32 %v758, %v920
  %v967 = vmul.f32 %v759, %v920
  %v968 = vmul.f32 %v760, %v920
  %v969 = vmul.f32 %v761, %v920
  %v970 = vmul.f32 %v762, %v920
  %v971 = vmul.f32 %v763, %v920
  %v972 = vmul.f32 %v764, %v920
  %v973 = vmul.f32 %v765, %v920
  %v974 = vmul.f32 %v766, %v920
  %v975 = vmul.f32 %v767, %v920
  %v976 = vmul.f32 %v768, %v920
  %v977 = vmul.f32 %v769, %v920
  %v978 = vmul.f32 %v770, %v920
  %v979 = vmul.f32 %v771, %v920
  %v980 = vmul.f32 %v772, %v920
  %v981 = vmul.f32 %v773, %v920
  %v982 = vmul.f32 %v774, %v920
  %v983 = vmul.f32 %v775, %v920
  %v984 = vmul.f32 %v776, %v920
  %v985 = vmul.f32 %v777, %v920
  %v986 = vld [vmem:[%s3] sm:$0x1]
  %v988 = vlaneseq
  %v989 = vshrl.u32 %v988, 7
  %v990 = vsub.s32 0, %v989
  %v991 = vrot.slane %v986, %v990
  %v993 = vadd.f32 %v922, %v991
  %v994 = vadd.f32 %v923, %v991
  %v995 = vadd.f32 %v924, %v991
  %v996 = vadd.f32 %v925, %v991
  %v997 = vadd.f32 %v926, %v991
  %v998 = vadd.f32 %v927, %v991
  %v999 = vadd.f32 %v928, %v991
  %v1000 = vadd.f32 %v929, %v991
  %v1001 = vadd.f32 %v930, %v991
  %v1002 = vadd.f32 %v931, %v991
  %v1003 = vadd.f32 %v932, %v991
  %v1004 = vadd.f32 %v933, %v991
  %v1005 = vadd.f32 %v934, %v991
  %v1006 = vadd.f32 %v935, %v991
  %v1007 = vadd.f32 %v936, %v991
  %v1008 = vadd.f32 %v937, %v991
  %v1009 = vadd.f32 %v938, %v991
  %v1010 = vadd.f32 %v939, %v991
  %v1011 = vadd.f32 %v940, %v991
  %v1012 = vadd.f32 %v941, %v991
  %v1013 = vadd.f32 %v942, %v991
  %v1014 = vadd.f32 %v943, %v991
  %v1015 = vadd.f32 %v944, %v991
  %v1016 = vadd.f32 %v945, %v991
  %v1017 = vadd.f32 %v946, %v991
  %v1018 = vadd.f32 %v947, %v991
  %v1019 = vadd.f32 %v948, %v991
  %v1020 = vadd.f32 %v949, %v991
  %v1021 = vadd.f32 %v950, %v991
  %v1022 = vadd.f32 %v951, %v991
  %v1023 = vadd.f32 %v952, %v991
  %v1024 = vadd.f32 %v953, %v991
  %v1025 = vadd.f32 %v954, %v991
  %v1026 = vadd.f32 %v955, %v991
  %v1027 = vadd.f32 %v956, %v991
  %v1028 = vadd.f32 %v957, %v991
  %v1029 = vadd.f32 %v958, %v991
  %v1030 = vadd.f32 %v959, %v991
  %v1031 = vadd.f32 %v960, %v991
  %v1032 = vadd.f32 %v961, %v991
  %v1033 = vadd.f32 %v962, %v991
  %v1034 = vadd.f32 %v963, %v991
  %v1035 = vadd.f32 %v964, %v991
  %v1036 = vadd.f32 %v965, %v991
  %v1037 = vadd.f32 %v966, %v991
  %v1038 = vadd.f32 %v967, %v991
  %v1039 = vadd.f32 %v968, %v991
  %v1040 = vadd.f32 %v969, %v991
  %v1041 = vadd.f32 %v970, %v991
  %v1042 = vadd.f32 %v971, %v991
  %v1043 = vadd.f32 %v972, %v991
  %v1044 = vadd.f32 %v973, %v991
  %v1045 = vadd.f32 %v974, %v991
  %v1046 = vadd.f32 %v975, %v991
  %v1047 = vadd.f32 %v976, %v991
  %v1048 = vadd.f32 %v977, %v991
  %v1049 = vadd.f32 %v978, %v991
  %v1050 = vadd.f32 %v979, %v991
  %v1051 = vadd.f32 %v980, %v991
  %v1052 = vadd.f32 %v981, %v991
  %v1053 = vadd.f32 %v982, %v991
  %v1054 = vadd.f32 %v983, %v991
  %v1055 = vadd.f32 %v984, %v991
  %v1056 = vadd.f32 %v985, %v991
  %v1057 = vmax.f32 %v993, 0.0
  %v1058 = vmax.f32 %v994, 0.0
  %v1059 = vmax.f32 %v995, 0.0
  %v1060 = vmax.f32 %v996, 0.0
  %v1061 = vmax.f32 %v997, 0.0
  %v1062 = vmax.f32 %v998, 0.0
  %v1063 = vmax.f32 %v999, 0.0
  %v1064 = vmax.f32 %v1000, 0.0
  %v1065 = vmax.f32 %v1001, 0.0
  %v1066 = vmax.f32 %v1002, 0.0
  %v1067 = vmax.f32 %v1003, 0.0
  %v1068 = vmax.f32 %v1004, 0.0
  %v1069 = vmax.f32 %v1005, 0.0
  %v1070 = vmax.f32 %v1006, 0.0
  %v1071 = vmax.f32 %v1007, 0.0
  %v1072 = vmax.f32 %v1008, 0.0
  %v1073 = vmax.f32 %v1009, 0.0
  %v1074 = vmax.f32 %v1010, 0.0
  %v1075 = vmax.f32 %v1011, 0.0
  %v1076 = vmax.f32 %v1012, 0.0
  %v1077 = vmax.f32 %v1013, 0.0
  %v1078 = vmax.f32 %v1014, 0.0
  %v1079 = vmax.f32 %v1015, 0.0
  %v1080 = vmax.f32 %v1016, 0.0
  %v1081 = vmax.f32 %v1017, 0.0
  %v1082 = vmax.f32 %v1018, 0.0
  %v1083 = vmax.f32 %v1019, 0.0
  %v1084 = vmax.f32 %v1020, 0.0
  %v1085 = vmax.f32 %v1021, 0.0
  %v1086 = vmax.f32 %v1022, 0.0
  %v1087 = vmax.f32 %v1023, 0.0
  %v1088 = vmax.f32 %v1024, 0.0
  %v1089 = vmax.f32 %v1025, 0.0
  %v1090 = vmax.f32 %v1026, 0.0
  %v1091 = vmax.f32 %v1027, 0.0
  %v1092 = vmax.f32 %v1028, 0.0
  %v1093 = vmax.f32 %v1029, 0.0
  %v1094 = vmax.f32 %v1030, 0.0
  %v1095 = vmax.f32 %v1031, 0.0
  %v1096 = vmax.f32 %v1032, 0.0
  %v1097 = vmax.f32 %v1033, 0.0
  %v1098 = vmax.f32 %v1034, 0.0
  %v1099 = vmax.f32 %v1035, 0.0
  %v1100 = vmax.f32 %v1036, 0.0
  %v1101 = vmax.f32 %v1037, 0.0
  %v1102 = vmax.f32 %v1038, 0.0
  %v1103 = vmax.f32 %v1039, 0.0
  %v1104 = vmax.f32 %v1040, 0.0
  %v1105 = vmax.f32 %v1041, 0.0
  %v1106 = vmax.f32 %v1042, 0.0
  %v1107 = vmax.f32 %v1043, 0.0
  %v1108 = vmax.f32 %v1044, 0.0
  %v1109 = vmax.f32 %v1045, 0.0
  %v1110 = vmax.f32 %v1046, 0.0
  %v1111 = vmax.f32 %v1047, 0.0
  %v1112 = vmax.f32 %v1048, 0.0
  %v1113 = vmax.f32 %v1049, 0.0
  %v1114 = vmax.f32 %v1050, 0.0
  %v1115 = vmax.f32 %v1051, 0.0
  %v1116 = vmax.f32 %v1052, 0.0
  %v1117 = vmax.f32 %v1053, 0.0
  %v1118 = vmax.f32 %v1054, 0.0
  %v1119 = vmax.f32 %v1055, 0.0
  %v1120 = vmax.f32 %v1056, 0.0
  %1121 = vst [vmem:[%s4] sm:$0xff] %v1057
  %1122 = vst [vmem:[%s4 + $0x8] sm:$0xff] %v1058
  %1123 = vst [vmem:[%s4 + $0x10] sm:$0xff] %v1059
  %1124 = vst [vmem:[%s4 + $0x18] sm:$0xff] %v1060
  %1125 = vst [vmem:[%s4 + $0x20] sm:$0xff] %v1061
  %1126 = vst [vmem:[%s4 + $0x28] sm:$0xff] %v1062
  %1127 = vst [vmem:[%s4 + $0x30] sm:$0xff] %v1063
  %1128 = vst [vmem:[%s4 + $0x38] sm:$0xff] %v1064
  %1129 = vst [vmem:[%s4 + $0x40] sm:$0xff] %v1065
  %1130 = vst [vmem:[%s4 + $0x48] sm:$0xff] %v1066
  %1131 = vst [vmem:[%s4 + $0x50] sm:$0xff] %v1067
  %1132 = vst [vmem:[%s4 + $0x58] sm:$0xff] %v1068
  %1133 = vst [vmem:[%s4 + $0x60] sm:$0xff] %v1069
  %1134 = vst [vmem:[%s4 + $0x68] sm:$0xff] %v1070
  %1135 = vst [vmem:[%s4 + $0x70] sm:$0xff] %v1071
  %1136 = vst [vmem:[%s4 + $0x78] sm:$0xff] %v1072
  %1137 = vst [vmem:[%s4 + $0x80] sm:$0xff] %v1073
  %1138 = vst [vmem:[%s4 + $0x88] sm:$0xff] %v1074
  %1139 = vst [vmem:[%s4 + $0x90] sm:$0xff] %v1075
  %1140 = vst [vmem:[%s4 + $0x98] sm:$0xff] %v1076
  %1141 = vst [vmem:[%s4 + $0xa0] sm:$0xff] %v1077
  %1142 = vst [vmem:[%s4 + $0xa8] sm:$0xff] %v1078
  %1143 = vst [vmem:[%s4 + $0xb0] sm:$0xff] %v1079
  %1144 = vst [vmem:[%s4 + $0xb8] sm:$0xff] %v1080
  %1145 = vst [vmem:[%s4 + $0xc0] sm:$0xff] %v1081
  %1146 = vst [vmem:[%s4 + $0xc8] sm:$0xff] %v1082
  %1147 = vst [vmem:[%s4 + $0xd0] sm:$0xff] %v1083
  %1148 = vst [vmem:[%s4 + $0xd8] sm:$0xff] %v1084
  %1149 = vst [vmem:[%s4 + $0xe0] sm:$0xff] %v1085
  %1150 = vst [vmem:[%s4 + $0xe8] sm:$0xff] %v1086
  %1151 = vst [vmem:[%s4 + $0xf0] sm:$0xff] %v1087
  %1152 = vst [vmem:[%s4 + $0xf8] sm:$0xff] %v1088
  %1153 = vst [vmem:[%s4 + $0x100] sm:$0xff] %v1089
  %1154 = vst [vmem:[%s4 + $0x108] sm:$0xff] %v1090
  %1155 = vst [vmem:[%s4 + $0x110] sm:$0xff] %v1091
  %1156 = vst [vmem:[%s4 + $0x118] sm:$0xff] %v1092
  %1157 = vst [vmem:[%s4 + $0x120] sm:$0xff] %v1093
  %1158 = vst [vmem:[%s4 + $0x128] sm:$0xff] %v1094
  %1159 = vst [vmem:[%s4 + $0x130] sm:$0xff] %v1095
  %1160 = vst [vmem:[%s4 + $0x138] sm:$0xff] %v1096
  %1161 = vst [vmem:[%s4 + $0x140] sm:$0xff] %v1097
  %1162 = vst [vmem:[%s4 + $0x148] sm:$0xff] %v1098
  %1163 = vst [vmem:[%s4 + $0x150] sm:$0xff] %v1099
  %1164 = vst [vmem:[%s4 + $0x158] sm:$0xff] %v1100
  %1165 = vst [vmem:[%s4 + $0x160] sm:$0xff] %v1101
  %1166 = vst [vmem:[%s4 + $0x168] sm:$0xff] %v1102
  %1167 = vst [vmem:[%s4 + $0x170] sm:$0xff] %v1103
  %1168 = vst [vmem:[%s4 + $0x178] sm:$0xff] %v1104
  %1169 = vst [vmem:[%s4 + $0x180] sm:$0xff] %v1105
  %1170 = vst [vmem:[%s4 + $0x188] sm:$0xff] %v1106
  %1171 = vst [vmem:[%s4 + $0x190] sm:$0xff] %v1107
  %1172 = vst [vmem:[%s4 + $0x198] sm:$0xff] %v1108
  %1173 = vst [vmem:[%s4 + $0x1a0] sm:$0xff] %v1109
  %1174 = vst [vmem:[%s4 + $0x1a8] sm:$0xff] %v1110
  %1175 = vst [vmem:[%s4 + $0x1b0] sm:$0xff] %v1111
  %1176 = vst [vmem:[%s4 + $0x1b8] sm:$0xff] %v1112
  %1177 = vst [vmem:[%s4 + $0x1c0] sm:$0xff] %v1113
  %1178 = vst [vmem:[%s4 + $0x1c8] sm:$0xff] %v1114
  %1179 = vst [vmem:[%s4 + $0x1d0] sm:$0xff] %v1115
  %1180 = vst [vmem:[%s4 + $0x1d8] sm:$0xff] %v1116
  %1181 = vst [vmem:[%s4 + $0x1e0] sm:$0xff] %v1117
  %1182 = vst [vmem:[%s4 + $0x1e8] sm:$0xff] %v1118
  %1183 = vst [vmem:[%s4 + $0x1f0] sm:$0xff] %v1119
  %1184 = vst [vmem:[%s4 + $0x1f8] sm:$0xff] %v1120
  // Predicated region
  $region18: #{generator_forward.27} parent=0 // pred_check
    _
  $region19: #{generator_forward.27} parent=0 // pred_check_branch
    %1186 = sbr.rel (0) target = $region21
  $region20: #{generator_forward.27} parent=0 // pred_region
    _
  $region21: #{generator_forward.27} parent=0 // pred_fallthru
    _
  // Predicated region
  $region22: #{generator_forward.27} parent=0 // pred_check
    _
  $region23: #{generator_forward.27} parent=0 // pred_check_branch
    %1188 = sbr.rel (0) target = $region25
  $region24: #{generator_forward.27} parent=0 // pred_region
    _
  $region25: #{generator_forward.27} parent=0 // pred_fallthru
    _

// kernel: generator_forward.28
$region0: #{generator_forward.28}
  #allocation0 [shape = 'u32[]', space=smem, size = 0x4, offset = 0x4, fixed_abs, tag = 'smem constant byte address 0x4 - core index']
  #allocation1 [shape = 'u32[144,128]{1,0:T(1,128)}', space=vmem, size = 0x12000, scoped, tag = 'internal scratch']
  %s0 = inlined_call_operand.vmem [shape: bf16[512,72], index: 0, kind: input, shape index: {}]
  %s1 = inlined_call_operand.vmem [shape: bf16[72,128], index: 1, kind: input, shape index: {}]
  %s2 = inlined_call_operand.vmem [shape: f32[1,128], index: 2, kind: input, shape index: {}]
  %s3 = inlined_call_operand.vmem [shape: f32[1,128], index: 3, kind: input, shape index: {}]
  %s4 = inlined_call_operand.vmem [shape: f32[512,128], index: 4, kind: output, shape index: {}]
  %s5 = sld [smem:[#allocation0]]
  $region26: #{generator_forward.28} parent=0
    _
  %s7 = ssub.s32 1, %s5
  %s8 = scalar_select 0, %s7, %s5
  // Predicated region
  $region2: #{generator_forward.28} parent=0 // pred_check
    _
  $region3: #{generator_forward.28} parent=0 // pred_check_branch
    %10 = sbr.rel (0) target = $region5
  $region4: #{generator_forward.28} parent=0 // pred_region
    _
  $region5: #{generator_forward.28} parent=0 // pred_fallthru
    _
  // Predicated region
  $region6: #{generator_forward.28} parent=0 // pred_check
    _
  $region7: #{generator_forward.28} parent=0 // pred_check_branch
    %12 = sbr.rel (0) target = $region9
  $region8: #{generator_forward.28} parent=0 // pred_region
    _
  $region9: #{generator_forward.28} parent=0 // pred_fallthru
    _
  // Predicated region
  $region10: #{generator_forward.28} parent=0 // pred_check
    _
  $region11: #{generator_forward.28} parent=0 // pred_check_branch
    %14 = sbr.rel (0) target = $region13
  $region12: #{generator_forward.28} parent=0 // pred_region
    _
  $region13: #{generator_forward.28} parent=0 // pred_fallthru
    _
  // Predicated region
  $region14: #{generator_forward.28} parent=0 // pred_check
    _
  $region15: #{generator_forward.28} parent=0 // pred_check_branch
    %16 = sbr.rel (0) target = $region17
  $region16: #{generator_forward.28} parent=0 // pred_region
    _
  $region17: #{generator_forward.28} parent=0 // pred_fallthru
    _
  %v18 = vld [vmem:[%s0] sm:$0xf]
  %v19 = vld [vmem:[%s0 + $0x4] sm:$0xf]
  %v20 = vld [vmem:[%s0 + $0x8] sm:$0xf]
  %v21 = vld [vmem:[%s0 + $0xc] sm:$0xf]
  %v22 = vld [vmem:[%s0 + $0x10] sm:$0xf]
  %v23 = vld [vmem:[%s0 + $0x14] sm:$0xf]
  %v24 = vld [vmem:[%s0 + $0x18] sm:$0xf]
  %v25 = vld [vmem:[%s0 + $0x1c] sm:$0xf]
  %v26 = vld [vmem:[%s0 + $0x20] sm:$0xf]
  %v27 = vld [vmem:[%s0 + $0x24] sm:$0xf]
  %v28 = vld [vmem:[%s0 + $0x28] sm:$0xf]
  %v29 = vld [vmem:[%s0 + $0x2c] sm:$0xf]
  %v30 = vld [vmem:[%s0 + $0x30] sm:$0xf]
  %v31 = vld [vmem:[%s0 + $0x34] sm:$0xf]
  %v32 = vld [vmem:[%s0 + $0x38] sm:$0xf]
  %v33 = vld [vmem:[%s0 + $0x3c] sm:$0xf]
  %v34 = vld [vmem:[%s0 + $0x40] sm:$0xf]
  %v35 = vld [vmem:[%s0 + $0x44] sm:$0xf]
  %v36 = vld [vmem:[%s0 + $0x48] sm:$0xf]
  %v37 = vld [vmem:[%s0 + $0x4c] sm:$0xf]
  %v38 = vld [vmem:[%s0 + $0x50] sm:$0xf]
  %v39 = vld [vmem:[%s0 + $0x54] sm:$0xf]
  %v40 = vld [vmem:[%s0 + $0x58] sm:$0xf]
  %v41 = vld [vmem:[%s0 + $0x5c] sm:$0xf]
  %v42 = vld [vmem:[%s0 + $0x60] sm:$0xf]
  %v43 = vld [vmem:[%s0 + $0x64] sm:$0xf]
  %v44 = vld [vmem:[%s0 + $0x68] sm:$0xf]
  %v45 = vld [vmem:[%s0 + $0x6c] sm:$0xf]
  %v46 = vld [vmem:[%s0 + $0x70] sm:$0xf]
  %v47 = vld [vmem:[%s0 + $0x74] sm:$0xf]
  %v48 = vld [vmem:[%s0 + $0x78] sm:$0xf]
  %v49 = vld [vmem:[%s0 + $0x7c] sm:$0xf]
  %v50 = vld [vmem:[%s0 + $0x80] sm:$0xf]
  %v51 = vld [vmem:[%s0 + $0x84] sm:$0xf]
  %v52 = vld [vmem:[%s0 + $0x88] sm:$0xf]
  %v53 = vld [vmem:[%s0 + $0x8c] sm:$0xf]
  %v54 = vld [vmem:[%s0 + $0x90] sm:$0xf]
  %v55 = vld [vmem:[%s0 + $0x94] sm:$0xf]
  %v56 = vld [vmem:[%s0 + $0x98] sm:$0xf]
  %v57 = vld [vmem:[%s0 + $0x9c] sm:$0xf]
  %v58 = vld [vmem:[%s0 + $0xa0] sm:$0xf]
  %v59 = vld [vmem:[%s0 + $0xa4] sm:$0xf]
  %v60 = vld [vmem:[%s0 + $0xa8] sm:$0xf]
  %v61 = vld [vmem:[%s0 + $0xac] sm:$0xf]
  %v62 = vld [vmem:[%s0 + $0xb0] sm:$0xf]
  %v63 = vld [vmem:[%s0 + $0xb4] sm:$0xf]
  %v64 = vld [vmem:[%s0 + $0xb8] sm:$0xf]
  %v65 = vld [vmem:[%s0 + $0xbc] sm:$0xf]
  %v66 = vld [vmem:[%s0 + $0xc0] sm:$0xf]
  %v67 = vld [vmem:[%s0 + $0xc4] sm:$0xf]
  %v68 = vld [vmem:[%s0 + $0xc8] sm:$0xf]
  %v69 = vld [vmem:[%s0 + $0xcc] sm:$0xf]
  %v70 = vld [vmem:[%s0 + $0xd0] sm:$0xf]
  %v71 = vld [vmem:[%s0 + $0xd4] sm:$0xf]
  %v72 = vld [vmem:[%s0 + $0xd8] sm:$0xf]
  %v73 = vld [vmem:[%s0 + $0xdc] sm:$0xf]
  %v74 = vld [vmem:[%s0 + $0xe0] sm:$0xf]
  %v75 = vld [vmem:[%s0 + $0xe4] sm:$0xf]
  %v76 = vld [vmem:[%s0 + $0xe8] sm:$0xf]
  %v77 = vld [vmem:[%s0 + $0xec] sm:$0xf]
  %v78 = vld [vmem:[%s0 + $0xf0] sm:$0xf]
  %v79 = vld [vmem:[%s0 + $0xf4] sm:$0xf]
  %v80 = vld [vmem:[%s0 + $0xf8] sm:$0xf]
  %v81 = vld [vmem:[%s0 + $0xfc] sm:$0xf]
  %v82 = vld [vmem:[%s1] sm:$0xf]
  %v83 = vld [vmem:[%s1 + $0x4] sm:$0xf]
  %v84 = vld [vmem:[%s1 + $0x8] sm:$0xf]
  %v85 = vld [vmem:[%s1 + $0xc] sm:$0xf]
  %v86 = vld [vmem:[%s1 + $0x10] sm:$0xf]
  %v87 = vld [vmem:[%s1 + $0x14] sm:$0xf]
  %v88 = vld [vmem:[%s1 + $0x18] sm:$0xf]
  %v89 = vld [vmem:[%s1 + $0x1c] sm:$0xf]
  %v90 = vld [vmem:[%s1 + $0x20] sm:$0xf]
  %v155 = vunpack.c.l.b16 %v18
  %v156 = vunpack.c.l.b16 %v19
  %v157 = vunpack.c.l.b16 %v20
  %v158 = vunpack.c.l.b16 %v21
  %v159 = vunpack.c.l.b16 %v22
  %v160 = vunpack.c.l.b16 %v23
  %v161 = vunpack.c.l.b16 %v24
  %v162 = vunpack.c.l.b16 %v25
  %v163 = vunpack.c.l.b16 %v26
  %v164 = vunpack.c.l.b16 %v27
  %v165 = vunpack.c.l.b16 %v28
  %v166 = vunpack.c.l.b16 %v29
  %v167 = vunpack.c.l.b16 %v30
  %v168 = vunpack.c.l.b16 %v31
  %v169 = vunpack.c.l.b16 %v32
  %v170 = vunpack.c.l.b16 %v33
  %v171 = vunpack.c.l.b16 %v34
  %v172 = vunpack.c.l.b16 %v35
  %v173 = vunpack.c.l.b16 %v36
  %v174 = vunpack.c.l.b16 %v37
  %v175 = vunpack.c.l.b16 %v38
  %v176 = vunpack.c.l.b16 %v39
  %v177 = vunpack.c.l.b16 %v40
  %v178 = vunpack.c.l.b16 %v41
  %v179 = vunpack.c.l.b16 %v42
  %v180 = vunpack.c.l.b16 %v43
  %v181 = vunpack.c.l.b16 %v44
  %v182 = vunpack.c.l.b16 %v45
  %v183 = vunpack.c.l.b16 %v46
  %v184 = vunpack.c.l.b16 %v47
  %v185 = vunpack.c.l.b16 %v48
  %v186 = vunpack.c.l.b16 %v49
  %v187 = vunpack.c.l.b16 %v50
  %v188 = vunpack.c.l.b16 %v51
  %v189 = vunpack.c.l.b16 %v52
  %v190 = vunpack.c.l.b16 %v53
  %v191 = vunpack.c.l.b16 %v54
  %v192 = vunpack.c.l.b16 %v55
  %v193 = vunpack.c.l.b16 %v56
  %v194 = vunpack.c.l.b16 %v57
  %v195 = vunpack.c.l.b16 %v58
  %v196 = vunpack.c.l.b16 %v59
  %v197 = vunpack.c.l.b16 %v60
  %v198 = vunpack.c.l.b16 %v61
  %v199 = vunpack.c.l.b16 %v62
  %v200 = vunpack.c.l.b16 %v63
  %v201 = vunpack.c.l.b16 %v64
  %v202 = vunpack.c.l.b16 %v65
  %v203 = vunpack.c.l.b16 %v66
  %v204 = vunpack.c.l.b16 %v67
  %v205 = vunpack.c.l.b16 %v68
  %v206 = vunpack.c.l.b16 %v69
  %v207 = vunpack.c.l.b16 %v70
  %v208 = vunpack.c.l.b16 %v71
  %v209 = vunpack.c.l.b16 %v72
  %v210 = vunpack.c.l.b16 %v73
  %v211 = vunpack.c.l.b16 %v74
  %v212 = vunpack.c.l.b16 %v75
  %v213 = vunpack.c.l.b16 %v76
  %v214 = vunpack.c.l.b16 %v77
  %v215 = vunpack.c.l.b16 %v78
  %v216 = vunpack.c.l.b16 %v79
  %v217 = vunpack.c.l.b16 %v80
  %v218 = vunpack.c.l.b16 %v81
  %v219 = vpack.c.b16 %v156, %v155
  %v220 = vpack.c.b16 %v158, %v157
  %v221 = vpack.c.b16 %v160, %v159
  %v222 = vpack.c.b16 %v162, %v161
  %v223 = vpack.c.b16 %v164, %v163
  %v224 = vpack.c.b16 %v166, %v165
  %v225 = vpack.c.b16 %v168, %v167
  %v226 = vpack.c.b16 %v170, %v169
  %v227 = vpack.c.b16 %v172, %v171
  %v228 = vpack.c.b16 %v174, %v173
  %v229 = vpack.c.b16 %v176, %v175
  %v230 = vpack.c.b16 %v178, %v177
  %v231 = vpack.c.b16 %v180, %v179
  %v232 = vpack.c.b16 %v182, %v181
  %v233 = vpack.c.b16 %v184, %v183
  %v234 = vpack.c.b16 %v186, %v185
  %v235 = vpack.c.b16 %v188, %v187
  %v236 = vpack.c.b16 %v190, %v189
  %v237 = vpack.c.b16 %v192, %v191
  %v238 = vpack.c.b16 %v194, %v193
  %v239 = vpack.c.b16 %v196, %v195
  %v240 = vpack.c.b16 %v198, %v197
  %v241 = vpack.c.b16 %v200, %v199
  %v242 = vpack.c.b16 %v202, %v201
  %v243 = vpack.c.b16 %v204, %v203
  %v244 = vpack.c.b16 %v206, %v205
  %v245 = vpack.c.b16 %v208, %v207
  %v246 = vpack.c.b16 %v210, %v209
  %v247 = vpack.c.b16 %v212, %v211
  %v248 = vpack.c.b16 %v214, %v213
  %v249 = vpack.c.b16 %v216, %v215
  %v250 = vpack.c.b16 %v218, %v217
  %v260 = vunpack.c.l.b16 %v82
  %v261 = vunpack.c.l.b16 %v83
  %v262 = vunpack.c.l.b16 %v84
  %v263 = vunpack.c.l.b16 %v85
  %v264 = vunpack.c.l.b16 %v86
  %v265 = vunpack.c.l.b16 %v87
  %v266 = vunpack.c.l.b16 %v88
  %v267 = vunpack.c.l.b16 %v89
  %v268 = vunpack.c.l.b16 %v90
  %v269 = vpack.c.b16 %v261, %v260
  %v270 = vpack.c.b16 %v263, %v262
  %v271 = vpack.c.b16 %v265, %v264
  %v272 = vpack.c.b16 %v267, %v266
  %v273 = vpack.c.b16 %v268, %v268
  %vm278 = vcmask 588800
  %v280 = vsel %vm278, %v219, 0
  %v283 = vsel %vm278, %v220, 0
  %v286 = vsel %vm278, %v221, 0
  %v289 = vsel %vm278, %v222, 0
  %v292 = vsel %vm278, %v223, 0
  %v295 = vsel %vm278, %v224, 0
  %v298 = vsel %vm278, %v225, 0
  %v301 = vsel %vm278, %v226, 0
  %v304 = vsel %vm278, %v227, 0
  %v307 = vsel %vm278, %v228, 0
  %v310 = vsel %vm278, %v229, 0
  %v313 = vsel %vm278, %v230, 0
  %v316 = vsel %vm278, %v231, 0
  %v319 = vsel %vm278, %v232, 0
  %v322 = vsel %vm278, %v233, 0
  %v325 = vsel %vm278, %v234, 0
  %v328 = vsel %vm278, %v235, 0
  %v331 = vsel %vm278, %v236, 0
  %v334 = vsel %vm278, %v237, 0
  %v337 = vsel %vm278, %v238, 0
  %v340 = vsel %vm278, %v239, 0
  %v343 = vsel %vm278, %v240, 0
  %v346 = vsel %vm278, %v241, 0
  %v349 = vsel %vm278, %v242, 0
  %v352 = vsel %vm278, %v243, 0
  %v355 = vsel %vm278, %v244, 0
  %v358 = vsel %vm278, %v245, 0
  %v361 = vsel %vm278, %v246, 0
  %v364 = vsel %vm278, %v247, 0
  %v367 = vsel %vm278, %v248, 0
  %v370 = vsel %vm278, %v249, 0
  %v373 = vsel %vm278, %v250, 0
  %vm375 = vcmask 1043456
  %v377 = vsel %vm375, %v273, 0
  %379 = vmatprep.subr.bf16.mxu0 0
  %380 = vmatpush1.bf16.msra.mxu0 0
  %381 = vmatprep.subr.bf16.mxu0 0
  %382 = vmatpush1.bf16.msra.mxu0 0
  %383 = vmatprep.subr.bf16.mxu0 0
  %384 = vmatpush1.bf16.msra.mxu0 0
  %385 = vmatprep.subr.bf16.mxu0 0
  %386 = vmatpush1.bf16.msra.mxu0 %v377
  %387 = vmatprep.subr.bf16.mxu0 0
  %388 = vmatpush1.bf16.msra.mxu0 %v272
  %389 = vmatprep.subr.bf16.mxu0 0
  %390 = vmatpush1.bf16.msra.mxu0 %v271
  %391 = vmatprep.subr.bf16.mxu0 0
  %392 = vmatpush1.bf16.msra.mxu0 %v270
  %393 = vmatprep.subr.bf16.mxu0 0
  %394 = vmatpush1.bf16.msra.mxu0 %v269
  %395 = vmatprep.subr.bf16.mxu0 0
  %396 = vmatpush2.bf16.msra.mxu0 0
  %397 = vmatprep.subr.bf16.mxu0 0
  %398 = vmatpush2.bf16.msra.mxu0 0
  %399 = vmatprep.subr.bf16.mxu0 0
  %400 = vmatpush2.bf16.msra.mxu0 0
  %401 = vmatprep.subr.bf16.mxu0 0
  %402 = vmatpush2.bf16.msra.mxu0 0
  %403 = vmatprep.subr.bf16.mxu0 0
  %404 = vmatpush2.bf16.msra.mxu0 0
  %405 = vmatprep.subr.bf16.mxu0 0
  %406 = vmatpush2.bf16.msra.mxu0 0
  %407 = vmatprep.subr.bf16.mxu0 0
  %408 = vmatpush2.bf16.msra.mxu0 0
  %409 = vmatprep.subr.bf16.mxu0 0
  %410 = vmatpush2.bf16.msra.mxu0 0
  %411 = vmatprep.mubr.bf16.mxu0 0
  %412 = vmatmul.mubr.bf16.gmra.mxu0 %v280
  %v413 = vpop.f32.mrf.mxu0
  %v414 = vadd.f32 0.0, %v413
  %v415 = vpop.f32.mrf.mxu0
  %v416 = vpop.f32.mrf.mxu0
  %v417 = vadd.f32 0.0, %v416
  %v418 = vpop.f32.mrf.mxu0
  %419 = vmatprep.mubr.bf16.mxu0 0
  %420 = vmatmul.mubr.bf16.gmra.mxu0 %v283
  %v421 = vpop.f32.mrf.mxu0
  %v422 = vadd.f32 0.0, %v421
  %v423 = vpop.f32.mrf.mxu0
  %v424 = vpop.f32.mrf.mxu0
  %v425 = vadd.f32 0.0, %v424
  %v426 = vpop.f32.mrf.mxu0
  %427 = vmatprep.mubr.bf16.mxu0 0
  %428 = vmatmul.mubr.bf16.gmra.mxu0 %v286
  %v429 = vpop.f32.mrf.mxu0
  %v430 = vadd.f32 0.0, %v429
  %v431 = vpop.f32.mrf.mxu0
  %v432 = vpop.f32.mrf.mxu0
  %v433 = vadd.f32 0.0, %v432
  %v434 = vpop.f32.mrf.mxu0
  %435 = vmatprep.mubr.bf16.mxu0 0
  %436 = vmatmul.mubr.bf16.gmra.mxu0 %v289
  %v437 = vpop.f32.mrf.mxu0
  %v438 = vadd.f32 0.0, %v437
  %v439 = vpop.f32.mrf.mxu0
  %v440 = vpop.f32.mrf.mxu0
  %v441 = vadd.f32 0.0, %v440
  %v442 = vpop.f32.mrf.mxu0
  %443 = vmatprep.mubr.bf16.mxu0 0
  %444 = vmatmul.mubr.bf16.gmra.mxu0 %v292
  %v445 = vpop.f32.mrf.mxu0
  %v446 = vadd.f32 0.0, %v445
  %v447 = vpop.f32.mrf.mxu0
  %v448 = vpop.f32.mrf.mxu0
  %v449 = vadd.f32 0.0, %v448
  %v450 = vpop.f32.mrf.mxu0
  %451 = vmatprep.mubr.bf16.mxu0 0
  %452 = vmatmul.mubr.bf16.gmra.mxu0 %v295
  %v453 = vpop.f32.mrf.mxu0
  %v454 = vadd.f32 0.0, %v453
  %v455 = vpop.f32.mrf.mxu0
  %v456 = vpop.f32.mrf.mxu0
  %v457 = vadd.f32 0.0, %v456
  %v458 = vpop.f32.mrf.mxu0
  %459 = vmatprep.mubr.bf16.mxu0 0
  %460 = vmatmul.mubr.bf16.gmra.mxu0 %v298
  %v461 = vpop.f32.mrf.mxu0
  %v462 = vadd.f32 0.0, %v461
  %v463 = vpop.f32.mrf.mxu0
  %v464 = vpop.f32.mrf.mxu0
  %v465 = vadd.f32 0.0, %v464
  %v466 = vpop.f32.mrf.mxu0
  %467 = vmatprep.mubr.bf16.mxu0 0
  %468 = vmatmul.mubr.bf16.gmra.mxu0 %v301
  %v469 = vpop.f32.mrf.mxu0
  %v470 = vadd.f32 0.0, %v469
  %v471 = vpop.f32.mrf.mxu0
  %v472 = vpop.f32.mrf.mxu0
  %v473 = vadd.f32 0.0, %v472
  %v474 = vpop.f32.mrf.mxu0
  %475 = vmatprep.mubr.bf16.mxu0 0
  %476 = vmatmul.mubr.bf16.gmra.mxu0 %v304
  %v477 = vpop.f32.mrf.mxu0
  %v478 = vadd.f32 0.0, %v477
  %v479 = vpop.f32.mrf.mxu0
  %v480 = vpop.f32.mrf.mxu0
  %v481 = vadd.f32 0.0, %v480
  %v482 = vpop.f32.mrf.mxu0
  %483 = vmatprep.mubr.bf16.mxu0 0
  %484 = vmatmul.mubr.bf16.gmra.mxu0 %v307
  %v485 = vpop.f32.mrf.mxu0
  %v486 = vadd.f32 0.0, %v485
  %v487 = vpop.f32.mrf.mxu0
  %v488 = vpop.f32.mrf.mxu0
  %v489 = vadd.f32 0.0, %v488
  %v490 = vpop.f32.mrf.mxu0
  %491 = vmatprep.mubr.bf16.mxu0 0
  %492 = vmatmul.mubr.bf16.gmra.mxu0 %v310
  %v493 = vpop.f32.mrf.mxu0
  %v494 = vadd.f32 0.0, %v493
  %v495 = vpop.f32.mrf.mxu0
  %v496 = vpop.f32.mrf.mxu0
  %v497 = vadd.f32 0.0, %v496
  %v498 = vpop.f32.mrf.mxu0
  %499 = vmatprep.mubr.bf16.mxu0 0
  %500 = vmatmul.mubr.bf16.gmra.mxu0 %v313
  %v501 = vpop.f32.mrf.mxu0
  %v502 = vadd.f32 0.0, %v501
  %v503 = vpop.f32.mrf.mxu0
  %v504 = vpop.f32.mrf.mxu0
  %v505 = vadd.f32 0.0, %v504
  %v506 = vpop.f32.mrf.mxu0
  %507 = vmatprep.mubr.bf16.mxu0 0
  %508 = vmatmul.mubr.bf16.gmra.mxu0 %v316
  %v509 = vpop.f32.mrf.mxu0
  %v510 = vadd.f32 0.0, %v509
  %v511 = vpop.f32.mrf.mxu0
  %v512 = vpop.f32.mrf.mxu0
  %v513 = vadd.f32 0.0, %v512
  %v514 = vpop.f32.mrf.mxu0
  %515 = vmatprep.mubr.bf16.mxu0 0
  %516 = vmatmul.mubr.bf16.gmra.mxu0 %v319
  %v517 = vpop.f32.mrf.mxu0
  %v518 = vadd.f32 0.0, %v517
  %v519 = vpop.f32.mrf.mxu0
  %v520 = vpop.f32.mrf.mxu0
  %v521 = vadd.f32 0.0, %v520
  %v522 = vpop.f32.mrf.mxu0
  %523 = vmatprep.mubr.bf16.mxu0 0
  %524 = vmatmul.mubr.bf16.gmra.mxu0 %v322
  %v525 = vpop.f32.mrf.mxu0
  %v526 = vadd.f32 0.0, %v525
  %v527 = vpop.f32.mrf.mxu0
  %v528 = vpop.f32.mrf.mxu0
  %v529 = vadd.f32 0.0, %v528
  %v530 = vpop.f32.mrf.mxu0
  %531 = vmatprep.mubr.bf16.mxu0 0
  %532 = vmatmul.mubr.bf16.gmra.mxu0 %v325
  %v533 = vpop.f32.mrf.mxu0
  %v534 = vadd.f32 0.0, %v533
  %v535 = vpop.f32.mrf.mxu0
  %v536 = vpop.f32.mrf.mxu0
  %v537 = vadd.f32 0.0, %v536
  %v538 = vpop.f32.mrf.mxu0
  %539 = vmatprep.mubr.bf16.mxu0 0
  %540 = vmatmul.mubr.bf16.gmra.mxu0 %v328
  %v541 = vpop.f32.mrf.mxu0
  %v542 = vadd.f32 0.0, %v541
  %v543 = vpop.f32.mrf.mxu0
  %v544 = vpop.f32.mrf.mxu0
  %v545 = vadd.f32 0.0, %v544
  %v546 = vpop.f32.mrf.mxu0
  %547 = vmatprep.mubr.bf16.mxu0 0
  %548 = vmatmul.mubr.bf16.gmra.mxu0 %v331
  %v549 = vpop.f32.mrf.mxu0
  %v550 = vadd.f32 0.0, %v549
  %v551 = vpop.f32.mrf.mxu0
  %v552 = vpop.f32.mrf.mxu0
  %v553 = vadd.f32 0.0, %v552
  %v554 = vpop.f32.mrf.mxu0
  %555 = vmatprep.mubr.bf16.mxu0 0
  %556 = vmatmul.mubr.bf16.gmra.mxu0 %v334
  %v557 = vpop.f32.mrf.mxu0
  %v558 = vadd.f32 0.0, %v557
  %v559 = vpop.f32.mrf.mxu0
  %v560 = vpop.f32.mrf.mxu0
  %v561 = vadd.f32 0.0, %v560
  %v562 = vpop.f32.mrf.mxu0
  %563 = vmatprep.mubr.bf16.mxu0 0
  %564 = vmatmul.mubr.bf16.gmra.mxu0 %v337
  %v565 = vpop.f32.mrf.mxu0
  %v566 = vadd.f32 0.0, %v565
  %v567 = vpop.f32.mrf.mxu0
  %v568 = vpop.f32.mrf.mxu0
  %v569 = vadd.f32 0.0, %v568
  %v570 = vpop.f32.mrf.mxu0
  %571 = vmatprep.mubr.bf16.mxu0 0
  %572 = vmatmul.mubr.bf16.gmra.mxu0 %v340
  %v573 = vpop.f32.mrf.mxu0
  %v574 = vadd.f32 0.0, %v573
  %v575 = vpop.f32.mrf.mxu0
  %v576 = vpop.f32.mrf.mxu0
  %v577 = vadd.f32 0.0, %v576
  %v578 = vpop.f32.mrf.mxu0
  %579 = vmatprep.mubr.bf16.mxu0 0
  %580 = vmatmul.mubr.bf16.gmra.mxu0 %v343
  %v581 = vpop.f32.mrf.mxu0
  %v582 = vadd.f32 0.0, %v581
  %v583 = vpop.f32.mrf.mxu0
  %v584 = vpop.f32.mrf.mxu0
  %v585 = vadd.f32 0.0, %v584
  %v586 = vpop.f32.mrf.mxu0
  %587 = vmatprep.mubr.bf16.mxu0 0
  %588 = vmatmul.mubr.bf16.gmra.mxu0 %v346
  %v589 = vpop.f32.mrf.mxu0
  %v590 = vadd.f32 0.0, %v589
  %v591 = vpop.f32.mrf.mxu0
  %v592 = vpop.f32.mrf.mxu0
  %v593 = vadd.f32 0.0, %v592
  %v594 = vpop.f32.mrf.mxu0
  %595 = vmatprep.mubr.bf16.mxu0 0
  %596 = vmatmul.mubr.bf16.gmra.mxu0 %v349
  %v597 = vpop.f32.mrf.mxu0
  %v598 = vadd.f32 0.0, %v597
  %v599 = vpop.f32.mrf.mxu0
  %v600 = vpop.f32.mrf.mxu0
  %v601 = vadd.f32 0.0, %v600
  %v602 = vpop.f32.mrf.mxu0
  %603 = vmatprep.mubr.bf16.mxu0 0
  %604 = vmatmul.mubr.bf16.gmra.mxu0 %v352
  %v605 = vpop.f32.mrf.mxu0
  %v606 = vadd.f32 0.0, %v605
  %v607 = vpop.f32.mrf.mxu0
  %v608 = vpop.f32.mrf.mxu0
  %v609 = vadd.f32 0.0, %v608
  %v610 = vpop.f32.mrf.mxu0
  %611 = vmatprep.mubr.bf16.mxu0 0
  %612 = vmatmul.mubr.bf16.gmra.mxu0 %v355
  %v613 = vpop.f32.mrf.mxu0
  %v614 = vadd.f32 0.0, %v613
  %v615 = vpop.f32.mrf.mxu0
  %v616 = vpop.f32.mrf.mxu0
  %v617 = vadd.f32 0.0, %v616
  %v618 = vpop.f32.mrf.mxu0
  %619 = vmatprep.mubr.bf16.mxu0 0
  %620 = vmatmul.mubr.bf16.gmra.mxu0 %v358
  %v621 = vpop.f32.mrf.mxu0
  %v622 = vadd.f32 0.0, %v621
  %v623 = vpop.f32.mrf.mxu0
  %v624 = vpop.f32.mrf.mxu0
  %v625 = vadd.f32 0.0, %v624
  %v626 = vpop.f32.mrf.mxu0
  %627 = vmatprep.mubr.bf16.mxu0 0
  %628 = vmatmul.mubr.bf16.gmra.mxu0 %v361
  %v629 = vpop.f32.mrf.mxu0
  %v630 = vadd.f32 0.0, %v629
  %v631 = vpop.f32.mrf.mxu0
  %v632 = vpop.f32.mrf.mxu0
  %v633 = vadd.f32 0.0, %v632
  %v634 = vpop.f32.mrf.mxu0
  %635 = vmatprep.mubr.bf16.mxu0 0
  %636 = vmatmul.mubr.bf16.gmra.mxu0 %v364
  %v637 = vpop.f32.mrf.mxu0
  %v638 = vadd.f32 0.0, %v637
  %v639 = vpop.f32.mrf.mxu0
  %v640 = vpop.f32.mrf.mxu0
  %v641 = vadd.f32 0.0, %v640
  %v642 = vpop.f32.mrf.mxu0
  %643 = vmatprep.mubr.bf16.mxu0 0
  %644 = vmatmul.mubr.bf16.gmra.mxu0 %v367
  %v645 = vpop.f32.mrf.mxu0
  %v646 = vadd.f32 0.0, %v645
  %v647 = vpop.f32.mrf.mxu0
  %v648 = vpop.f32.mrf.mxu0
  %v649 = vadd.f32 0.0, %v648
  %v650 = vpop.f32.mrf.mxu0
  %651 = vmatprep.mubr.bf16.mxu0 0
  %652 = vmatmul.mubr.bf16.gmra.mxu0 %v370
  %v653 = vpop.f32.mrf.mxu0
  %v654 = vadd.f32 0.0, %v653
  %v655 = vpop.f32.mrf.mxu0
  %v656 = vpop.f32.mrf.mxu0
  %v657 = vadd.f32 0.0, %v656
  %v658 = vpop.f32.mrf.mxu0
  %659 = vmatprep.mubr.bf16.mxu0 0
  %660 = vmatmul.mubr.bf16.gmra.mxu0 %v373
  %v661 = vpop.f32.mrf.mxu0
  %v662 = vadd.f32 0.0, %v661
  %v663 = vpop.f32.mrf.mxu0
  %v664 = vpop.f32.mrf.mxu0
  %v665 = vadd.f32 0.0, %v664
  %v666 = vpop.f32.mrf.mxu0
  %667 = vdwg.mxu0
  %v668 = vadd.f32 %v414, %v417
  %v669 = vadd.f32 %v668, %v422
  %v670 = vadd.f32 %v669, %v425
  %v671 = vadd.f32 %v670, %v430
  %v672 = vadd.f32 %v671, %v433
  %v673 = vadd.f32 %v672, %v438
  %v674 = vadd.f32 %v673, %v441
  %v675 = vadd.f32 %v674, %v446
  %v676 = vadd.f32 %v675, %v449
  %v677 = vadd.f32 %v676, %v454
  %v678 = vadd.f32 %v677, %v457
  %v679 = vadd.f32 %v678, %v462
  %v680 = vadd.f32 %v679, %v465
  %v681 = vadd.f32 %v680, %v470
  %v682 = vadd.f32 %v681, %v473
  %v683 = vadd.f32 %v682, %v478
  %v684 = vadd.f32 %v683, %v481
  %v685 = vadd.f32 %v684, %v486
  %v686 = vadd.f32 %v685, %v489
  %v687 = vadd.f32 %v686, %v494
  %v688 = vadd.f32 %v687, %v497
  %v689 = vadd.f32 %v688, %v502
  %v690 = vadd.f32 %v689, %v505
  %v691 = vadd.f32 %v690, %v510
  %v692 = vadd.f32 %v691, %v513
  %v693 = vadd.f32 %v692, %v518
  %v694 = vadd.f32 %v693, %v521
  %v695 = vadd.f32 %v694, %v526
  %v696 = vadd.f32 %v695, %v529
  %v697 = vadd.f32 %v696, %v534
  %v698 = vadd.f32 %v697, %v537
  %v699 = vadd.f32 %v698, %v542
  %v700 = vadd.f32 %v699, %v545
  %v701 = vadd.f32 %v700, %v550
  %v702 = vadd.f32 %v701, %v553
  %v703 = vadd.f32 %v702, %v558
  %v704 = vadd.f32 %v703, %v561
  %v705 = vadd.f32 %v704, %v566
  %v706 = vadd.f32 %v705, %v569
  %v707 = vadd.f32 %v706, %v574
  %v708 = vadd.f32 %v707, %v577
  %v709 = vadd.f32 %v708, %v582
  %v710 = vadd.f32 %v709, %v585
  %v711 = vadd.f32 %v710, %v590
  %v712 = vadd.f32 %v711, %v593
  %v713 = vadd.f32 %v712, %v598
  %v714 = vadd.f32 %v713, %v601
  %v715 = vadd.f32 %v714, %v606
  %v716 = vadd.f32 %v715, %v609
  %v717 = vadd.f32 %v716, %v614
  %v718 = vadd.f32 %v717, %v617
  %v719 = vadd.f32 %v718, %v622
  %v720 = vadd.f32 %v719, %v625
  %v721 = vadd.f32 %v720, %v630
  %v722 = vadd.f32 %v721, %v633
  %v723 = vadd.f32 %v722, %v638
  %v724 = vadd.f32 %v723, %v641
  %v725 = vadd.f32 %v724, %v646
  %v726 = vadd.f32 %v725, %v649
  %v727 = vadd.f32 %v726, %v654
  %v728 = vadd.f32 %v727, %v657
  %v729 = vadd.f32 %v728, %v662
  %v730 = vadd.f32 %v729, %v665
  %v731 = vrot.slane %v730, 4
  %v732 = vadd.f32 %v730, %v731
  %v733 = vrot.slane %v732, 2
  %v734 = vadd.f32 %v732, %v733
  %v735 = vrot.slane %v734, 1
  %v736 = vadd.f32 %v734, %v735
  %v737 = vmul.f32 %v736, 0.001953125
  %v738 = vsub.f32 %v414, %v737
  %v739 = vsub.f32 %v417, %v737
  %v740 = vsub.f32 %v422, %v737
  %v741 = vsub.f32 %v425, %v737
  %v742 = vsub.f32 %v430, %v737
  %v743 = vsub.f32 %v433, %v737
  %v744 = vsub.f32 %v438, %v737
  %v745 = vsub.f32 %v441, %v737
  %v746 = vsub.f32 %v446, %v737
  %v747 = vsub.f32 %v449, %v737
  %v748 = vsub.f32 %v454, %v737
  %v749 = vsub.f32 %v457, %v737
  %v750 = vsub.f32 %v462, %v737
  %v751 = vsub.f32 %v465, %v737
  %v752 = vsub.f32 %v470, %v737
  %v753 = vsub.f32 %v473, %v737
  %v754 = vsub.f32 %v478, %v737
  %v755 = vsub.f32 %v481, %v737
  %v756 = vsub.f32 %v486, %v737
  %v757 = vsub.f32 %v489, %v737
  %v758 = vsub.f32 %v494, %v737
  %v759 = vsub.f32 %v497, %v737
  %v760 = vsub.f32 %v502, %v737
  %v761 = vsub.f32 %v505, %v737
  %v762 = vsub.f32 %v510, %v737
  %v763 = vsub.f32 %v513, %v737
  %v764 = vsub.f32 %v518, %v737
  %v765 = vsub.f32 %v521, %v737
  %v766 = vsub.f32 %v526, %v737
  %v767 = vsub.f32 %v529, %v737
  %v768 = vsub.f32 %v534, %v737
  %v769 = vsub.f32 %v537, %v737
  %v770 = vsub.f32 %v542, %v737
  %v771 = vsub.f32 %v545, %v737
  %v772 = vsub.f32 %v550, %v737
  %v773 = vsub.f32 %v553, %v737
  %v774 = vsub.f32 %v558, %v737
  %v775 = vsub.f32 %v561, %v737
  %v776 = vsub.f32 %v566, %v737
  %v777 = vsub.f32 %v569, %v737
  %v778 = vsub.f32 %v574, %v737
  %v779 = vsub.f32 %v577, %v737
  %v780 = vsub.f32 %v582, %v737
  %v781 = vsub.f32 %v585, %v737
  %v782 = vsub.f32 %v590, %v737
  %v783 = vsub.f32 %v593, %v737
  %v784 = vsub.f32 %v598, %v737
  %v785 = vsub.f32 %v601, %v737
  %v786 = vsub.f32 %v606, %v737
  %v787 = vsub.f32 %v609, %v737
  %v788 = vsub.f32 %v614, %v737
  %v789 = vsub.f32 %v617, %v737
  %v790 = vsub.f32 %v622, %v737
  %v791 = vsub.f32 %v625, %v737
  %v792 = vsub.f32 %v630, %v737
  %v793 = vsub.f32 %v633, %v737
  %v794 = vsub.f32 %v638, %v737
  %v795 = vsub.f32 %v641, %v737
  %v796 = vsub.f32 %v646, %v737
  %v797 = vsub.f32 %v649, %v737
  %v798 = vsub.f32 %v654, %v737
  %v799 = vsub.f32 %v657, %v737
  %v800 = vsub.f32 %v662, %v737
  %v801 = vsub.f32 %v665, %v737
  %v802 = vmul.f32 %v738, %v738
  %v803 = vmul.f32 %v739, %v739
  %v804 = vmul.f32 %v740, %v740
  %v805 = vmul.f32 %v741, %v741
  %v806 = vmul.f32 %v742, %v742
  %v807 = vmul.f32 %v743, %v743
  %v808 = vmul.f32 %v744, %v744
  %v809 = vmul.f32 %v745, %v745
  %v810 = vmul.f32 %v746, %v746
  %v811 = vmul.f32 %v747, %v747
  %v812 = vmul.f32 %v748, %v748
  %v813 = vmul.f32 %v749, %v749
  %v814 = vmul.f32 %v750, %v750
  %v815 = vmul.f32 %v751, %v751
  %v816 = vmul.f32 %v752, %v752
  %v817 = vmul.f32 %v753, %v753
  %v818 = vmul.f32 %v754, %v754
  %v819 = vmul.f32 %v755, %v755
  %v820 = vmul.f32 %v756, %v756
  %v821 = vmul.f32 %v757, %v757
  %v822 = vmul.f32 %v758, %v758
  %v823 = vmul.f32 %v759, %v759
  %v824 = vmul.f32 %v760, %v760
  %v825 = vmul.f32 %v761, %v761
  %v826 = vmul.f32 %v762, %v762
  %v827 = vmul.f32 %v763, %v763
  %v828 = vmul.f32 %v764, %v764
  %v829 = vmul.f32 %v765, %v765
  %v830 = vmul.f32 %v766, %v766
  %v831 = vmul.f32 %v767, %v767
  %v832 = vmul.f32 %v768, %v768
  %v833 = vmul.f32 %v769, %v769
  %v834 = vmul.f32 %v770, %v770
  %v835 = vmul.f32 %v771, %v771
  %v836 = vmul.f32 %v772, %v772
  %v837 = vmul.f32 %v773, %v773
  %v838 = vmul.f32 %v774, %v774
  %v839 = vmul.f32 %v775, %v775
  %v840 = vmul.f32 %v776, %v776
  %v841 = vmul.f32 %v777, %v777
  %v842 = vmul.f32 %v778, %v778
  %v843 = vmul.f32 %v779, %v779
  %v844 = vmul.f32 %v780, %v780
  %v845 = vmul.f32 %v781, %v781
  %v846 = vmul.f32 %v782, %v782
  %v847 = vmul.f32 %v783, %v783
  %v848 = vmul.f32 %v784, %v784
  %v849 = vmul.f32 %v785, %v785
  %v850 = vmul.f32 %v786, %v786
  %v851 = vmul.f32 %v787, %v787
  %v852 = vmul.f32 %v788, %v788
  %v853 = vmul.f32 %v789, %v789
  %v854 = vmul.f32 %v790, %v790
  %v855 = vmul.f32 %v791, %v791
  %v856 = vmul.f32 %v792, %v792
  %v857 = vmul.f32 %v793, %v793
  %v858 = vmul.f32 %v794, %v794
  %v859 = vmul.f32 %v795, %v795
  %v860 = vmul.f32 %v796, %v796
  %v861 = vmul.f32 %v797, %v797
  %v862 = vmul.f32 %v798, %v798
  %v863 = vmul.f32 %v799, %v799
  %v864 = vmul.f32 %v800, %v800
  %v865 = vmul.f32 %v801, %v801
  %v866 = vadd.f32 %v802, %v803
  %v867 = vadd.f32 %v866, %v804
  %v868 = vadd.f32 %v867, %v805
  %v869 = vadd.f32 %v868, %v806
  %v870 = vadd.f32 %v869, %v807
  %v871 = vadd.f32 %v870, %v808
  %v872 = vadd.f32 %v871, %v809
  %v873 = vadd.f32 %v872, %v810
  %v874 = vadd.f32 %v873, %v811
  %v875 = vadd.f32 %v874, %v812
  %v876 = vadd.f32 %v875, %v813
  %v877 = vadd.f32 %v876, %v814
  %v878 = vadd.f32 %v877, %v815
  %v879 = vadd.f32 %v878, %v816
  %v880 = vadd.f32 %v879, %v817
  %v881 = vadd.f32 %v880, %v818
  %v882 = vadd.f32 %v881, %v819
  %v883 = vadd.f32 %v882, %v820
  %v884 = vadd.f32 %v883, %v821
  %v885 = vadd.f32 %v884, %v822
  %v886 = vadd.f32 %v885, %v823
  %v887 = vadd.f32 %v886, %v824
  %v888 = vadd.f32 %v887, %v825
  %v889 = vadd.f32 %v888, %v826
  %v890 = vadd.f32 %v889, %v827
  %v891 = vadd.f32 %v890, %v828
  %v892 = vadd.f32 %v891, %v829
  %v893 = vadd.f32 %v892, %v830
  %v894 = vadd.f32 %v893, %v831
  %v895 = vadd.f32 %v894, %v832
  %v896 = vadd.f32 %v895, %v833
  %v897 = vadd.f32 %v896, %v834
  %v898 = vadd.f32 %v897, %v835
  %v899 = vadd.f32 %v898, %v836
  %v900 = vadd.f32 %v899, %v837
  %v901 = vadd.f32 %v900, %v838
  %v902 = vadd.f32 %v901, %v839
  %v903 = vadd.f32 %v902, %v840
  %v904 = vadd.f32 %v903, %v841
  %v905 = vadd.f32 %v904, %v842
  %v906 = vadd.f32 %v905, %v843
  %v907 = vadd.f32 %v906, %v844
  %v908 = vadd.f32 %v907, %v845
  %v909 = vadd.f32 %v908, %v846
  %v910 = vadd.f32 %v909, %v847
  %v911 = vadd.f32 %v910, %v848
  %v912 = vadd.f32 %v911, %v849
  %v913 = vadd.f32 %v912, %v850
  %v914 = vadd.f32 %v913, %v851
  %v915 = vadd.f32 %v914, %v852
  %v916 = vadd.f32 %v915, %v853
  %v917 = vadd.f32 %v916, %v854
  %v918 = vadd.f32 %v917, %v855
  %v919 = vadd.f32 %v918, %v856
  %v920 = vadd.f32 %v919, %v857
  %v921 = vadd.f32 %v920, %v858
  %v922 = vadd.f32 %v921, %v859
  %v923 = vadd.f32 %v922, %v860
  %v924 = vadd.f32 %v923, %v861
  %v925 = vadd.f32 %v924, %v862
  %v926 = vadd.f32 %v925, %v863
  %v927 = vadd.f32 %v926, %v864
  %v928 = vadd.f32 %v927, %v865
  %v929 = vrot.slane %v928, 4
  %v930 = vadd.f32 %v928, %v929
  %v931 = vrot.slane %v930, 2
  %v932 = vadd.f32 %v930, %v931
  %v933 = vrot.slane %v932, 1
  %v934 = vadd.f32 %v932, %v933
  %v935 = vmul.f32 %v934, 0.001953125
  %v936 = vld [vmem:[%s2] sm:$0x1]
  %v937 = vadd.f32 %v935, 1e-05
  %v938 = vrsqrt.pop %v937
  %v939 = vmul.f32 %v936, %v938
  %v941 = vlaneseq
  %v942 = vshrl.u32 %v941, 7
  %v943 = vsub.s32 0, %v942
  %v944 = vrot.slane %v939, %v943
  %v946 = vmul.f32 %v738, %v944
  %v947 = vmul.f32 %v739, %v944
  %v948 = vmul.f32 %v740, %v944
  %v949 = vmul.f32 %v741, %v944
  %v950 = vmul.f32 %v742, %v944
  %v951 = vmul.f32 %v743, %v944
  %v952 = vmul.f32 %v744, %v944
  %v953 = vmul.f32 %v745, %v944
  %v954 = vmul.f32 %v746, %v944
  %v955 = vmul.f32 %v747, %v944
  %v956 = vmul.f32 %v748, %v944
  %v957 = vmul.f32 %v749, %v944
  %v958 = vmul.f32 %v750, %v944
  %v959 = vmul.f32 %v751, %v944
  %v960 = vmul.f32 %v752, %v944
  %v961 = vmul.f32 %v753, %v944
  %v962 = vmul.f32 %v754, %v944
  %v963 = vmul.f32 %v755, %v944
  %v964 = vmul.f32 %v756, %v944
  %v965 = vmul.f32 %v757, %v944
  %v966 = vmul.f32 %v758, %v944
  %v967 = vmul.f32 %v759, %v944
  %v968 = vmul.f32 %v760, %v944
  %v969 = vmul.f32 %v761, %v944
  %v970 = vmul.f32 %v762, %v944
  %v971 = vmul.f32 %v763, %v944
  %v972 = vmul.f32 %v764, %v944
  %v973 = vmul.f32 %v765, %v944
  %v974 = vmul.f32 %v766, %v944
  %v975 = vmul.f32 %v767, %v944
  %v976 = vmul.f32 %v768, %v944
  %v977 = vmul.f32 %v769, %v944
  %v978 = vmul.f32 %v770, %v944
  %v979 = vmul.f32 %v771, %v944
  %v980 = vmul.f32 %v772, %v944
  %v981 = vmul.f32 %v773, %v944
  %v982 = vmul.f32 %v774, %v944
  %v983 = vmul.f32 %v775, %v944
  %v984 = vmul.f32 %v776, %v944
  %v985 = vmul.f32 %v777, %v944
  %v986 = vmul.f32 %v778, %v944
  %v987 = vmul.f32 %v779, %v944
  %v988 = vmul.f32 %v780, %v944
  %v989 = vmul.f32 %v781, %v944
  %v990 = vmul.f32 %v782, %v944
  %v991 = vmul.f32 %v783, %v944
  %v992 = vmul.f32 %v784, %v944
  %v993 = vmul.f32 %v785, %v944
  %v994 = vmul.f32 %v786, %v944
  %v995 = vmul.f32 %v787, %v944
  %v996 = vmul.f32 %v788, %v944
  %v997 = vmul.f32 %v789, %v944
  %v998 = vmul.f32 %v790, %v944
  %v999 = vmul.f32 %v791, %v944
  %v1000 = vmul.f32 %v792, %v944
  %v1001 = vmul.f32 %v793, %v944
  %v1002 = vmul.f32 %v794, %v944
  %v1003 = vmul.f32 %v795, %v944
  %v1004 = vmul.f32 %v796, %v944
  %v1005 = vmul.f32 %v797, %v944
  %v1006 = vmul.f32 %v798, %v944
  %v1007 = vmul.f32 %v799, %v944
  %v1008 = vmul.f32 %v800, %v944
  %v1009 = vmul.f32 %v801, %v944
  %v1010 = vld [vmem:[%s3] sm:$0x1]
  %v1012 = vlaneseq
  %v1013 = vshrl.u32 %v1012, 7
  %v1014 = vsub.s32 0, %v1013
  %v1015 = vrot.slane %v1010, %v1014
  %v1017 = vadd.f32 %v946, %v1015
  %v1018 = vadd.f32 %v947, %v1015
  %v1019 = vadd.f32 %v948, %v1015
  %v1020 = vadd.f32 %v949, %v1015
  %v1021 = vadd.f32 %v950, %v1015
  %v1022 = vadd.f32 %v951, %v1015
  %v1023 = vadd.f32 %v952, %v1015
  %v1024 = vadd.f32 %v953, %v1015
  %v1025 = vadd.f32 %v954, %v1015
  %v1026 = vadd.f32 %v955, %v1015
  %v1027 = vadd.f32 %v956, %v1015
  %v1028 = vadd.f32 %v957, %v1015
  %v1029 = vadd.f32 %v958, %v1015
  %v1030 = vadd.f32 %v959, %v1015
  %v1031 = vadd.f32 %v960, %v1015
  %v1032 = vadd.f32 %v961, %v1015
  %v1033 = vadd.f32 %v962, %v1015
  %v1034 = vadd.f32 %v963, %v1015
  %v1035 = vadd.f32 %v964, %v1015
  %v1036 = vadd.f32 %v965, %v1015
  %v1037 = vadd.f32 %v966, %v1015
  %v1038 = vadd.f32 %v967, %v1015
  %v1039 = vadd.f32 %v968, %v1015
  %v1040 = vadd.f32 %v969, %v1015
  %v1041 = vadd.f32 %v970, %v1015
  %v1042 = vadd.f32 %v971, %v1015
  %v1043 = vadd.f32 %v972, %v1015
  %v1044 = vadd.f32 %v973, %v1015
  %v1045 = vadd.f32 %v974, %v1015
  %v1046 = vadd.f32 %v975, %v1015
  %v1047 = vadd.f32 %v976, %v1015
  %v1048 = vadd.f32 %v977, %v1015
  %v1049 = vadd.f32 %v978, %v1015
  %v1050 = vadd.f32 %v979, %v1015
  %v1051 = vadd.f32 %v980, %v1015
  %v1052 = vadd.f32 %v981, %v1015
  %v1053 = vadd.f32 %v982, %v1015
  %v1054 = vadd.f32 %v983, %v1015
  %v1055 = vadd.f32 %v984, %v1015
  %v1056 = vadd.f32 %v985, %v1015
  %v1057 = vadd.f32 %v986, %v1015
  %v1058 = vadd.f32 %v987, %v1015
  %v1059 = vadd.f32 %v988, %v1015
  %v1060 = vadd.f32 %v989, %v1015
  %v1061 = vadd.f32 %v990, %v1015
  %v1062 = vadd.f32 %v991, %v1015
  %v1063 = vadd.f32 %v992, %v1015
  %v1064 = vadd.f32 %v993, %v1015
  %v1065 = vadd.f32 %v994, %v1015
  %v1066 = vadd.f32 %v995, %v1015
  %v1067 = vadd.f32 %v996, %v1015
  %v1068 = vadd.f32 %v997, %v1015
  %v1069 = vadd.f32 %v998, %v1015
  %v1070 = vadd.f32 %v999, %v1015
  %v1071 = vadd.f32 %v1000, %v1015
  %v1072 = vadd.f32 %v1001, %v1015
  %v1073 = vadd.f32 %v1002, %v1015
  %v1074 = vadd.f32 %v1003, %v1015
  %v1075 = vadd.f32 %v1004, %v1015
  %v1076 = vadd.f32 %v1005, %v1015
  %v1077 = vadd.f32 %v1006, %v1015
  %v1078 = vadd.f32 %v1007, %v1015
  %v1079 = vadd.f32 %v1008, %v1015
  %v1080 = vadd.f32 %v1009, %v1015
  %v1081 = vmax.f32 %v1017, 0.0
  %v1082 = vmax.f32 %v1018, 0.0
  %v1083 = vmax.f32 %v1019, 0.0
  %v1084 = vmax.f32 %v1020, 0.0
  %v1085 = vmax.f32 %v1021, 0.0
  %v1086 = vmax.f32 %v1022, 0.0
  %v1087 = vmax.f32 %v1023, 0.0
  %v1088 = vmax.f32 %v1024, 0.0
  %v1089 = vmax.f32 %v1025, 0.0
  %v1090 = vmax.f32 %v1026, 0.0
  %v1091 = vmax.f32 %v1027, 0.0
  %v1092 = vmax.f32 %v1028, 0.0
  %v1093 = vmax.f32 %v1029, 0.0
  %v1094 = vmax.f32 %v1030, 0.0
  %v1095 = vmax.f32 %v1031, 0.0
  %v1096 = vmax.f32 %v1032, 0.0
  %v1097 = vmax.f32 %v1033, 0.0
  %v1098 = vmax.f32 %v1034, 0.0
  %v1099 = vmax.f32 %v1035, 0.0
  %v1100 = vmax.f32 %v1036, 0.0
  %v1101 = vmax.f32 %v1037, 0.0
  %v1102 = vmax.f32 %v1038, 0.0
  %v1103 = vmax.f32 %v1039, 0.0
  %v1104 = vmax.f32 %v1040, 0.0
  %v1105 = vmax.f32 %v1041, 0.0
  %v1106 = vmax.f32 %v1042, 0.0
  %v1107 = vmax.f32 %v1043, 0.0
  %v1108 = vmax.f32 %v1044, 0.0
  %v1109 = vmax.f32 %v1045, 0.0
  %v1110 = vmax.f32 %v1046, 0.0
  %v1111 = vmax.f32 %v1047, 0.0
  %v1112 = vmax.f32 %v1048, 0.0
  %v1113 = vmax.f32 %v1049, 0.0
  %v1114 = vmax.f32 %v1050, 0.0
  %v1115 = vmax.f32 %v1051, 0.0
  %v1116 = vmax.f32 %v1052, 0.0
  %v1117 = vmax.f32 %v1053, 0.0
  %v1118 = vmax.f32 %v1054, 0.0
  %v1119 = vmax.f32 %v1055, 0.0
  %v1120 = vmax.f32 %v1056, 0.0
  %v1121 = vmax.f32 %v1057, 0.0
  %v1122 = vmax.f32 %v1058, 0.0
  %v1123 = vmax.f32 %v1059, 0.0
  %v1124 = vmax.f32 %v1060, 0.0
  %v1125 = vmax.f32 %v1061, 0.0
  %v1126 = vmax.f32 %v1062, 0.0
  %v1127 = vmax.f32 %v1063, 0.0
  %v1128 = vmax.f32 %v1064, 0.0
  %v1129 = vmax.f32 %v1065, 0.0
  %v1130 = vmax.f32 %v1066, 0.0
  %v1131 = vmax.f32 %v1067, 0.0
  %v1132 = vmax.f32 %v1068, 0.0
  %v1133 = vmax.f32 %v1069, 0.0
  %v1134 = vmax.f32 %v1070, 0.0
  %v1135 = vmax.f32 %v1071, 0.0
  %v1136 = vmax.f32 %v1072, 0.0
  %v1137 = vmax.f32 %v1073, 0.0
  %v1138 = vmax.f32 %v1074, 0.0
  %v1139 = vmax.f32 %v1075, 0.0
  %v1140 = vmax.f32 %v1076, 0.0
  %v1141 = vmax.f32 %v1077, 0.0
  %v1142 = vmax.f32 %v1078, 0.0
  %v1143 = vmax.f32 %v1079, 0.0
  %v1144 = vmax.f32 %v1080, 0.0
  %1145 = vst [vmem:[%s4] sm:$0xff] %v1081
  %1146 = vst [vmem:[%s4 + $0x8] sm:$0xff] %v1082
  %1147 = vst [vmem:[%s4 + $0x10] sm:$0xff] %v1083
  %1148 = vst [vmem:[%s4 + $0x18] sm:$0xff] %v1084
  %1149 = vst [vmem:[%s4 + $0x20] sm:$0xff] %v1085
  %1150 = vst [vmem:[%s4 + $0x28] sm:$0xff] %v1086
  %1151 = vst [vmem:[%s4 + $0x30] sm:$0xff] %v1087
  %1152 = vst [vmem:[%s4 + $0x38] sm:$0xff] %v1088
  %1153 = vst [vmem:[%s4 + $0x40] sm:$0xff] %v1089
  %1154 = vst [vmem:[%s4 + $0x48] sm:$0xff] %v1090
  %1155 = vst [vmem:[%s4 + $0x50] sm:$0xff] %v1091
  %1156 = vst [vmem:[%s4 + $0x58] sm:$0xff] %v1092
  %1157 = vst [vmem:[%s4 + $0x60] sm:$0xff] %v1093
  %1158 = vst [vmem:[%s4 + $0x68] sm:$0xff] %v1094
  %1159 = vst [vmem:[%s4 + $0x70] sm:$0xff] %v1095
  %1160 = vst [vmem:[%s4 + $0x78] sm:$0xff] %v1096
  %1161 = vst [vmem:[%s4 + $0x80] sm:$0xff] %v1097
  %1162 = vst [vmem:[%s4 + $0x88] sm:$0xff] %v1098
  %1163 = vst [vmem:[%s4 + $0x90] sm:$0xff] %v1099
  %1164 = vst [vmem:[%s4 + $0x98] sm:$0xff] %v1100
  %1165 = vst [vmem:[%s4 + $0xa0] sm:$0xff] %v1101
  %1166 = vst [vmem:[%s4 + $0xa8] sm:$0xff] %v1102
  %1167 = vst [vmem:[%s4 + $0xb0] sm:$0xff] %v1103
  %1168 = vst [vmem:[%s4 + $0xb8] sm:$0xff] %v1104
  %1169 = vst [vmem:[%s4 + $0xc0] sm:$0xff] %v1105
  %1170 = vst [vmem:[%s4 + $0xc8] sm:$0xff] %v1106
  %1171 = vst [vmem:[%s4 + $0xd0] sm:$0xff] %v1107
  %1172 = vst [vmem:[%s4 + $0xd8] sm:$0xff] %v1108
  %1173 = vst [vmem:[%s4 + $0xe0] sm:$0xff] %v1109
  %1174 = vst [vmem:[%s4 + $0xe8] sm:$0xff] %v1110
  %1175 = vst [vmem:[%s4 + $0xf0] sm:$0xff] %v1111
  %1176 = vst [vmem:[%s4 + $0xf8] sm:$0xff] %v1112
  %1177 = vst [vmem:[%s4 + $0x100] sm:$0xff] %v1113
  %1178 = vst [vmem:[%s4 + $0x108] sm:$0xff] %v1114
  %1179 = vst [vmem:[%s4 + $0x110] sm:$0xff] %v1115
  %1180 = vst [vmem:[%s4 + $0x118] sm:$0xff] %v1116
  %1181 = vst [vmem:[%s4 + $0x120] sm:$0xff] %v1117
  %1182 = vst [vmem:[%s4 + $0x128] sm:$0xff] %v1118
  %1183 = vst [vmem:[%s4 + $0x130] sm:$0xff] %v1119
  %1184 = vst [vmem:[%s4 + $0x138] sm:$0xff] %v1120
  %1185 = vst [vmem:[%s4 + $0x140] sm:$0xff] %v1121
  %1186 = vst [vmem:[%s4 + $0x148] sm:$0xff] %v1122
  %1187 = vst [vmem:[%s4 + $0x150] sm:$0xff] %v1123
  %1188 = vst [vmem:[%s4 + $0x158] sm:$0xff] %v1124
  %1189 = vst [vmem:[%s4 + $0x160] sm:$0xff] %v1125
  %1190 = vst [vmem:[%s4 + $0x168] sm:$0xff] %v1126
  %1191 = vst [vmem:[%s4 + $0x170] sm:$0xff] %v1127
  %1192 = vst [vmem:[%s4 + $0x178] sm:$0xff] %v1128
  %1193 = vst [vmem:[%s4 + $0x180] sm:$0xff] %v1129
  %1194 = vst [vmem:[%s4 + $0x188] sm:$0xff] %v1130
  %1195 = vst [vmem:[%s4 + $0x190] sm:$0xff] %v1131
  %1196 = vst [vmem:[%s4 + $0x198] sm:$0xff] %v1132
  %1197 = vst [vmem:[%s4 + $0x1a0] sm:$0xff] %v1133
  %1198 = vst [vmem:[%s4 + $0x1a8] sm:$0xff] %v1134
  %1199 = vst [vmem:[%s4 + $0x1b0] sm:$0xff] %v1135
  %1200 = vst [vmem:[%s4 + $0x1b8] sm:$0xff] %v1136
  %1201 = vst [vmem:[%s4 + $0x1c0] sm:$0xff] %v1137
  %1202 = vst [vmem:[%s4 + $0x1c8] sm:$0xff] %v1138
  %1203 = vst [vmem:[%s4 + $0x1d0] sm:$0xff] %v1139
  %1204 = vst [vmem:[%s4 + $0x1d8] sm:$0xff] %v1140
  %1205 = vst [vmem:[%s4 + $0x1e0] sm:$0xff] %v1141
  %1206 = vst [vmem:[%s4 + $0x1e8] sm:$0xff] %v1142
  %1207 = vst [vmem:[%s4 + $0x1f0] sm:$0xff] %v1143
  %1208 = vst [vmem:[%s4 + $0x1f8] sm:$0xff] %v1144
  // Predicated region
  $region18: #{generator_forward.28} parent=0 // pred_check
    _
  $region19: #{generator_forward.28} parent=0 // pred_check_branch
    %1210 = sbr.rel (0) target = $region21
  $region20: #{generator_forward.28} parent=0 // pred_region
    _
  $region21: #{generator_forward.28} parent=0 // pred_fallthru
    _
  // Predicated region
  $region22: #{generator_forward.28} parent=0 // pred_check
    _
  $region23: #{generator_forward.28} parent=0 // pred_check_branch
    %1212 = sbr.rel (0) target = $region25
  $region24: #{generator_forward.28} parent=0 // pred_region
    _
  $region25: #{generator_forward.28} parent=0 // pred_fallthru
    _

// kernel: generator_forward.29
$region0: #{generator_forward.29}
  #allocation0 [shape = 'u32[]', space=smem, size = 0x4, offset = 0x4, fixed_abs, tag = 'smem constant byte address 0x4 - core index']
  #allocation1 [shape = 'u32[144,128]{1,0:T(1,128)}', space=vmem, size = 0x12000, scoped, tag = 'internal scratch']
  %s0 = inlined_call_operand.vmem [shape: f32[16,2,8,2,128], index: 0, kind: input, shape index: {}]
  %s1 = inlined_call_operand.vmem [shape: f32[16,8,128], index: 1, kind: output, shape index: {}]
  %s2 = sld [smem:[#allocation0]]
  $region14: #{generator_forward.29} parent=0
    _
  %s4 = ssub.s32 1, %s2
  %s5 = scalar_select 0, %s4, %s2
  // Predicated region
  $region2: #{generator_forward.29} parent=0 // pred_check
    _
  $region3: #{generator_forward.29} parent=0 // pred_check_branch
    %7 = sbr.rel (0) target = $region5
  $region4: #{generator_forward.29} parent=0 // pred_region
    _
  $region5: #{generator_forward.29} parent=0 // pred_fallthru
    _
  %v8 = vld [vmem:[%s0] sm:$0x3]
  %v9 = vld [vmem:[%s0 + $0x2] sm:$0x3]
  %v10 = vld [vmem:[%s0 + $0x4] sm:$0x3]
  %v11 = vld [vmem:[%s0 + $0x6] sm:$0x3]
  %v12 = vld [vmem:[%s0 + $0x8] sm:$0x3]
  %v13 = vld [vmem:[%s0 + $0xa] sm:$0x3]
  %v14 = vld [vmem:[%s0 + $0xc] sm:$0x3]
  %v15 = vld [vmem:[%s0 + $0xe] sm:$0x3]
  %v16 = vld [vmem:[%s0 + $0x10] sm:$0x3]
  %v17 = vld [vmem:[%s0 + $0x12] sm:$0x3]
  %v18 = vld [vmem:[%s0 + $0x14] sm:$0x3]
  %v19 = vld [vmem:[%s0 + $0x16] sm:$0x3]
  %v20 = vld [vmem:[%s0 + $0x18] sm:$0x3]
  %v21 = vld [vmem:[%s0 + $0x1a] sm:$0x3]
  %v22 = vld [vmem:[%s0 + $0x1c] sm:$0x3]
  %v23 = vld [vmem:[%s0 + $0x1e] sm:$0x3]
  %v24 = vld [vmem:[%s0 + $0x20] sm:$0x3]
  %v25 = vld [vmem:[%s0 + $0x22] sm:$0x3]
  %v26 = vld [vmem:[%s0 + $0x24] sm:$0x3]
  %v27 = vld [vmem:[%s0 + $0x26] sm:$0x3]
  %v28 = vld [vmem:[%s0 + $0x28] sm:$0x3]
  %v29 = vld [vmem:[%s0 + $0x2a] sm:$0x3]
  %v30 = vld [vmem:[%s0 + $0x2c] sm:$0x3]
  %v31 = vld [vmem:[%s0 + $0x2e] sm:$0x3]
  %v32 = vld [vmem:[%s0 + $0x30] sm:$0x3]
  %v33 = vld [vmem:[%s0 + $0x32] sm:$0x3]
  %v34 = vld [vmem:[%s0 + $0x34] sm:$0x3]
  %v35 = vld [vmem:[%s0 + $0x36] sm:$0x3]
  %v36 = vld [vmem:[%s0 + $0x38] sm:$0x3]
  %v37 = vld [vmem:[%s0 + $0x3a] sm:$0x3]
  %v38 = vld [vmem:[%s0 + $0x3c] sm:$0x3]
  %v39 = vld [vmem:[%s0 + $0x3e] sm:$0x3]
  %v40 = vld [vmem:[%s0 + $0x40] sm:$0x3]
  %v41 = vld [vmem:[%s0 + $0x42] sm:$0x3]
  %v42 = vld [vmem:[%s0 + $0x44] sm:$0x3]
  %v43 = vld [vmem:[%s0 + $0x46] sm:$0x3]
  %v44 = vld [vmem:[%s0 + $0x48] sm:$0x3]
  %v45 = vld [vmem:[%s0 + $0x4a] sm:$0x3]
  %v46 = vld [vmem:[%s0 + $0x4c] sm:$0x3]
  %v47 = vld [vmem:[%s0 + $0x4e] sm:$0x3]
  %v48 = vld [vmem:[%s0 + $0x50] sm:$0x3]
  %v49 = vld [vmem:[%s0 + $0x52] sm:$0x3]
  %v50 = vld [vmem:[%s0 + $0x54] sm:$0x3]
  %v51 = vld [vmem:[%s0 + $0x56] sm:$0x3]
  %v52 = vld [vmem:[%s0 + $0x58] sm:$0x3]
  %v53 = vld [vmem:[%s0 + $0x5a] sm:$0x3]
  %v54 = vld [vmem:[%s0 + $0x5c] sm:$0x3]
  %v55 = vld [vmem:[%s0 + $0x5e] sm:$0x3]
  %v56 = vld [vmem:[%s0 + $0x60] sm:$0x3]
  %v57 = vld [vmem:[%s0 + $0x62] sm:$0x3]
  %v58 = vld [vmem:[%s0 + $0x64] sm:$0x3]
  %v59 = vld [vmem:[%s0 + $0x66] sm:$0x3]
  %v60 = vld [vmem:[%s0 + $0x68] sm:$0x3]
  %v61 = vld [vmem:[%s0 + $0x6a] sm:$0x3]
  %v62 = vld [vmem:[%s0 + $0x6c] sm:$0x3]
  %v63 = vld [vmem:[%s0 + $0x6e] sm:$0x3]
  %v64 = vld [vmem:[%s0 + $0x70] sm:$0x3]
  %v65 = vld [vmem:[%s0 + $0x72] sm:$0x3]
  %v66 = vld [vmem:[%s0 + $0x74] sm:$0x3]
  %v67 = vld [vmem:[%s0 + $0x76] sm:$0x3]
  %v68 = vld [vmem:[%s0 + $0x78] sm:$0x3]
  %v69 = vld [vmem:[%s0 + $0x7a] sm:$0x3]
  %v70 = vld [vmem:[%s0 + $0x7c] sm:$0x3]
  %v71 = vld [vmem:[%s0 + $0x7e] sm:$0x3]
  %v72 = vld [vmem:[%s0 + $0x80] sm:$0x3]
  %v73 = vld [vmem:[%s0 + $0x82] sm:$0x3]
  %v74 = vld [vmem:[%s0 + $0x84] sm:$0x3]
  %v75 = vld [vmem:[%s0 + $0x86] sm:$0x3]
  %v76 = vld [vmem:[%s0 + $0x88] sm:$0x3]
  %v77 = vld [vmem:[%s0 + $0x8a] sm:$0x3]
  %v78 = vld [vmem:[%s0 + $0x8c] sm:$0x3]
  %v79 = vld [vmem:[%s0 + $0x8e] sm:$0x3]
  %v80 = vld [vmem:[%s0 + $0x90] sm:$0x3]
  %v81 = vld [vmem:[%s0 + $0x92] sm:$0x3]
  %v82 = vld [vmem:[%s0 + $0x94] sm:$0x3]
  %v83 = vld [vmem:[%s0 + $0x96] sm:$0x3]
  %v84 = vld [vmem:[%s0 + $0x98] sm:$0x3]
  %v85 = vld [vmem:[%s0 + $0x9a] sm:$0x3]
  %v86 = vld [vmem:[%s0 + $0x9c] sm:$0x3]
  %v87 = vld [vmem:[%s0 + $0x9e] sm:$0x3]
  %v88 = vld [vmem:[%s0 + $0xa0] sm:$0x3]
  %v89 = vld [vmem:[%s0 + $0xa2] sm:$0x3]
  %v90 = vld [vmem:[%s0 + $0xa4] sm:$0x3]
  %v91 = vld [vmem:[%s0 + $0xa6] sm:$0x3]
  %v92 = vld [vmem:[%s0 + $0xa8] sm:$0x3]
  %v93 = vld [vmem:[%s0 + $0xaa] sm:$0x3]
  %v94 = vld [vmem:[%s0 + $0xac] sm:$0x3]
  %v95 = vld [vmem:[%s0 + $0xae] sm:$0x3]
  %v96 = vld [vmem:[%s0 + $0xb0] sm:$0x3]
  %v97 = vld [vmem:[%s0 + $0xb2] sm:$0x3]
  %v98 = vld [vmem:[%s0 + $0xb4] sm:$0x3]
  %v99 = vld [vmem:[%s0 + $0xb6] sm:$0x3]
  %v100 = vld [vmem:[%s0 + $0xb8] sm:$0x3]
  %v101 = vld [vmem:[%s0 + $0xba] sm:$0x3]
  %v102 = vld [vmem:[%s0 + $0xbc] sm:$0x3]
  %v103 = vld [vmem:[%s0 + $0xbe] sm:$0x3]
  %v104 = vld [vmem:[%s0 + $0xc0] sm:$0x3]
  %v105 = vld [vmem:[%s0 + $0xc2] sm:$0x3]
  %v106 = vld [vmem:[%s0 + $0xc4] sm:$0x3]
  %v107 = vld [vmem:[%s0 + $0xc6] sm:$0x3]
  %v108 = vld [vmem:[%s0 + $0xc8] sm:$0x3]
  %v109 = vld [vmem:[%s0 + $0xca] sm:$0x3]
  %v110 = vld [vmem:[%s0 + $0xcc] sm:$0x3]
  %v111 = vld [vmem:[%s0 + $0xce] sm:$0x3]
  %v112 = vld [vmem:[%s0 + $0xd0] sm:$0x3]
  %v113 = vld [vmem:[%s0 + $0xd2] sm:$0x3]
  %v114 = vld [vmem:[%s0 + $0xd4] sm:$0x3]
  %v115 = vld [vmem:[%s0 + $0xd6] sm:$0x3]
  %v116 = vld [vmem:[%s0 + $0xd8] sm:$0x3]
  %v117 = vld [vmem:[%s0 + $0xda] sm:$0x3]
  %v118 = vld [vmem:[%s0 + $0xdc] sm:$0x3]
  %v119 = vld [vmem:[%s0 + $0xde] sm:$0x3]
  %v120 = vld [vmem:[%s0 + $0xe0] sm:$0x3]
  %v121 = vld [vmem:[%s0 + $0xe2] sm:$0x3]
  %v122 = vld [vmem:[%s0 + $0xe4] sm:$0x3]
  %v123 = vld [vmem:[%s0 + $0xe6] sm:$0x3]
  %v124 = vld [vmem:[%s0 + $0xe8] sm:$0x3]
  %v125 = vld [vmem:[%s0 + $0xea] sm:$0x3]
  %v126 = vld [vmem:[%s0 + $0xec] sm:$0x3]
  %v127 = vld [vmem:[%s0 + $0xee] sm:$0x3]
  %v128 = vld [vmem:[%s0 + $0xf0] sm:$0x3]
  %v129 = vld [vmem:[%s0 + $0xf2] sm:$0x3]
  %v130 = vld [vmem:[%s0 + $0xf4] sm:$0x3]
  %v131 = vld [vmem:[%s0 + $0xf6] sm:$0x3]
  %v132 = vld [vmem:[%s0 + $0xf8] sm:$0x3]
  %v133 = vld [vmem:[%s0 + $0xfa] sm:$0x3]
  %v134 = vld [vmem:[%s0 + $0xfc] sm:$0x3]
  %v135 = vld [vmem:[%s0 + $0xfe] sm:$0x3]
  %v136 = vld [vmem:[%s0 + $0x100] sm:$0x3]
  %v137 = vld [vmem:[%s0 + $0x102] sm:$0x3]
  %v138 = vld [vmem:[%s0 + $0x104] sm:$0x3]
  %v139 = vld [vmem:[%s0 + $0x106] sm:$0x3]
  %v140 = vld [vmem:[%s0 + $0x108] sm:$0x3]
  %v141 = vld [vmem:[%s0 + $0x10a] sm:$0x3]
  %v142 = vld [vmem:[%s0 + $0x10c] sm:$0x3]
  %v143 = vld [vmem:[%s0 + $0x10e] sm:$0x3]
  %v144 = vld [vmem:[%s0 + $0x110] sm:$0x3]
  %v145 = vld [vmem:[%s0 + $0x112] sm:$0x3]
  %v146 = vld [vmem:[%s0 + $0x114] sm:$0x3]
  %v147 = vld [vmem:[%s0 + $0x116] sm:$0x3]
  %v148 = vld [vmem:[%s0 + $0x118] sm:$0x3]
  %v149 = vld [vmem:[%s0 + $0x11a] sm:$0x3]
  %v150 = vld [vmem:[%s0 + $0x11c] sm:$0x3]
  %v151 = vld [vmem:[%s0 + $0x11e] sm:$0x3]
  %v152 = vld [vmem:[%s0 + $0x120] sm:$0x3]
  %v153 = vld [vmem:[%s0 + $0x122] sm:$0x3]
  %v154 = vld [vmem:[%s0 + $0x124] sm:$0x3]
  %v155 = vld [vmem:[%s0 + $0x126] sm:$0x3]
  %v156 = vld [vmem:[%s0 + $0x128] sm:$0x3]
  %v157 = vld [vmem:[%s0 + $0x12a] sm:$0x3]
  %v158 = vld [vmem:[%s0 + $0x12c] sm:$0x3]
  %v159 = vld [vmem:[%s0 + $0x12e] sm:$0x3]
  %v160 = vld [vmem:[%s0 + $0x130] sm:$0x3]
  %v161 = vld [vmem:[%s0 + $0x132] sm:$0x3]
  %v162 = vld [vmem:[%s0 + $0x134] sm:$0x3]
  %v163 = vld [vmem:[%s0 + $0x136] sm:$0x3]
  %v164 = vld [vmem:[%s0 + $0x138] sm:$0x3]
  %v165 = vld [vmem:[%s0 + $0x13a] sm:$0x3]
  %v166 = vld [vmem:[%s0 + $0x13c] sm:$0x3]
  %v167 = vld [vmem:[%s0 + $0x13e] sm:$0x3]
  %v168 = vld [vmem:[%s0 + $0x140] sm:$0x3]
  %v169 = vld [vmem:[%s0 + $0x142] sm:$0x3]
  %v170 = vld [vmem:[%s0 + $0x144] sm:$0x3]
  %v171 = vld [vmem:[%s0 + $0x146] sm:$0x3]
  %v172 = vld [vmem:[%s0 + $0x148] sm:$0x3]
  %v173 = vld [vmem:[%s0 + $0x14a] sm:$0x3]
  %v174 = vld [vmem:[%s0 + $0x14c] sm:$0x3]
  %v175 = vld [vmem:[%s0 + $0x14e] sm:$0x3]
  %v176 = vld [vmem:[%s0 + $0x150] sm:$0x3]
  %v177 = vld [vmem:[%s0 + $0x152] sm:$0x3]
  %v178 = vld [vmem:[%s0 + $0x154] sm:$0x3]
  %v179 = vld [vmem:[%s0 + $0x156] sm:$0x3]
  %v180 = vld [vmem:[%s0 + $0x158] sm:$0x3]
  %v181 = vld [vmem:[%s0 + $0x15a] sm:$0x3]
  %v182 = vld [vmem:[%s0 + $0x15c] sm:$0x3]
  %v183 = vld [vmem:[%s0 + $0x15e] sm:$0x3]
  %v184 = vld [vmem:[%s0 + $0x160] sm:$0x3]
  %v185 = vld [vmem:[%s0 + $0x162] sm:$0x3]
  %v186 = vld [vmem:[%s0 + $0x164] sm:$0x3]
  %v187 = vld [vmem:[%s0 + $0x166] sm:$0x3]
  %v188 = vld [vmem:[%s0 + $0x168] sm:$0x3]
  %v189 = vld [vmem:[%s0 + $0x16a] sm:$0x3]
  %v190 = vld [vmem:[%s0 + $0x16c] sm:$0x3]
  %v191 = vld [vmem:[%s0 + $0x16e] sm:$0x3]
  %v192 = vld [vmem:[%s0 + $0x170] sm:$0x3]
  %v193 = vld [vmem:[%s0 + $0x172] sm:$0x3]
  %v194 = vld [vmem:[%s0 + $0x174] sm:$0x3]
  %v195 = vld [vmem:[%s0 + $0x176] sm:$0x3]
  %v196 = vld [vmem:[%s0 + $0x178] sm:$0x3]
  %v197 = vld [vmem:[%s0 + $0x17a] sm:$0x3]
  %v198 = vld [vmem:[%s0 + $0x17c] sm:$0x3]
  %v199 = vld [vmem:[%s0 + $0x17e] sm:$0x3]
  %v200 = vld [vmem:[%s0 + $0x180] sm:$0x3]
  %v201 = vld [vmem:[%s0 + $0x182] sm:$0x3]
  %v202 = vld [vmem:[%s0 + $0x184] sm:$0x3]
  %v203 = vld [vmem:[%s0 + $0x186] sm:$0x3]
  %v204 = vld [vmem:[%s0 + $0x188] sm:$0x3]
  %v205 = vld [vmem:[%s0 + $0x18a] sm:$0x3]
  %v206 = vld [vmem:[%s0 + $0x18c] sm:$0x3]
  %v207 = vld [vmem:[%s0 + $0x18e] sm:$0x3]
  %v208 = vld [vmem:[%s0 + $0x190] sm:$0x3]
  %v209 = vld [vmem:[%s0 + $0x192] sm:$0x3]
  %v210 = vld [vmem:[%s0 + $0x194] sm:$0x3]
  %v211 = vld [vmem:[%s0 + $0x196] sm:$0x3]
  %v212 = vld [vmem:[%s0 + $0x198] sm:$0x3]
  %v213 = vld [vmem:[%s0 + $0x19a] sm:$0x3]
  %v214 = vld [vmem:[%s0 + $0x19c] sm:$0x3]
  %v215 = vld [vmem:[%s0 + $0x19e] sm:$0x3]
  %v216 = vld [vmem:[%s0 + $0x1a0] sm:$0x3]
  %v217 = vld [vmem:[%s0 + $0x1a2] sm:$0x3]
  %v218 = vld [vmem:[%s0 + $0x1a4] sm:$0x3]
  %v219 = vld [vmem:[%s0 + $0x1a6] sm:$0x3]
  %v220 = vld [vmem:[%s0 + $0x1a8] sm:$0x3]
  %v221 = vld [vmem:[%s0 + $0x1aa] sm:$0x3]
  %v222 = vld [vmem:[%s0 + $0x1ac] sm:$0x3]
  %v223 = vld [vmem:[%s0 + $0x1ae] sm:$0x3]
  %v224 = vld [vmem:[%s0 + $0x1b0] sm:$0x3]
  %v225 = vld [vmem:[%s0 + $0x1b2] sm:$0x3]
  %v226 = vld [vmem:[%s0 + $0x1b4] sm:$0x3]
  %v227 = vld [vmem:[%s0 + $0x1b6] sm:$0x3]
  %v228 = vld [vmem:[%s0 + $0x1b8] sm:$0x3]
  %v229 = vld [vmem:[%s0 + $0x1ba] sm:$0x3]
  %v230 = vld [vmem:[%s0 + $0x1bc] sm:$0x3]
  %v231 = vld [vmem:[%s0 + $0x1be] sm:$0x3]
  %v232 = vld [vmem:[%s0 + $0x1c0] sm:$0x3]
  %v233 = vld [vmem:[%s0 + $0x1c2] sm:$0x3]
  %v234 = vld [vmem:[%s0 + $0x1c4] sm:$0x3]
  %v235 = vld [vmem:[%s0 + $0x1c6] sm:$0x3]
  %v236 = vld [vmem:[%s0 + $0x1c8] sm:$0x3]
  %v237 = vld [vmem:[%s0 + $0x1ca] sm:$0x3]
  %v238 = vld [vmem:[%s0 + $0x1cc] sm:$0x3]
  %v239 = vld [vmem:[%s0 + $0x1ce] sm:$0x3]
  %v240 = vld [vmem:[%s0 + $0x1d0] sm:$0x3]
  %v241 = vld [vmem:[%s0 + $0x1d2] sm:$0x3]
  %v242 = vld [vmem:[%s0 + $0x1d4] sm:$0x3]
  %v243 = vld [vmem:[%s0 + $0x1d6] sm:$0x3]
  %v244 = vld [vmem:[%s0 + $0x1d8] sm:$0x3]
  %v245 = vld [vmem:[%s0 + $0x1da] sm:$0x3]
  %v246 = vld [vmem:[%s0 + $0x1dc] sm:$0x3]
  %v247 = vld [vmem:[%s0 + $0x1de] sm:$0x3]
  %v248 = vld [vmem:[%s0 + $0x1e0] sm:$0x3]
  %v249 = vld [vmem:[%s0 + $0x1e2] sm:$0x3]
  %v250 = vld [vmem:[%s0 + $0x1e4] sm:$0x3]
  %v251 = vld [vmem:[%s0 + $0x1e6] sm:$0x3]
  %v252 = vld [vmem:[%s0 + $0x1e8] sm:$0x3]
  %v253 = vld [vmem:[%s0 + $0x1ea] sm:$0x3]
  %v254 = vld [vmem:[%s0 + $0x1ec] sm:$0x3]
  %v255 = vld [vmem:[%s0 + $0x1ee] sm:$0x3]
  %v256 = vld [vmem:[%s0 + $0x1f0] sm:$0x3]
  %v257 = vld [vmem:[%s0 + $0x1f2] sm:$0x3]
  %v258 = vld [vmem:[%s0 + $0x1f4] sm:$0x3]
  %v259 = vld [vmem:[%s0 + $0x1f6] sm:$0x3]
  %v260 = vld [vmem:[%s0 + $0x1f8] sm:$0x3]
  %v261 = vld [vmem:[%s0 + $0x1fa] sm:$0x3]
  %v262 = vld [vmem:[%s0 + $0x1fc] sm:$0x3]
  %v263 = vld [vmem:[%s0 + $0x1fe] sm:$0x3]
  %v264 = vmax.f32 %v8, %v16
  %v265 = vmax.f32 %v9, %v17
  %v266 = vmax.f32 %v10, %v18
  %v267 = vmax.f32 %v11, %v19
  %v268 = vmax.f32 %v12, %v20
  %v269 = vmax.f32 %v13, %v21
  %v270 = vmax.f32 %v14, %v22
  %v271 = vmax.f32 %v15, %v23
  %v272 = vmax.f32 %v24, %v32
  %v273 = vmax.f32 %v25, %v33
  %v274 = vmax.f32 %v26, %v34
  %v275 = vmax.f32 %v27, %v35
  %v276 = vmax.f32 %v28, %v36
  %v277 = vmax.f32 %v29, %v37
  %v278 = vmax.f32 %v30, %v38
  %v279 = vmax.f32 %v31, %v39
  %v280 = vmax.f32 %v40, %v48
  %v281 = vmax.f32 %v41, %v49
  %v282 = vmax.f32 %v42, %v50
  %v283 = vmax.f32 %v43, %v51
  %v284 = vmax.f32 %v44, %v52
  %v285 = vmax.f32 %v45, %v53
  %v286 = vmax.f32 %v46, %v54
  %v287 = vmax.f32 %v47, %v55
  %v288 = vmax.f32 %v56, %v64
  %v289 = vmax.f32 %v57, %v65
  %v290 = vmax.f32 %v58, %v66
  %v291 = vmax.f32 %v59, %v67
  %v292 = vmax.f32 %v60, %v68
  %v293 = vmax.f32 %v61, %v69
  %v294 = vmax.f32 %v62, %v70
  %v295 = vmax.f32 %v63, %v71
  %v296 = vmax.f32 %v72, %v80
  %v297 = vmax.f32 %v73, %v81
  %v298 = vmax.f32 %v74, %v82
  %v299 = vmax.f32 %v75, %v83
  %v300 = vmax.f32 %v76, %v84
  %v301 = vmax.f32 %v77, %v85
  %v302 = vmax.f32 %v78, %v86
  %v303 = vmax.f32 %v79, %v87
  %v304 = vmax.f32 %v88, %v96
  %v305 = vmax.f32 %v89, %v97
  %v306 = vmax.f32 %v90, %v98
  %v307 = vmax.f32 %v91, %v99
  %v308 = vmax.f32 %v92, %v100
  %v309 = vmax.f32 %v93, %v101
  %v310 = vmax.f32 %v94, %v102
  %v311 = vmax.f32 %v95, %v103
  %v312 = vmax.f32 %v104, %v112
  %v313 = vmax.f32 %v105, %v113
  %v314 = vmax.f32 %v106, %v114
  %v315 = vmax.f32 %v107, %v115
  %v316 = vmax.f32 %v108, %v116
  %v317 = vmax.f32 %v109, %v117
  %v318 = vmax.f32 %v110, %v118
  %v319 = vmax.f32 %v111, %v119
  %v320 = vmax.f32 %v120, %v128
  %v321 = vmax.f32 %v121, %v129
  %v322 = vmax.f32 %v122, %v130
  %v323 = vmax.f32 %v123, %v131
  %v324 = vmax.f32 %v124, %v132
  %v325 = vmax.f32 %v125, %v133
  %v326 = vmax.f32 %v126, %v134
  %v327 = vmax.f32 %v127, %v135
  %v328 = vmax.f32 %v136, %v144
  %v329 = vmax.f32 %v137, %v145
  %v330 = vmax.f32 %v138, %v146
  %v331 = vmax.f32 %v139, %v147
  %v332 = vmax.f32 %v140, %v148
  %v333 = vmax.f32 %v141, %v149
  %v334 = vmax.f32 %v142, %v150
  %v335 = vmax.f32 %v143, %v151
  %v336 = vmax.f32 %v152, %v160
  %v337 = vmax.f32 %v153, %v161
  %v338 = vmax.f32 %v154, %v162
  %v339 = vmax.f32 %v155, %v163
  %v340 = vmax.f32 %v156, %v164
  %v341 = vmax.f32 %v157, %v165
  %v342 = vmax.f32 %v158, %v166
  %v343 = vmax.f32 %v159, %v167
  %v344 = vmax.f32 %v168, %v176
  %v345 = vmax.f32 %v169, %v177
  %v346 = vmax.f32 %v170, %v178
  %v347 = vmax.f32 %v171, %v179
  %v348 = vmax.f32 %v172, %v180
  %v349 = vmax.f32 %v173, %v181
  %v350 = vmax.f32 %v174, %v182
  %v351 = vmax.f32 %v175, %v183
  %v352 = vmax.f32 %v184, %v192
  %v353 = vmax.f32 %v185, %v193
  %v354 = vmax.f32 %v186, %v194
  %v355 = vmax.f32 %v187, %v195
  %v356 = vmax.f32 %v188, %v196
  %v357 = vmax.f32 %v189, %v197
  %v358 = vmax.f32 %v190, %v198
  %v359 = vmax.f32 %v191, %v199
  %v360 = vmax.f32 %v200, %v208
  %v361 = vmax.f32 %v201, %v209
  %v362 = vmax.f32 %v202, %v210
  %v363 = vmax.f32 %v203, %v211
  %v364 = vmax.f32 %v204, %v212
  %v365 = vmax.f32 %v205, %v213
  %v366 = vmax.f32 %v206, %v214
  %v367 = vmax.f32 %v207, %v215
  %v368 = vmax.f32 %v216, %v224
  %v369 = vmax.f32 %v217, %v225
  %v370 = vmax.f32 %v218, %v226
  %v371 = vmax.f32 %v219, %v227
  %v372 = vmax.f32 %v220, %v228
  %v373 = vmax.f32 %v221, %v229
  %v374 = vmax.f32 %v222, %v230
  %v375 = vmax.f32 %v223, %v231
  %v376 = vmax.f32 %v232, %v240
  %v377 = vmax.f32 %v233, %v241
  %v378 = vmax.f32 %v234, %v242
  %v379 = vmax.f32 %v235, %v243
  %v380 = vmax.f32 %v236, %v244
  %v381 = vmax.f32 %v237, %v245
  %v382 = vmax.f32 %v238, %v246
  %v383 = vmax.f32 %v239, %v247
  %v384 = vmax.f32 %v248, %v256
  %v385 = vmax.f32 %v249, %v257
  %v386 = vmax.f32 %v250, %v258
  %v387 = vmax.f32 %v251, %v259
  %v388 = vmax.f32 %v252, %v260
  %v389 = vmax.f32 %v253, %v261
  %v390 = vmax.f32 %v254, %v262
  %v391 = vmax.f32 %v255, %v263
  %v520 = vrot.slane %v264, 1
  %v521 = vrot.slane %v265, 1
  %v522 = vrot.slane %v266, 1
  %v523 = vrot.slane %v267, 1
  %v524 = vrot.slane %v268, 1
  %v525 = vrot.slane %v269, 1
  %v526 = vrot.slane %v270, 1
  %v527 = vrot.slane %v271, 1
  %v528 = vrot.slane %v272, 1
  %v529 = vrot.slane %v273, 1
  %v530 = vrot.slane %v274, 1
  %v531 = vrot.slane %v275, 1
  %v532 = vrot.slane %v276, 1
  %v533 = vrot.slane %v277, 1
  %v534 = vrot.slane %v278, 1
  %v535 = vrot.slane %v279, 1
  %v536 = vrot.slane %v280, 1
  %v537 = vrot.slane %v281, 1
  %v538 = vrot.slane %v282, 1
  %v539 = vrot.slane %v283, 1
  %v540 = vrot.slane %v284, 1
  %v541 = vrot.slane %v285, 1
  %v542 = vrot.slane %v286, 1
  %v543 = vrot.slane %v287, 1
  %v544 = vrot.slane %v288, 1
  %v545 = vrot.slane %v289, 1
  %v546 = vrot.slane %v290, 1
  %v547 = vrot.slane %v291, 1
  %v548 = vrot.slane %v292, 1
  %v549 = vrot.slane %v293, 1
  %v550 = vrot.slane %v294, 1
  %v551 = vrot.slane %v295, 1
  %v552 = vrot.slane %v296, 1
  %v553 = vrot.slane %v297, 1
  %v554 = vrot.slane %v298, 1
  %v555 = vrot.slane %v299, 1
  %v556 = vrot.slane %v300, 1
  %v557 = vrot.slane %v301, 1
  %v558 = vrot.slane %v302, 1
  %v559 = vrot.slane %v303, 1
  %v560 = vrot.slane %v304, 1
  %v561 = vrot.slane %v305, 1
  %v562 = vrot.slane %v306, 1
  %v563 = vrot.slane %v307, 1
  %v564 = vrot.slane %v308, 1
  %v565 = vrot.slane %v309, 1
  %v566 = vrot.slane %v310, 1
  %v567 = vrot.slane %v311, 1
  %v568 = vrot.slane %v312, 1
  %v569 = vrot.slane %v313, 1
  %v570 = vrot.slane %v314, 1
  %v571 = vrot.slane %v315, 1
  %v572 = vrot.slane %v316, 1
  %v573 = vrot.slane %v317, 1
  %v574 = vrot.slane %v318, 1
  %v575 = vrot.slane %v319, 1
  %v576 = vrot.slane %v320, 1
  %v577 = vrot.slane %v321, 1
  %v578 = vrot.slane %v322, 1
  %v579 = vrot.slane %v323, 1
  %v580 = vrot.slane %v324, 1
  %v581 = vrot.slane %v325, 1
  %v582 = vrot.slane %v326, 1
  %v583 = vrot.slane %v327, 1
  %v584 = vrot.slane %v328, 1
  %v585 = vrot.slane %v329, 1
  %v586 = vrot.slane %v330, 1
  %v587 = vrot.slane %v331, 1
  %v588 = vrot.slane %v332, 1
  %v589 = vrot.slane %v333, 1
  %v590 = vrot.slane %v334, 1
  %v591 = vrot.slane %v335, 1
  %v592 = vrot.slane %v336, 1
  %v593 = vrot.slane %v337, 1
  %v594 = vrot.slane %v338, 1
  %v595 = vrot.slane %v339, 1
  %v596 = vrot.slane %v340, 1
  %v597 = vrot.slane %v341, 1
  %v598 = vrot.slane %v342, 1
  %v599 = vrot.slane %v343, 1
  %v600 = vrot.slane %v344, 1
  %v601 = vrot.slane %v345, 1
  %v602 = vrot.slane %v346, 1
  %v603 = vrot.slane %v347, 1
  %v604 = vrot.slane %v348, 1
  %v605 = vrot.slane %v349, 1
  %v606 = vrot.slane %v350, 1
  %v607 = vrot.slane %v351, 1
  %v608 = vrot.slane %v352, 1
  %v609 = vrot.slane %v353, 1
  %v610 = vrot.slane %v354, 1
  %v611 = vrot.slane %v355, 1
  %v612 = vrot.slane %v356, 1
  %v613 = vrot.slane %v357, 1
  %v614 = vrot.slane %v358, 1
  %v615 = vrot.slane %v359, 1
  %v616 = vrot.slane %v360, 1
  %v617 = vrot.slane %v361, 1
  %v618 = vrot.slane %v362, 1
  %v619 = vrot.slane %v363, 1
  %v620 = vrot.slane %v364, 1
  %v621 = vrot.slane %v365, 1
  %v622 = vrot.slane %v366, 1
  %v623 = vrot.slane %v367, 1
  %v624 = vrot.slane %v368, 1
  %v625 = vrot.slane %v369, 1
  %v626 = vrot.slane %v370, 1
  %v627 = vrot.slane %v371, 1
  %v628 = vrot.slane %v372, 1
  %v629 = vrot.slane %v373, 1
  %v630 = vrot.slane %v374, 1
  %v631 = vrot.slane %v375, 1
  %v632 = vrot.slane %v376, 1
  %v633 = vrot.slane %v377, 1
  %v634 = vrot.slane %v378, 1
  %v635 = vrot.slane %v379, 1
  %v636 = vrot.slane %v380, 1
  %v637 = vrot.slane %v381, 1
  %v638 = vrot.slane %v382, 1
  %v639 = vrot.slane %v383, 1
  %v640 = vrot.slane %v384, 1
  %v641 = vrot.slane %v385, 1
  %v642 = vrot.slane %v386, 1
  %v643 = vrot.slane %v387, 1
  %v644 = vrot.slane %v388, 1
  %v645 = vrot.slane %v389, 1
  %v646 = vrot.slane %v390, 1
  %v647 = vrot.slane %v391, 1
  %v776 = vmax.f32 %v264, %v520
  %v777 = vmax.f32 %v265, %v521
  %v778 = vmax.f32 %v266, %v522
  %v779 = vmax.f32 %v267, %v523
  %v780 = vmax.f32 %v268, %v524
  %v781 = vmax.f32 %v269, %v525
  %v782 = vmax.f32 %v270, %v526
  %v783 = vmax.f32 %v271, %v527
  %v784 = vmax.f32 %v272, %v528
  %v785 = vmax.f32 %v273, %v529
  %v786 = vmax.f32 %v274, %v530
  %v787 = vmax.f32 %v275, %v531
  %v788 = vmax.f32 %v276, %v532
  %v789 = vmax.f32 %v277, %v533
  %v790 = vmax.f32 %v278, %v534
  %v791 = vmax.f32 %v279, %v535
  %v792 = vmax.f32 %v280, %v536
  %v793 = vmax.f32 %v281, %v537
  %v794 = vmax.f32 %v282, %v538
  %v795 = vmax.f32 %v283, %v539
  %v796 = vmax.f32 %v284, %v540
  %v797 = vmax.f32 %v285, %v541
  %v798 = vmax.f32 %v286, %v542
  %v799 = vmax.f32 %v287, %v543
  %v800 = vmax.f32 %v288, %v544
  %v801 = vmax.f32 %v289, %v545
  %v802 = vmax.f32 %v290, %v546
  %v803 = vmax.f32 %v291, %v547
  %v804 = vmax.f32 %v292, %v548
  %v805 = vmax.f32 %v293, %v549
  %v806 = vmax.f32 %v294, %v550
  %v807 = vmax.f32 %v295, %v551
  %v808 = vmax.f32 %v296, %v552
  %v809 = vmax.f32 %v297, %v553
  %v810 = vmax.f32 %v298, %v554
  %v811 = vmax.f32 %v299, %v555
  %v812 = vmax.f32 %v300, %v556
  %v813 = vmax.f32 %v301, %v557
  %v814 = vmax.f32 %v302, %v558
  %v815 = vmax.f32 %v303, %v559
  %v816 = vmax.f32 %v304, %v560
  %v817 = vmax.f32 %v305, %v561
  %v818 = vmax.f32 %v306, %v562
  %v819 = vmax.f32 %v307, %v563
  %v820 = vmax.f32 %v308, %v564
  %v821 = vmax.f32 %v309, %v565
  %v822 = vmax.f32 %v310, %v566
  %v823 = vmax.f32 %v311, %v567
  %v824 = vmax.f32 %v312, %v568
  %v825 = vmax.f32 %v313, %v569
  %v826 = vmax.f32 %v314, %v570
  %v827 = vmax.f32 %v315, %v571
  %v828 = vmax.f32 %v316, %v572
  %v829 = vmax.f32 %v317, %v573
  %v830 = vmax.f32 %v318, %v574
  %v831 = vmax.f32 %v319, %v575
  %v832 = vmax.f32 %v320, %v576
  %v833 = vmax.f32 %v321, %v577
  %v834 = vmax.f32 %v322, %v578
  %v835 = vmax.f32 %v323, %v579
  %v836 = vmax.f32 %v324, %v580
  %v837 = vmax.f32 %v325, %v581
  %v838 = vmax.f32 %v326, %v582
  %v839 = vmax.f32 %v327, %v583
  %v840 = vmax.f32 %v328, %v584
  %v841 = vmax.f32 %v329, %v585
  %v842 = vmax.f32 %v330, %v586
  %v843 = vmax.f32 %v331, %v587
  %v844 = vmax.f32 %v332, %v588
  %v845 = vmax.f32 %v333, %v589
  %v846 = vmax.f32 %v334, %v590
  %v847 = vmax.f32 %v335, %v591
  %v848 = vmax.f32 %v336, %v592
  %v849 = vmax.f32 %v337, %v593
  %v850 = vmax.f32 %v338, %v594
  %v851 = vmax.f32 %v339, %v595
  %v852 = vmax.f32 %v340, %v596
  %v853 = vmax.f32 %v341, %v597
  %v854 = vmax.f32 %v342, %v598
  %v855 = vmax.f32 %v343, %v599
  %v856 = vmax.f32 %v344, %v600
  %v857 = vmax.f32 %v345, %v601
  %v858 = vmax.f32 %v346, %v602
  %v859 = vmax.f32 %v347, %v603
  %v860 = vmax.f32 %v348, %v604
  %v861 = vmax.f32 %v349, %v605
  %v862 = vmax.f32 %v350, %v606
  %v863 = vmax.f32 %v351, %v607
  %v864 = vmax.f32 %v352, %v608
  %v865 = vmax.f32 %v353, %v609
  %v866 = vmax.f32 %v354, %v610
  %v867 = vmax.f32 %v355, %v611
  %v868 = vmax.f32 %v356, %v612
  %v869 = vmax.f32 %v357, %v613
  %v870 = vmax.f32 %v358, %v614
  %v871 = vmax.f32 %v359, %v615
  %v872 = vmax.f32 %v360, %v616
  %v873 = vmax.f32 %v361, %v617
  %v874 = vmax.f32 %v362, %v618
  %v875 = vmax.f32 %v363, %v619
  %v876 = vmax.f32 %v364, %v620
  %v877 = vmax.f32 %v365, %v621
  %v878 = vmax.f32 %v366, %v622
  %v879 = vmax.f32 %v367, %v623
  %v880 = vmax.f32 %v368, %v624
  %v881 = vmax.f32 %v369, %v625
  %v882 = vmax.f32 %v370, %v626
  %v883 = vmax.f32 %v371, %v627
  %v884 = vmax.f32 %v372, %v628
  %v885 = vmax.f32 %v373, %v629
  %v886 = vmax.f32 %v374, %v630
  %v887 = vmax.f32 %v375, %v631
  %v888 = vmax.f32 %v376, %v632
  %v889 = vmax.f32 %v377, %v633
  %v890 = vmax.f32 %v378, %v634
  %v891 = vmax.f32 %v379, %v635
  %v892 = vmax.f32 %v380, %v636
  %v893 = vmax.f32 %v381, %v637
  %v894 = vmax.f32 %v382, %v638
  %v895 = vmax.f32 %v383, %v639
  %v896 = vmax.f32 %v384, %v640
  %v897 = vmax.f32 %v385, %v641
  %v898 = vmax.f32 %v386, %v642
  %v899 = vmax.f32 %v387, %v643
  %v900 = vmax.f32 %v388, %v644
  %v901 = vmax.f32 %v389, %v645
  %v902 = vmax.f32 %v390, %v646
  %v903 = vmax.f32 %v391, %v647
  %v1032 = vrot.slane %v777, 7
  %vm1033 = vcmask 1041409
  %v1034 = vsel %vm1033, %v1032, %v776
  %v1035 = vrot.slane %v778, 6
  %vm1036 = vcmask 1042434
  %v1037 = vsel %vm1036, %v1035, %v1034
  %v1038 = vrot.slane %v779, 5
  %vm1039 = vcmask 1043459
  %v1040 = vsel %vm1039, %v1038, %v1037
  %v1041 = vrot.slane %v780, 4
  %vm1042 = vcmask 1044484
  %v1043 = vsel %vm1042, %v1041, %v1040
  %v1044 = vrot.slane %v781, 3
  %vm1045 = vcmask 1045509
  %v1046 = vsel %vm1045, %v1044, %v1043
  %v1047 = vrot.slane %v782, 2
  %vm1048 = vcmask 1046534
  %v1049 = vsel %vm1048, %v1047, %v1046
  %v1050 = vrot.slane %v783, 1
  %vm1051 = vcmask 1047559
  %v1052 = vsel %vm1051, %v1050, %v1049
  %v1053 = vrot.slane %v785, 7
  %v1054 = vsel %vm1033, %v1053, %v784
  %v1055 = vrot.slane %v786, 6
  %v1056 = vsel %vm1036, %v1055, %v1054
  %v1057 = vrot.slane %v787, 5
  %v1058 = vsel %vm1039, %v1057, %v1056
  %v1059 = vrot.slane %v788, 4
  %v1060 = vsel %vm1042, %v1059, %v1058
  %v1061 = vrot.slane %v789, 3
  %v1062 = vsel %vm1045, %v1061, %v1060
  %v1063 = vrot.slane %v790, 2
  %v1064 = vsel %vm1048, %v1063, %v1062
  %v1065 = vrot.slane %v791, 1
  %v1066 = vsel %vm1051, %v1065, %v1064
  %v1067 = vrot.slane %v793, 7
  %v1068 = vsel %vm1033, %v1067, %v792
  %v1069 = vrot.slane %v794, 6
  %v1070 = vsel %vm1036, %v1069, %v1068
  %v1071 = vrot.slane %v795, 5
  %v1072 = vsel %vm1039, %v1071, %v1070
  %v1073 = vrot.slane %v796, 4
  %v1074 = vsel %vm1042, %v1073, %v1072
  %v1075 = vrot.slane %v797, 3
  %v1076 = vsel %vm1045, %v1075, %v1074
  %v1077 = vrot.slane %v798, 2
  %v1078 = vsel %vm1048, %v1077, %v1076
  %v1079 = vrot.slane %v799, 1
  %v1080 = vsel %vm1051, %v1079, %v1078
  %v1081 = vrot.slane %v801, 7
  %v1082 = vsel %vm1033, %v1081, %v800
  %v1083 = vrot.slane %v802, 6
  %v1084 = vsel %vm1036, %v1083, %v1082
  %v1085 = vrot.slane %v803, 5
  %v1086 = vsel %vm1039, %v1085, %v1084
  %v1087 = vrot.slane %v804, 4
  %v1088 = vsel %vm1042, %v1087, %v1086
  %v1089 = vrot.slane %v805, 3
  %v1090 = vsel %vm1045, %v1089, %v1088
  %v1091 = vrot.slane %v806, 2
  %v1092 = vsel %vm1048, %v1091, %v1090
  %v1093 = vrot.slane %v807, 1
  %v1094 = vsel %vm1051, %v1093, %v1092
  %v1095 = vrot.slane %v809, 7
  %v1096 = vsel %vm1033, %v1095, %v808
  %v1097 = vrot.slane %v810, 6
  %v1098 = vsel %vm1036, %v1097, %v1096
  %v1099 = vrot.slane %v811, 5
  %v1100 = vsel %vm1039, %v1099, %v1098
  %v1101 = vrot.slane %v812, 4
  %v1102 = vsel %vm1042, %v1101, %v1100
  %v1103 = vrot.slane %v813, 3
  %v1104 = vsel %vm1045, %v1103, %v1102
  %v1105 = vrot.slane %v814, 2
  %v1106 = vsel %vm1048, %v1105, %v1104
  %v1107 = vrot.slane %v815, 1
  %v1108 = vsel %vm1051, %v1107, %v1106
  %v1109 = vrot.slane %v817, 7
  %v1110 = vsel %vm1033, %v1109, %v816
  %v1111 = vrot.slane %v818, 6
  %v1112 = vsel %vm1036, %v1111, %v1110
  %v1113 = vrot.slane %v819, 5
  %v1114 = vsel %vm1039, %v1113, %v1112
  %v1115 = vrot.slane %v820, 4
  %v1116 = vsel %vm1042, %v1115, %v1114
  %v1117 = vrot.slane %v821, 3
  %v1118 = vsel %vm1045, %v1117, %v1116
  %v1119 = vrot.slane %v822, 2
  %v1120 = vsel %vm1048, %v1119, %v1118
  %v1121 = vrot.slane %v823, 1
  %v1122 = vsel %vm1051, %v1121, %v1120
  %v1123 = vrot.slane %v825, 7
  %v1124 = vsel %vm1033, %v1123, %v824
  %v1125 = vrot.slane %v826, 6
  %v1126 = vsel %vm1036, %v1125, %v1124
  %v1127 = vrot.slane %v827, 5
  %v1128 = vsel %vm1039, %v1127, %v1126
  %v1129 = vrot.slane %v828, 4
  %v1130 = vsel %vm1042, %v1129, %v1128
  %v1131 = vrot.slane %v829, 3
  %v1132 = vsel %vm1045, %v1131, %v1130
  %v1133 = vrot.slane %v830, 2
  %v1134 = vsel %vm1048, %v1133, %v1132
  %v1135 = vrot.slane %v831, 1
  %v1136 = vsel %vm1051, %v1135, %v1134
  %v1137 = vrot.slane %v833, 7
  %v1138 = vsel %vm1033, %v1137, %v832
  %v1139 = vrot.slane %v834, 6
  %v1140 = vsel %vm1036, %v1139, %v1138
  %v1141 = vrot.slane %v835, 5
  %v1142 = vsel %vm1039, %v1141, %v1140
  %v1143 = vrot.slane %v836, 4
  %v1144 = vsel %vm1042, %v1143, %v1142
  %v1145 = vrot.slane %v837, 3
  %v1146 = vsel %vm1045, %v1145, %v1144
  %v1147 = vrot.slane %v838, 2
  %v1148 = vsel %vm1048, %v1147, %v1146
  %v1149 = vrot.slane %v839, 1
  %v1150 = vsel %vm1051, %v1149, %v1148
  %v1151 = vrot.slane %v841, 7
  %v1152 = vsel %vm1033, %v1151, %v840
  %v1153 = vrot.slane %v842, 6
  %v1154 = vsel %vm1036, %v1153, %v1152
  %v1155 = vrot.slane %v843, 5
  %v1156 = vsel %vm1039, %v1155, %v1154
  %v1157 = vrot.slane %v844, 4
  %v1158 = vsel %vm1042, %v1157, %v1156
  %v1159 = vrot.slane %v845, 3
  %v1160 = vsel %vm1045, %v1159, %v1158
  %v1161 = vrot.slane %v846, 2
  %v1162 = vsel %vm1048, %v1161, %v1160
  %v1163 = vrot.slane %v847, 1
  %v1164 = vsel %vm1051, %v1163, %v1162
  %v1165 = vrot.slane %v849, 7
  %v1166 = vsel %vm1033, %v1165, %v848
  %v1167 = vrot.slane %v850, 6
  %v1168 = vsel %vm1036, %v1167, %v1166
  %v1169 = vrot.slane %v851, 5
  %v1170 = vsel %vm1039, %v1169, %v1168
  %v1171 = vrot.slane %v852, 4
  %v1172 = vsel %vm1042, %v1171, %v1170
  %v1173 = vrot.slane %v853, 3
  %v1174 = vsel %vm1045, %v1173, %v1172
  %v1175 = vrot.slane %v854, 2
  %v1176 = vsel %vm1048, %v1175, %v1174
  %v1177 = vrot.slane %v855, 1
  %v1178 = vsel %vm1051, %v1177, %v1176
  %v1179 = vrot.slane %v857, 7
  %v1180 = vsel %vm1033, %v1179, %v856
  %v1181 = vrot.slane %v858, 6
  %v1182 = vsel %vm1036, %v1181, %v1180
  %v1183 = vrot.slane %v859, 5
  %v1184 = vsel %vm1039, %v1183, %v1182
  %v1185 = vrot.slane %v860, 4
  %v1186 = vsel %vm1042, %v1185, %v1184
  %v1187 = vrot.slane %v861, 3
  %v1188 = vsel %vm1045, %v1187, %v1186
  %v1189 = vrot.slane %v862, 2
  %v1190 = vsel %vm1048, %v1189, %v1188
  %v1191 = vrot.slane %v863, 1
  %v1192 = vsel %vm1051, %v1191, %v1190
  %v1193 = vrot.slane %v865, 7
  %v1194 = vsel %vm1033, %v1193, %v864
  %v1195 = vrot.slane %v866, 6
  %v1196 = vsel %vm1036, %v1195, %v1194
  %v1197 = vrot.slane %v867, 5
  %v1198 = vsel %vm1039, %v1197, %v1196
  %v1199 = vrot.slane %v868, 4
  %v1200 = vsel %vm1042, %v1199, %v1198
  %v1201 = vrot.slane %v869, 3
  %v1202 = vsel %vm1045, %v1201, %v1200
  %v1203 = vrot.slane %v870, 2
  %v1204 = vsel %vm1048, %v1203, %v1202
  %v1205 = vrot.slane %v871, 1
  %v1206 = vsel %vm1051, %v1205, %v1204
  %v1207 = vrot.slane %v873, 7
  %v1208 = vsel %vm1033, %v1207, %v872
  %v1209 = vrot.slane %v874, 6
  %v1210 = vsel %vm1036, %v1209, %v1208
  %v1211 = vrot.slane %v875, 5
  %v1212 = vsel %vm1039, %v1211, %v1210
  %v1213 = vrot.slane %v876, 4
  %v1214 = vsel %vm1042, %v1213, %v1212
  %v1215 = vrot.slane %v877, 3
  %v1216 = vsel %vm1045, %v1215, %v1214
  %v1217 = vrot.slane %v878, 2
  %v1218 = vsel %vm1048, %v1217, %v1216
  %v1219 = vrot.slane %v879, 1
  %v1220 = vsel %vm1051, %v1219, %v1218
  %v1221 = vrot.slane %v881, 7
  %v1222 = vsel %vm1033, %v1221, %v880
  %v1223 = vrot.slane %v882, 6
  %v1224 = vsel %vm1036, %v1223, %v1222
  %v1225 = vrot.slane %v883, 5
  %v1226 = vsel %vm1039, %v1225, %v1224
  %v1227 = vrot.slane %v884, 4
  %v1228 = vsel %vm1042, %v1227, %v1226
  %v1229 = vrot.slane %v885, 3
  %v1230 = vsel %vm1045, %v1229, %v1228
  %v1231 = vrot.slane %v886, 2
  %v1232 = vsel %vm1048, %v1231, %v1230
  %v1233 = vrot.slane %v887, 1
  %v1234 = vsel %vm1051, %v1233, %v1232
  %v1235 = vrot.slane %v889, 7
  %v1236 = vsel %vm1033, %v1235, %v888
  %v1237 = vrot.slane %v890, 6
  %v1238 = vsel %vm1036, %v1237, %v1236
  %v1239 = vrot.slane %v891, 5
  %v1240 = vsel %vm1039, %v1239, %v1238
  %v1241 = vrot.slane %v892, 4
  %v1242 = vsel %vm1042, %v1241, %v1240
  %v1243 = vrot.slane %v893, 3
  %v1244 = vsel %vm1045, %v1243, %v1242
  %v1245 = vrot.slane %v894, 2
  %v1246 = vsel %vm1048, %v1245, %v1244
  %v1247 = vrot.slane %v895, 1
  %v1248 = vsel %vm1051, %v1247, %v1246
  %v1249 = vrot.slane %v897, 7
  %v1250 = vsel %vm1033, %v1249, %v896
  %v1251 = vrot.slane %v898, 6
  %v1252 = vsel %vm1036, %v1251, %v1250
  %v1253 = vrot.slane %v899, 5
  %v1254 = vsel %vm1039, %v1253, %v1252
  %v1255 = vrot.slane %v900, 4
  %v1256 = vsel %vm1042, %v1255, %v1254
  %v1257 = vrot.slane %v901, 3
  %v1258 = vsel %vm1045, %v1257, %v1256
  %v1259 = vrot.slane %v902, 2
  %v1260 = vsel %vm1048, %v1259, %v1258
  %v1261 = vrot.slane %v903, 1
  %v1262 = vsel %vm1051, %v1261, %v1260
  %1279 = vst [vmem:[%s1] sm:$0xff] %v1052
  %1280 = vst [vmem:[%s1 + $0x8] sm:$0xff] %v1066
  %1281 = vst [vmem:[%s1 + $0x10] sm:$0xff] %v1080
  %1282 = vst [vmem:[%s1 + $0x18] sm:$0xff] %v1094
  %1283 = vst [vmem:[%s1 + $0x20] sm:$0xff] %v1108
  %1284 = vst [vmem:[%s1 + $0x28] sm:$0xff] %v1122
  %1285 = vst [vmem:[%s1 + $0x30] sm:$0xff] %v1136
  %1286 = vst [vmem:[%s1 + $0x38] sm:$0xff] %v1150
  %1287 = vst [vmem:[%s1 + $0x40] sm:$0xff] %v1164
  %1288 = vst [vmem:[%s1 + $0x48] sm:$0xff] %v1178
  %1289 = vst [vmem:[%s1 + $0x50] sm:$0xff] %v1192
  %1290 = vst [vmem:[%s1 + $0x58] sm:$0xff] %v1206
  %1291 = vst [vmem:[%s1 + $0x60] sm:$0xff] %v1220
  %1292 = vst [vmem:[%s1 + $0x68] sm:$0xff] %v1234
  %1293 = vst [vmem:[%s1 + $0x70] sm:$0xff] %v1248
  %1294 = vst [vmem:[%s1 + $0x78] sm:$0xff] %v1262
  // Predicated region
  $region6: #{generator_forward.29} parent=0 // pred_check
    _
  $region7: #{generator_forward.29} parent=0 // pred_check_branch
    %1296 = sbr.rel (0) target = $region9
  $region8: #{generator_forward.29} parent=0 // pred_region
    _
  $region9: #{generator_forward.29} parent=0 // pred_fallthru
    _
  // Predicated region
  $region10: #{generator_forward.29} parent=0 // pred_check
    _
  $region11: #{generator_forward.29} parent=0 // pred_check_branch
    %1298 = sbr.rel (0) target = $region13
  $region12: #{generator_forward.29} parent=0 // pred_region
    _
  $region13: #{generator_forward.29} parent=0 // pred_fallthru
    _

// kernel: generator_forward.30
$region0: #{generator_forward.30}
  #allocation0 [shape = 'u32[]', space=smem, size = 0x4, offset = 0x4, fixed_abs, tag = 'smem constant byte address 0x4 - core index']
  #allocation1 [shape = 'u32[144,128]{1,0:T(1,128)}', space=vmem, size = 0x12000, scoped, tag = 'internal scratch']
  %s0 = inlined_call_operand.vmem [shape: bf16[128,72], index: 0, kind: input, shape index: {}]
  %s1 = inlined_call_operand.vmem [shape: bf16[72,128], index: 1, kind: input, shape index: {}]
  %s2 = inlined_call_operand.vmem [shape: f32[1,128], index: 2, kind: input, shape index: {}]
  %s3 = inlined_call_operand.vmem [shape: f32[1,128], index: 3, kind: input, shape index: {}]
  %s4 = inlined_call_operand.vmem [shape: f32[128,128], index: 4, kind: output, shape index: {}]
  %s5 = sld [smem:[#allocation0]]
  $region26: #{generator_forward.30} parent=0
    _
  %s7 = ssub.s32 1, %s5
  %s8 = scalar_select 0, %s7, %s5
  // Predicated region
  $region2: #{generator_forward.30} parent=0 // pred_check
    _
  $region3: #{generator_forward.30} parent=0 // pred_check_branch
    %10 = sbr.rel (0) target = $region5
  $region4: #{generator_forward.30} parent=0 // pred_region
    _
  $region5: #{generator_forward.30} parent=0 // pred_fallthru
    _
  // Predicated region
  $region6: #{generator_forward.30} parent=0 // pred_check
    _
  $region7: #{generator_forward.30} parent=0 // pred_check_branch
    %12 = sbr.rel (0) target = $region9
  $region8: #{generator_forward.30} parent=0 // pred_region
    _
  $region9: #{generator_forward.30} parent=0 // pred_fallthru
    _
  // Predicated region
  $region10: #{generator_forward.30} parent=0 // pred_check
    _
  $region11: #{generator_forward.30} parent=0 // pred_check_branch
    %14 = sbr.rel (0) target = $region13
  $region12: #{generator_forward.30} parent=0 // pred_region
    _
  $region13: #{generator_forward.30} parent=0 // pred_fallthru
    _
  // Predicated region
  $region14: #{generator_forward.30} parent=0 // pred_check
    _
  $region15: #{generator_forward.30} parent=0 // pred_check_branch
    %16 = sbr.rel (0) target = $region17
  $region16: #{generator_forward.30} parent=0 // pred_region
    _
  $region17: #{generator_forward.30} parent=0 // pred_fallthru
    _
  %v18 = vld [vmem:[%s0] sm:$0xf]
  %v19 = vld [vmem:[%s0 + $0x4] sm:$0xf]
  %v20 = vld [vmem:[%s0 + $0x8] sm:$0xf]
  %v21 = vld [vmem:[%s0 + $0xc] sm:$0xf]
  %v22 = vld [vmem:[%s0 + $0x10] sm:$0xf]
  %v23 = vld [vmem:[%s0 + $0x14] sm:$0xf]
  %v24 = vld [vmem:[%s0 + $0x18] sm:$0xf]
  %v25 = vld [vmem:[%s0 + $0x1c] sm:$0xf]
  %v26 = vld [vmem:[%s0 + $0x20] sm:$0xf]
  %v27 = vld [vmem:[%s0 + $0x24] sm:$0xf]
  %v28 = vld [vmem:[%s0 + $0x28] sm:$0xf]
  %v29 = vld [vmem:[%s0 + $0x2c] sm:$0xf]
  %v30 = vld [vmem:[%s0 + $0x30] sm:$0xf]
  %v31 = vld [vmem:[%s0 + $0x34] sm:$0xf]
  %v32 = vld [vmem:[%s0 + $0x38] sm:$0xf]
  %v33 = vld [vmem:[%s0 + $0x3c] sm:$0xf]
  %v34 = vld [vmem:[%s1] sm:$0xf]
  %v35 = vld [vmem:[%s1 + $0x4] sm:$0xf]
  %v36 = vld [vmem:[%s1 + $0x8] sm:$0xf]
  %v37 = vld [vmem:[%s1 + $0xc] sm:$0xf]
  %v38 = vld [vmem:[%s1 + $0x10] sm:$0xf]
  %v39 = vld [vmem:[%s1 + $0x14] sm:$0xf]
  %v40 = vld [vmem:[%s1 + $0x18] sm:$0xf]
  %v41 = vld [vmem:[%s1 + $0x1c] sm:$0xf]
  %v42 = vld [vmem:[%s1 + $0x20] sm:$0xf]
  %v59 = vunpack.c.l.b16 %v18
  %v60 = vunpack.c.l.b16 %v19
  %v61 = vunpack.c.l.b16 %v20
  %v62 = vunpack.c.l.b16 %v21
  %v63 = vunpack.c.l.b16 %v22
  %v64 = vunpack.c.l.b16 %v23
  %v65 = vunpack.c.l.b16 %v24
  %v66 = vunpack.c.l.b16 %v25
  %v67 = vunpack.c.l.b16 %v26
  %v68 = vunpack.c.l.b16 %v27
  %v69 = vunpack.c.l.b16 %v28
  %v70 = vunpack.c.l.b16 %v29
  %v71 = vunpack.c.l.b16 %v30
  %v72 = vunpack.c.l.b16 %v31
  %v73 = vunpack.c.l.b16 %v32
  %v74 = vunpack.c.l.b16 %v33
  %v75 = vpack.c.b16 %v60, %v59
  %v76 = vpack.c.b16 %v62, %v61
  %v77 = vpack.c.b16 %v64, %v63
  %v78 = vpack.c.b16 %v66, %v65
  %v79 = vpack.c.b16 %v68, %v67
  %v80 = vpack.c.b16 %v70, %v69
  %v81 = vpack.c.b16 %v72, %v71
  %v82 = vpack.c.b16 %v74, %v73
  %v92 = vunpack.c.l.b16 %v34
  %v93 = vunpack.c.l.b16 %v35
  %v94 = vunpack.c.l.b16 %v36
  %v95 = vunpack.c.l.b16 %v37
  %v96 = vunpack.c.l.b16 %v38
  %v97 = vunpack.c.l.b16 %v39
  %v98 = vunpack.c.l.b16 %v40
  %v99 = vunpack.c.l.b16 %v41
  %v100 = vunpack.c.l.b16 %v42
  %v101 = vpack.c.b16 %v93, %v92
  %v102 = vpack.c.b16 %v95, %v94
  %v103 = vpack.c.b16 %v97, %v96
  %v104 = vpack.c.b16 %v99, %v98
  %v105 = vpack.c.b16 %v100, %v100
  %vm110 = vcmask 588800
  %v112 = vsel %vm110, %v75, 0
  %v115 = vsel %vm110, %v76, 0
  %v118 = vsel %vm110, %v77, 0
  %v121 = vsel %vm110, %v78, 0
  %v124 = vsel %vm110, %v79, 0
  %v127 = vsel %vm110, %v80, 0
  %v130 = vsel %vm110, %v81, 0
  %v133 = vsel %vm110, %v82, 0
  %vm135 = vcmask 1043456
  %v137 = vsel %vm135, %v105, 0
  %139 = vmatprep.subr.bf16.mxu0 0
  %140 = vmatpush1.bf16.msra.mxu0 0
  %141 = vmatprep.subr.bf16.mxu0 0
  %142 = vmatpush1.bf16.msra.mxu0 0
  %143 = vmatprep.subr.bf16.mxu0 0
  %144 = vmatpush1.bf16.msra.mxu0 0
  %145 = vmatprep.subr.bf16.mxu0 0
  %146 = vmatpush1.bf16.msra.mxu0 %v137
  %147 = vmatprep.subr.bf16.mxu0 0
  %148 = vmatpush1.bf16.msra.mxu0 %v104
  %149 = vmatprep.subr.bf16.mxu0 0
  %150 = vmatpush1.bf16.msra.mxu0 %v103
  %151 = vmatprep.subr.bf16.mxu0 0
  %152 = vmatpush1.bf16.msra.mxu0 %v102
  %153 = vmatprep.subr.bf16.mxu0 0
  %154 = vmatpush1.bf16.msra.mxu0 %v101
  %155 = vmatprep.subr.bf16.mxu0 0
  %156 = vmatpush2.bf16.msra.mxu0 0
  %157 = vmatprep.subr.bf16.mxu0 0
  %158 = vmatpush2.bf16.msra.mxu0 0
  %159 = vmatprep.subr.bf16.mxu0 0
  %160 = vmatpush2.bf16.msra.mxu0 0
  %161 = vmatprep.subr.bf16.mxu0 0
  %162 = vmatpush2.bf16.msra.mxu0 0
  %163 = vmatprep.subr.bf16.mxu0 0
  %164 = vmatpush2.bf16.msra.mxu0 0
  %165 = vmatprep.subr.bf16.mxu0 0
  %166 = vmatpush2.bf16.msra.mxu0 0
  %167 = vmatprep.subr.bf16.mxu0 0
  %168 = vmatpush2.bf16.msra.mxu0 0
  %169 = vmatprep.subr.bf16.mxu0 0
  %170 = vmatpush2.bf16.msra.mxu0 0
  %171 = vmatprep.mubr.bf16.mxu0 0
  %172 = vmatmul.mubr.bf16.gmra.mxu0 %v112
  %v173 = vpop.f32.mrf.mxu0
  %v174 = vadd.f32 0.0, %v173
  %v175 = vpop.f32.mrf.mxu0
  %v176 = vpop.f32.mrf.mxu0
  %v177 = vadd.f32 0.0, %v176
  %v178 = vpop.f32.mrf.mxu0
  %179 = vmatprep.mubr.bf16.mxu0 0
  %180 = vmatmul.mubr.bf16.gmra.mxu0 %v115
  %v181 = vpop.f32.mrf.mxu0
  %v182 = vadd.f32 0.0, %v181
  %v183 = vpop.f32.mrf.mxu0
  %v184 = vpop.f32.mrf.mxu0
  %v185 = vadd.f32 0.0, %v184
  %v186 = vpop.f32.mrf.mxu0
  %187 = vmatprep.mubr.bf16.mxu0 0
  %188 = vmatmul.mubr.bf16.gmra.mxu0 %v118
  %v189 = vpop.f32.mrf.mxu0
  %v190 = vadd.f32 0.0, %v189
  %v191 = vpop.f32.mrf.mxu0
  %v192 = vpop.f32.mrf.mxu0
  %v193 = vadd.f32 0.0, %v192
  %v194 = vpop.f32.mrf.mxu0
  %195 = vmatprep.mubr.bf16.mxu0 0
  %196 = vmatmul.mubr.bf16.gmra.mxu0 %v121
  %v197 = vpop.f32.mrf.mxu0
  %v198 = vadd.f32 0.0, %v197
  %v199 = vpop.f32.mrf.mxu0
  %v200 = vpop.f32.mrf.mxu0
  %v201 = vadd.f32 0.0, %v200
  %v202 = vpop.f32.mrf.mxu0
  %203 = vmatprep.mubr.bf16.mxu0 0
  %204 = vmatmul.mubr.bf16.gmra.mxu0 %v124
  %v205 = vpop.f32.mrf.mxu0
  %v206 = vadd.f32 0.0, %v205
  %v207 = vpop.f32.mrf.mxu0
  %v208 = vpop.f32.mrf.mxu0
  %v209 = vadd.f32 0.0, %v208
  %v210 = vpop.f32.mrf.mxu0
  %211 = vmatprep.mubr.bf16.mxu0 0
  %212 = vmatmul.mubr.bf16.gmra.mxu0 %v127
  %v213 = vpop.f32.mrf.mxu0
  %v214 = vadd.f32 0.0, %v213
  %v215 = vpop.f32.mrf.mxu0
  %v216 = vpop.f32.mrf.mxu0
  %v217 = vadd.f32 0.0, %v216
  %v218 = vpop.f32.mrf.mxu0
  %219 = vmatprep.mubr.bf16.mxu0 0
  %220 = vmatmul.mubr.bf16.gmra.mxu0 %v130
  %v221 = vpop.f32.mrf.mxu0
  %v222 = vadd.f32 0.0, %v221
  %v223 = vpop.f32.mrf.mxu0
  %v224 = vpop.f32.mrf.mxu0
  %v225 = vadd.f32 0.0, %v224
  %v226 = vpop.f32.mrf.mxu0
  %227 = vmatprep.mubr.bf16.mxu0 0
  %228 = vmatmul.mubr.bf16.gmra.mxu0 %v133
  %v229 = vpop.f32.mrf.mxu0
  %v230 = vadd.f32 0.0, %v229
  %v231 = vpop.f32.mrf.mxu0
  %v232 = vpop.f32.mrf.mxu0
  %v233 = vadd.f32 0.0, %v232
  %v234 = vpop.f32.mrf.mxu0
  %235 = vdwg.mxu0
  %v236 = vadd.f32 %v174, %v177
  %v237 = vadd.f32 %v236, %v182
  %v238 = vadd.f32 %v237, %v185
  %v239 = vadd.f32 %v238, %v190
  %v240 = vadd.f32 %v239, %v193
  %v241 = vadd.f32 %v240, %v198
  %v242 = vadd.f32 %v241, %v201
  %v243 = vadd.f32 %v242, %v206
  %v244 = vadd.f32 %v243, %v209
  %v245 = vadd.f32 %v244, %v214
  %v246 = vadd.f32 %v245, %v217
  %v247 = vadd.f32 %v246, %v222
  %v248 = vadd.f32 %v247, %v225
  %v249 = vadd.f32 %v248, %v230
  %v250 = vadd.f32 %v249, %v233
  %v251 = vrot.slane %v250, 4
  %v252 = vadd.f32 %v250, %v251
  %v253 = vrot.slane %v252, 2
  %v254 = vadd.f32 %v252, %v253
  %v255 = vrot.slane %v254, 1
  %v256 = vadd.f32 %v254, %v255
  %v257 = vmul.f32 %v256, 0.0078125
  %v258 = vsub.f32 %v174, %v257
  %v259 = vsub.f32 %v177, %v257
  %v260 = vsub.f32 %v182, %v257
  %v261 = vsub.f32 %v185, %v257
  %v262 = vsub.f32 %v190, %v257
  %v263 = vsub.f32 %v193, %v257
  %v264 = vsub.f32 %v198, %v257
  %v265 = vsub.f32 %v201, %v257
  %v266 = vsub.f32 %v206, %v257
  %v267 = vsub.f32 %v209, %v257
  %v268 = vsub.f32 %v214, %v257
  %v269 = vsub.f32 %v217, %v257
  %v270 = vsub.f32 %v222, %v257
  %v271 = vsub.f32 %v225, %v257
  %v272 = vsub.f32 %v230, %v257
  %v273 = vsub.f32 %v233, %v257
  %v274 = vmul.f32 %v258, %v258
  %v275 = vmul.f32 %v259, %v259
  %v276 = vmul.f32 %v260, %v260
  %v277 = vmul.f32 %v261, %v261
  %v278 = vmul.f32 %v262, %v262
  %v279 = vmul.f32 %v263, %v263
  %v280 = vmul.f32 %v264, %v264
  %v281 = vmul.f32 %v265, %v265
  %v282 = vmul.f32 %v266, %v266
  %v283 = vmul.f32 %v267, %v267
  %v284 = vmul.f32 %v268, %v268
  %v285 = vmul.f32 %v269, %v269
  %v286 = vmul.f32 %v270, %v270
  %v287 = vmul.f32 %v271, %v271
  %v288 = vmul.f32 %v272, %v272
  %v289 = vmul.f32 %v273, %v273
  %v290 = vadd.f32 %v274, %v275
  %v291 = vadd.f32 %v290, %v276
  %v292 = vadd.f32 %v291, %v277
  %v293 = vadd.f32 %v292, %v278
  %v294 = vadd.f32 %v293, %v279
  %v295 = vadd.f32 %v294, %v280
  %v296 = vadd.f32 %v295, %v281
  %v297 = vadd.f32 %v296, %v282
  %v298 = vadd.f32 %v297, %v283
  %v299 = vadd.f32 %v298, %v284
  %v300 = vadd.f32 %v299, %v285
  %v301 = vadd.f32 %v300, %v286
  %v302 = vadd.f32 %v301, %v287
  %v303 = vadd.f32 %v302, %v288
  %v304 = vadd.f32 %v303, %v289
  %v305 = vrot.slane %v304, 4
  %v306 = vadd.f32 %v304, %v305
  %v307 = vrot.slane %v306, 2
  %v308 = vadd.f32 %v306, %v307
  %v309 = vrot.slane %v308, 1
  %v310 = vadd.f32 %v308, %v309
  %v311 = vmul.f32 %v310, 0.0078125
  %v312 = vld [vmem:[%s2] sm:$0x1]
  %v313 = vadd.f32 %v311, 1e-05
  %v314 = vrsqrt.pop %v313
  %v315 = vmul.f32 %v312, %v314
  %v317 = vlaneseq
  %v318 = vshrl.u32 %v317, 7
  %v319 = vsub.s32 0, %v318
  %v320 = vrot.slane %v315, %v319
  %v322 = vmul.f32 %v258, %v320
  %v323 = vmul.f32 %v259, %v320
  %v324 = vmul.f32 %v260, %v320
  %v325 = vmul.f32 %v261, %v320
  %v326 = vmul.f32 %v262, %v320
  %v327 = vmul.f32 %v263, %v320
  %v328 = vmul.f32 %v264, %v320
  %v329 = vmul.f32 %v265, %v320
  %v330 = vmul.f32 %v266, %v320
  %v331 = vmul.f32 %v267, %v320
  %v332 = vmul.f32 %v268, %v320
  %v333 = vmul.f32 %v269, %v320
  %v334 = vmul.f32 %v270, %v320
  %v335 = vmul.f32 %v271, %v320
  %v336 = vmul.f32 %v272, %v320
  %v337 = vmul.f32 %v273, %v320
  %v338 = vld [vmem:[%s3] sm:$0x1]
  %v340 = vlaneseq
  %v341 = vshrl.u32 %v340, 7
  %v342 = vsub.s32 0, %v341
  %v343 = vrot.slane %v338, %v342
  %v345 = vadd.f32 %v322, %v343
  %v346 = vadd.f32 %v323, %v343
  %v347 = vadd.f32 %v324, %v343
  %v348 = vadd.f32 %v325, %v343
  %v349 = vadd.f32 %v326, %v343
  %v350 = vadd.f32 %v327, %v343
  %v351 = vadd.f32 %v328, %v343
  %v352 = vadd.f32 %v329, %v343
  %v353 = vadd.f32 %v330, %v343
  %v354 = vadd.f32 %v331, %v343
  %v355 = vadd.f32 %v332, %v343
  %v356 = vadd.f32 %v333, %v343
  %v357 = vadd.f32 %v334, %v343
  %v358 = vadd.f32 %v335, %v343
  %v359 = vadd.f32 %v336, %v343
  %v360 = vadd.f32 %v337, %v343
  %v361 = vmax.f32 %v345, 0.0
  %v362 = vmax.f32 %v346, 0.0
  %v363 = vmax.f32 %v347, 0.0
  %v364 = vmax.f32 %v348, 0.0
  %v365 = vmax.f32 %v349, 0.0
  %v366 = vmax.f32 %v350, 0.0
  %v367 = vmax.f32 %v351, 0.0
  %v368 = vmax.f32 %v352, 0.0
  %v369 = vmax.f32 %v353, 0.0
  %v370 = vmax.f32 %v354, 0.0
  %v371 = vmax.f32 %v355, 0.0
  %v372 = vmax.f32 %v356, 0.0
  %v373 = vmax.f32 %v357, 0.0
  %v374 = vmax.f32 %v358, 0.0
  %v375 = vmax.f32 %v359, 0.0
  %v376 = vmax.f32 %v360, 0.0
  %377 = vst [vmem:[%s4] sm:$0xff] %v361
  %378 = vst [vmem:[%s4 + $0x8] sm:$0xff] %v362
  %379 = vst [vmem:[%s4 + $0x10] sm:$0xff] %v363
  %380 = vst [vmem:[%s4 + $0x18] sm:$0xff] %v364
  %381 = vst [vmem:[%s4 + $0x20] sm:$0xff] %v365
  %382 = vst [vmem:[%s4 + $0x28] sm:$0xff] %v366
  %383 = vst [vmem:[%s4 + $0x30] sm:$0xff] %v367
  %384 = vst [vmem:[%s4 + $0x38] sm:$0xff] %v368
  %385 = vst [vmem:[%s4 + $0x40] sm:$0xff] %v369
  %386 = vst [vmem:[%s4 + $0x48] sm:$0xff] %v370
  %387 = vst [vmem:[%s4 + $0x50] sm:$0xff] %v371
  %388 = vst [vmem:[%s4 + $0x58] sm:$0xff] %v372
  %389 = vst [vmem:[%s4 + $0x60] sm:$0xff] %v373
  %390 = vst [vmem:[%s4 + $0x68] sm:$0xff] %v374
  %391 = vst [vmem:[%s4 + $0x70] sm:$0xff] %v375
  %392 = vst [vmem:[%s4 + $0x78] sm:$0xff] %v376
  // Predicated region
  $region18: #{generator_forward.30} parent=0 // pred_check
    _
  $region19: #{generator_forward.30} parent=0 // pred_check_branch
    %394 = sbr.rel (0) target = $region21
  $region20: #{generator_forward.30} parent=0 // pred_region
    _
  $region21: #{generator_forward.30} parent=0 // pred_fallthru
    _
  // Predicated region
  $region22: #{generator_forward.30} parent=0 // pred_check
    _
  $region23: #{generator_forward.30} parent=0 // pred_check_branch
    %396 = sbr.rel (0) target = $region25
  $region24: #{generator_forward.30} parent=0 // pred_region
    _
  $region25: #{generator_forward.30} parent=0 // pred_fallthru
    _

// kernel: generator_forward.32
$region0: #{generator_forward.32}
  #allocation0 [shape = 'u32[]', space=smem, size = 0x4, offset = 0x4, fixed_abs, tag = 'smem constant byte address 0x4 - core index']
  #allocation1 [shape = 'u32[144,128]{1,0:T(1,128)}', space=vmem, size = 0x12000, scoped, tag = 'internal scratch']
  %s0 = inlined_call_operand.vmem [shape: f32[8,2,4,2,128], index: 0, kind: input, shape index: {}]
  %s1 = inlined_call_operand.vmem [shape: f32[8,4,128], index: 1, kind: output, shape index: {}]
  %s2 = sld [smem:[#allocation0]]
  $region14: #{generator_forward.32} parent=0
    _
  %s4 = ssub.s32 1, %s2
  %s5 = scalar_select 0, %s4, %s2
  // Predicated region
  $region2: #{generator_forward.32} parent=0 // pred_check
    _
  $region3: #{generator_forward.32} parent=0 // pred_check_branch
    %7 = sbr.rel (0) target = $region5
  $region4: #{generator_forward.32} parent=0 // pred_region
    _
  $region5: #{generator_forward.32} parent=0 // pred_fallthru
    _
  %v8 = vld [vmem:[%s0] sm:$0x3]
  %v9 = vld [vmem:[%s0 + $0x2] sm:$0x3]
  %v10 = vld [vmem:[%s0 + $0x4] sm:$0x3]
  %v11 = vld [vmem:[%s0 + $0x6] sm:$0x3]
  %v12 = vld [vmem:[%s0 + $0x8] sm:$0x3]
  %v13 = vld [vmem:[%s0 + $0xa] sm:$0x3]
  %v14 = vld [vmem:[%s0 + $0xc] sm:$0x3]
  %v15 = vld [vmem:[%s0 + $0xe] sm:$0x3]
  %v16 = vld [vmem:[%s0 + $0x10] sm:$0x3]
  %v17 = vld [vmem:[%s0 + $0x12] sm:$0x3]
  %v18 = vld [vmem:[%s0 + $0x14] sm:$0x3]
  %v19 = vld [vmem:[%s0 + $0x16] sm:$0x3]
  %v20 = vld [vmem:[%s0 + $0x18] sm:$0x3]
  %v21 = vld [vmem:[%s0 + $0x1a] sm:$0x3]
  %v22 = vld [vmem:[%s0 + $0x1c] sm:$0x3]
  %v23 = vld [vmem:[%s0 + $0x1e] sm:$0x3]
  %v24 = vld [vmem:[%s0 + $0x20] sm:$0x3]
  %v25 = vld [vmem:[%s0 + $0x22] sm:$0x3]
  %v26 = vld [vmem:[%s0 + $0x24] sm:$0x3]
  %v27 = vld [vmem:[%s0 + $0x26] sm:$0x3]
  %v28 = vld [vmem:[%s0 + $0x28] sm:$0x3]
  %v29 = vld [vmem:[%s0 + $0x2a] sm:$0x3]
  %v30 = vld [vmem:[%s0 + $0x2c] sm:$0x3]
  %v31 = vld [vmem:[%s0 + $0x2e] sm:$0x3]
  %v32 = vld [vmem:[%s0 + $0x30] sm:$0x3]
  %v33 = vld [vmem:[%s0 + $0x32] sm:$0x3]
  %v34 = vld [vmem:[%s0 + $0x34] sm:$0x3]
  %v35 = vld [vmem:[%s0 + $0x36] sm:$0x3]
  %v36 = vld [vmem:[%s0 + $0x38] sm:$0x3]
  %v37 = vld [vmem:[%s0 + $0x3a] sm:$0x3]
  %v38 = vld [vmem:[%s0 + $0x3c] sm:$0x3]
  %v39 = vld [vmem:[%s0 + $0x3e] sm:$0x3]
  %v40 = vld [vmem:[%s0 + $0x40] sm:$0x3]
  %v41 = vld [vmem:[%s0 + $0x42] sm:$0x3]
  %v42 = vld [vmem:[%s0 + $0x44] sm:$0x3]
  %v43 = vld [vmem:[%s0 + $0x46] sm:$0x3]
  %v44 = vld [vmem:[%s0 + $0x48] sm:$0x3]
  %v45 = vld [vmem:[%s0 + $0x4a] sm:$0x3]
  %v46 = vld [vmem:[%s0 + $0x4c] sm:$0x3]
  %v47 = vld [vmem:[%s0 + $0x4e] sm:$0x3]
  %v48 = vld [vmem:[%s0 + $0x50] sm:$0x3]
  %v49 = vld [vmem:[%s0 + $0x52] sm:$0x3]
  %v50 = vld [vmem:[%s0 + $0x54] sm:$0x3]
  %v51 = vld [vmem:[%s0 + $0x56] sm:$0x3]
  %v52 = vld [vmem:[%s0 + $0x58] sm:$0x3]
  %v53 = vld [vmem:[%s0 + $0x5a] sm:$0x3]
  %v54 = vld [vmem:[%s0 + $0x5c] sm:$0x3]
  %v55 = vld [vmem:[%s0 + $0x5e] sm:$0x3]
  %v56 = vld [vmem:[%s0 + $0x60] sm:$0x3]
  %v57 = vld [vmem:[%s0 + $0x62] sm:$0x3]
  %v58 = vld [vmem:[%s0 + $0x64] sm:$0x3]
  %v59 = vld [vmem:[%s0 + $0x66] sm:$0x3]
  %v60 = vld [vmem:[%s0 + $0x68] sm:$0x3]
  %v61 = vld [vmem:[%s0 + $0x6a] sm:$0x3]
  %v62 = vld [vmem:[%s0 + $0x6c] sm:$0x3]
  %v63 = vld [vmem:[%s0 + $0x6e] sm:$0x3]
  %v64 = vld [vmem:[%s0 + $0x70] sm:$0x3]
  %v65 = vld [vmem:[%s0 + $0x72] sm:$0x3]
  %v66 = vld [vmem:[%s0 + $0x74] sm:$0x3]
  %v67 = vld [vmem:[%s0 + $0x76] sm:$0x3]
  %v68 = vld [vmem:[%s0 + $0x78] sm:$0x3]
  %v69 = vld [vmem:[%s0 + $0x7a] sm:$0x3]
  %v70 = vld [vmem:[%s0 + $0x7c] sm:$0x3]
  %v71 = vld [vmem:[%s0 + $0x7e] sm:$0x3]
  %v72 = vmax.f32 %v8, %v12
  %v73 = vmax.f32 %v9, %v13
  %v74 = vmax.f32 %v10, %v14
  %v75 = vmax.f32 %v11, %v15
  %v76 = vmax.f32 %v16, %v20
  %v77 = vmax.f32 %v17, %v21
  %v78 = vmax.f32 %v18, %v22
  %v79 = vmax.f32 %v19, %v23
  %v80 = vmax.f32 %v24, %v28
  %v81 = vmax.f32 %v25, %v29
  %v82 = vmax.f32 %v26, %v30
  %v83 = vmax.f32 %v27, %v31
  %v84 = vmax.f32 %v32, %v36
  %v85 = vmax.f32 %v33, %v37
  %v86 = vmax.f32 %v34, %v38
  %v87 = vmax.f32 %v35, %v39
  %v88 = vmax.f32 %v40, %v44
  %v89 = vmax.f32 %v41, %v45
  %v90 = vmax.f32 %v42, %v46
  %v91 = vmax.f32 %v43, %v47
  %v92 = vmax.f32 %v48, %v52
  %v93 = vmax.f32 %v49, %v53
  %v94 = vmax.f32 %v50, %v54
  %v95 = vmax.f32 %v51, %v55
  %v96 = vmax.f32 %v56, %v60
  %v97 = vmax.f32 %v57, %v61
  %v98 = vmax.f32 %v58, %v62
  %v99 = vmax.f32 %v59, %v63
  %v100 = vmax.f32 %v64, %v68
  %v101 = vmax.f32 %v65, %v69
  %v102 = vmax.f32 %v66, %v70
  %v103 = vmax.f32 %v67, %v71
  %v136 = vrot.slane %v72, 1
  %v137 = vrot.slane %v73, 1
  %v138 = vrot.slane %v74, 1
  %v139 = vrot.slane %v75, 1
  %v140 = vrot.slane %v76, 1
  %v141 = vrot.slane %v77, 1
  %v142 = vrot.slane %v78, 1
  %v143 = vrot.slane %v79, 1
  %v144 = vrot.slane %v80, 1
  %v145 = vrot.slane %v81, 1
  %v146 = vrot.slane %v82, 1
  %v147 = vrot.slane %v83, 1
  %v148 = vrot.slane %v84, 1
  %v149 = vrot.slane %v85, 1
  %v150 = vrot.slane %v86, 1
  %v151 = vrot.slane %v87, 1
  %v152 = vrot.slane %v88, 1
  %v153 = vrot.slane %v89, 1
  %v154 = vrot.slane %v90, 1
  %v155 = vrot.slane %v91, 1
  %v156 = vrot.slane %v92, 1
  %v157 = vrot.slane %v93, 1
  %v158 = vrot.slane %v94, 1
  %v159 = vrot.slane %v95, 1
  %v160 = vrot.slane %v96, 1
  %v161 = vrot.slane %v97, 1
  %v162 = vrot.slane %v98, 1
  %v163 = vrot.slane %v99, 1
  %v164 = vrot.slane %v100, 1
  %v165 = vrot.slane %v101, 1
  %v166 = vrot.slane %v102, 1
  %v167 = vrot.slane %v103, 1
  %v200 = vmax.f32 %v72, %v136
  %v201 = vmax.f32 %v73, %v137
  %v202 = vmax.f32 %v74, %v138
  %v203 = vmax.f32 %v75, %v139
  %v204 = vmax.f32 %v76, %v140
  %v205 = vmax.f32 %v77, %v141
  %v206 = vmax.f32 %v78, %v142
  %v207 = vmax.f32 %v79, %v143
  %v208 = vmax.f32 %v80, %v144
  %v209 = vmax.f32 %v81, %v145
  %v210 = vmax.f32 %v82, %v146
  %v211 = vmax.f32 %v83, %v147
  %v212 = vmax.f32 %v84, %v148
  %v213 = vmax.f32 %v85, %v149
  %v214 = vmax.f32 %v86, %v150
  %v215 = vmax.f32 %v87, %v151
  %v216 = vmax.f32 %v88, %v152
  %v217 = vmax.f32 %v89, %v153
  %v218 = vmax.f32 %v90, %v154
  %v219 = vmax.f32 %v91, %v155
  %v220 = vmax.f32 %v92, %v156
  %v221 = vmax.f32 %v93, %v157
  %v222 = vmax.f32 %v94, %v158
  %v223 = vmax.f32 %v95, %v159
  %v224 = vmax.f32 %v96, %v160
  %v225 = vmax.f32 %v97, %v161
  %v226 = vmax.f32 %v98, %v162
  %v227 = vmax.f32 %v99, %v163
  %v228 = vmax.f32 %v100, %v164
  %v229 = vmax.f32 %v101, %v165
  %v230 = vmax.f32 %v102, %v166
  %v231 = vmax.f32 %v103, %v167
  %v264 = vrot.slane %v201, 7
  %vm265 = vcmask 1041409
  %v266 = vsel %vm265, %v264, %v200
  %v267 = vrot.slane %v202, 6
  %vm268 = vcmask 1042434
  %v269 = vsel %vm268, %v267, %v266
  %v270 = vrot.slane %v203, 5
  %vm271 = vcmask 1043459
  %v272 = vsel %vm271, %v270, %v269
  %v273 = vrot.slane %v205, 7
  %v274 = vsel %vm265, %v273, %v204
  %v275 = vrot.slane %v206, 6
  %v276 = vsel %vm268, %v275, %v274
  %v277 = vrot.slane %v207, 5
  %v278 = vsel %vm271, %v277, %v276
  %v279 = vrot.slane %v209, 7
  %v280 = vsel %vm265, %v279, %v208
  %v281 = vrot.slane %v210, 6
  %v282 = vsel %vm268, %v281, %v280
  %v283 = vrot.slane %v211, 5
  %v284 = vsel %vm271, %v283, %v282
  %v285 = vrot.slane %v213, 7
  %v286 = vsel %vm265, %v285, %v212
  %v287 = vrot.slane %v214, 6
  %v288 = vsel %vm268, %v287, %v286
  %v289 = vrot.slane %v215, 5
  %v290 = vsel %vm271, %v289, %v288
  %v291 = vrot.slane %v217, 7
  %v292 = vsel %vm265, %v291, %v216
  %v293 = vrot.slane %v218, 6
  %v294 = vsel %vm268, %v293, %v292
  %v295 = vrot.slane %v219, 5
  %v296 = vsel %vm271, %v295, %v294
  %v297 = vrot.slane %v221, 7
  %v298 = vsel %vm265, %v297, %v220
  %v299 = vrot.slane %v222, 6
  %v300 = vsel %vm268, %v299, %v298
  %v301 = vrot.slane %v223, 5
  %v302 = vsel %vm271, %v301, %v300
  %v303 = vrot.slane %v225, 7
  %v304 = vsel %vm265, %v303, %v224
  %v305 = vrot.slane %v226, 6
  %v306 = vsel %vm268, %v305, %v304
  %v307 = vrot.slane %v227, 5
  %v308 = vsel %vm271, %v307, %v306
  %v309 = vrot.slane %v229, 7
  %v310 = vsel %vm265, %v309, %v228
  %v311 = vrot.slane %v230, 6
  %v312 = vsel %vm268, %v311, %v310
  %v313 = vrot.slane %v231, 5
  %v314 = vsel %vm271, %v313, %v312
  %323 = vst [vmem:[%s1] sm:$0xf] %v272
  %324 = vst [vmem:[%s1 + $0x4] sm:$0xf] %v278
  %325 = vst [vmem:[%s1 + $0x8] sm:$0xf] %v284
  %326 = vst [vmem:[%s1 + $0xc] sm:$0xf] %v290
  %327 = vst [vmem:[%s1 + $0x10] sm:$0xf] %v296
  %328 = vst [vmem:[%s1 + $0x14] sm:$0xf] %v302
  %329 = vst [vmem:[%s1 + $0x18] sm:$0xf] %v308
  %330 = vst [vmem:[%s1 + $0x1c] sm:$0xf] %v314
  // Predicated region
  $region6: #{generator_forward.32} parent=0 // pred_check
    _
  $region7: #{generator_forward.32} parent=0 // pred_check_branch
    %332 = sbr.rel (0) target = $region9
  $region8: #{generator_forward.32} parent=0 // pred_region
    _
  $region9: #{generator_forward.32} parent=0 // pred_fallthru
    _
  // Predicated region
  $region10: #{generator_forward.32} parent=0 // pred_check
    _
  $region11: #{generator_forward.32} parent=0 // pred_check_branch
    %334 = sbr.rel (0) target = $region13
  $region12: #{generator_forward.32} parent=0 // pred_region
    _
  $region13: #{generator_forward.32} parent=0 // pred_fallthru
    _

// kernel: generator_forward.31
$region0: #{generator_forward.31}
  #allocation0 [shape = 'u32[]', space=smem, size = 0x4, offset = 0x4, fixed_abs, tag = 'smem constant byte address 0x4 - core index']
  #allocation1 [shape = 'u32[144,128]{1,0:T(1,128)}', space=vmem, size = 0x12000, scoped, tag = 'internal scratch']
  %s0 = inlined_call_operand.vmem [shape: bf16[128,144], index: 0, kind: input, shape index: {}]
  %s1 = inlined_call_operand.vmem [shape: bf16[144,128], index: 1, kind: input, shape index: {}]
  %s2 = inlined_call_operand.vmem [shape: f32[1,128], index: 2, kind: input, shape index: {}]
  %s3 = inlined_call_operand.vmem [shape: f32[1,128], index: 3, kind: input, shape index: {}]
  %s4 = inlined_call_operand.vmem [shape: f32[128,128], index: 4, kind: output, shape index: {}]
  %s5 = sld [smem:[#allocation0]]
  $region26: #{generator_forward.31} parent=0
    _
  %s7 = ssub.s32 1, %s5
  %s8 = scalar_select 0, %s7, %s5
  // Predicated region
  $region2: #{generator_forward.31} parent=0 // pred_check
    _
  $region3: #{generator_forward.31} parent=0 // pred_check_branch
    %10 = sbr.rel (0) target = $region5
  $region4: #{generator_forward.31} parent=0 // pred_region
    _
  $region5: #{generator_forward.31} parent=0 // pred_fallthru
    _
  // Predicated region
  $region6: #{generator_forward.31} parent=0 // pred_check
    _
  $region7: #{generator_forward.31} parent=0 // pred_check_branch
    %12 = sbr.rel (0) target = $region9
  $region8: #{generator_forward.31} parent=0 // pred_region
    _
  $region9: #{generator_forward.31} parent=0 // pred_fallthru
    _
  // Predicated region
  $region10: #{generator_forward.31} parent=0 // pred_check
    _
  $region11: #{generator_forward.31} parent=0 // pred_check_branch
    %14 = sbr.rel (0) target = $region13
  $region12: #{generator_forward.31} parent=0 // pred_region
    _
  $region13: #{generator_forward.31} parent=0 // pred_fallthru
    _
  // Predicated region
  $region14: #{generator_forward.31} parent=0 // pred_check
    _
  $region15: #{generator_forward.31} parent=0 // pred_check_branch
    %16 = sbr.rel (0) target = $region17
  $region16: #{generator_forward.31} parent=0 // pred_region
    _
  $region17: #{generator_forward.31} parent=0 // pred_fallthru
    _
  %v18 = vld [vmem:[%s0] sm:$0xff]
  %v19 = vld [vmem:[%s0 + $0x8] sm:$0xff]
  %v20 = vld [vmem:[%s0 + $0x10] sm:$0xff]
  %v21 = vld [vmem:[%s0 + $0x18] sm:$0xff]
  %v22 = vld [vmem:[%s0 + $0x20] sm:$0xff]
  %v23 = vld [vmem:[%s0 + $0x28] sm:$0xff]
  %v24 = vld [vmem:[%s0 + $0x30] sm:$0xff]
  %v25 = vld [vmem:[%s0 + $0x38] sm:$0xff]
  %v26 = vld [vmem:[%s0 + $0x40] sm:$0xff]
  %v27 = vld [vmem:[%s0 + $0x48] sm:$0xff]
  %v28 = vld [vmem:[%s0 + $0x50] sm:$0xff]
  %v29 = vld [vmem:[%s0 + $0x58] sm:$0xff]
  %v30 = vld [vmem:[%s0 + $0x60] sm:$0xff]
  %v31 = vld [vmem:[%s0 + $0x68] sm:$0xff]
  %v32 = vld [vmem:[%s0 + $0x70] sm:$0xff]
  %v33 = vld [vmem:[%s0 + $0x78] sm:$0xff]
  %v34 = vld [vmem:[%s1] sm:$0xf]
  %v35 = vld [vmem:[%s1 + $0x4] sm:$0xf]
  %v36 = vld [vmem:[%s1 + $0x8] sm:$0xf]
  %v37 = vld [vmem:[%s1 + $0xc] sm:$0xf]
  %v38 = vld [vmem:[%s1 + $0x10] sm:$0xf]
  %v39 = vld [vmem:[%s1 + $0x14] sm:$0xf]
  %v40 = vld [vmem:[%s1 + $0x18] sm:$0xf]
  %v41 = vld [vmem:[%s1 + $0x1c] sm:$0xf]
  %v42 = vld [vmem:[%s1 + $0x20] sm:$0xf]
  %v43 = vld [vmem:[%s1 + $0x24] sm:$0xf]
  %v44 = vld [vmem:[%s1 + $0x28] sm:$0xf]
  %v45 = vld [vmem:[%s1 + $0x2c] sm:$0xf]
  %v46 = vld [vmem:[%s1 + $0x30] sm:$0xf]
  %v47 = vld [vmem:[%s1 + $0x34] sm:$0xf]
  %v48 = vld [vmem:[%s1 + $0x38] sm:$0xf]
  %v49 = vld [vmem:[%s1 + $0x3c] sm:$0xf]
  %v50 = vld [vmem:[%s1 + $0x40] sm:$0xf]
  %v51 = vld [vmem:[%s1 + $0x44] sm:$0xf]
  %v68 = vunpack.c.l.b16 %v18
  %v69 = vunpack.c.h.b16 %v18
  %v70 = vunpack.c.l.b16 %v19
  %v71 = vunpack.c.h.b16 %v19
  %v72 = vunpack.c.l.b16 %v20
  %v73 = vunpack.c.h.b16 %v20
  %v74 = vunpack.c.l.b16 %v21
  %v75 = vunpack.c.h.b16 %v21
  %v76 = vunpack.c.l.b16 %v22
  %v77 = vunpack.c.h.b16 %v22
  %v78 = vunpack.c.l.b16 %v23
  %v79 = vunpack.c.h.b16 %v23
  %v80 = vunpack.c.l.b16 %v24
  %v81 = vunpack.c.h.b16 %v24
  %v82 = vunpack.c.l.b16 %v25
  %v83 = vunpack.c.h.b16 %v25
  %v84 = vunpack.c.l.b16 %v26
  %v85 = vunpack.c.h.b16 %v26
  %v86 = vunpack.c.l.b16 %v27
  %v87 = vunpack.c.h.b16 %v27
  %v88 = vunpack.c.l.b16 %v28
  %v89 = vunpack.c.h.b16 %v28
  %v90 = vunpack.c.l.b16 %v29
  %v91 = vunpack.c.h.b16 %v29
  %v92 = vunpack.c.l.b16 %v30
  %v93 = vunpack.c.h.b16 %v30
  %v94 = vunpack.c.l.b16 %v31
  %v95 = vunpack.c.h.b16 %v31
  %v96 = vunpack.c.l.b16 %v32
  %v97 = vunpack.c.h.b16 %v32
  %v98 = vunpack.c.l.b16 %v33
  %v99 = vunpack.c.h.b16 %v33
  %v100 = vpack.c.b16 %v70, %v68
  %v101 = vpack.c.b16 %v71, %v69
  %v102 = vpack.c.b16 %v74, %v72
  %v103 = vpack.c.b16 %v75, %v73
  %v104 = vpack.c.b16 %v78, %v76
  %v105 = vpack.c.b16 %v79, %v77
  %v106 = vpack.c.b16 %v82, %v80
  %v107 = vpack.c.b16 %v83, %v81
  %v108 = vpack.c.b16 %v86, %v84
  %v109 = vpack.c.b16 %v87, %v85
  %v110 = vpack.c.b16 %v90, %v88
  %v111 = vpack.c.b16 %v91, %v89
  %v112 = vpack.c.b16 %v94, %v92
  %v113 = vpack.c.b16 %v95, %v93
  %v114 = vpack.c.b16 %v98, %v96
  %v115 = vpack.c.b16 %v99, %v97
  %v142 = vunpack.c.l.b16 %v34
  %v143 = vunpack.c.l.b16 %v35
  %v144 = vunpack.c.l.b16 %v36
  %v145 = vunpack.c.l.b16 %v37
  %v146 = vunpack.c.l.b16 %v38
  %v147 = vunpack.c.l.b16 %v39
  %v148 = vunpack.c.l.b16 %v40
  %v149 = vunpack.c.l.b16 %v41
  %v150 = vunpack.c.l.b16 %v42
  %v151 = vunpack.c.l.b16 %v43
  %v152 = vunpack.c.l.b16 %v44
  %v153 = vunpack.c.l.b16 %v45
  %v154 = vunpack.c.l.b16 %v46
  %v155 = vunpack.c.l.b16 %v47
  %v156 = vunpack.c.l.b16 %v48
  %v157 = vunpack.c.l.b16 %v49
  %v158 = vunpack.c.l.b16 %v50
  %v159 = vunpack.c.l.b16 %v51
  %v160 = vpack.c.b16 %v143, %v142
  %v161 = vpack.c.b16 %v145, %v144
  %v162 = vpack.c.b16 %v147, %v146
  %v163 = vpack.c.b16 %v149, %v148
  %v164 = vpack.c.b16 %v151, %v150
  %v165 = vpack.c.b16 %v153, %v152
  %v166 = vpack.c.b16 %v155, %v154
  %v167 = vpack.c.b16 %v157, %v156
  %v168 = vpack.c.b16 %v159, %v158
  %vm178 = vcmask 130048
  %v180 = vsel %vm178, %v101, 0
  %v183 = vsel %vm178, %v103, 0
  %v186 = vsel %vm178, %v105, 0
  %v189 = vsel %vm178, %v107, 0
  %v192 = vsel %vm178, %v109, 0
  %v195 = vsel %vm178, %v111, 0
  %v198 = vsel %vm178, %v113, 0
  %v201 = vsel %vm178, %v115, 0
  %203 = vmatprep.subr.bf16.mxu0 0
  %204 = vmatpush1.bf16.msra.mxu0 %v167
  %205 = vmatprep.subr.bf16.mxu0 0
  %206 = vmatpush1.bf16.msra.mxu0 %v166
  %207 = vmatprep.subr.bf16.mxu0 0
  %208 = vmatpush1.bf16.msra.mxu0 %v165
  %209 = vmatprep.subr.bf16.mxu0 0
  %210 = vmatpush1.bf16.msra.mxu0 %v164
  %211 = vmatprep.subr.bf16.mxu0 0
  %212 = vmatpush1.bf16.msra.mxu0 %v163
  %213 = vmatprep.subr.bf16.mxu0 0
  %214 = vmatpush1.bf16.msra.mxu0 %v162
  %215 = vmatprep.subr.bf16.mxu0 0
  %216 = vmatpush1.bf16.msra.mxu0 %v161
  %217 = vmatprep.subr.bf16.mxu0 0
  %218 = vmatpush1.bf16.msra.mxu0 %v160
  %219 = vmatprep.subr.bf16.mxu0 0
  %220 = vmatpush2.bf16.msra.mxu0 0
  %221 = vmatprep.subr.bf16.mxu0 0
  %222 = vmatpush2.bf16.msra.mxu0 0
  %223 = vmatprep.subr.bf16.mxu0 0
  %224 = vmatpush2.bf16.msra.mxu0 0
  %225 = vmatprep.subr.bf16.mxu0 0
  %226 = vmatpush2.bf16.msra.mxu0 0
  %227 = vmatprep.subr.bf16.mxu0 0
  %228 = vmatpush2.bf16.msra.mxu0 0
  %229 = vmatprep.subr.bf16.mxu0 0
  %230 = vmatpush2.bf16.msra.mxu0 0
  %231 = vmatprep.subr.bf16.mxu0 0
  %232 = vmatpush2.bf16.msra.mxu0 0
  %233 = vmatprep.subr.bf16.mxu0 0
  %234 = vmatpush2.bf16.msra.mxu0 %v168
  %235 = vmatprep.mubr.bf16.mxu0 %v180
  %236 = vmatmul.mubr.bf16.gmra.mxu0 %v100
  %v237 = vpop.f32.mrf.mxu0
  %v238 = vadd.f32 0.0, %v237
  %v239 = vpop.f32.mrf.mxu0
  %v240 = vpop.f32.mrf.mxu0
  %v241 = vadd.f32 0.0, %v240
  %v242 = vpop.f32.mrf.mxu0
  %243 = vmatprep.mubr.bf16.mxu0 %v183
  %244 = vmatmul.mubr.bf16.gmra.mxu0 %v102
  %v245 = vpop.f32.mrf.mxu0
  %v246 = vadd.f32 0.0, %v245
  %v247 = vpop.f32.mrf.mxu0
  %v248 = vpop.f32.mrf.mxu0
  %v249 = vadd.f32 0.0, %v248
  %v250 = vpop.f32.mrf.mxu0
  %251 = vmatprep.mubr.bf16.mxu0 %v186
  %252 = vmatmul.mubr.bf16.gmra.mxu0 %v104
  %v253 = vpop.f32.mrf.mxu0
  %v254 = vadd.f32 0.0, %v253
  %v255 = vpop.f32.mrf.mxu0
  %v256 = vpop.f32.mrf.mxu0
  %v257 = vadd.f32 0.0, %v256
  %v258 = vpop.f32.mrf.mxu0
  %259 = vmatprep.mubr.bf16.mxu0 %v189
  %260 = vmatmul.mubr.bf16.gmra.mxu0 %v106
  %v261 = vpop.f32.mrf.mxu0
  %v262 = vadd.f32 0.0, %v261
  %v263 = vpop.f32.mrf.mxu0
  %v264 = vpop.f32.mrf.mxu0
  %v265 = vadd.f32 0.0, %v264
  %v266 = vpop.f32.mrf.mxu0
  %267 = vmatprep.mubr.bf16.mxu0 %v192
  %268 = vmatmul.mubr.bf16.gmra.mxu0 %v108
  %v269 = vpop.f32.mrf.mxu0
  %v270 = vadd.f32 0.0, %v269
  %v271 = vpop.f32.mrf.mxu0
  %v272 = vpop.f32.mrf.mxu0
  %v273 = vadd.f32 0.0, %v272
  %v274 = vpop.f32.mrf.mxu0
  %275 = vmatprep.mubr.bf16.mxu0 %v195
  %276 = vmatmul.mubr.bf16.gmra.mxu0 %v110
  %v277 = vpop.f32.mrf.mxu0
  %v278 = vadd.f32 0.0, %v277
  %v279 = vpop.f32.mrf.mxu0
  %v280 = vpop.f32.mrf.mxu0
  %v281 = vadd.f32 0.0, %v280
  %v282 = vpop.f32.mrf.mxu0
  %283 = vmatprep.mubr.bf16.mxu0 %v198
  %284 = vmatmul.mubr.bf16.gmra.mxu0 %v112
  %v285 = vpop.f32.mrf.mxu0
  %v286 = vadd.f32 0.0, %v285
  %v287 = vpop.f32.mrf.mxu0
  %v288 = vpop.f32.mrf.mxu0
  %v289 = vadd.f32 0.0, %v288
  %v290 = vpop.f32.mrf.mxu0
  %291 = vmatprep.mubr.bf16.mxu0 %v201
  %292 = vmatmul.mubr.bf16.gmra.mxu0 %v114
  %v293 = vpop.f32.mrf.mxu0
  %v294 = vadd.f32 0.0, %v293
  %v295 = vpop.f32.mrf.mxu0
  %v296 = vpop.f32.mrf.mxu0
  %v297 = vadd.f32 0.0, %v296
  %v298 = vpop.f32.mrf.mxu0
  %299 = vdwg.mxu0
  %v300 = vadd.f32 %v238, %v241
  %v301 = vadd.f32 %v300, %v246
  %v302 = vadd.f32 %v301, %v249
  %v303 = vadd.f32 %v302, %v254
  %v304 = vadd.f32 %v303, %v257
  %v305 = vadd.f32 %v304, %v262
  %v306 = vadd.f32 %v305, %v265
  %v307 = vadd.f32 %v306, %v270
  %v308 = vadd.f32 %v307, %v273
  %v309 = vadd.f32 %v308, %v278
  %v310 = vadd.f32 %v309, %v281
  %v311 = vadd.f32 %v310, %v286
  %v312 = vadd.f32 %v311, %v289
  %v313 = vadd.f32 %v312, %v294
  %v314 = vadd.f32 %v313, %v297
  %v315 = vrot.slane %v314, 4
  %v316 = vadd.f32 %v314, %v315
  %v317 = vrot.slane %v316, 2
  %v318 = vadd.f32 %v316, %v317
  %v319 = vrot.slane %v318, 1
  %v320 = vadd.f32 %v318, %v319
  %v321 = vmul.f32 %v320, 0.0078125
  %v322 = vsub.f32 %v238, %v321
  %v323 = vsub.f32 %v241, %v321
  %v324 = vsub.f32 %v246, %v321
  %v325 = vsub.f32 %v249, %v321
  %v326 = vsub.f32 %v254, %v321
  %v327 = vsub.f32 %v257, %v321
  %v328 = vsub.f32 %v262, %v321
  %v329 = vsub.f32 %v265, %v321
  %v330 = vsub.f32 %v270, %v321
  %v331 = vsub.f32 %v273, %v321
  %v332 = vsub.f32 %v278, %v321
  %v333 = vsub.f32 %v281, %v321
  %v334 = vsub.f32 %v286, %v321
  %v335 = vsub.f32 %v289, %v321
  %v336 = vsub.f32 %v294, %v321
  %v337 = vsub.f32 %v297, %v321
  %v338 = vmul.f32 %v322, %v322
  %v339 = vmul.f32 %v323, %v323
  %v340 = vmul.f32 %v324, %v324
  %v341 = vmul.f32 %v325, %v325
  %v342 = vmul.f32 %v326, %v326
  %v343 = vmul.f32 %v327, %v327
  %v344 = vmul.f32 %v328, %v328
  %v345 = vmul.f32 %v329, %v329
  %v346 = vmul.f32 %v330, %v330
  %v347 = vmul.f32 %v331, %v331
  %v348 = vmul.f32 %v332, %v332
  %v349 = vmul.f32 %v333, %v333
  %v350 = vmul.f32 %v334, %v334
  %v351 = vmul.f32 %v335, %v335
  %v352 = vmul.f32 %v336, %v336
  %v353 = vmul.f32 %v337, %v337
  %v354 = vadd.f32 %v338, %v339
  %v355 = vadd.f32 %v354, %v340
  %v356 = vadd.f32 %v355, %v341
  %v357 = vadd.f32 %v356, %v342
  %v358 = vadd.f32 %v357, %v343
  %v359 = vadd.f32 %v358, %v344
  %v360 = vadd.f32 %v359, %v345
  %v361 = vadd.f32 %v360, %v346
  %v362 = vadd.f32 %v361, %v347
  %v363 = vadd.f32 %v362, %v348
  %v364 = vadd.f32 %v363, %v349
  %v365 = vadd.f32 %v364, %v350
  %v366 = vadd.f32 %v365, %v351
  %v367 = vadd.f32 %v366, %v352
  %v368 = vadd.f32 %v367, %v353
  %v369 = vrot.slane %v368, 4
  %v370 = vadd.f32 %v368, %v369
  %v371 = vrot.slane %v370, 2
  %v372 = vadd.f32 %v370, %v371
  %v373 = vrot.slane %v372, 1
  %v374 = vadd.f32 %v372, %v373
  %v375 = vmul.f32 %v374, 0.0078125
  %v376 = vld [vmem:[%s2] sm:$0x1]
  %v377 = vadd.f32 %v375, 1e-05
  %v378 = vrsqrt.pop %v377
  %v379 = vmul.f32 %v376, %v378
  %v381 = vlaneseq
  %v382 = vshrl.u32 %v381, 7
  %v383 = vsub.s32 0, %v382
  %v384 = vrot.slane %v379, %v383
  %v386 = vmul.f32 %v322, %v384
  %v387 = vmul.f32 %v323, %v384
  %v388 = vmul.f32 %v324, %v384
  %v389 = vmul.f32 %v325, %v384
  %v390 = vmul.f32 %v326, %v384
  %v391 = vmul.f32 %v327, %v384
  %v392 = vmul.f32 %v328, %v384
  %v393 = vmul.f32 %v329, %v384
  %v394 = vmul.f32 %v330, %v384
  %v395 = vmul.f32 %v331, %v384
  %v396 = vmul.f32 %v332, %v384
  %v397 = vmul.f32 %v333, %v384
  %v398 = vmul.f32 %v334, %v384
  %v399 = vmul.f32 %v335, %v384
  %v400 = vmul.f32 %v336, %v384
  %v401 = vmul.f32 %v337, %v384
  %v402 = vld [vmem:[%s3] sm:$0x1]
  %v404 = vlaneseq
  %v405 = vshrl.u32 %v404, 7
  %v406 = vsub.s32 0, %v405
  %v407 = vrot.slane %v402, %v406
  %v409 = vadd.f32 %v386, %v407
  %v410 = vadd.f32 %v387, %v407
  %v411 = vadd.f32 %v388, %v407
  %v412 = vadd.f32 %v389, %v407
  %v413 = vadd.f32 %v390, %v407
  %v414 = vadd.f32 %v391, %v407
  %v415 = vadd.f32 %v392, %v407
  %v416 = vadd.f32 %v393, %v407
  %v417 = vadd.f32 %v394, %v407
  %v418 = vadd.f32 %v395, %v407
  %v419 = vadd.f32 %v396, %v407
  %v420 = vadd.f32 %v397, %v407
  %v421 = vadd.f32 %v398, %v407
  %v422 = vadd.f32 %v399, %v407
  %v423 = vadd.f32 %v400, %v407
  %v424 = vadd.f32 %v401, %v407
  %v425 = vmax.f32 %v409, 0.0
  %v426 = vmax.f32 %v410, 0.0
  %v427 = vmax.f32 %v411, 0.0
  %v428 = vmax.f32 %v412, 0.0
  %v429 = vmax.f32 %v413, 0.0
  %v430 = vmax.f32 %v414, 0.0
  %v431 = vmax.f32 %v415, 0.0
  %v432 = vmax.f32 %v416, 0.0
  %v433 = vmax.f32 %v417, 0.0
  %v434 = vmax.f32 %v418, 0.0
  %v435 = vmax.f32 %v419, 0.0
  %v436 = vmax.f32 %v420, 0.0
  %v437 = vmax.f32 %v421, 0.0
  %v438 = vmax.f32 %v422, 0.0
  %v439 = vmax.f32 %v423, 0.0
  %v440 = vmax.f32 %v424, 0.0
  %441 = vst [vmem:[%s4] sm:$0xff] %v425
  %442 = vst [vmem:[%s4 + $0x8] sm:$0xff] %v426
  %443 = vst [vmem:[%s4 + $0x10] sm:$0xff] %v427
  %444 = vst [vmem:[%s4 + $0x18] sm:$0xff] %v428
  %445 = vst [vmem:[%s4 + $0x20] sm:$0xff] %v429
  %446 = vst [vmem:[%s4 + $0x28] sm:$0xff] %v430
  %447 = vst [vmem:[%s4 + $0x30] sm:$0xff] %v431
  %448 = vst [vmem:[%s4 + $0x38] sm:$0xff] %v432
  %449 = vst [vmem:[%s4 + $0x40] sm:$0xff] %v433
  %450 = vst [vmem:[%s4 + $0x48] sm:$0xff] %v434
  %451 = vst [vmem:[%s4 + $0x50] sm:$0xff] %v435
  %452 = vst [vmem:[%s4 + $0x58] sm:$0xff] %v436
  %453 = vst [vmem:[%s4 + $0x60] sm:$0xff] %v437
  %454 = vst [vmem:[%s4 + $0x68] sm:$0xff] %v438
  %455 = vst [vmem:[%s4 + $0x70] sm:$0xff] %v439
  %456 = vst [vmem:[%s4 + $0x78] sm:$0xff] %v440
  // Predicated region
  $region18: #{generator_forward.31} parent=0 // pred_check
    _
  $region19: #{generator_forward.31} parent=0 // pred_check_branch
    %458 = sbr.rel (0) target = $region21
  $region20: #{generator_forward.31} parent=0 // pred_region
    _
  $region21: #{generator_forward.31} parent=0 // pred_fallthru
    _
  // Predicated region
  $region22: #{generator_forward.31} parent=0 // pred_check
    _
  $region23: #{generator_forward.31} parent=0 // pred_check_branch
    %460 = sbr.rel (0) target = $region25
  $region24: #{generator_forward.31} parent=0 // pred_region
    _
  $region25: #{generator_forward.31} parent=0 // pred_fallthru
    _

// kernel: generator_forward.33
$region0: #{generator_forward.33}
  #allocation0 [shape = 'u32[]', space=smem, size = 0x4, offset = 0x4, fixed_abs, tag = 'smem constant byte address 0x4 - core index']
  #allocation1 [shape = 'u32[144,128]{1,0:T(1,128)}', space=vmem, size = 0x12000, scoped, tag = 'internal scratch']
  %s0 = inlined_call_operand.vmem [shape: bf16[32,144], index: 0, kind: input, shape index: {}]
  %s1 = inlined_call_operand.vmem [shape: bf16[144,128], index: 1, kind: input, shape index: {}]
  %s2 = inlined_call_operand.vmem [shape: f32[1,128], index: 2, kind: input, shape index: {}]
  %s3 = inlined_call_operand.vmem [shape: f32[1,128], index: 3, kind: input, shape index: {}]
  %s4 = inlined_call_operand.vmem [shape: f32[32,128], index: 4, kind: output, shape index: {}]
  %s5 = sld [smem:[#allocation0]]
  $region26: #{generator_forward.33} parent=0
    _
  %s7 = ssub.s32 1, %s5
  %s8 = scalar_select 0, %s7, %s5
  // Predicated region
  $region2: #{generator_forward.33} parent=0 // pred_check
    _
  $region3: #{generator_forward.33} parent=0 // pred_check_branch
    %10 = sbr.rel (0) target = $region5
  $region4: #{generator_forward.33} parent=0 // pred_region
    _
  $region5: #{generator_forward.33} parent=0 // pred_fallthru
    _
  // Predicated region
  $region6: #{generator_forward.33} parent=0 // pred_check
    _
  $region7: #{generator_forward.33} parent=0 // pred_check_branch
    %12 = sbr.rel (0) target = $region9
  $region8: #{generator_forward.33} parent=0 // pred_region
    _
  $region9: #{generator_forward.33} parent=0 // pred_fallthru
    _
  // Predicated region
  $region10: #{generator_forward.33} parent=0 // pred_check
    _
  $region11: #{generator_forward.33} parent=0 // pred_check_branch
    %14 = sbr.rel (0) target = $region13
  $region12: #{generator_forward.33} parent=0 // pred_region
    _
  $region13: #{generator_forward.33} parent=0 // pred_fallthru
    _
  // Predicated region
  $region14: #{generator_forward.33} parent=0 // pred_check
    _
  $region15: #{generator_forward.33} parent=0 // pred_check_branch
    %16 = sbr.rel (0) target = $region17
  $region16: #{generator_forward.33} parent=0 // pred_region
    _
  $region17: #{generator_forward.33} parent=0 // pred_fallthru
    _
  %v18 = vld [vmem:[%s0] sm:$0xff]
  %v19 = vld [vmem:[%s0 + $0x8] sm:$0xff]
  %v20 = vld [vmem:[%s0 + $0x10] sm:$0xff]
  %v21 = vld [vmem:[%s0 + $0x18] sm:$0xff]
  %v22 = vld [vmem:[%s1] sm:$0xf]
  %v23 = vld [vmem:[%s1 + $0x4] sm:$0xf]
  %v24 = vld [vmem:[%s1 + $0x8] sm:$0xf]
  %v25 = vld [vmem:[%s1 + $0xc] sm:$0xf]
  %v26 = vld [vmem:[%s1 + $0x10] sm:$0xf]
  %v27 = vld [vmem:[%s1 + $0x14] sm:$0xf]
  %v28 = vld [vmem:[%s1 + $0x18] sm:$0xf]
  %v29 = vld [vmem:[%s1 + $0x1c] sm:$0xf]
  %v30 = vld [vmem:[%s1 + $0x20] sm:$0xf]
  %v31 = vld [vmem:[%s1 + $0x24] sm:$0xf]
  %v32 = vld [vmem:[%s1 + $0x28] sm:$0xf]
  %v33 = vld [vmem:[%s1 + $0x2c] sm:$0xf]
  %v34 = vld [vmem:[%s1 + $0x30] sm:$0xf]
  %v35 = vld [vmem:[%s1 + $0x34] sm:$0xf]
  %v36 = vld [vmem:[%s1 + $0x38] sm:$0xf]
  %v37 = vld [vmem:[%s1 + $0x3c] sm:$0xf]
  %v38 = vld [vmem:[%s1 + $0x40] sm:$0xf]
  %v39 = vld [vmem:[%s1 + $0x44] sm:$0xf]
  %v44 = vunpack.c.l.b16 %v18
  %v45 = vunpack.c.h.b16 %v18
  %v46 = vunpack.c.l.b16 %v19
  %v47 = vunpack.c.h.b16 %v19
  %v48 = vunpack.c.l.b16 %v20
  %v49 = vunpack.c.h.b16 %v20
  %v50 = vunpack.c.l.b16 %v21
  %v51 = vunpack.c.h.b16 %v21
  %v52 = vpack.c.b16 %v46, %v44
  %v53 = vpack.c.b16 %v47, %v45
  %v54 = vpack.c.b16 %v50, %v48
  %v55 = vpack.c.b16 %v51, %v49
  %v76 = vunpack.c.l.b16 %v22
  %v77 = vunpack.c.l.b16 %v23
  %v78 = vunpack.c.l.b16 %v24
  %v79 = vunpack.c.l.b16 %v25
  %v80 = vunpack.c.l.b16 %v26
  %v81 = vunpack.c.l.b16 %v27
  %v82 = vunpack.c.l.b16 %v28
  %v83 = vunpack.c.l.b16 %v29
  %v84 = vunpack.c.l.b16 %v30
  %v85 = vunpack.c.l.b16 %v31
  %v86 = vunpack.c.l.b16 %v32
  %v87 = vunpack.c.l.b16 %v33
  %v88 = vunpack.c.l.b16 %v34
  %v89 = vunpack.c.l.b16 %v35
  %v90 = vunpack.c.l.b16 %v36
  %v91 = vunpack.c.l.b16 %v37
  %v92 = vunpack.c.l.b16 %v38
  %v93 = vunpack.c.l.b16 %v39
  %v94 = vpack.c.b16 %v77, %v76
  %v95 = vpack.c.b16 %v79, %v78
  %v96 = vpack.c.b16 %v81, %v80
  %v97 = vpack.c.b16 %v83, %v82
  %v98 = vpack.c.b16 %v85, %v84
  %v99 = vpack.c.b16 %v87, %v86
  %v100 = vpack.c.b16 %v89, %v88
  %v101 = vpack.c.b16 %v91, %v90
  %v102 = vpack.c.b16 %v93, %v92
  %vm112 = vcmask 130048
  %v114 = vsel %vm112, %v53, 0
  %v117 = vsel %vm112, %v55, 0
  %119 = vmatprep.subr.bf16.mxu0 0
  %120 = vmatpush1.bf16.msra.mxu0 %v101
  %121 = vmatprep.subr.bf16.mxu0 0
  %122 = vmatpush1.bf16.msra.mxu0 %v100
  %123 = vmatprep.subr.bf16.mxu0 0
  %124 = vmatpush1.bf16.msra.mxu0 %v99
  %125 = vmatprep.subr.bf16.mxu0 0
  %126 = vmatpush1.bf16.msra.mxu0 %v98
  %127 = vmatprep.subr.bf16.mxu0 0
  %128 = vmatpush1.bf16.msra.mxu0 %v97
  %129 = vmatprep.subr.bf16.mxu0 0
  %130 = vmatpush1.bf16.msra.mxu0 %v96
  %131 = vmatprep.subr.bf16.mxu0 0
  %132 = vmatpush1.bf16.msra.mxu0 %v95
  %133 = vmatprep.subr.bf16.mxu0 0
  %134 = vmatpush1.bf16.msra.mxu0 %v94
  %135 = vmatprep.subr.bf16.mxu0 0
  %136 = vmatpush2.bf16.msra.mxu0 0
  %137 = vmatprep.subr.bf16.mxu0 0
  %138 = vmatpush2.bf16.msra.mxu0 0
  %139 = vmatprep.subr.bf16.mxu0 0
  %140 = vmatpush2.bf16.msra.mxu0 0
  %141 = vmatprep.subr.bf16.mxu0 0
  %142 = vmatpush2.bf16.msra.mxu0 0
  %143 = vmatprep.subr.bf16.mxu0 0
  %144 = vmatpush2.bf16.msra.mxu0 0
  %145 = vmatprep.subr.bf16.mxu0 0
  %146 = vmatpush2.bf16.msra.mxu0 0
  %147 = vmatprep.subr.bf16.mxu0 0
  %148 = vmatpush2.bf16.msra.mxu0 0
  %149 = vmatprep.subr.bf16.mxu0 0
  %150 = vmatpush2.bf16.msra.mxu0 %v102
  %151 = vmatprep.mubr.bf16.mxu0 %v114
  %152 = vmatmul.mubr.bf16.gmra.mxu0 %v52
  %v153 = vpop.f32.mrf.mxu0
  %v154 = vadd.f32 0.0, %v153
  %v155 = vpop.f32.mrf.mxu0
  %v156 = vpop.f32.mrf.mxu0
  %v157 = vadd.f32 0.0, %v156
  %v158 = vpop.f32.mrf.mxu0
  %159 = vmatprep.mubr.bf16.mxu0 %v117
  %160 = vmatmul.mubr.bf16.gmra.mxu0 %v54
  %v161 = vpop.f32.mrf.mxu0
  %v162 = vadd.f32 0.0, %v161
  %v163 = vpop.f32.mrf.mxu0
  %v164 = vpop.f32.mrf.mxu0
  %v165 = vadd.f32 0.0, %v164
  %v166 = vpop.f32.mrf.mxu0
  %167 = vdwg.mxu0
  %v168 = vadd.f32 %v154, %v157
  %v169 = vadd.f32 %v168, %v162
  %v170 = vadd.f32 %v169, %v165
  %v171 = vrot.slane %v170, 4
  %v172 = vadd.f32 %v170, %v171
  %v173 = vrot.slane %v172, 2
  %v174 = vadd.f32 %v172, %v173
  %v175 = vrot.slane %v174, 1
  %v176 = vadd.f32 %v174, %v175
  %v177 = vmul.f32 %v176, 0.03125
  %v178 = vsub.f32 %v154, %v177
  %v179 = vsub.f32 %v157, %v177
  %v180 = vsub.f32 %v162, %v177
  %v181 = vsub.f32 %v165, %v177
  %v182 = vmul.f32 %v178, %v178
  %v183 = vmul.f32 %v179, %v179
  %v184 = vmul.f32 %v180, %v180
  %v185 = vmul.f32 %v181, %v181
  %v186 = vadd.f32 %v182, %v183
  %v187 = vadd.f32 %v186, %v184
  %v188 = vadd.f32 %v187, %v185
  %v189 = vrot.slane %v188, 4
  %v190 = vadd.f32 %v188, %v189
  %v191 = vrot.slane %v190, 2
  %v192 = vadd.f32 %v190, %v191
  %v193 = vrot.slane %v192, 1
  %v194 = vadd.f32 %v192, %v193
  %v195 = vmul.f32 %v194, 0.03125
  %v196 = vld [vmem:[%s2] sm:$0x1]
  %v197 = vadd.f32 %v195, 1e-05
  %v198 = vrsqrt.pop %v197
  %v199 = vmul.f32 %v196, %v198
  %v201 = vlaneseq
  %v202 = vshrl.u32 %v201, 7
  %v203 = vsub.s32 0, %v202
  %v204 = vrot.slane %v199, %v203
  %v206 = vmul.f32 %v178, %v204
  %v207 = vmul.f32 %v179, %v204
  %v208 = vmul.f32 %v180, %v204
  %v209 = vmul.f32 %v181, %v204
  %v210 = vld [vmem:[%s3] sm:$0x1]
  %v212 = vlaneseq
  %v213 = vshrl.u32 %v212, 7
  %v214 = vsub.s32 0, %v213
  %v215 = vrot.slane %v210, %v214
  %v217 = vadd.f32 %v206, %v215
  %v218 = vadd.f32 %v207, %v215
  %v219 = vadd.f32 %v208, %v215
  %v220 = vadd.f32 %v209, %v215
  %v221 = vmax.f32 %v217, 0.0
  %v222 = vmax.f32 %v218, 0.0
  %v223 = vmax.f32 %v219, 0.0
  %v224 = vmax.f32 %v220, 0.0
  %225 = vst [vmem:[%s4] sm:$0xff] %v221
  %226 = vst [vmem:[%s4 + $0x8] sm:$0xff] %v222
  %227 = vst [vmem:[%s4 + $0x10] sm:$0xff] %v223
  %228 = vst [vmem:[%s4 + $0x18] sm:$0xff] %v224
  // Predicated region
  $region18: #{generator_forward.33} parent=0 // pred_check
    _
  $region19: #{generator_forward.33} parent=0 // pred_check_branch
    %230 = sbr.rel (0) target = $region21
  $region20: #{generator_forward.33} parent=0 // pred_region
    _
  $region21: #{generator_forward.33} parent=0 // pred_fallthru
    _
  // Predicated region
  $region22: #{generator_forward.33} parent=0 // pred_check
    _
  $region23: #{generator_forward.33} parent=0 // pred_check_branch
    %232 = sbr.rel (0) target = $region25
  $region24: #{generator_forward.33} parent=0 // pred_region
    _
  $region25: #{generator_forward.33} parent=0 // pred_fallthru
    _

// kernel: generator_forward.35
$region0: #{generator_forward.35}
  #allocation0 [shape = 'u32[]', space=smem, size = 0x4, offset = 0x4, fixed_abs, tag = 'smem constant byte address 0x4 - core index']
  #allocation1 [shape = 'u32[144,128]{1,0:T(1,128)}', space=vmem, size = 0x12000, scoped, tag = 'internal scratch']
  %s0 = inlined_call_operand.vmem [shape: f32[4,2,2,2,128], index: 0, kind: input, shape index: {}]
  %s1 = inlined_call_operand.vmem [shape: f32[4,2,128], index: 1, kind: output, shape index: {}]
  %s2 = sld [smem:[#allocation0]]
  $region14: #{generator_forward.35} parent=0
    _
  %s4 = ssub.s32 1, %s2
  %s5 = scalar_select 0, %s4, %s2
  // Predicated region
  $region2: #{generator_forward.35} parent=0 // pred_check
    _
  $region3: #{generator_forward.35} parent=0 // pred_check_branch
    %7 = sbr.rel (0) target = $region5
  $region4: #{generator_forward.35} parent=0 // pred_region
    _
  $region5: #{generator_forward.35} parent=0 // pred_fallthru
    _
  %v8 = vld [vmem:[%s0] sm:$0x3]
  %v9 = vld [vmem:[%s0 + $0x2] sm:$0x3]
  %v10 = vld [vmem:[%s0 + $0x4] sm:$0x3]
  %v11 = vld [vmem:[%s0 + $0x6] sm:$0x3]
  %v12 = vld [vmem:[%s0 + $0x8] sm:$0x3]
  %v13 = vld [vmem:[%s0 + $0xa] sm:$0x3]
  %v14 = vld [vmem:[%s0 + $0xc] sm:$0x3]
  %v15 = vld [vmem:[%s0 + $0xe] sm:$0x3]
  %v16 = vld [vmem:[%s0 + $0x10] sm:$0x3]
  %v17 = vld [vmem:[%s0 + $0x12] sm:$0x3]
  %v18 = vld [vmem:[%s0 + $0x14] sm:$0x3]
  %v19 = vld [vmem:[%s0 + $0x16] sm:$0x3]
  %v20 = vld [vmem:[%s0 + $0x18] sm:$0x3]
  %v21 = vld [vmem:[%s0 + $0x1a] sm:$0x3]
  %v22 = vld [vmem:[%s0 + $0x1c] sm:$0x3]
  %v23 = vld [vmem:[%s0 + $0x1e] sm:$0x3]
  %v24 = vmax.f32 %v8, %v10
  %v25 = vmax.f32 %v9, %v11
  %v26 = vmax.f32 %v12, %v14
  %v27 = vmax.f32 %v13, %v15
  %v28 = vmax.f32 %v16, %v18
  %v29 = vmax.f32 %v17, %v19
  %v30 = vmax.f32 %v20, %v22
  %v31 = vmax.f32 %v21, %v23
  %v40 = vrot.slane %v24, 1
  %v41 = vrot.slane %v25, 1
  %v42 = vrot.slane %v26, 1
  %v43 = vrot.slane %v27, 1
  %v44 = vrot.slane %v28, 1
  %v45 = vrot.slane %v29, 1
  %v46 = vrot.slane %v30, 1
  %v47 = vrot.slane %v31, 1
  %v56 = vmax.f32 %v24, %v40
  %v57 = vmax.f32 %v25, %v41
  %v58 = vmax.f32 %v26, %v42
  %v59 = vmax.f32 %v27, %v43
  %v60 = vmax.f32 %v28, %v44
  %v61 = vmax.f32 %v29, %v45
  %v62 = vmax.f32 %v30, %v46
  %v63 = vmax.f32 %v31, %v47
  %v72 = vrot.slane %v57, 7
  %vm73 = vcmask 1041409
  %v74 = vsel %vm73, %v72, %v56
  %v75 = vrot.slane %v59, 7
  %v76 = vsel %vm73, %v75, %v58
  %v77 = vrot.slane %v61, 7
  %v78 = vsel %vm73, %v77, %v60
  %v79 = vrot.slane %v63, 7
  %v80 = vsel %vm73, %v79, %v62
  %85 = vst [vmem:[%s1] sm:$0x3] %v74
  %86 = vst [vmem:[%s1 + $0x2] sm:$0x3] %v76
  %87 = vst [vmem:[%s1 + $0x4] sm:$0x3] %v78
  %88 = vst [vmem:[%s1 + $0x6] sm:$0x3] %v80
  // Predicated region
  $region6: #{generator_forward.35} parent=0 // pred_check
    _
  $region7: #{generator_forward.35} parent=0 // pred_check_branch
    %90 = sbr.rel (0) target = $region9
  $region8: #{generator_forward.35} parent=0 // pred_region
    _
  $region9: #{generator_forward.35} parent=0 // pred_fallthru
    _
  // Predicated region
  $region10: #{generator_forward.35} parent=0 // pred_check
    _
  $region11: #{generator_forward.35} parent=0 // pred_check_branch
    %92 = sbr.rel (0) target = $region13
  $region12: #{generator_forward.35} parent=0 // pred_region
    _
  $region13: #{generator_forward.35} parent=0 // pred_fallthru
    _

// kernel: generator_forward.34
$region0: #{generator_forward.34}
  #allocation0 [shape = 'u32[]', space=smem, size = 0x4, offset = 0x4, fixed_abs, tag = 'smem constant byte address 0x4 - core index']
  #allocation1 [shape = 'u32[144,128]{1,0:T(1,128)}', space=vmem, size = 0x12000, scoped, tag = 'internal scratch']
  %s0 = inlined_call_operand.vmem [shape: bf16[32,288], index: 0, kind: input, shape index: {}]
  %s1 = inlined_call_operand.vmem [shape: bf16[288,128], index: 1, kind: input, shape index: {}]
  %s2 = inlined_call_operand.vmem [shape: f32[1,128], index: 2, kind: input, shape index: {}]
  %s3 = inlined_call_operand.vmem [shape: f32[1,128], index: 3, kind: input, shape index: {}]
  %s4 = inlined_call_operand.vmem [shape: f32[32,128], index: 4, kind: output, shape index: {}]
  %s5 = sld [smem:[#allocation0]]
  $region26: #{generator_forward.34} parent=0
    _
  %s7 = ssub.s32 1, %s5
  %s8 = scalar_select 0, %s7, %s5
  // Predicated region
  $region2: #{generator_forward.34} parent=0 // pred_check
    _
  $region3: #{generator_forward.34} parent=0 // pred_check_branch
    %10 = sbr.rel (0) target = $region5
  $region4: #{generator_forward.34} parent=0 // pred_region
    _
  $region5: #{generator_forward.34} parent=0 // pred_fallthru
    _
  // Predicated region
  $region6: #{generator_forward.34} parent=0 // pred_check
    _
  $region7: #{generator_forward.34} parent=0 // pred_check_branch
    %12 = sbr.rel (0) target = $region9
  $region8: #{generator_forward.34} parent=0 // pred_region
    _
  $region9: #{generator_forward.34} parent=0 // pred_fallthru
    _
  // Predicated region
  $region10: #{generator_forward.34} parent=0 // pred_check
    _
  $region11: #{generator_forward.34} parent=0 // pred_check_branch
    %14 = sbr.rel (0) target = $region13
  $region12: #{generator_forward.34} parent=0 // pred_region
    _
  $region13: #{generator_forward.34} parent=0 // pred_fallthru
    _
  // Predicated region
  $region14: #{generator_forward.34} parent=0 // pred_check
    _
  $region15: #{generator_forward.34} parent=0 // pred_check_branch
    %16 = sbr.rel (0) target = $region17
  $region16: #{generator_forward.34} parent=0 // pred_region
    _
  $region17: #{generator_forward.34} parent=0 // pred_fallthru
    _
  %v18 = vld [vmem:[%s0] sm:$0xff]
  %v19 = vld [vmem:[%s0 + $0x8] sm:$0xf]
  %v20 = vld [vmem:[%s0 + $0xc] sm:$0xff]
  %v21 = vld [vmem:[%s0 + $0x14] sm:$0xf]
  %v22 = vld [vmem:[%s0 + $0x18] sm:$0xff]
  %v23 = vld [vmem:[%s0 + $0x20] sm:$0xf]
  %v24 = vld [vmem:[%s0 + $0x24] sm:$0xff]
  %v25 = vld [vmem:[%s0 + $0x2c] sm:$0xf]
  %v26 = vld [vmem:[%s1] sm:$0xf]
  %v27 = vld [vmem:[%s1 + $0x4] sm:$0xf]
  %v28 = vld [vmem:[%s1 + $0x8] sm:$0xf]
  %v29 = vld [vmem:[%s1 + $0xc] sm:$0xf]
  %v30 = vld [vmem:[%s1 + $0x10] sm:$0xf]
  %v31 = vld [vmem:[%s1 + $0x14] sm:$0xf]
  %v32 = vld [vmem:[%s1 + $0x18] sm:$0xf]
  %v33 = vld [vmem:[%s1 + $0x1c] sm:$0xf]
  %v34 = vld [vmem:[%s1 + $0x20] sm:$0xf]
  %v35 = vld [vmem:[%s1 + $0x24] sm:$0xf]
  %v36 = vld [vmem:[%s1 + $0x28] sm:$0xf]
  %v37 = vld [vmem:[%s1 + $0x2c] sm:$0xf]
  %v38 = vld [vmem:[%s1 + $0x30] sm:$0xf]
  %v39 = vld [vmem:[%s1 + $0x34] sm:$0xf]
  %v40 = vld [vmem:[%s1 + $0x38] sm:$0xf]
  %v41 = vld [vmem:[%s1 + $0x3c] sm:$0xf]
  %v42 = vld [vmem:[%s1 + $0x40] sm:$0xf]
  %v43 = vld [vmem:[%s1 + $0x44] sm:$0xf]
  %v44 = vld [vmem:[%s1 + $0x48] sm:$0xf]
  %v45 = vld [vmem:[%s1 + $0x4c] sm:$0xf]
  %v46 = vld [vmem:[%s1 + $0x50] sm:$0xf]
  %v47 = vld [vmem:[%s1 + $0x54] sm:$0xf]
  %v48 = vld [vmem:[%s1 + $0x58] sm:$0xf]
  %v49 = vld [vmem:[%s1 + $0x5c] sm:$0xf]
  %v50 = vld [vmem:[%s1 + $0x60] sm:$0xf]
  %v51 = vld [vmem:[%s1 + $0x64] sm:$0xf]
  %v52 = vld [vmem:[%s1 + $0x68] sm:$0xf]
  %v53 = vld [vmem:[%s1 + $0x6c] sm:$0xf]
  %v54 = vld [vmem:[%s1 + $0x70] sm:$0xf]
  %v55 = vld [vmem:[%s1 + $0x74] sm:$0xf]
  %v56 = vld [vmem:[%s1 + $0x78] sm:$0xf]
  %v57 = vld [vmem:[%s1 + $0x7c] sm:$0xf]
  %v58 = vld [vmem:[%s1 + $0x80] sm:$0xf]
  %v59 = vld [vmem:[%s1 + $0x84] sm:$0xf]
  %v60 = vld [vmem:[%s1 + $0x88] sm:$0xf]
  %v61 = vld [vmem:[%s1 + $0x8c] sm:$0xf]
  %v70 = vunpack.c.l.b16 %v18
  %v71 = vunpack.c.h.b16 %v18
  %v72 = vunpack.c.l.b16 %v19
  %v73 = vunpack.c.l.b16 %v20
  %v74 = vunpack.c.h.b16 %v20
  %v75 = vunpack.c.l.b16 %v21
  %v76 = vunpack.c.l.b16 %v22
  %v77 = vunpack.c.h.b16 %v22
  %v78 = vunpack.c.l.b16 %v23
  %v79 = vunpack.c.l.b16 %v24
  %v80 = vunpack.c.h.b16 %v24
  %v81 = vunpack.c.l.b16 %v25
  %v82 = vpack.c.b16 %v73, %v70
  %v83 = vpack.c.b16 %v74, %v71
  %v84 = vpack.c.b16 %v75, %v72
  %v85 = vpack.c.b16 %v79, %v76
  %v86 = vpack.c.b16 %v80, %v77
  %v87 = vpack.c.b16 %v81, %v78
  %v128 = vunpack.c.l.b16 %v26
  %v129 = vunpack.c.l.b16 %v27
  %v130 = vunpack.c.l.b16 %v28
  %v131 = vunpack.c.l.b16 %v29
  %v132 = vunpack.c.l.b16 %v30
  %v133 = vunpack.c.l.b16 %v31
  %v134 = vunpack.c.l.b16 %v32
  %v135 = vunpack.c.l.b16 %v33
  %v136 = vunpack.c.l.b16 %v34
  %v137 = vunpack.c.l.b16 %v35
  %v138 = vunpack.c.l.b16 %v36
  %v139 = vunpack.c.l.b16 %v37
  %v140 = vunpack.c.l.b16 %v38
  %v141 = vunpack.c.l.b16 %v39
  %v142 = vunpack.c.l.b16 %v40
  %v143 = vunpack.c.l.b16 %v41
  %v144 = vunpack.c.l.b16 %v42
  %v145 = vunpack.c.l.b16 %v43
  %v146 = vunpack.c.l.b16 %v44
  %v147 = vunpack.c.l.b16 %v45
  %v148 = vunpack.c.l.b16 %v46
  %v149 = vunpack.c.l.b16 %v47
  %v150 = vunpack.c.l.b16 %v48
  %v151 = vunpack.c.l.b16 %v49
  %v152 = vunpack.c.l.b16 %v50
  %v153 = vunpack.c.l.b16 %v51
  %v154 = vunpack.c.l.b16 %v52
  %v155 = vunpack.c.l.b16 %v53
  %v156 = vunpack.c.l.b16 %v54
  %v157 = vunpack.c.l.b16 %v55
  %v158 = vunpack.c.l.b16 %v56
  %v159 = vunpack.c.l.b16 %v57
  %v160 = vunpack.c.l.b16 %v58
  %v161 = vunpack.c.l.b16 %v59
  %v162 = vunpack.c.l.b16 %v60
  %v163 = vunpack.c.l.b16 %v61
  %v164 = vpack.c.b16 %v129, %v128
  %v165 = vpack.c.b16 %v131, %v130
  %v166 = vpack.c.b16 %v133, %v132
  %v167 = vpack.c.b16 %v135, %v134
  %v168 = vpack.c.b16 %v137, %v136
  %v169 = vpack.c.b16 %v139, %v138
  %v170 = vpack.c.b16 %v141, %v140
  %v171 = vpack.c.b16 %v143, %v142
  %v172 = vpack.c.b16 %v145, %v144
  %v173 = vpack.c.b16 %v147, %v146
  %v174 = vpack.c.b16 %v149, %v148
  %v175 = vpack.c.b16 %v151, %v150
  %v176 = vpack.c.b16 %v153, %v152
  %v177 = vpack.c.b16 %v155, %v154
  %v178 = vpack.c.b16 %v157, %v156
  %v179 = vpack.c.b16 %v159, %v158
  %v180 = vpack.c.b16 %v161, %v160
  %v181 = vpack.c.b16 %v163, %v162
  %vm200 = vcmask 261120
  %v202 = vsel %vm200, %v84, 0
  %v205 = vsel %vm200, %v87, 0
  %207 = vmatprep.subr.bf16.mxu0 0
  %208 = vmatpush1.bf16.msra.mxu0 %v171
  %209 = vmatprep.subr.bf16.mxu0 0
  %210 = vmatpush1.bf16.msra.mxu0 %v170
  %211 = vmatprep.subr.bf16.mxu0 0
  %212 = vmatpush1.bf16.msra.mxu0 %v169
  %213 = vmatprep.subr.bf16.mxu0 0
  %214 = vmatpush1.bf16.msra.mxu0 %v168
  %215 = vmatprep.subr.bf16.mxu0 0
  %216 = vmatpush1.bf16.msra.mxu0 %v167
  %217 = vmatprep.subr.bf16.mxu0 0
  %218 = vmatpush1.bf16.msra.mxu0 %v166
  %219 = vmatprep.subr.bf16.mxu0 0
  %220 = vmatpush1.bf16.msra.mxu0 %v165
  %221 = vmatprep.subr.bf16.mxu0 0
  %222 = vmatpush1.bf16.msra.mxu0 %v164
  %223 = vmatprep.subr.bf16.mxu0 0
  %224 = vmatpush2.bf16.msra.mxu0 %v179
  %225 = vmatprep.subr.bf16.mxu0 0
  %226 = vmatpush2.bf16.msra.mxu0 %v178
  %227 = vmatprep.subr.bf16.mxu0 0
  %228 = vmatpush2.bf16.msra.mxu0 %v177
  %229 = vmatprep.subr.bf16.mxu0 0
  %230 = vmatpush2.bf16.msra.mxu0 %v176
  %231 = vmatprep.subr.bf16.mxu0 0
  %232 = vmatpush2.bf16.msra.mxu0 %v175
  %233 = vmatprep.subr.bf16.mxu0 0
  %234 = vmatpush2.bf16.msra.mxu0 %v174
  %235 = vmatprep.subr.bf16.mxu0 0
  %236 = vmatpush2.bf16.msra.mxu0 %v173
  %237 = vmatprep.subr.bf16.mxu0 0
  %238 = vmatpush2.bf16.msra.mxu0 %v172
  %239 = vmatprep.mubr.bf16.mxu0 %v83
  %240 = vmatmul.mubr.bf16.gmra.mxu0 %v82
  %v241 = vpop.f32.mrf.mxu0
  %v242 = vadd.f32 0.0, %v241
  %v243 = vpop.f32.mrf.mxu0
  %v244 = vpop.f32.mrf.mxu0
  %v245 = vadd.f32 0.0, %v244
  %v246 = vpop.f32.mrf.mxu0
  %247 = vmatprep.mubr.bf16.mxu0 %v86
  %248 = vmatmul.mubr.bf16.gmra.mxu0 %v85
  %v249 = vpop.f32.mrf.mxu0
  %v250 = vadd.f32 0.0, %v249
  %v251 = vpop.f32.mrf.mxu0
  %v252 = vpop.f32.mrf.mxu0
  %v253 = vadd.f32 0.0, %v252
  %v254 = vpop.f32.mrf.mxu0
  %255 = vdwg.mxu0
  %256 = vmatprep.subr.bf16.mxu0 0
  %257 = vmatpush1.bf16.msra.mxu0 0
  %258 = vmatprep.subr.bf16.mxu0 0
  %259 = vmatpush1.bf16.msra.mxu0 0
  %260 = vmatprep.subr.bf16.mxu0 0
  %261 = vmatpush1.bf16.msra.mxu0 0
  %262 = vmatprep.subr.bf16.mxu0 0
  %263 = vmatpush1.bf16.msra.mxu0 0
  %264 = vmatprep.subr.bf16.mxu0 0
  %265 = vmatpush1.bf16.msra.mxu0 0
  %266 = vmatprep.subr.bf16.mxu0 0
  %267 = vmatpush1.bf16.msra.mxu0 0
  %268 = vmatprep.subr.bf16.mxu0 0
  %269 = vmatpush1.bf16.msra.mxu0 %v181
  %270 = vmatprep.subr.bf16.mxu0 0
  %271 = vmatpush1.bf16.msra.mxu0 %v180
  %272 = vmatprep.subr.bf16.mxu0 0
  %273 = vmatpush2.bf16.msra.mxu0 0
  %274 = vmatprep.subr.bf16.mxu0 0
  %275 = vmatpush2.bf16.msra.mxu0 0
  %276 = vmatprep.subr.bf16.mxu0 0
  %277 = vmatpush2.bf16.msra.mxu0 0
  %278 = vmatprep.subr.bf16.mxu0 0
  %279 = vmatpush2.bf16.msra.mxu0 0
  %280 = vmatprep.subr.bf16.mxu0 0
  %281 = vmatpush2.bf16.msra.mxu0 0
  %282 = vmatprep.subr.bf16.mxu0 0
  %283 = vmatpush2.bf16.msra.mxu0 0
  %284 = vmatprep.subr.bf16.mxu0 0
  %285 = vmatpush2.bf16.msra.mxu0 0
  %286 = vmatprep.subr.bf16.mxu0 0
  %287 = vmatpush2.bf16.msra.mxu0 0
  %288 = vmatprep.mubr.bf16.mxu0 0
  %289 = vmatmul.mubr.bf16.gmra.mxu0 %v202
  %v290 = vpop.f32.mrf.mxu0
  %v291 = vadd.f32 %v242, %v290
  %v292 = vpop.f32.mrf.mxu0
  %v293 = vpop.f32.mrf.mxu0
  %v294 = vadd.f32 %v245, %v293
  %v295 = vpop.f32.mrf.mxu0
  %296 = vmatprep.mubr.bf16.mxu0 0
  %297 = vmatmul.mubr.bf16.gmra.mxu0 %v205
  %v298 = vpop.f32.mrf.mxu0
  %v299 = vadd.f32 %v250, %v298
  %v300 = vpop.f32.mrf.mxu0
  %v301 = vpop.f32.mrf.mxu0
  %v302 = vadd.f32 %v253, %v301
  %v303 = vpop.f32.mrf.mxu0
  %304 = vdwg.mxu0
  %v305 = vadd.f32 %v291, %v294
  %v306 = vadd.f32 %v305, %v299
  %v307 = vadd.f32 %v306, %v302
  %v308 = vrot.slane %v307, 4
  %v309 = vadd.f32 %v307, %v308
  %v310 = vrot.slane %v309, 2
  %v311 = vadd.f32 %v309, %v310
  %v312 = vrot.slane %v311, 1
  %v313 = vadd.f32 %v311, %v312
  %v314 = vmul.f32 %v313, 0.03125
  %v315 = vsub.f32 %v291, %v314
  %v316 = vsub.f32 %v294, %v314
  %v317 = vsub.f32 %v299, %v314
  %v318 = vsub.f32 %v302, %v314
  %v319 = vmul.f32 %v315, %v315
  %v320 = vmul.f32 %v316, %v316
  %v321 = vmul.f32 %v317, %v317
  %v322 = vmul.f32 %v318, %v318
  %v323 = vadd.f32 %v319, %v320
  %v324 = vadd.f32 %v323, %v321
  %v325 = vadd.f32 %v324, %v322
  %v326 = vrot.slane %v325, 4
  %v327 = vadd.f32 %v325, %v326
  %v328 = vrot.slane %v327, 2
  %v329 = vadd.f32 %v327, %v328
  %v330 = vrot.slane %v329, 1
  %v331 = vadd.f32 %v329, %v330
  %v332 = vmul.f32 %v331, 0.03125
  %v333 = vld [vmem:[%s2] sm:$0x1]
  %v334 = vadd.f32 %v332, 1e-05
  %v335 = vrsqrt.pop %v334
  %v336 = vmul.f32 %v333, %v335
  %v338 = vlaneseq
  %v339 = vshrl.u32 %v338, 7
  %v340 = vsub.s32 0, %v339
  %v341 = vrot.slane %v336, %v340
  %v343 = vmul.f32 %v315, %v341
  %v344 = vmul.f32 %v316, %v341
  %v345 = vmul.f32 %v317, %v341
  %v346 = vmul.f32 %v318, %v341
  %v347 = vld [vmem:[%s3] sm:$0x1]
  %v349 = vlaneseq
  %v350 = vshrl.u32 %v349, 7
  %v351 = vsub.s32 0, %v350
  %v352 = vrot.slane %v347, %v351
  %v354 = vadd.f32 %v343, %v352
  %v355 = vadd.f32 %v344, %v352
  %v356 = vadd.f32 %v345, %v352
  %v357 = vadd.f32 %v346, %v352
  %v358 = vmax.f32 %v354, 0.0
  %v359 = vmax.f32 %v355, 0.0
  %v360 = vmax.f32 %v356, 0.0
  %v361 = vmax.f32 %v357, 0.0
  %362 = vst [vmem:[%s4] sm:$0xff] %v358
  %363 = vst [vmem:[%s4 + $0x8] sm:$0xff] %v359
  %364 = vst [vmem:[%s4 + $0x10] sm:$0xff] %v360
  %365 = vst [vmem:[%s4 + $0x18] sm:$0xff] %v361
  // Predicated region
  $region18: #{generator_forward.34} parent=0 // pred_check
    _
  $region19: #{generator_forward.34} parent=0 // pred_check_branch
    %367 = sbr.rel (0) target = $region21
  $region20: #{generator_forward.34} parent=0 // pred_region
    _
  $region21: #{generator_forward.34} parent=0 // pred_fallthru
    _
  // Predicated region
  $region22: #{generator_forward.34} parent=0 // pred_check
    _
  $region23: #{generator_forward.34} parent=0 // pred_check_branch
    %369 = sbr.rel (0) target = $region25
  $region24: #{generator_forward.34} parent=0 // pred_region
    _
  $region25: #{generator_forward.34} parent=0 // pred_fallthru
    _

// kernel: generator_forward.36
$region0: #{generator_forward.36}
  #allocation0 [shape = 'u32[]', space=smem, size = 0x4, offset = 0x4, fixed_abs, tag = 'smem constant byte address 0x4 - core index']
  #allocation1 [shape = 'u32[144,128]{1,0:T(1,128)}', space=vmem, size = 0x12000, scoped, tag = 'internal scratch']
  %s0 = inlined_call_operand.vmem [shape: bf16[8,288], index: 0, kind: input, shape index: {}]
  %s1 = inlined_call_operand.vmem [shape: bf16[288,128], index: 1, kind: input, shape index: {}]
  %s2 = inlined_call_operand.vmem [shape: f32[1,128], index: 2, kind: input, shape index: {}]
  %s3 = inlined_call_operand.vmem [shape: f32[1,128], index: 3, kind: input, shape index: {}]
  %s4 = inlined_call_operand.vmem [shape: f32[8,128], index: 4, kind: output, shape index: {}]
  %s5 = sld [smem:[#allocation0]]
  $region26: #{generator_forward.36} parent=0
    _
  %s7 = ssub.s32 1, %s5
  %s8 = scalar_select 0, %s7, %s5
  // Predicated region
  $region2: #{generator_forward.36} parent=0 // pred_check
    _
  $region3: #{generator_forward.36} parent=0 // pred_check_branch
    %10 = sbr.rel (0) target = $region5
  $region4: #{generator_forward.36} parent=0 // pred_region
    _
  $region5: #{generator_forward.36} parent=0 // pred_fallthru
    _
  // Predicated region
  $region6: #{generator_forward.36} parent=0 // pred_check
    _
  $region7: #{generator_forward.36} parent=0 // pred_check_branch
    %12 = sbr.rel (0) target = $region9
  $region8: #{generator_forward.36} parent=0 // pred_region
    _
  $region9: #{generator_forward.36} parent=0 // pred_fallthru
    _
  // Predicated region
  $region10: #{generator_forward.36} parent=0 // pred_check
    _
  $region11: #{generator_forward.36} parent=0 // pred_check_branch
    %14 = sbr.rel (0) target = $region13
  $region12: #{generator_forward.36} parent=0 // pred_region
    _
  $region13: #{generator_forward.36} parent=0 // pred_fallthru
    _
  // Predicated region
  $region14: #{generator_forward.36} parent=0 // pred_check
    _
  $region15: #{generator_forward.36} parent=0 // pred_check_branch
    %16 = sbr.rel (0) target = $region17
  $region16: #{generator_forward.36} parent=0 // pred_region
    _
  $region17: #{generator_forward.36} parent=0 // pred_fallthru
    _
  %v18 = vld [vmem:[%s0] sm:$0xff]
  %v19 = vld [vmem:[%s0 + $0x8] sm:$0xf]
  %v20 = vld [vmem:[%s1] sm:$0xf]
  %v21 = vld [vmem:[%s1 + $0x4] sm:$0xf]
  %v22 = vld [vmem:[%s1 + $0x8] sm:$0xf]
  %v23 = vld [vmem:[%s1 + $0xc] sm:$0xf]
  %v24 = vld [vmem:[%s1 + $0x10] sm:$0xf]
  %v25 = vld [vmem:[%s1 + $0x14] sm:$0xf]
  %v26 = vld [vmem:[%s1 + $0x18] sm:$0xf]
  %v27 = vld [vmem:[%s1 + $0x1c] sm:$0xf]
  %v28 = vld [vmem:[%s1 + $0x20] sm:$0xf]
  %v29 = vld [vmem:[%s1 + $0x24] sm:$0xf]
  %v30 = vld [vmem:[%s1 + $0x28] sm:$0xf]
  %v31 = vld [vmem:[%s1 + $0x2c] sm:$0xf]
  %v32 = vld [vmem:[%s1 + $0x30] sm:$0xf]
  %v33 = vld [vmem:[%s1 + $0x34] sm:$0xf]
  %v34 = vld [vmem:[%s1 + $0x38] sm:$0xf]
  %v35 = vld [vmem:[%s1 + $0x3c] sm:$0xf]
  %v36 = vld [vmem:[%s1 + $0x40] sm:$0xf]
  %v37 = vld [vmem:[%s1 + $0x44] sm:$0xf]
  %v38 = vld [vmem:[%s1 + $0x48] sm:$0xf]
  %v39 = vld [vmem:[%s1 + $0x4c] sm:$0xf]
  %v40 = vld [vmem:[%s1 + $0x50] sm:$0xf]
  %v41 = vld [vmem:[%s1 + $0x54] sm:$0xf]
  %v42 = vld [vmem:[%s1 + $0x58] sm:$0xf]
  %v43 = vld [vmem:[%s1 + $0x5c] sm:$0xf]
  %v44 = vld [vmem:[%s1 + $0x60] sm:$0xf]
  %v45 = vld [vmem:[%s1 + $0x64] sm:$0xf]
  %v46 = vld [vmem:[%s1 + $0x68] sm:$0xf]
  %v47 = vld [vmem:[%s1 + $0x6c] sm:$0xf]
  %v48 = vld [vmem:[%s1 + $0x70] sm:$0xf]
  %v49 = vld [vmem:[%s1 + $0x74] sm:$0xf]
  %v50 = vld [vmem:[%s1 + $0x78] sm:$0xf]
  %v51 = vld [vmem:[%s1 + $0x7c] sm:$0xf]
  %v52 = vld [vmem:[%s1 + $0x80] sm:$0xf]
  %v53 = vld [vmem:[%s1 + $0x84] sm:$0xf]
  %v54 = vld [vmem:[%s1 + $0x88] sm:$0xf]
  %v55 = vld [vmem:[%s1 + $0x8c] sm:$0xf]
  %v58 = vunpack.c.l.b16 %v18
  %v59 = vunpack.c.h.b16 %v18
  %v60 = vunpack.c.l.b16 %v19
  %v61 = vpack.c.b16 %v58, %v58
  %v62 = vpack.c.b16 %v59, %v59
  %v63 = vpack.c.b16 %v60, %v60
  %v102 = vunpack.c.l.b16 %v20
  %v103 = vunpack.c.l.b16 %v21
  %v104 = vunpack.c.l.b16 %v22
  %v105 = vunpack.c.l.b16 %v23
  %v106 = vunpack.c.l.b16 %v24
  %v107 = vunpack.c.l.b16 %v25
  %v108 = vunpack.c.l.b16 %v26
  %v109 = vunpack.c.l.b16 %v27
  %v110 = vunpack.c.l.b16 %v28
  %v111 = vunpack.c.l.b16 %v29
  %v112 = vunpack.c.l.b16 %v30
  %v113 = vunpack.c.l.b16 %v31
  %v114 = vunpack.c.l.b16 %v32
  %v115 = vunpack.c.l.b16 %v33
  %v116 = vunpack.c.l.b16 %v34
  %v117 = vunpack.c.l.b16 %v35
  %v118 = vunpack.c.l.b16 %v36
  %v119 = vunpack.c.l.b16 %v37
  %v120 = vunpack.c.l.b16 %v38
  %v121 = vunpack.c.l.b16 %v39
  %v122 = vunpack.c.l.b16 %v40
  %v123 = vunpack.c.l.b16 %v41
  %v124 = vunpack.c.l.b16 %v42
  %v125 = vunpack.c.l.b16 %v43
  %v126 = vunpack.c.l.b16 %v44
  %v127 = vunpack.c.l.b16 %v45
  %v128 = vunpack.c.l.b16 %v46
  %v129 = vunpack.c.l.b16 %v47
  %v130 = vunpack.c.l.b16 %v48
  %v131 = vunpack.c.l.b16 %v49
  %v132 = vunpack.c.l.b16 %v50
  %v133 = vunpack.c.l.b16 %v51
  %v134 = vunpack.c.l.b16 %v52
  %v135 = vunpack.c.l.b16 %v53
  %v136 = vunpack.c.l.b16 %v54
  %v137 = vunpack.c.l.b16 %v55
  %v138 = vpack.c.b16 %v103, %v102
  %v139 = vpack.c.b16 %v105, %v104
  %v140 = vpack.c.b16 %v107, %v106
  %v141 = vpack.c.b16 %v109, %v108
  %v142 = vpack.c.b16 %v111, %v110
  %v143 = vpack.c.b16 %v113, %v112
  %v144 = vpack.c.b16 %v115, %v114
  %v145 = vpack.c.b16 %v117, %v116
  %v146 = vpack.c.b16 %v119, %v118
  %v147 = vpack.c.b16 %v121, %v120
  %v148 = vpack.c.b16 %v123, %v122
  %v149 = vpack.c.b16 %v125, %v124
  %v150 = vpack.c.b16 %v127, %v126
  %v151 = vpack.c.b16 %v129, %v128
  %v152 = vpack.c.b16 %v131, %v130
  %v153 = vpack.c.b16 %v133, %v132
  %v154 = vpack.c.b16 %v135, %v134
  %v155 = vpack.c.b16 %v137, %v136
  %vm174 = vcmask 261120
  %v176 = vsel %vm174, %v63, 0
  %178 = vmatprep.subr.bf16.mxu0 0
  %179 = vmatpush1.bf16.msra.mxu0 %v145
  %180 = vmatprep.subr.bf16.mxu0 0
  %181 = vmatpush1.bf16.msra.mxu0 %v144
  %182 = vmatprep.subr.bf16.mxu0 0
  %183 = vmatpush1.bf16.msra.mxu0 %v143
  %184 = vmatprep.subr.bf16.mxu0 0
  %185 = vmatpush1.bf16.msra.mxu0 %v142
  %186 = vmatprep.subr.bf16.mxu0 0
  %187 = vmatpush1.bf16.msra.mxu0 %v141
  %188 = vmatprep.subr.bf16.mxu0 0
  %189 = vmatpush1.bf16.msra.mxu0 %v140
  %190 = vmatprep.subr.bf16.mxu0 0
  %191 = vmatpush1.bf16.msra.mxu0 %v139
  %192 = vmatprep.subr.bf16.mxu0 0
  %193 = vmatpush1.bf16.msra.mxu0 %v138
  %194 = vmatprep.subr.bf16.mxu0 0
  %195 = vmatpush2.bf16.msra.mxu0 %v153
  %196 = vmatprep.subr.bf16.mxu0 0
  %197 = vmatpush2.bf16.msra.mxu0 %v152
  %198 = vmatprep.subr.bf16.mxu0 0
  %199 = vmatpush2.bf16.msra.mxu0 %v151
  %200 = vmatprep.subr.bf16.mxu0 0
  %201 = vmatpush2.bf16.msra.mxu0 %v150
  %202 = vmatprep.subr.bf16.mxu0 0
  %203 = vmatpush2.bf16.msra.mxu0 %v149
  %204 = vmatprep.subr.bf16.mxu0 0
  %205 = vmatpush2.bf16.msra.mxu0 %v148
  %206 = vmatprep.subr.bf16.mxu0 0
  %207 = vmatpush2.bf16.msra.mxu0 %v147
  %208 = vmatprep.subr.bf16.mxu0 0
  %209 = vmatpush2.bf16.msra.mxu0 %v146
  %210 = vmatprep.mubr.bf16.mxu0 %v62
  %211 = vmatmul.mubr.bf16.gmra.mxu0 %v61
  %v212 = vpop.f32.mrf.mxu0
  %v213 = vadd.f32 0.0, %v212
  %v214 = vpop.f32.mrf.mxu0
  %v215 = vpop.f32.mrf.mxu0
  %v216 = vpop.f32.mrf.mxu0
  %217 = vdwg.mxu0
  %218 = vmatprep.subr.bf16.mxu0 0
  %219 = vmatpush1.bf16.msra.mxu0 0
  %220 = vmatprep.subr.bf16.mxu0 0
  %221 = vmatpush1.bf16.msra.mxu0 0
  %222 = vmatprep.subr.bf16.mxu0 0
  %223 = vmatpush1.bf16.msra.mxu0 0
  %224 = vmatprep.subr.bf16.mxu0 0
  %225 = vmatpush1.bf16.msra.mxu0 0
  %226 = vmatprep.subr.bf16.mxu0 0
  %227 = vmatpush1.bf16.msra.mxu0 0
  %228 = vmatprep.subr.bf16.mxu0 0
  %229 = vmatpush1.bf16.msra.mxu0 0
  %230 = vmatprep.subr.bf16.mxu0 0
  %231 = vmatpush1.bf16.msra.mxu0 %v155
  %232 = vmatprep.subr.bf16.mxu0 0
  %233 = vmatpush1.bf16.msra.mxu0 %v154
  %234 = vmatprep.subr.bf16.mxu0 0
  %235 = vmatpush2.bf16.msra.mxu0 0
  %236 = vmatprep.subr.bf16.mxu0 0
  %237 = vmatpush2.bf16.msra.mxu0 0
  %238 = vmatprep.subr.bf16.mxu0 0
  %239 = vmatpush2.bf16.msra.mxu0 0
  %240 = vmatprep.subr.bf16.mxu0 0
  %241 = vmatpush2.bf16.msra.mxu0 0
  %242 = vmatprep.subr.bf16.mxu0 0
  %243 = vmatpush2.bf16.msra.mxu0 0
  %244 = vmatprep.subr.bf16.mxu0 0
  %245 = vmatpush2.bf16.msra.mxu0 0
  %246 = vmatprep.subr.bf16.mxu0 0
  %247 = vmatpush2.bf16.msra.mxu0 0
  %248 = vmatprep.subr.bf16.mxu0 0
  %249 = vmatpush2.bf16.msra.mxu0 0
  %250 = vmatprep.mubr.bf16.mxu0 0
  %251 = vmatmul.mubr.bf16.gmra.mxu0 %v176
  %v252 = vpop.f32.mrf.mxu0
  %v253 = vadd.f32 %v213, %v252
  %v254 = vpop.f32.mrf.mxu0
  %v255 = vpop.f32.mrf.mxu0
  %v256 = vpop.f32.mrf.mxu0
  %257 = vdwg.mxu0
  %v258 = vrot.slane %v253, 4
  %v259 = vadd.f32 %v253, %v258
  %v260 = vrot.slane %v259, 2
  %v261 = vadd.f32 %v259, %v260
  %v262 = vrot.slane %v261, 1
  %v263 = vadd.f32 %v261, %v262
  %v264 = vmul.f32 %v263, 0.125
  %v265 = vsub.f32 %v253, %v264
  %v266 = vmul.f32 %v265, %v265
  %v267 = vrot.slane %v266, 4
  %v268 = vadd.f32 %v266, %v267
  %v269 = vrot.slane %v268, 2
  %v270 = vadd.f32 %v268, %v269
  %v271 = vrot.slane %v270, 1
  %v272 = vadd.f32 %v270, %v271
  %v273 = vmul.f32 %v272, 0.125
  %v274 = vld [vmem:[%s2] sm:$0x1]
  %v275 = vadd.f32 %v273, 1e-05
  %v276 = vrsqrt.pop %v275
  %v277 = vmul.f32 %v274, %v276
  %v279 = vlaneseq
  %v280 = vshrl.u32 %v279, 7
  %v281 = vsub.s32 0, %v280
  %v282 = vrot.slane %v277, %v281
  %v284 = vmul.f32 %v265, %v282
  %v285 = vld [vmem:[%s3] sm:$0x1]
  %v287 = vlaneseq
  %v288 = vshrl.u32 %v287, 7
  %v289 = vsub.s32 0, %v288
  %v290 = vrot.slane %v285, %v289
  %v292 = vadd.f32 %v284, %v290
  %v293 = vmax.f32 %v292, 0.0
  %294 = vst [vmem:[%s4] sm:$0xff] %v293
  // Predicated region
  $region18: #{generator_forward.36} parent=0 // pred_check
    _
  $region19: #{generator_forward.36} parent=0 // pred_check_branch
    %296 = sbr.rel (0) target = $region21
  $region20: #{generator_forward.36} parent=0 // pred_region
    _
  $region21: #{generator_forward.36} parent=0 // pred_fallthru
    _
  // Predicated region
  $region22: #{generator_forward.36} parent=0 // pred_check
    _
  $region23: #{generator_forward.36} parent=0 // pred_check_branch
    %298 = sbr.rel (0) target = $region25
  $region24: #{generator_forward.36} parent=0 // pred_region
    _
  $region25: #{generator_forward.36} parent=0 // pred_fallthru
    _

// kernel: generator_forward.38
$region0: #{generator_forward.38}
  #allocation0 [shape = 'u32[]', space=smem, size = 0x4, offset = 0x4, fixed_abs, tag = 'smem constant byte address 0x4 - core index']
  #allocation1 [shape = 'u32[144,128]{1,0:T(1,128)}', space=vmem, size = 0x12000, scoped, tag = 'internal scratch']
  %s0 = inlined_call_operand.vmem [shape: f32[2,2,1,2,128], index: 0, kind: input, shape index: {}]
  %s1 = inlined_call_operand.vmem [shape: f32[2,1,128], index: 1, kind: output, shape index: {}]
  %s2 = sld [smem:[#allocation0]]
  $region14: #{generator_forward.38} parent=0
    _
  %s4 = ssub.s32 1, %s2
  %s5 = scalar_select 0, %s4, %s2
  // Predicated region
  $region2: #{generator_forward.38} parent=0 // pred_check
    _
  $region3: #{generator_forward.38} parent=0 // pred_check_branch
    %7 = sbr.rel (0) target = $region5
  $region4: #{generator_forward.38} parent=0 // pred_region
    _
  $region5: #{generator_forward.38} parent=0 // pred_fallthru
    _
  %v8 = vld [vmem:[%s0] sm:$0x3]
  %v9 = vld [vmem:[%s0 + $0x2] sm:$0x3]
  %v10 = vld [vmem:[%s0 + $0x4] sm:$0x3]
  %v11 = vld [vmem:[%s0 + $0x6] sm:$0x3]
  %v12 = vmax.f32 %v8, %v9
  %v13 = vmax.f32 %v10, %v11
  %v16 = vrot.slane %v12, 1
  %v17 = vrot.slane %v13, 1
  %v20 = vmax.f32 %v12, %v16
  %v21 = vmax.f32 %v13, %v17
  %22 = vst [vmem:[%s1] sm:$0x1] %v20
  %23 = vst [vmem:[%s1 + $0x1] sm:$0x1] %v21
  // Predicated region
  $region6: #{generator_forward.38} parent=0 // pred_check
    _
  $region7: #{generator_forward.38} parent=0 // pred_check_branch
    %25 = sbr.rel (0) target = $region9
  $region8: #{generator_forward.38} parent=0 // pred_region
    _
  $region9: #{generator_forward.38} parent=0 // pred_fallthru
    _
  // Predicated region
  $region10: #{generator_forward.38} parent=0 // pred_check
    _
  $region11: #{generator_forward.38} parent=0 // pred_check_branch
    %27 = sbr.rel (0) target = $region13
  $region12: #{generator_forward.38} parent=0 // pred_region
    _
  $region13: #{generator_forward.38} parent=0 // pred_fallthru
    _

// kernel: generator_forward.37
$region0: #{generator_forward.37}
  #allocation0 [shape = 'u32[]', space=smem, size = 0x4, offset = 0x4, fixed_abs, tag = 'smem constant byte address 0x4 - core index']
  #allocation1 [shape = 'u32[144,128]{1,0:T(1,128)}', space=vmem, size = 0x12000, scoped, tag = 'internal scratch']
  %s0 = inlined_call_operand.vmem [shape: bf16[8,576], index: 0, kind: input, shape index: {}]
  %s1 = inlined_call_operand.vmem [shape: bf16[576,128], index: 1, kind: input, shape index: {}]
  %s2 = inlined_call_operand.vmem [shape: f32[1,128], index: 2, kind: input, shape index: {}]
  %s3 = inlined_call_operand.vmem [shape: f32[1,128], index: 3, kind: input, shape index: {}]
  %s4 = inlined_call_operand.vmem [shape: f32[8,128], index: 4, kind: output, shape index: {}]
  %s5 = sld [smem:[#allocation0]]
  $region26: #{generator_forward.37} parent=0
    _
  %s7 = ssub.s32 1, %s5
  %s8 = scalar_select 0, %s7, %s5
  // Predicated region
  $region2: #{generator_forward.37} parent=0 // pred_check
    _
  $region3: #{generator_forward.37} parent=0 // pred_check_branch
    %10 = sbr.rel (0) target = $region5
  $region4: #{generator_forward.37} parent=0 // pred_region
    _
  $region5: #{generator_forward.37} parent=0 // pred_fallthru
    _
  // Predicated region
  $region6: #{generator_forward.37} parent=0 // pred_check
    _
  $region7: #{generator_forward.37} parent=0 // pred_check_branch
    %12 = sbr.rel (0) target = $region9
  $region8: #{generator_forward.37} parent=0 // pred_region
    _
  $region9: #{generator_forward.37} parent=0 // pred_fallthru
    _
  // Predicated region
  $region10: #{generator_forward.37} parent=0 // pred_check
    _
  $region11: #{generator_forward.37} parent=0 // pred_check_branch
    %14 = sbr.rel (0) target = $region13
  $region12: #{generator_forward.37} parent=0 // pred_region
    _
  $region13: #{generator_forward.37} parent=0 // pred_fallthru
    _
  // Predicated region
  $region14: #{generator_forward.37} parent=0 // pred_check
    _
  $region15: #{generator_forward.37} parent=0 // pred_check_branch
    %16 = sbr.rel (0) target = $region17
  $region16: #{generator_forward.37} parent=0 // pred_region
    _
  $region17: #{generator_forward.37} parent=0 // pred_fallthru
    _
  %v18 = vld [vmem:[%s0] sm:$0xff]
  %v19 = vld [vmem:[%s0 + $0x8] sm:$0xff]
  %v20 = vld [vmem:[%s0 + $0x10] sm:$0xf]
  %v21 = vld [vmem:[%s1] sm:$0xf]
  %v22 = vld [vmem:[%s1 + $0x4] sm:$0xf]
  %v23 = vld [vmem:[%s1 + $0x8] sm:$0xf]
  %v24 = vld [vmem:[%s1 + $0xc] sm:$0xf]
  %v25 = vld [vmem:[%s1 + $0x10] sm:$0xf]
  %v26 = vld [vmem:[%s1 + $0x14] sm:$0xf]
  %v27 = vld [vmem:[%s1 + $0x18] sm:$0xf]
  %v28 = vld [vmem:[%s1 + $0x1c] sm:$0xf]
  %v29 = vld [vmem:[%s1 + $0x20] sm:$0xf]
  %v30 = vld [vmem:[%s1 + $0x24] sm:$0xf]
  %v31 = vld [vmem:[%s1 + $0x28] sm:$0xf]
  %v32 = vld [vmem:[%s1 + $0x2c] sm:$0xf]
  %v33 = vld [vmem:[%s1 + $0x30] sm:$0xf]
  %v34 = vld [vmem:[%s1 + $0x34] sm:$0xf]
  %v35 = vld [vmem:[%s1 + $0x38] sm:$0xf]
  %v36 = vld [vmem:[%s1 + $0x3c] sm:$0xf]
  %v37 = vld [vmem:[%s1 + $0x40] sm:$0xf]
  %v38 = vld [vmem:[%s1 + $0x44] sm:$0xf]
  %v39 = vld [vmem:[%s1 + $0x48] sm:$0xf]
  %v40 = vld [vmem:[%s1 + $0x4c] sm:$0xf]
  %v41 = vld [vmem:[%s1 + $0x50] sm:$0xf]
  %v42 = vld [vmem:[%s1 + $0x54] sm:$0xf]
  %v43 = vld [vmem:[%s1 + $0x58] sm:$0xf]
  %v44 = vld [vmem:[%s1 + $0x5c] sm:$0xf]
  %v45 = vld [vmem:[%s1 + $0x60] sm:$0xf]
  %v46 = vld [vmem:[%s1 + $0x64] sm:$0xf]
  %v47 = vld [vmem:[%s1 + $0x68] sm:$0xf]
  %v48 = vld [vmem:[%s1 + $0x6c] sm:$0xf]
  %v49 = vld [vmem:[%s1 + $0x70] sm:$0xf]
  %v50 = vld [vmem:[%s1 + $0x74] sm:$0xf]
  %v51 = vld [vmem:[%s1 + $0x78] sm:$0xf]
  %v52 = vld [vmem:[%s1 + $0x7c] sm:$0xf]
  %v53 = vld [vmem:[%s1 + $0x80] sm:$0xf]
  %v54 = vld [vmem:[%s1 + $0x84] sm:$0xf]
  %v55 = vld [vmem:[%s1 + $0x88] sm:$0xf]
  %v56 = vld [vmem:[%s1 + $0x8c] sm:$0xf]
  %v57 = vld [vmem:[%s1 + $0x90] sm:$0xf]
  %v58 = vld [vmem:[%s1 + $0x94] sm:$0xf]
  %v59 = vld [vmem:[%s1 + $0x98] sm:$0xf]
  %v60 = vld [vmem:[%s1 + $0x9c] sm:$0xf]
  %v61 = vld [vmem:[%s1 + $0xa0] sm:$0xf]
  %v62 = vld [vmem:[%s1 + $0xa4] sm:$0xf]
  %v63 = vld [vmem:[%s1 + $0xa8] sm:$0xf]
  %v64 = vld [vmem:[%s1 + $0xac] sm:$0xf]
  %v65 = vld [vmem:[%s1 + $0xb0] sm:$0xf]
  %v66 = vld [vmem:[%s1 + $0xb4] sm:$0xf]
  %v67 = vld [vmem:[%s1 + $0xb8] sm:$0xf]
  %v68 = vld [vmem:[%s1 + $0xbc] sm:$0xf]
  %v69 = vld [vmem:[%s1 + $0xc0] sm:$0xf]
  %v70 = vld [vmem:[%s1 + $0xc4] sm:$0xf]
  %v71 = vld [vmem:[%s1 + $0xc8] sm:$0xf]
  %v72 = vld [vmem:[%s1 + $0xcc] sm:$0xf]
  %v73 = vld [vmem:[%s1 + $0xd0] sm:$0xf]
  %v74 = vld [vmem:[%s1 + $0xd4] sm:$0xf]
  %v75 = vld [vmem:[%s1 + $0xd8] sm:$0xf]
  %v76 = vld [vmem:[%s1 + $0xdc] sm:$0xf]
  %v77 = vld [vmem:[%s1 + $0xe0] sm:$0xf]
  %v78 = vld [vmem:[%s1 + $0xe4] sm:$0xf]
  %v79 = vld [vmem:[%s1 + $0xe8] sm:$0xf]
  %v80 = vld [vmem:[%s1 + $0xec] sm:$0xf]
  %v81 = vld [vmem:[%s1 + $0xf0] sm:$0xf]
  %v82 = vld [vmem:[%s1 + $0xf4] sm:$0xf]
  %v83 = vld [vmem:[%s1 + $0xf8] sm:$0xf]
  %v84 = vld [vmem:[%s1 + $0xfc] sm:$0xf]
  %v85 = vld [vmem:[%s1 + $0x100] sm:$0xf]
  %v86 = vld [vmem:[%s1 + $0x104] sm:$0xf]
  %v87 = vld [vmem:[%s1 + $0x108] sm:$0xf]
  %v88 = vld [vmem:[%s1 + $0x10c] sm:$0xf]
  %v89 = vld [vmem:[%s1 + $0x110] sm:$0xf]
  %v90 = vld [vmem:[%s1 + $0x114] sm:$0xf]
  %v91 = vld [vmem:[%s1 + $0x118] sm:$0xf]
  %v92 = vld [vmem:[%s1 + $0x11c] sm:$0xf]
  %v96 = vunpack.c.l.b16 %v18
  %v97 = vunpack.c.h.b16 %v18
  %v98 = vunpack.c.l.b16 %v19
  %v99 = vunpack.c.h.b16 %v19
  %v100 = vunpack.c.l.b16 %v20
  %v101 = vpack.c.b16 %v96, %v96
  %v102 = vpack.c.b16 %v97, %v97
  %v103 = vpack.c.b16 %v98, %v98
  %v104 = vpack.c.b16 %v99, %v99
  %v105 = vpack.c.b16 %v100, %v100
  %v182 = vunpack.c.l.b16 %v21
  %v183 = vunpack.c.l.b16 %v22
  %v184 = vunpack.c.l.b16 %v23
  %v185 = vunpack.c.l.b16 %v24
  %v186 = vunpack.c.l.b16 %v25
  %v187 = vunpack.c.l.b16 %v26
  %v188 = vunpack.c.l.b16 %v27
  %v189 = vunpack.c.l.b16 %v28
  %v190 = vunpack.c.l.b16 %v29
  %v191 = vunpack.c.l.b16 %v30
  %v192 = vunpack.c.l.b16 %v31
  %v193 = vunpack.c.l.b16 %v32
  %v194 = vunpack.c.l.b16 %v33
  %v195 = vunpack.c.l.b16 %v34
  %v196 = vunpack.c.l.b16 %v35
  %v197 = vunpack.c.l.b16 %v36
  %v198 = vunpack.c.l.b16 %v37
  %v199 = vunpack.c.l.b16 %v38
  %v200 = vunpack.c.l.b16 %v39
  %v201 = vunpack.c.l.b16 %v40
  %v202 = vunpack.c.l.b16 %v41
  %v203 = vunpack.c.l.b16 %v42
  %v204 = vunpack.c.l.b16 %v43
  %v205 = vunpack.c.l.b16 %v44
  %v206 = vunpack.c.l.b16 %v45
  %v207 = vunpack.c.l.b16 %v46
  %v208 = vunpack.c.l.b16 %v47
  %v209 = vunpack.c.l.b16 %v48
  %v210 = vunpack.c.l.b16 %v49
  %v211 = vunpack.c.l.b16 %v50
  %v212 = vunpack.c.l.b16 %v51
  %v213 = vunpack.c.l.b16 %v52
  %v214 = vunpack.c.l.b16 %v53
  %v215 = vunpack.c.l.b16 %v54
  %v216 = vunpack.c.l.b16 %v55
  %v217 = vunpack.c.l.b16 %v56
  %v218 = vunpack.c.l.b16 %v57
  %v219 = vunpack.c.l.b16 %v58
  %v220 = vunpack.c.l.b16 %v59
  %v221 = vunpack.c.l.b16 %v60
  %v222 = vunpack.c.l.b16 %v61
  %v223 = vunpack.c.l.b16 %v62
  %v224 = vunpack.c.l.b16 %v63
  %v225 = vunpack.c.l.b16 %v64
  %v226 = vunpack.c.l.b16 %v65
  %v227 = vunpack.c.l.b16 %v66
  %v228 = vunpack.c.l.b16 %v67
  %v229 = vunpack.c.l.b16 %v68
  %v230 = vunpack.c.l.b16 %v69
  %v231 = vunpack.c.l.b16 %v70
  %v232 = vunpack.c.l.b16 %v71
  %v233 = vunpack.c.l.b16 %v72
  %v234 = vunpack.c.l.b16 %v73
  %v235 = vunpack.c.l.b16 %v74
  %v236 = vunpack.c.l.b16 %v75
  %v237 = vunpack.c.l.b16 %v76
  %v238 = vunpack.c.l.b16 %v77
  %v239 = vunpack.c.l.b16 %v78
  %v240 = vunpack.c.l.b16 %v79
  %v241 = vunpack.c.l.b16 %v80
  %v242 = vunpack.c.l.b16 %v81
  %v243 = vunpack.c.l.b16 %v82
  %v244 = vunpack.c.l.b16 %v83
  %v245 = vunpack.c.l.b16 %v84
  %v246 = vunpack.c.l.b16 %v85
  %v247 = vunpack.c.l.b16 %v86
  %v248 = vunpack.c.l.b16 %v87
  %v249 = vunpack.c.l.b16 %v88
  %v250 = vunpack.c.l.b16 %v89
  %v251 = vunpack.c.l.b16 %v90
  %v252 = vunpack.c.l.b16 %v91
  %v253 = vunpack.c.l.b16 %v92
  %v254 = vpack.c.b16 %v183, %v182
  %v255 = vpack.c.b16 %v185, %v184
  %v256 = vpack.c.b16 %v187, %v186
  %v257 = vpack.c.b16 %v189, %v188
  %v258 = vpack.c.b16 %v191, %v190
  %v259 = vpack.c.b16 %v193, %v192
  %v260 = vpack.c.b16 %v195, %v194
  %v261 = vpack.c.b16 %v197, %v196
  %v262 = vpack.c.b16 %v199, %v198
  %v263 = vpack.c.b16 %v201, %v200
  %v264 = vpack.c.b16 %v203, %v202
  %v265 = vpack.c.b16 %v205, %v204
  %v266 = vpack.c.b16 %v207, %v206
  %v267 = vpack.c.b16 %v209, %v208
  %v268 = vpack.c.b16 %v211, %v210
  %v269 = vpack.c.b16 %v213, %v212
  %v270 = vpack.c.b16 %v215, %v214
  %v271 = vpack.c.b16 %v217, %v216
  %v272 = vpack.c.b16 %v219, %v218
  %v273 = vpack.c.b16 %v221, %v220
  %v274 = vpack.c.b16 %v223, %v222
  %v275 = vpack.c.b16 %v225, %v224
  %v276 = vpack.c.b16 %v227, %v226
  %v277 = vpack.c.b16 %v229, %v228
  %v278 = vpack.c.b16 %v231, %v230
  %v279 = vpack.c.b16 %v233, %v232
  %v280 = vpack.c.b16 %v235, %v234
  %v281 = vpack.c.b16 %v237, %v236
  %v282 = vpack.c.b16 %v239, %v238
  %v283 = vpack.c.b16 %v241, %v240
  %v284 = vpack.c.b16 %v243, %v242
  %v285 = vpack.c.b16 %v245, %v244
  %v286 = vpack.c.b16 %v247, %v246
  %v287 = vpack.c.b16 %v249, %v248
  %v288 = vpack.c.b16 %v251, %v250
  %v289 = vpack.c.b16 %v253, %v252
  %vm326 = vcmask 523264
  %v328 = vsel %vm326, %v105, 0
  %330 = vmatprep.subr.bf16.mxu0 0
  %331 = vmatpush1.bf16.msra.mxu0 %v261
  %332 = vmatprep.subr.bf16.mxu0 0
  %333 = vmatpush1.bf16.msra.mxu0 %v260
  %334 = vmatprep.subr.bf16.mxu0 0
  %335 = vmatpush1.bf16.msra.mxu0 %v259
  %336 = vmatprep.subr.bf16.mxu0 0
  %337 = vmatpush1.bf16.msra.mxu0 %v258
  %338 = vmatprep.subr.bf16.mxu0 0
  %339 = vmatpush1.bf16.msra.mxu0 %v257
  %340 = vmatprep.subr.bf16.mxu0 0
  %341 = vmatpush1.bf16.msra.mxu0 %v256
  %342 = vmatprep.subr.bf16.mxu0 0
  %343 = vmatpush1.bf16.msra.mxu0 %v255
  %344 = vmatprep.subr.bf16.mxu0 0
  %345 = vmatpush1.bf16.msra.mxu0 %v254
  %346 = vmatprep.subr.bf16.mxu0 0
  %347 = vmatpush2.bf16.msra.mxu0 %v269
  %348 = vmatprep.subr.bf16.mxu0 0
  %349 = vmatpush2.bf16.msra.mxu0 %v268
  %350 = vmatprep.subr.bf16.mxu0 0
  %351 = vmatpush2.bf16.msra.mxu0 %v267
  %352 = vmatprep.subr.bf16.mxu0 0
  %353 = vmatpush2.bf16.msra.mxu0 %v266
  %354 = vmatprep.subr.bf16.mxu0 0
  %355 = vmatpush2.bf16.msra.mxu0 %v265
  %356 = vmatprep.subr.bf16.mxu0 0
  %357 = vmatpush2.bf16.msra.mxu0 %v264
  %358 = vmatprep.subr.bf16.mxu0 0
  %359 = vmatpush2.bf16.msra.mxu0 %v263
  %360 = vmatprep.subr.bf16.mxu0 0
  %361 = vmatpush2.bf16.msra.mxu0 %v262
  %362 = vmatprep.mubr.bf16.mxu0 %v102
  %363 = vmatmul.mubr.bf16.gmra.mxu0 %v101
  %v364 = vpop.f32.mrf.mxu0
  %v365 = vadd.f32 0.0, %v364
  %v366 = vpop.f32.mrf.mxu0
  %v367 = vpop.f32.mrf.mxu0
  %v368 = vpop.f32.mrf.mxu0
  %369 = vdwg.mxu0
  %370 = vmatprep.subr.bf16.mxu0 0
  %371 = vmatpush1.bf16.msra.mxu0 %v277
  %372 = vmatprep.subr.bf16.mxu0 0
  %373 = vmatpush1.bf16.msra.mxu0 %v276
  %374 = vmatprep.subr.bf16.mxu0 0
  %375 = vmatpush1.bf16.msra.mxu0 %v275
  %376 = vmatprep.subr.bf16.mxu0 0
  %377 = vmatpush1.bf16.msra.mxu0 %v274
  %378 = vmatprep.subr.bf16.mxu0 0
  %379 = vmatpush1.bf16.msra.mxu0 %v273
  %380 = vmatprep.subr.bf16.mxu0 0
  %381 = vmatpush1.bf16.msra.mxu0 %v272
  %382 = vmatprep.subr.bf16.mxu0 0
  %383 = vmatpush1.bf16.msra.mxu0 %v271
  %384 = vmatprep.subr.bf16.mxu0 0
  %385 = vmatpush1.bf16.msra.mxu0 %v270
  %386 = vmatprep.subr.bf16.mxu0 0
  %387 = vmatpush2.bf16.msra.mxu0 %v285
  %388 = vmatprep.subr.bf16.mxu0 0
  %389 = vmatpush2.bf16.msra.mxu0 %v284
  %390 = vmatprep.subr.bf16.mxu0 0
  %391 = vmatpush2.bf16.msra.mxu0 %v283
  %392 = vmatprep.subr.bf16.mxu0 0
  %393 = vmatpush2.bf16.msra.mxu0 %v282
  %394 = vmatprep.subr.bf16.mxu0 0
  %395 = vmatpush2.bf16.msra.mxu0 %v281
  %396 = vmatprep.subr.bf16.mxu0 0
  %397 = vmatpush2.bf16.msra.mxu0 %v280
  %398 = vmatprep.subr.bf16.mxu0 0
  %399 = vmatpush2.bf16.msra.mxu0 %v279
  %400 = vmatprep.subr.bf16.mxu0 0
  %401 = vmatpush2.bf16.msra.mxu0 %v278
  %402 = vmatprep.mubr.bf16.mxu0 %v104
  %403 = vmatmul.mubr.bf16.gmra.mxu0 %v103
  %v404 = vpop.f32.mrf.mxu0
  %v405 = vadd.f32 %v365, %v404
  %v406 = vpop.f32.mrf.mxu0
  %v407 = vpop.f32.mrf.mxu0
  %v408 = vpop.f32.mrf.mxu0
  %409 = vdwg.mxu0
  %410 = vmatprep.subr.bf16.mxu0 0
  %411 = vmatpush1.bf16.msra.mxu0 0
  %412 = vmatprep.subr.bf16.mxu0 0
  %413 = vmatpush1.bf16.msra.mxu0 0
  %414 = vmatprep.subr.bf16.mxu0 0
  %415 = vmatpush1.bf16.msra.mxu0 0
  %416 = vmatprep.subr.bf16.mxu0 0
  %417 = vmatpush1.bf16.msra.mxu0 0
  %418 = vmatprep.subr.bf16.mxu0 0
  %419 = vmatpush1.bf16.msra.mxu0 %v289
  %420 = vmatprep.subr.bf16.mxu0 0
  %421 = vmatpush1.bf16.msra.mxu0 %v288
  %422 = vmatprep.subr.bf16.mxu0 0
  %423 = vmatpush1.bf16.msra.mxu0 %v287
  %424 = vmatprep.subr.bf16.mxu0 0
  %425 = vmatpush1.bf16.msra.mxu0 %v286
  %426 = vmatprep.subr.bf16.mxu0 0
  %427 = vmatpush2.bf16.msra.mxu0 0
  %428 = vmatprep.subr.bf16.mxu0 0
  %429 = vmatpush2.bf16.msra.mxu0 0
  %430 = vmatprep.subr.bf16.mxu0 0
  %431 = vmatpush2.bf16.msra.mxu0 0
  %432 = vmatprep.subr.bf16.mxu0 0
  %433 = vmatpush2.bf16.msra.mxu0 0
  %434 = vmatprep.subr.bf16.mxu0 0
  %435 = vmatpush2.bf16.msra.mxu0 0
  %436 = vmatprep.subr.bf16.mxu0 0
  %437 = vmatpush2.bf16.msra.mxu0 0
  %438 = vmatprep.subr.bf16.mxu0 0
  %439 = vmatpush2.bf16.msra.mxu0 0
  %440 = vmatprep.subr.bf16.mxu0 0
  %441 = vmatpush2.bf16.msra.mxu0 0
  %442 = vmatprep.mubr.bf16.mxu0 0
  %443 = vmatmul.mubr.bf16.gmra.mxu0 %v328
  %v444 = vpop.f32.mrf.mxu0
  %v445 = vadd.f32 %v405, %v444
  %v446 = vpop.f32.mrf.mxu0
  %v447 = vpop.f32.mrf.mxu0
  %v448 = vpop.f32.mrf.mxu0
  %449 = vdwg.mxu0
  %v450 = vrot.slane %v445, 4
  %v451 = vadd.f32 %v445, %v450
  %v452 = vrot.slane %v451, 2
  %v453 = vadd.f32 %v451, %v452
  %v454 = vrot.slane %v453, 1
  %v455 = vadd.f32 %v453, %v454
  %v456 = vmul.f32 %v455, 0.125
  %v457 = vsub.f32 %v445, %v456
  %v458 = vmul.f32 %v457, %v457
  %v459 = vrot.slane %v458, 4
  %v460 = vadd.f32 %v458, %v459
  %v461 = vrot.slane %v460, 2
  %v462 = vadd.f32 %v460, %v461
  %v463 = vrot.slane %v462, 1
  %v464 = vadd.f32 %v462, %v463
  %v465 = vmul.f32 %v464, 0.125
  %v466 = vld [vmem:[%s2] sm:$0x1]
  %v467 = vadd.f32 %v465, 1e-05
  %v468 = vrsqrt.pop %v467
  %v469 = vmul.f32 %v466, %v468
  %v471 = vlaneseq
  %v472 = vshrl.u32 %v471, 7
  %v473 = vsub.s32 0, %v472
  %v474 = vrot.slane %v469, %v473
  %v476 = vmul.f32 %v457, %v474
  %v477 = vld [vmem:[%s3] sm:$0x1]
  %v479 = vlaneseq
  %v480 = vshrl.u32 %v479, 7
  %v481 = vsub.s32 0, %v480
  %v482 = vrot.slane %v477, %v481
  %v484 = vadd.f32 %v476, %v482
  %v485 = vmax.f32 %v484, 0.0
  %486 = vst [vmem:[%s4] sm:$0xff] %v485
  // Predicated region
  $region18: #{generator_forward.37} parent=0 // pred_check
    _
  $region19: #{generator_forward.37} parent=0 // pred_check_branch
    %488 = sbr.rel (0) target = $region21
  $region20: #{generator_forward.37} parent=0 // pred_region
    _
  $region21: #{generator_forward.37} parent=0 // pred_fallthru
    _
  // Predicated region
  $region22: #{generator_forward.37} parent=0 // pred_check
    _
  $region23: #{generator_forward.37} parent=0 // pred_check_branch
    %490 = sbr.rel (0) target = $region25
  $region24: #{generator_forward.37} parent=0 // pred_region
    _
  $region25: #{generator_forward.37} parent=0 // pred_fallthru
    _

// kernel: generator_forward.39
$region0: #{generator_forward.39}
  #allocation0 [shape = 'u32[]', space=smem, size = 0x4, offset = 0x4, fixed_abs, tag = 'smem constant byte address 0x4 - core index']
  #allocation1 [shape = 'u32[144,128]{1,0:T(1,128)}', space=vmem, size = 0x12000, scoped, tag = 'internal scratch']
  %s0 = inlined_call_operand.vmem [shape: bf16[2,576], index: 0, kind: input, shape index: {}]
  %s1 = inlined_call_operand.vmem [shape: bf16[576,128], index: 1, kind: input, shape index: {}]
  %s2 = inlined_call_operand.vmem [shape: f32[1,128], index: 2, kind: input, shape index: {}]
  %s3 = inlined_call_operand.vmem [shape: f32[1,128], index: 3, kind: input, shape index: {}]
  %s4 = inlined_call_operand.vmem [shape: f32[2,128], index: 4, kind: output, shape index: {}]
  %s5 = sld [smem:[#allocation0]]
  $region26: #{generator_forward.39} parent=0
    _
  %s7 = ssub.s32 1, %s5
  %s8 = scalar_select 0, %s7, %s5
  // Predicated region
  $region2: #{generator_forward.39} parent=0 // pred_check
    _
  $region3: #{generator_forward.39} parent=0 // pred_check_branch
    %10 = sbr.rel (0) target = $region5
  $region4: #{generator_forward.39} parent=0 // pred_region
    _
  $region5: #{generator_forward.39} parent=0 // pred_fallthru
    _
  // Predicated region
  $region6: #{generator_forward.39} parent=0 // pred_check
    _
  $region7: #{generator_forward.39} parent=0 // pred_check_branch
    %12 = sbr.rel (0) target = $region9
  $region8: #{generator_forward.39} parent=0 // pred_region
    _
  $region9: #{generator_forward.39} parent=0 // pred_fallthru
    _
  // Predicated region
  $region10: #{generator_forward.39} parent=0 // pred_check
    _
  $region11: #{generator_forward.39} parent=0 // pred_check_branch
    %14 = sbr.rel (0) target = $region13
  $region12: #{generator_forward.39} parent=0 // pred_region
    _
  $region13: #{generator_forward.39} parent=0 // pred_fallthru
    _
  // Predicated region
  $region14: #{generator_forward.39} parent=0 // pred_check
    _
  $region15: #{generator_forward.39} parent=0 // pred_check_branch
    %16 = sbr.rel (0) target = $region17
  $region16: #{generator_forward.39} parent=0 // pred_region
    _
  $region17: #{generator_forward.39} parent=0 // pred_fallthru
    _
  %v18 = vld [vmem:[%s0] sm:$0x1f]
  %v19 = vld [vmem:[%s1] sm:$0xf]
  %v20 = vld [vmem:[%s1 + $0x4] sm:$0xf]
  %v21 = vld [vmem:[%s1 + $0x8] sm:$0xf]
  %v22 = vld [vmem:[%s1 + $0xc] sm:$0xf]
  %v23 = vld [vmem:[%s1 + $0x10] sm:$0xf]
  %v24 = vld [vmem:[%s1 + $0x14] sm:$0xf]
  %v25 = vld [vmem:[%s1 + $0x18] sm:$0xf]
  %v26 = vld [vmem:[%s1 + $0x1c] sm:$0xf]
  %v27 = vld [vmem:[%s1 + $0x20] sm:$0xf]
  %v28 = vld [vmem:[%s1 + $0x24] sm:$0xf]
  %v29 = vld [vmem:[%s1 + $0x28] sm:$0xf]
  %v30 = vld [vmem:[%s1 + $0x2c] sm:$0xf]
  %v31 = vld [vmem:[%s1 + $0x30] sm:$0xf]
  %v32 = vld [vmem:[%s1 + $0x34] sm:$0xf]
  %v33 = vld [vmem:[%s1 + $0x38] sm:$0xf]
  %v34 = vld [vmem:[%s1 + $0x3c] sm:$0xf]
  %v35 = vld [vmem:[%s1 + $0x40] sm:$0xf]
  %v36 = vld [vmem:[%s1 + $0x44] sm:$0xf]
  %v37 = vld [vmem:[%s1 + $0x48] sm:$0xf]
  %v38 = vld [vmem:[%s1 + $0x4c] sm:$0xf]
  %v39 = vld [vmem:[%s1 + $0x50] sm:$0xf]
  %v40 = vld [vmem:[%s1 + $0x54] sm:$0xf]
  %v41 = vld [vmem:[%s1 + $0x58] sm:$0xf]
  %v42 = vld [vmem:[%s1 + $0x5c] sm:$0xf]
  %v43 = vld [vmem:[%s1 + $0x60] sm:$0xf]
  %v44 = vld [vmem:[%s1 + $0x64] sm:$0xf]
  %v45 = vld [vmem:[%s1 + $0x68] sm:$0xf]
  %v46 = vld [vmem:[%s1 + $0x6c] sm:$0xf]
  %v47 = vld [vmem:[%s1 + $0x70] sm:$0xf]
  %v48 = vld [vmem:[%s1 + $0x74] sm:$0xf]
  %v49 = vld [vmem:[%s1 + $0x78] sm:$0xf]
  %v50 = vld [vmem:[%s1 + $0x7c] sm:$0xf]
  %v51 = vld [vmem:[%s1 + $0x80] sm:$0xf]
  %v52 = vld [vmem:[%s1 + $0x84] sm:$0xf]
  %v53 = vld [vmem:[%s1 + $0x88] sm:$0xf]
  %v54 = vld [vmem:[%s1 + $0x8c] sm:$0xf]
  %v55 = vld [vmem:[%s1 + $0x90] sm:$0xf]
  %v56 = vld [vmem:[%s1 + $0x94] sm:$0xf]
  %v57 = vld [vmem:[%s1 + $0x98] sm:$0xf]
  %v58 = vld [vmem:[%s1 + $0x9c] sm:$0xf]
  %v59 = vld [vmem:[%s1 + $0xa0] sm:$0xf]
  %v60 = vld [vmem:[%s1 + $0xa4] sm:$0xf]
  %v61 = vld [vmem:[%s1 + $0xa8] sm:$0xf]
  %v62 = vld [vmem:[%s1 + $0xac] sm:$0xf]
  %v63 = vld [vmem:[%s1 + $0xb0] sm:$0xf]
  %v64 = vld [vmem:[%s1 + $0xb4] sm:$0xf]
  %v65 = vld [vmem:[%s1 + $0xb8] sm:$0xf]
  %v66 = vld [vmem:[%s1 + $0xbc] sm:$0xf]
  %v67 = vld [vmem:[%s1 + $0xc0] sm:$0xf]
  %v68 = vld [vmem:[%s1 + $0xc4] sm:$0xf]
  %v69 = vld [vmem:[%s1 + $0xc8] sm:$0xf]
  %v70 = vld [vmem:[%s1 + $0xcc] sm:$0xf]
  %v71 = vld [vmem:[%s1 + $0xd0] sm:$0xf]
  %v72 = vld [vmem:[%s1 + $0xd4] sm:$0xf]
  %v73 = vld [vmem:[%s1 + $0xd8] sm:$0xf]
  %v74 = vld [vmem:[%s1 + $0xdc] sm:$0xf]
  %v75 = vld [vmem:[%s1 + $0xe0] sm:$0xf]
  %v76 = vld [vmem:[%s1 + $0xe4] sm:$0xf]
  %v77 = vld [vmem:[%s1 + $0xe8] sm:$0xf]
  %v78 = vld [vmem:[%s1 + $0xec] sm:$0xf]
  %v79 = vld [vmem:[%s1 + $0xf0] sm:$0xf]
  %v80 = vld [vmem:[%s1 + $0xf4] sm:$0xf]
  %v81 = vld [vmem:[%s1 + $0xf8] sm:$0xf]
  %v82 = vld [vmem:[%s1 + $0xfc] sm:$0xf]
  %v83 = vld [vmem:[%s1 + $0x100] sm:$0xf]
  %v84 = vld [vmem:[%s1 + $0x104] sm:$0xf]
  %v85 = vld [vmem:[%s1 + $0x108] sm:$0xf]
  %v86 = vld [vmem:[%s1 + $0x10c] sm:$0xf]
  %v87 = vld [vmem:[%s1 + $0x110] sm:$0xf]
  %v88 = vld [vmem:[%s1 + $0x114] sm:$0xf]
  %v89 = vld [vmem:[%s1 + $0x118] sm:$0xf]
  %v90 = vld [vmem:[%s1 + $0x11c] sm:$0xf]
  %v92 = vcombine.high %v18, %v18
  %v94 = vunpack.c.l.s4 1966171168
  %v95 = vunpack.c.0.s8 %v94
  %v96 = vlaneseq
  %v97 = vshrl.u32 %v96, 7
  %v98 = vsub.s32 %v95, %v97
  %v99 = vrot.slane %v18, %v98
  %v101 = vunpack.c.l.s4 1966171168
  %v102 = vunpack.c.0.s8 %v101
  %v103 = vlaneseq
  %v104 = vshrl.u32 %v103, 7
  %v105 = vsub.s32 %v102, %v104
  %v106 = vrot.slane %v92, %v105
  %v107 = vcombine.high %v99, %v99
  %v109 = vunpack.c.l.s4 1966171168
  %v110 = vunpack.c.0.s8 %v109
  %v111 = vlaneseq
  %v112 = vshrl.u32 %v111, 7
  %v113 = vsub.s32 %v110, %v112
  %v114 = vrot.slane %v99, %v113
  %v116 = vunpack.c.l.s4 1966171168
  %v117 = vunpack.c.0.s8 %v116
  %v118 = vlaneseq
  %v119 = vshrl.u32 %v118, 7
  %v120 = vsub.s32 %v117, %v119
  %v121 = vrot.slane %v106, %v120
  %v123 = vunpack.c.l.s4 1966171168
  %v124 = vunpack.c.0.s8 %v123
  %v125 = vlaneseq
  %v126 = vshrl.u32 %v125, 7
  %v127 = vsub.s32 %v124, %v126
  %v128 = vrot.slane %v107, %v127
  %v129 = vcombine.high %v114, %v114
  %v130 = vcombine.high %v128, %v128
  %v207 = vunpack.c.l.b16 %v19
  %v208 = vunpack.c.l.b16 %v20
  %v209 = vunpack.c.l.b16 %v21
  %v210 = vunpack.c.l.b16 %v22
  %v211 = vunpack.c.l.b16 %v23
  %v212 = vunpack.c.l.b16 %v24
  %v213 = vunpack.c.l.b16 %v25
  %v214 = vunpack.c.l.b16 %v26
  %v215 = vunpack.c.l.b16 %v27
  %v216 = vunpack.c.l.b16 %v28
  %v217 = vunpack.c.l.b16 %v29
  %v218 = vunpack.c.l.b16 %v30
  %v219 = vunpack.c.l.b16 %v31
  %v220 = vunpack.c.l.b16 %v32
  %v221 = vunpack.c.l.b16 %v33
  %v222 = vunpack.c.l.b16 %v34
  %v223 = vunpack.c.l.b16 %v35
  %v224 = vunpack.c.l.b16 %v36
  %v225 = vunpack.c.l.b16 %v37
  %v226 = vunpack.c.l.b16 %v38
  %v227 = vunpack.c.l.b16 %v39
  %v228 = vunpack.c.l.b16 %v40
  %v229 = vunpack.c.l.b16 %v41
  %v230 = vunpack.c.l.b16 %v42
  %v231 = vunpack.c.l.b16 %v43
  %v232 = vunpack.c.l.b16 %v44
  %v233 = vunpack.c.l.b16 %v45
  %v234 = vunpack.c.l.b16 %v46
  %v235 = vunpack.c.l.b16 %v47
  %v236 = vunpack.c.l.b16 %v48
  %v237 = vunpack.c.l.b16 %v49
  %v238 = vunpack.c.l.b16 %v50
  %v239 = vunpack.c.l.b16 %v51
  %v240 = vunpack.c.l.b16 %v52
  %v241 = vunpack.c.l.b16 %v53
  %v242 = vunpack.c.l.b16 %v54
  %v243 = vunpack.c.l.b16 %v55
  %v244 = vunpack.c.l.b16 %v56
  %v245 = vunpack.c.l.b16 %v57
  %v246 = vunpack.c.l.b16 %v58
  %v247 = vunpack.c.l.b16 %v59
  %v248 = vunpack.c.l.b16 %v60
  %v249 = vunpack.c.l.b16 %v61
  %v250 = vunpack.c.l.b16 %v62
  %v251 = vunpack.c.l.b16 %v63
  %v252 = vunpack.c.l.b16 %v64
  %v253 = vunpack.c.l.b16 %v65
  %v254 = vunpack.c.l.b16 %v66
  %v255 = vunpack.c.l.b16 %v67
  %v256 = vunpack.c.l.b16 %v68
  %v257 = vunpack.c.l.b16 %v69
  %v258 = vunpack.c.l.b16 %v70
  %v259 = vunpack.c.l.b16 %v71
  %v260 = vunpack.c.l.b16 %v72
  %v261 = vunpack.c.l.b16 %v73
  %v262 = vunpack.c.l.b16 %v74
  %v263 = vunpack.c.l.b16 %v75
  %v264 = vunpack.c.l.b16 %v76
  %v265 = vunpack.c.l.b16 %v77
  %v266 = vunpack.c.l.b16 %v78
  %v267 = vunpack.c.l.b16 %v79
  %v268 = vunpack.c.l.b16 %v80
  %v269 = vunpack.c.l.b16 %v81
  %v270 = vunpack.c.l.b16 %v82
  %v271 = vunpack.c.l.b16 %v83
  %v272 = vunpack.c.l.b16 %v84
  %v273 = vunpack.c.l.b16 %v85
  %v274 = vunpack.c.l.b16 %v86
  %v275 = vunpack.c.l.b16 %v87
  %v276 = vunpack.c.l.b16 %v88
  %v277 = vunpack.c.l.b16 %v89
  %v278 = vunpack.c.l.b16 %v90
  %v279 = vpack.c.b16 %v208, %v207
  %v280 = vpack.c.b16 %v210, %v209
  %v281 = vpack.c.b16 %v212, %v211
  %v282 = vpack.c.b16 %v214, %v213
  %v283 = vpack.c.b16 %v216, %v215
  %v284 = vpack.c.b16 %v218, %v217
  %v285 = vpack.c.b16 %v220, %v219
  %v286 = vpack.c.b16 %v222, %v221
  %v287 = vpack.c.b16 %v224, %v223
  %v288 = vpack.c.b16 %v226, %v225
  %v289 = vpack.c.b16 %v228, %v227
  %v290 = vpack.c.b16 %v230, %v229
  %v291 = vpack.c.b16 %v232, %v231
  %v292 = vpack.c.b16 %v234, %v233
  %v293 = vpack.c.b16 %v236, %v235
  %v294 = vpack.c.b16 %v238, %v237
  %v295 = vpack.c.b16 %v240, %v239
  %v296 = vpack.c.b16 %v242, %v241
  %v297 = vpack.c.b16 %v244, %v243
  %v298 = vpack.c.b16 %v246, %v245
  %v299 = vpack.c.b16 %v248, %v247
  %v300 = vpack.c.b16 %v250, %v249
  %v301 = vpack.c.b16 %v252, %v251
  %v302 = vpack.c.b16 %v254, %v253
  %v303 = vpack.c.b16 %v256, %v255
  %v304 = vpack.c.b16 %v258, %v257
  %v305 = vpack.c.b16 %v260, %v259
  %v306 = vpack.c.b16 %v262, %v261
  %v307 = vpack.c.b16 %v264, %v263
  %v308 = vpack.c.b16 %v266, %v265
  %v309 = vpack.c.b16 %v268, %v267
  %v310 = vpack.c.b16 %v270, %v269
  %v311 = vpack.c.b16 %v272, %v271
  %v312 = vpack.c.b16 %v274, %v273
  %v313 = vpack.c.b16 %v276, %v275
  %v314 = vpack.c.b16 %v278, %v277
  %vm351 = vcmask 523264
  %v353 = vsel %vm351, %v121, 0
  %355 = vmatprep.subr.bf16.mxu0 0
  %356 = vmatpush1.bf16.msra.mxu0 %v286
  %357 = vmatprep.subr.bf16.mxu0 0
  %358 = vmatpush1.bf16.msra.mxu0 %v285
  %359 = vmatprep.subr.bf16.mxu0 0
  %360 = vmatpush1.bf16.msra.mxu0 %v284
  %361 = vmatprep.subr.bf16.mxu0 0
  %362 = vmatpush1.bf16.msra.mxu0 %v283
  %363 = vmatprep.subr.bf16.mxu0 0
  %364 = vmatpush1.bf16.msra.mxu0 %v282
  %365 = vmatprep.subr.bf16.mxu0 0
  %366 = vmatpush1.bf16.msra.mxu0 %v281
  %367 = vmatprep.subr.bf16.mxu0 0
  %368 = vmatpush1.bf16.msra.mxu0 %v280
  %369 = vmatprep.subr.bf16.mxu0 0
  %370 = vmatpush1.bf16.msra.mxu0 %v279
  %371 = vmatprep.subr.bf16.mxu0 0
  %372 = vmatpush2.bf16.msra.mxu0 %v294
  %373 = vmatprep.subr.bf16.mxu0 0
  %374 = vmatpush2.bf16.msra.mxu0 %v293
  %375 = vmatprep.subr.bf16.mxu0 0
  %376 = vmatpush2.bf16.msra.mxu0 %v292
  %377 = vmatprep.subr.bf16.mxu0 0
  %378 = vmatpush2.bf16.msra.mxu0 %v291
  %379 = vmatprep.subr.bf16.mxu0 0
  %380 = vmatpush2.bf16.msra.mxu0 %v290
  %381 = vmatprep.subr.bf16.mxu0 0
  %382 = vmatpush2.bf16.msra.mxu0 %v289
  %383 = vmatprep.subr.bf16.mxu0 0
  %384 = vmatpush2.bf16.msra.mxu0 %v288
  %385 = vmatprep.subr.bf16.mxu0 0
  %386 = vmatpush2.bf16.msra.mxu0 %v287
  %387 = vmatprep.mubr.bf16.mxu0 %v128
  %388 = vmatmul.mubr.bf16.gmra.mxu0 %v114
  %v389 = vpop.f32.mrf.mxu0
  %v390 = vadd.f32 0.0, %v389
  %v391 = vpop.f32.mrf.mxu0
  %v392 = vpop.f32.mrf.mxu0
  %v393 = vpop.f32.mrf.mxu0
  %394 = vdwg.mxu0
  %395 = vmatprep.subr.bf16.mxu0 0
  %396 = vmatpush1.bf16.msra.mxu0 %v302
  %397 = vmatprep.subr.bf16.mxu0 0
  %398 = vmatpush1.bf16.msra.mxu0 %v301
  %399 = vmatprep.subr.bf16.mxu0 0
  %400 = vmatpush1.bf16.msra.mxu0 %v300
  %401 = vmatprep.subr.bf16.mxu0 0
  %402 = vmatpush1.bf16.msra.mxu0 %v299
  %403 = vmatprep.subr.bf16.mxu0 0
  %404 = vmatpush1.bf16.msra.mxu0 %v298
  %405 = vmatprep.subr.bf16.mxu0 0
  %406 = vmatpush1.bf16.msra.mxu0 %v297
  %407 = vmatprep.subr.bf16.mxu0 0
  %408 = vmatpush1.bf16.msra.mxu0 %v296
  %409 = vmatprep.subr.bf16.mxu0 0
  %410 = vmatpush1.bf16.msra.mxu0 %v295
  %411 = vmatprep.subr.bf16.mxu0 0
  %412 = vmatpush2.bf16.msra.mxu0 %v310
  %413 = vmatprep.subr.bf16.mxu0 0
  %414 = vmatpush2.bf16.msra.mxu0 %v309
  %415 = vmatprep.subr.bf16.mxu0 0
  %416 = vmatpush2.bf16.msra.mxu0 %v308
  %417 = vmatprep.subr.bf16.mxu0 0
  %418 = vmatpush2.bf16.msra.mxu0 %v307
  %419 = vmatprep.subr.bf16.mxu0 0
  %420 = vmatpush2.bf16.msra.mxu0 %v306
  %421 = vmatprep.subr.bf16.mxu0 0
  %422 = vmatpush2.bf16.msra.mxu0 %v305
  %423 = vmatprep.subr.bf16.mxu0 0
  %424 = vmatpush2.bf16.msra.mxu0 %v304
  %425 = vmatprep.subr.bf16.mxu0 0
  %426 = vmatpush2.bf16.msra.mxu0 %v303
  %427 = vmatprep.mubr.bf16.mxu0 %v130
  %428 = vmatmul.mubr.bf16.gmra.mxu0 %v129
  %v429 = vpop.f32.mrf.mxu0
  %v430 = vadd.f32 %v390, %v429
  %v431 = vpop.f32.mrf.mxu0
  %v432 = vpop.f32.mrf.mxu0
  %v433 = vpop.f32.mrf.mxu0
  %434 = vdwg.mxu0
  %435 = vmatprep.subr.bf16.mxu0 0
  %436 = vmatpush1.bf16.msra.mxu0 0
  %437 = vmatprep.subr.bf16.mxu0 0
  %438 = vmatpush1.bf16.msra.mxu0 0
  %439 = vmatprep.subr.bf16.mxu0 0
  %440 = vmatpush1.bf16.msra.mxu0 0
  %441 = vmatprep.subr.bf16.mxu0 0
  %442 = vmatpush1.bf16.msra.mxu0 0
  %443 = vmatprep.subr.bf16.mxu0 0
  %444 = vmatpush1.bf16.msra.mxu0 %v314
  %445 = vmatprep.subr.bf16.mxu0 0
  %446 = vmatpush1.bf16.msra.mxu0 %v313
  %447 = vmatprep.subr.bf16.mxu0 0
  %448 = vmatpush1.bf16.msra.mxu0 %v312
  %449 = vmatprep.subr.bf16.mxu0 0
  %450 = vmatpush1.bf16.msra.mxu0 %v311
  %451 = vmatprep.subr.bf16.mxu0 0
  %452 = vmatpush2.bf16.msra.mxu0 0
  %453 = vmatprep.subr.bf16.mxu0 0
  %454 = vmatpush2.bf16.msra.mxu0 0
  %455 = vmatprep.subr.bf16.mxu0 0
  %456 = vmatpush2.bf16.msra.mxu0 0
  %457 = vmatprep.subr.bf16.mxu0 0
  %458 = vmatpush2.bf16.msra.mxu0 0
  %459 = vmatprep.subr.bf16.mxu0 0
  %460 = vmatpush2.bf16.msra.mxu0 0
  %461 = vmatprep.subr.bf16.mxu0 0
  %462 = vmatpush2.bf16.msra.mxu0 0
  %463 = vmatprep.subr.bf16.mxu0 0
  %464 = vmatpush2.bf16.msra.mxu0 0
  %465 = vmatprep.subr.bf16.mxu0 0
  %466 = vmatpush2.bf16.msra.mxu0 0
  %467 = vmatprep.mubr.bf16.mxu0 0
  %468 = vmatmul.mubr.bf16.gmra.mxu0 %v353
  %v469 = vpop.f32.mrf.mxu0
  %v470 = vadd.f32 %v430, %v469
  %v471 = vpop.f32.mrf.mxu0
  %v472 = vpop.f32.mrf.mxu0
  %v473 = vpop.f32.mrf.mxu0
  %474 = vdwg.mxu0
  %vm475 = vcmask 1041408
  %v476 = vsel %vm475, %v470, 0.0
  %v477 = vrot.slane %v476, 4
  %v478 = vadd.f32 %v476, %v477
  %v479 = vrot.slane %v478, 2
  %v480 = vadd.f32 %v478, %v479
  %v481 = vrot.slane %v480, 1
  %v482 = vadd.f32 %v480, %v481
  %v483 = vmul.f32 %v482, 0.5
  %v484 = vsub.f32 %v470, %v483
  %v485 = vmul.f32 %v484, %v484
  %v486 = vsel %vm475, %v485, 0.0
  %v487 = vrot.slane %v486, 4
  %v488 = vadd.f32 %v486, %v487
  %v489 = vrot.slane %v488, 2
  %v490 = vadd.f32 %v488, %v489
  %v491 = vrot.slane %v490, 1
  %v492 = vadd.f32 %v490, %v491
  %v493 = vmul.f32 %v492, 0.5
  %v494 = vld [vmem:[%s2] sm:$0x1]
  %v495 = vadd.f32 %v493, 1e-05
  %v496 = vrsqrt.pop %v495
  %v497 = vmul.f32 %v494, %v496
  %v499 = vlaneseq
  %v500 = vshrl.u32 %v499, 7
  %v501 = vsub.s32 0, %v500
  %v502 = vrot.slane %v497, %v501
  %v504 = vmul.f32 %v484, %v502
  %v505 = vld [vmem:[%s3] sm:$0x1]
  %v507 = vlaneseq
  %v508 = vshrl.u32 %v507, 7
  %v509 = vsub.s32 0, %v508
  %v510 = vrot.slane %v505, %v509
  %v512 = vadd.f32 %v504, %v510
  %v513 = vmax.f32 %v512, 0.0
  %514 = vst [vmem:[%s4] sm:$0x3] %v513
  // Predicated region
  $region18: #{generator_forward.39} parent=0 // pred_check
    _
  $region19: #{generator_forward.39} parent=0 // pred_check_branch
    %516 = sbr.rel (0) target = $region21
  $region20: #{generator_forward.39} parent=0 // pred_region
    _
  $region21: #{generator_forward.39} parent=0 // pred_fallthru
    _
  // Predicated region
  $region22: #{generator_forward.39} parent=0 // pred_check
    _
  $region23: #{generator_forward.39} parent=0 // pred_check_branch
    %518 = sbr.rel (0) target = $region25
  $region24: #{generator_forward.39} parent=0 // pred_region
    _
  $region25: #{generator_forward.39} parent=0 // pred_fallthru
    _

// kernel: generator_forward.41
$region0: #{generator_forward.41}
  #allocation0 [shape = 'u32[]', space=smem, size = 0x4, offset = 0x4, fixed_abs, tag = 'smem constant byte address 0x4 - core index']
  #allocation1 [shape = 'u32[144,128]{1,0:T(1,128)}', space=vmem, size = 0x12000, scoped, tag = 'internal scratch']
  %s0 = inlined_call_operand.vmem [shape: bf16[2,128], index: 0, kind: input, shape index: {}]
  %s1 = inlined_call_operand.vmem [shape: bf16[128,256], index: 1, kind: input, shape index: {}]
  %s2 = inlined_call_operand.vmem [shape: f32[1,256], index: 2, kind: input, shape index: {}]
  %s3 = inlined_call_operand.vmem [shape: f32[2,256], index: 3, kind: output, shape index: {}]
  %s4 = sld [smem:[#allocation0]]
  $region22: #{generator_forward.41} parent=0
    _
  %s6 = ssub.s32 1, %s4
  %s7 = scalar_select 0, %s6, %s4
  // Predicated region
  $region2: #{generator_forward.41} parent=0 // pred_check
    _
  $region3: #{generator_forward.41} parent=0 // pred_check_branch
    %9 = sbr.rel (0) target = $region5
  $region4: #{generator_forward.41} parent=0 // pred_region
    _
  $region5: #{generator_forward.41} parent=0 // pred_fallthru
    _
  // Predicated region
  $region6: #{generator_forward.41} parent=0 // pred_check
    _
  $region7: #{generator_forward.41} parent=0 // pred_check_branch
    %11 = sbr.rel (0) target = $region9
  $region8: #{generator_forward.41} parent=0 // pred_region
    _
  $region9: #{generator_forward.41} parent=0 // pred_fallthru
    _
  // Predicated region
  $region10: #{generator_forward.41} parent=0 // pred_check
    _
  $region11: #{generator_forward.41} parent=0 // pred_check_branch
    %13 = sbr.rel (0) target = $region13
  $region12: #{generator_forward.41} parent=0 // pred_region
    _
  $region13: #{generator_forward.41} parent=0 // pred_fallthru
    _
  %v15 = vld [vmem:[%s0] sm:$0x1]
  %v16 = vld [vmem:[%s1] sm:$0xff]
  %v17 = vld [vmem:[%s1 + $0x8] sm:$0xff]
  %v18 = vld [vmem:[%s1 + $0x10] sm:$0xff]
  %v19 = vld [vmem:[%s1 + $0x18] sm:$0xff]
  %v20 = vld [vmem:[%s1 + $0x20] sm:$0xff]
  %v21 = vld [vmem:[%s1 + $0x28] sm:$0xff]
  %v22 = vld [vmem:[%s1 + $0x30] sm:$0xff]
  %v23 = vld [vmem:[%s1 + $0x38] sm:$0xff]
  %v24 = vld [vmem:[%s1 + $0x40] sm:$0xff]
  %v25 = vld [vmem:[%s1 + $0x48] sm:$0xff]
  %v26 = vld [vmem:[%s1 + $0x50] sm:$0xff]
  %v27 = vld [vmem:[%s1 + $0x58] sm:$0xff]
  %v28 = vld [vmem:[%s1 + $0x60] sm:$0xff]
  %v29 = vld [vmem:[%s1 + $0x68] sm:$0xff]
  %v30 = vld [vmem:[%s1 + $0x70] sm:$0xff]
  %v31 = vld [vmem:[%s1 + $0x78] sm:$0xff]
  %v32 = vld [vmem:[%s2] sm:$0x3]
  %v34 = vlaneseq
  %v35 = vshrl.u32 %v34, 7
  %v36 = vsub.s32 0, %v35
  %v37 = vrot.slane %v32, %v36
  %v38 = vlaneseq
  %v39 = vshrl.u32 %v38, 7
  %v40 = vsub.s32 1, %v39
  %v41 = vrot.slane %v32, %v40
  %v60 = vunpack.c.l.b16 %v16
  %v61 = vunpack.c.h.b16 %v16
  %v62 = vunpack.c.l.b16 %v17
  %v63 = vunpack.c.h.b16 %v17
  %v64 = vunpack.c.l.b16 %v18
  %v65 = vunpack.c.h.b16 %v18
  %v66 = vunpack.c.l.b16 %v19
  %v67 = vunpack.c.h.b16 %v19
  %v68 = vunpack.c.l.b16 %v20
  %v69 = vunpack.c.h.b16 %v20
  %v70 = vunpack.c.l.b16 %v21
  %v71 = vunpack.c.h.b16 %v21
  %v72 = vunpack.c.l.b16 %v22
  %v73 = vunpack.c.h.b16 %v22
  %v74 = vunpack.c.l.b16 %v23
  %v75 = vunpack.c.h.b16 %v23
  %v76 = vunpack.c.l.b16 %v24
  %v77 = vunpack.c.h.b16 %v24
  %v78 = vunpack.c.l.b16 %v25
  %v79 = vunpack.c.h.b16 %v25
  %v80 = vunpack.c.l.b16 %v26
  %v81 = vunpack.c.h.b16 %v26
  %v82 = vunpack.c.l.b16 %v27
  %v83 = vunpack.c.h.b16 %v27
  %v84 = vunpack.c.l.b16 %v28
  %v85 = vunpack.c.h.b16 %v28
  %v86 = vunpack.c.l.b16 %v29
  %v87 = vunpack.c.h.b16 %v29
  %v88 = vunpack.c.l.b16 %v30
  %v89 = vunpack.c.h.b16 %v30
  %v90 = vunpack.c.l.b16 %v31
  %v91 = vunpack.c.h.b16 %v31
  %v92 = vpack.c.b16 %v62, %v60
  %v93 = vpack.c.b16 %v63, %v61
  %v94 = vpack.c.b16 %v66, %v64
  %v95 = vpack.c.b16 %v67, %v65
  %v96 = vpack.c.b16 %v70, %v68
  %v97 = vpack.c.b16 %v71, %v69
  %v98 = vpack.c.b16 %v74, %v72
  %v99 = vpack.c.b16 %v75, %v73
  %v100 = vpack.c.b16 %v78, %v76
  %v101 = vpack.c.b16 %v79, %v77
  %v102 = vpack.c.b16 %v82, %v80
  %v103 = vpack.c.b16 %v83, %v81
  %v104 = vpack.c.b16 %v86, %v84
  %v105 = vpack.c.b16 %v87, %v85
  %v106 = vpack.c.b16 %v90, %v88
  %v107 = vpack.c.b16 %v91, %v89
  %124 = vmatprep.subr.bf16.mxu0 %v107
  %125 = vmatpush1.bf16.msra.mxu0 %v106
  %126 = vmatprep.subr.bf16.mxu0 %v105
  %127 = vmatpush1.bf16.msra.mxu0 %v104
  %128 = vmatprep.subr.bf16.mxu0 %v103
  %129 = vmatpush1.bf16.msra.mxu0 %v102
  %130 = vmatprep.subr.bf16.mxu0 %v101
  %131 = vmatpush1.bf16.msra.mxu0 %v100
  %132 = vmatprep.subr.bf16.mxu0 %v99
  %133 = vmatpush1.bf16.msra.mxu0 %v98
  %134 = vmatprep.subr.bf16.mxu0 %v97
  %135 = vmatpush1.bf16.msra.mxu0 %v96
  %136 = vmatprep.subr.bf16.mxu0 %v95
  %137 = vmatpush1.bf16.msra.mxu0 %v94
  %138 = vmatprep.subr.bf16.mxu0 %v93
  %139 = vmatpush1.bf16.msra.mxu0 %v92
  %140 = vmatprep.subr.bf16.mxu0 0
  %141 = vmatpush2.bf16.msra.mxu0 0
  %142 = vmatprep.subr.bf16.mxu0 0
  %143 = vmatpush2.bf16.msra.mxu0 0
  %144 = vmatprep.subr.bf16.mxu0 0
  %145 = vmatpush2.bf16.msra.mxu0 0
  %146 = vmatprep.subr.bf16.mxu0 0
  %147 = vmatpush2.bf16.msra.mxu0 0
  %148 = vmatprep.subr.bf16.mxu0 0
  %149 = vmatpush2.bf16.msra.mxu0 0
  %150 = vmatprep.subr.bf16.mxu0 0
  %151 = vmatpush2.bf16.msra.mxu0 0
  %152 = vmatprep.subr.bf16.mxu0 0
  %153 = vmatpush2.bf16.msra.mxu0 0
  %154 = vmatprep.subr.bf16.mxu0 0
  %155 = vmatpush2.bf16.msra.mxu0 0
  %156 = vmatprep.mubr.bf16.mxu0 0
  %157 = vmatmul.mubr.bf16.gmra.mxu0 %v15
  %v158 = vpop.f32.mrf.mxu0
  %v159 = vadd.f32 %v37, %v158
  %v160 = vpop.f32.mrf.mxu0
  %v161 = vadd.f32 %v41, %v160
  %v162 = vpop.f32.mrf.mxu0
  %v163 = vpop.f32.mrf.mxu0
  %164 = vdwg.mxu0
  %v167 = vcombine.low %v159, %v161
  %v169 = vunpack.c.l.s4 1983009808
  %v170 = vunpack.c.0.s8 %v169
  %v171 = vlaneseq
  %v172 = vshrl.u32 %v171, 7
  %v173 = vsub.s32 %v170, %v172
  %v174 = vrot.slane %v167, %v173
  %176 = vst [vmem:[%s3] sm:$0xf] %v174
  // Predicated region
  $region14: #{generator_forward.41} parent=0 // pred_check
    _
  $region15: #{generator_forward.41} parent=0 // pred_check_branch
    %178 = sbr.rel (0) target = $region17
  $region16: #{generator_forward.41} parent=0 // pred_region
    _
  $region17: #{generator_forward.41} parent=0 // pred_fallthru
    _
  // Predicated region
  $region18: #{generator_forward.41} parent=0 // pred_check
    _
  $region19: #{generator_forward.41} parent=0 // pred_check_branch
    %180 = sbr.rel (0) target = $region21
  $region20: #{generator_forward.41} parent=0 // pred_region
    _
  $region21: #{generator_forward.41} parent=0 // pred_fallthru
    _

// kernel: generator_forward.40
$region0: #{generator_forward.40}
  #allocation0 [shape = 'u32[]', space=smem, size = 0x4, offset = 0x4, fixed_abs, tag = 'smem constant byte address 0x4 - core index']
  #allocation1 [shape = 'u32[144,128]{1,0:T(1,128)}', space=vmem, size = 0x12000, scoped, tag = 'internal scratch']
  %s0 = inlined_call_operand.vmem [shape: bf16[2,1152], index: 0, kind: input, shape index: {}]
  %s1 = inlined_call_operand.vmem [shape: bf16[1152,128], index: 1, kind: input, shape index: {}]
  %s2 = inlined_call_operand.vmem [shape: f32[1,128], index: 2, kind: input, shape index: {}]
  %s3 = inlined_call_operand.vmem [shape: f32[1,128], index: 3, kind: input, shape index: {}]
  %s4 = inlined_call_operand.vmem [shape: f32[2,128], index: 4, kind: output, shape index: {}]
  %s5 = sld [smem:[#allocation0]]
  $region26: #{generator_forward.40} parent=0
    _
  %s7 = ssub.s32 1, %s5
  %s8 = scalar_select 0, %s7, %s5
  // Predicated region
  $region2: #{generator_forward.40} parent=0 // pred_check
    _
  $region3: #{generator_forward.40} parent=0 // pred_check_branch
    %10 = sbr.rel (0) target = $region5
  $region4: #{generator_forward.40} parent=0 // pred_region
    _
  $region5: #{generator_forward.40} parent=0 // pred_fallthru
    _
  // Predicated region
  $region6: #{generator_forward.40} parent=0 // pred_check
    _
  $region7: #{generator_forward.40} parent=0 // pred_check_branch
    %12 = sbr.rel (0) target = $region9
  $region8: #{generator_forward.40} parent=0 // pred_region
    _
  $region9: #{generator_forward.40} parent=0 // pred_fallthru
    _
  // Predicated region
  $region10: #{generator_forward.40} parent=0 // pred_check
    _
  $region11: #{generator_forward.40} parent=0 // pred_check_branch
    %14 = sbr.rel (0) target = $region13
  $region12: #{generator_forward.40} parent=0 // pred_region
    _
  $region13: #{generator_forward.40} parent=0 // pred_fallthru
    _
  // Predicated region
  $region14: #{generator_forward.40} parent=0 // pred_check
    _
  $region15: #{generator_forward.40} parent=0 // pred_check_branch
    %16 = sbr.rel (0) target = $region17
  $region16: #{generator_forward.40} parent=0 // pred_region
    _
  $region17: #{generator_forward.40} parent=0 // pred_fallthru
    _
  %v18 = vld [vmem:[%s0] sm:$0xff]
  %v19 = vld [vmem:[%s0 + $0x8] sm:$0x1]
  %v20 = vld [vmem:[%s1] sm:$0xf]
  %v21 = vld [vmem:[%s1 + $0x4] sm:$0xf]
  %v22 = vld [vmem:[%s1 + $0x8] sm:$0xf]
  %v23 = vld [vmem:[%s1 + $0xc] sm:$0xf]
  %v24 = vld [vmem:[%s1 + $0x10] sm:$0xf]
  %v25 = vld [vmem:[%s1 + $0x14] sm:$0xf]
  %v26 = vld [vmem:[%s1 + $0x18] sm:$0xf]
  %v27 = vld [vmem:[%s1 + $0x1c] sm:$0xf]
  %v28 = vld [vmem:[%s1 + $0x20] sm:$0xf]
  %v29 = vld [vmem:[%s1 + $0x24] sm:$0xf]
  %v30 = vld [vmem:[%s1 + $0x28] sm:$0xf]
  %v31 = vld [vmem:[%s1 + $0x2c] sm:$0xf]
  %v32 = vld [vmem:[%s1 + $0x30] sm:$0xf]
  %v33 = vld [vmem:[%s1 + $0x34] sm:$0xf]
  %v34 = vld [vmem:[%s1 + $0x38] sm:$0xf]
  %v35 = vld [vmem:[%s1 + $0x3c] sm:$0xf]
  %v36 = vld [vmem:[%s1 + $0x40] sm:$0xf]
  %v37 = vld [vmem:[%s1 + $0x44] sm:$0xf]
  %v38 = vld [vmem:[%s1 + $0x48] sm:$0xf]
  %v39 = vld [vmem:[%s1 + $0x4c] sm:$0xf]
  %v40 = vld [vmem:[%s1 + $0x50] sm:$0xf]
  %v41 = vld [vmem:[%s1 + $0x54] sm:$0xf]
  %v42 = vld [vmem:[%s1 + $0x58] sm:$0xf]
  %v43 = vld [vmem:[%s1 + $0x5c] sm:$0xf]
  %v44 = vld [vmem:[%s1 + $0x60] sm:$0xf]
  %v45 = vld [vmem:[%s1 + $0x64] sm:$0xf]
  %v46 = vld [vmem:[%s1 + $0x68] sm:$0xf]
  %v47 = vld [vmem:[%s1 + $0x6c] sm:$0xf]
  %v48 = vld [vmem:[%s1 + $0x70] sm:$0xf]
  %v49 = vld [vmem:[%s1 + $0x74] sm:$0xf]
  %v50 = vld [vmem:[%s1 + $0x78] sm:$0xf]
  %v51 = vld [vmem:[%s1 + $0x7c] sm:$0xf]
  %v52 = vld [vmem:[%s1 + $0x80] sm:$0xf]
  %v53 = vld [vmem:[%s1 + $0x84] sm:$0xf]
  %v54 = vld [vmem:[%s1 + $0x88] sm:$0xf]
  %v55 = vld [vmem:[%s1 + $0x8c] sm:$0xf]
  %v56 = vld [vmem:[%s1 + $0x90] sm:$0xf]
  %v57 = vld [vmem:[%s1 + $0x94] sm:$0xf]
  %v58 = vld [vmem:[%s1 + $0x98] sm:$0xf]
  %v59 = vld [vmem:[%s1 + $0x9c] sm:$0xf]
  %v60 = vld [vmem:[%s1 + $0xa0] sm:$0xf]
  %v61 = vld [vmem:[%s1 + $0xa4] sm:$0xf]
  %v62 = vld [vmem:[%s1 + $0xa8] sm:$0xf]
  %v63 = vld [vmem:[%s1 + $0xac] sm:$0xf]
  %v64 = vld [vmem:[%s1 + $0xb0] sm:$0xf]
  %v65 = vld [vmem:[%s1 + $0xb4] sm:$0xf]
  %v66 = vld [vmem:[%s1 + $0xb8] sm:$0xf]
  %v67 = vld [vmem:[%s1 + $0xbc] sm:$0xf]
  %v68 = vld [vmem:[%s1 + $0xc0] sm:$0xf]
  %v69 = vld [vmem:[%s1 + $0xc4] sm:$0xf]
  %v70 = vld [vmem:[%s1 + $0xc8] sm:$0xf]
  %v71 = vld [vmem:[%s1 + $0xcc] sm:$0xf]
  %v72 = vld [vmem:[%s1 + $0xd0] sm:$0xf]
  %v73 = vld [vmem:[%s1 + $0xd4] sm:$0xf]
  %v74 = vld [vmem:[%s1 + $0xd8] sm:$0xf]
  %v75 = vld [vmem:[%s1 + $0xdc] sm:$0xf]
  %v76 = vld [vmem:[%s1 + $0xe0] sm:$0xf]
  %v77 = vld [vmem:[%s1 + $0xe4] sm:$0xf]
  %v78 = vld [vmem:[%s1 + $0xe8] sm:$0xf]
  %v79 = vld [vmem:[%s1 + $0xec] sm:$0xf]
  %v80 = vld [vmem:[%s1 + $0xf0] sm:$0xf]
  %v81 = vld [vmem:[%s1 + $0xf4] sm:$0xf]
  %v82 = vld [vmem:[%s1 + $0xf8] sm:$0xf]
  %v83 = vld [vmem:[%s1 + $0xfc] sm:$0xf]
  %v84 = vld [vmem:[%s1 + $0x100] sm:$0xf]
  %v85 = vld [vmem:[%s1 + $0x104] sm:$0xf]
  %v86 = vld [vmem:[%s1 + $0x108] sm:$0xf]
  %v87 = vld [vmem:[%s1 + $0x10c] sm:$0xf]
  %v88 = vld [vmem:[%s1 + $0x110] sm:$0xf]
  %v89 = vld [vmem:[%s1 + $0x114] sm:$0xf]
  %v90 = vld [vmem:[%s1 + $0x118] sm:$0xf]
  %v91 = vld [vmem:[%s1 + $0x11c] sm:$0xf]
  %v92 = vld [vmem:[%s1 + $0x120] sm:$0xf]
  %v93 = vld [vmem:[%s1 + $0x124] sm:$0xf]
  %v94 = vld [vmem:[%s1 + $0x128] sm:$0xf]
  %v95 = vld [vmem:[%s1 + $0x12c] sm:$0xf]
  %v96 = vld [vmem:[%s1 + $0x130] sm:$0xf]
  %v97 = vld [vmem:[%s1 + $0x134] sm:$0xf]
  %v98 = vld [vmem:[%s1 + $0x138] sm:$0xf]
  %v99 = vld [vmem:[%s1 + $0x13c] sm:$0xf]
  %v100 = vld [vmem:[%s1 + $0x140] sm:$0xf]
  %v101 = vld [vmem:[%s1 + $0x144] sm:$0xf]
  %v102 = vld [vmem:[%s1 + $0x148] sm:$0xf]
  %v103 = vld [vmem:[%s1 + $0x14c] sm:$0xf]
  %v104 = vld [vmem:[%s1 + $0x150] sm:$0xf]
  %v105 = vld [vmem:[%s1 + $0x154] sm:$0xf]
  %v106 = vld [vmem:[%s1 + $0x158] sm:$0xf]
  %v107 = vld [vmem:[%s1 + $0x15c] sm:$0xf]
  %v108 = vld [vmem:[%s1 + $0x160] sm:$0xf]
  %v109 = vld [vmem:[%s1 + $0x164] sm:$0xf]
  %v110 = vld [vmem:[%s1 + $0x168] sm:$0xf]
  %v111 = vld [vmem:[%s1 + $0x16c] sm:$0xf]
  %v112 = vld [vmem:[%s1 + $0x170] sm:$0xf]
  %v113 = vld [vmem:[%s1 + $0x174] sm:$0xf]
  %v114 = vld [vmem:[%s1 + $0x178] sm:$0xf]
  %v115 = vld [vmem:[%s1 + $0x17c] sm:$0xf]
  %v116 = vld [vmem:[%s1 + $0x180] sm:$0xf]
  %v117 = vld [vmem:[%s1 + $0x184] sm:$0xf]
  %v118 = vld [vmem:[%s1 + $0x188] sm:$0xf]
  %v119 = vld [vmem:[%s1 + $0x18c] sm:$0xf]
  %v120 = vld [vmem:[%s1 + $0x190] sm:$0xf]
  %v121 = vld [vmem:[%s1 + $0x194] sm:$0xf]
  %v122 = vld [vmem:[%s1 + $0x198] sm:$0xf]
  %v123 = vld [vmem:[%s1 + $0x19c] sm:$0xf]
  %v124 = vld [vmem:[%s1 + $0x1a0] sm:$0xf]
  %v125 = vld [vmem:[%s1 + $0x1a4] sm:$0xf]
  %v126 = vld [vmem:[%s1 + $0x1a8] sm:$0xf]
  %v127 = vld [vmem:[%s1 + $0x1ac] sm:$0xf]
  %v128 = vld [vmem:[%s1 + $0x1b0] sm:$0xf]
  %v129 = vld [vmem:[%s1 + $0x1b4] sm:$0xf]
  %v130 = vld [vmem:[%s1 + $0x1b8] sm:$0xf]
  %v131 = vld [vmem:[%s1 + $0x1bc] sm:$0xf]
  %v132 = vld [vmem:[%s1 + $0x1c0] sm:$0xf]
  %v133 = vld [vmem:[%s1 + $0x1c4] sm:$0xf]
  %v134 = vld [vmem:[%s1 + $0x1c8] sm:$0xf]
  %v135 = vld [vmem:[%s1 + $0x1cc] sm:$0xf]
  %v136 = vld [vmem:[%s1 + $0x1d0] sm:$0xf]
  %v137 = vld [vmem:[%s1 + $0x1d4] sm:$0xf]
  %v138 = vld [vmem:[%s1 + $0x1d8] sm:$0xf]
  %v139 = vld [vmem:[%s1 + $0x1dc] sm:$0xf]
  %v140 = vld [vmem:[%s1 + $0x1e0] sm:$0xf]
  %v141 = vld [vmem:[%s1 + $0x1e4] sm:$0xf]
  %v142 = vld [vmem:[%s1 + $0x1e8] sm:$0xf]
  %v143 = vld [vmem:[%s1 + $0x1ec] sm:$0xf]
  %v144 = vld [vmem:[%s1 + $0x1f0] sm:$0xf]
  %v145 = vld [vmem:[%s1 + $0x1f4] sm:$0xf]
  %v146 = vld [vmem:[%s1 + $0x1f8] sm:$0xf]
  %v147 = vld [vmem:[%s1 + $0x1fc] sm:$0xf]
  %v148 = vld [vmem:[%s1 + $0x200] sm:$0xf]
  %v149 = vld [vmem:[%s1 + $0x204] sm:$0xf]
  %v150 = vld [vmem:[%s1 + $0x208] sm:$0xf]
  %v151 = vld [vmem:[%s1 + $0x20c] sm:$0xf]
  %v152 = vld [vmem:[%s1 + $0x210] sm:$0xf]
  %v153 = vld [vmem:[%s1 + $0x214] sm:$0xf]
  %v154 = vld [vmem:[%s1 + $0x218] sm:$0xf]
  %v155 = vld [vmem:[%s1 + $0x21c] sm:$0xf]
  %v156 = vld [vmem:[%s1 + $0x220] sm:$0xf]
  %v157 = vld [vmem:[%s1 + $0x224] sm:$0xf]
  %v158 = vld [vmem:[%s1 + $0x228] sm:$0xf]
  %v159 = vld [vmem:[%s1 + $0x22c] sm:$0xf]
  %v160 = vld [vmem:[%s1 + $0x230] sm:$0xf]
  %v161 = vld [vmem:[%s1 + $0x234] sm:$0xf]
  %v162 = vld [vmem:[%s1 + $0x238] sm:$0xf]
  %v163 = vld [vmem:[%s1 + $0x23c] sm:$0xf]
  %v166 = vcombine.high %v18, %v18
  %v168 = vunpack.c.l.s4 1966171168
  %v169 = vunpack.c.0.s8 %v168
  %v170 = vlaneseq
  %v171 = vshrl.u32 %v170, 7
  %v172 = vsub.s32 %v169, %v171
  %v173 = vrot.slane %v18, %v172
  %v175 = vunpack.c.l.s4 1966171168
  %v176 = vunpack.c.0.s8 %v175
  %v177 = vlaneseq
  %v178 = vshrl.u32 %v177, 7
  %v179 = vsub.s32 %v176, %v178
  %v180 = vrot.slane %v166, %v179
  %v181 = vcombine.high %v173, %v173
  %v182 = vcombine.high %v180, %v180
  %v184 = vunpack.c.l.s4 1966171168
  %v185 = vunpack.c.0.s8 %v184
  %v186 = vlaneseq
  %v187 = vshrl.u32 %v186, 7
  %v188 = vsub.s32 %v185, %v187
  %v189 = vrot.slane %v173, %v188
  %v191 = vunpack.c.l.s4 1966171168
  %v192 = vunpack.c.0.s8 %v191
  %v193 = vlaneseq
  %v194 = vshrl.u32 %v193, 7
  %v195 = vsub.s32 %v192, %v194
  %v196 = vrot.slane %v180, %v195
  %v198 = vunpack.c.l.s4 1966171168
  %v199 = vunpack.c.0.s8 %v198
  %v200 = vlaneseq
  %v201 = vshrl.u32 %v200, 7
  %v202 = vsub.s32 %v199, %v201
  %v203 = vrot.slane %v181, %v202
  %v205 = vunpack.c.l.s4 1966171168
  %v206 = vunpack.c.0.s8 %v205
  %v207 = vlaneseq
  %v208 = vshrl.u32 %v207, 7
  %v209 = vsub.s32 %v206, %v208
  %v210 = vrot.slane %v182, %v209
  %v211 = vcombine.high %v189, %v189
  %v212 = vcombine.high %v196, %v196
  %v213 = vcombine.high %v203, %v203
  %v214 = vcombine.high %v210, %v210
  %v216 = vunpack.c.l.s4 1966171168
  %v217 = vunpack.c.0.s8 %v216
  %v218 = vlaneseq
  %v219 = vshrl.u32 %v218, 7
  %v220 = vsub.s32 %v217, %v219
  %v221 = vrot.slane %v19, %v220
  %v223 = vunpack.c.l.s4 1966171168
  %v224 = vunpack.c.0.s8 %v223
  %v225 = vlaneseq
  %v226 = vshrl.u32 %v225, 7
  %v227 = vsub.s32 %v224, %v226
  %v228 = vrot.slane %v221, %v227
  %v382 = vunpack.c.l.b16 %v20
  %v383 = vunpack.c.l.b16 %v21
  %v384 = vunpack.c.l.b16 %v22
  %v385 = vunpack.c.l.b16 %v23
  %v386 = vunpack.c.l.b16 %v24
  %v387 = vunpack.c.l.b16 %v25
  %v388 = vunpack.c.l.b16 %v26
  %v389 = vunpack.c.l.b16 %v27
  %v390 = vunpack.c.l.b16 %v28
  %v391 = vunpack.c.l.b16 %v29
  %v392 = vunpack.c.l.b16 %v30
  %v393 = vunpack.c.l.b16 %v31
  %v394 = vunpack.c.l.b16 %v32
  %v395 = vunpack.c.l.b16 %v33
  %v396 = vunpack.c.l.b16 %v34
  %v397 = vunpack.c.l.b16 %v35
  %v398 = vunpack.c.l.b16 %v36
  %v399 = vunpack.c.l.b16 %v37
  %v400 = vunpack.c.l.b16 %v38
  %v401 = vunpack.c.l.b16 %v39
  %v402 = vunpack.c.l.b16 %v40
  %v403 = vunpack.c.l.b16 %v41
  %v404 = vunpack.c.l.b16 %v42
  %v405 = vunpack.c.l.b16 %v43
  %v406 = vunpack.c.l.b16 %v44
  %v407 = vunpack.c.l.b16 %v45
  %v408 = vunpack.c.l.b16 %v46
  %v409 = vunpack.c.l.b16 %v47
  %v410 = vunpack.c.l.b16 %v48
  %v411 = vunpack.c.l.b16 %v49
  %v412 = vunpack.c.l.b16 %v50
  %v413 = vunpack.c.l.b16 %v51
  %v414 = vunpack.c.l.b16 %v52
  %v415 = vunpack.c.l.b16 %v53
  %v416 = vunpack.c.l.b16 %v54
  %v417 = vunpack.c.l.b16 %v55
  %v418 = vunpack.c.l.b16 %v56
  %v419 = vunpack.c.l.b16 %v57
  %v420 = vunpack.c.l.b16 %v58
  %v421 = vunpack.c.l.b16 %v59
  %v422 = vunpack.c.l.b16 %v60
  %v423 = vunpack.c.l.b16 %v61
  %v424 = vunpack.c.l.b16 %v62
  %v425 = vunpack.c.l.b16 %v63
  %v426 = vunpack.c.l.b16 %v64
  %v427 = vunpack.c.l.b16 %v65
  %v428 = vunpack.c.l.b16 %v66
  %v429 = vunpack.c.l.b16 %v67
  %v430 = vunpack.c.l.b16 %v68
  %v431 = vunpack.c.l.b16 %v69
  %v432 = vunpack.c.l.b16 %v70
  %v433 = vunpack.c.l.b16 %v71
  %v434 = vunpack.c.l.b16 %v72
  %v435 = vunpack.c.l.b16 %v73
  %v436 = vunpack.c.l.b16 %v74
  %v437 = vunpack.c.l.b16 %v75
  %v438 = vunpack.c.l.b16 %v76
  %v439 = vunpack.c.l.b16 %v77
  %v440 = vunpack.c.l.b16 %v78
  %v441 = vunpack.c.l.b16 %v79
  %v442 = vunpack.c.l.b16 %v80
  %v443 = vunpack.c.l.b16 %v81
  %v444 = vunpack.c.l.b16 %v82
  %v445 = vunpack.c.l.b16 %v83
  %v446 = vunpack.c.l.b16 %v84
  %v447 = vunpack.c.l.b16 %v85
  %v448 = vunpack.c.l.b16 %v86
  %v449 = vunpack.c.l.b16 %v87
  %v450 = vunpack.c.l.b16 %v88
  %v451 = vunpack.c.l.b16 %v89
  %v452 = vunpack.c.l.b16 %v90
  %v453 = vunpack.c.l.b16 %v91
  %v454 = vunpack.c.l.b16 %v92
  %v455 = vunpack.c.l.b16 %v93
  %v456 = vunpack.c.l.b16 %v94
  %v457 = vunpack.c.l.b16 %v95
  %v458 = vunpack.c.l.b16 %v96
  %v459 = vunpack.c.l.b16 %v97
  %v460 = vunpack.c.l.b16 %v98
  %v461 = vunpack.c.l.b16 %v99
  %v462 = vunpack.c.l.b16 %v100
  %v463 = vunpack.c.l.b16 %v101
  %v464 = vunpack.c.l.b16 %v102
  %v465 = vunpack.c.l.b16 %v103
  %v466 = vunpack.c.l.b16 %v104
  %v467 = vunpack.c.l.b16 %v105
  %v468 = vunpack.c.l.b16 %v106
  %v469 = vunpack.c.l.b16 %v107
  %v470 = vunpack.c.l.b16 %v108
  %v471 = vunpack.c.l.b16 %v109
  %v472 = vunpack.c.l.b16 %v110
  %v473 = vunpack.c.l.b16 %v111
  %v474 = vunpack.c.l.b16 %v112
  %v475 = vunpack.c.l.b16 %v113
  %v476 = vunpack.c.l.b16 %v114
  %v477 = vunpack.c.l.b16 %v115
  %v478 = vunpack.c.l.b16 %v116
  %v479 = vunpack.c.l.b16 %v117
  %v480 = vunpack.c.l.b16 %v118
  %v481 = vunpack.c.l.b16 %v119
  %v482 = vunpack.c.l.b16 %v120
  %v483 = vunpack.c.l.b16 %v121
  %v484 = vunpack.c.l.b16 %v122
  %v485 = vunpack.c.l.b16 %v123
  %v486 = vunpack.c.l.b16 %v124
  %v487 = vunpack.c.l.b16 %v125
  %v488 = vunpack.c.l.b16 %v126
  %v489 = vunpack.c.l.b16 %v127
  %v490 = vunpack.c.l.b16 %v128
  %v491 = vunpack.c.l.b16 %v129
  %v492 = vunpack.c.l.b16 %v130
  %v493 = vunpack.c.l.b16 %v131
  %v494 = vunpack.c.l.b16 %v132
  %v495 = vunpack.c.l.b16 %v133
  %v496 = vunpack.c.l.b16 %v134
  %v497 = vunpack.c.l.b16 %v135
  %v498 = vunpack.c.l.b16 %v136
  %v499 = vunpack.c.l.b16 %v137
  %v500 = vunpack.c.l.b16 %v138
  %v501 = vunpack.c.l.b16 %v139
  %v502 = vunpack.c.l.b16 %v140
  %v503 = vunpack.c.l.b16 %v141
  %v504 = vunpack.c.l.b16 %v142
  %v505 = vunpack.c.l.b16 %v143
  %v506 = vunpack.c.l.b16 %v144
  %v507 = vunpack.c.l.b16 %v145
  %v508 = vunpack.c.l.b16 %v146
  %v509 = vunpack.c.l.b16 %v147
  %v510 = vunpack.c.l.b16 %v148
  %v511 = vunpack.c.l.b16 %v149
  %v512 = vunpack.c.l.b16 %v150
  %v513 = vunpack.c.l.b16 %v151
  %v514 = vunpack.c.l.b16 %v152
  %v515 = vunpack.c.l.b16 %v153
  %v516 = vunpack.c.l.b16 %v154
  %v517 = vunpack.c.l.b16 %v155
  %v518 = vunpack.c.l.b16 %v156
  %v519 = vunpack.c.l.b16 %v157
  %v520 = vunpack.c.l.b16 %v158
  %v521 = vunpack.c.l.b16 %v159
  %v522 = vunpack.c.l.b16 %v160
  %v523 = vunpack.c.l.b16 %v161
  %v524 = vunpack.c.l.b16 %v162
  %v525 = vunpack.c.l.b16 %v163
  %v526 = vpack.c.b16 %v383, %v382
  %v527 = vpack.c.b16 %v385, %v384
  %v528 = vpack.c.b16 %v387, %v386
  %v529 = vpack.c.b16 %v389, %v388
  %v530 = vpack.c.b16 %v391, %v390
  %v531 = vpack.c.b16 %v393, %v392
  %v532 = vpack.c.b16 %v395, %v394
  %v533 = vpack.c.b16 %v397, %v396
  %v534 = vpack.c.b16 %v399, %v398
  %v535 = vpack.c.b16 %v401, %v400
  %v536 = vpack.c.b16 %v403, %v402
  %v537 = vpack.c.b16 %v405, %v404
  %v538 = vpack.c.b16 %v407, %v406
  %v539 = vpack.c.b16 %v409, %v408
  %v540 = vpack.c.b16 %v411, %v410
  %v541 = vpack.c.b16 %v413, %v412
  %v542 = vpack.c.b16 %v415, %v414
  %v543 = vpack.c.b16 %v417, %v416
  %v544 = vpack.c.b16 %v419, %v418
  %v545 = vpack.c.b16 %v421, %v420
  %v546 = vpack.c.b16 %v423, %v422
  %v547 = vpack.c.b16 %v425, %v424
  %v548 = vpack.c.b16 %v427, %v426
  %v549 = vpack.c.b16 %v429, %v428
  %v550 = vpack.c.b16 %v431, %v430
  %v551 = vpack.c.b16 %v433, %v432
  %v552 = vpack.c.b16 %v435, %v434
  %v553 = vpack.c.b16 %v437, %v436
  %v554 = vpack.c.b16 %v439, %v438
  %v555 = vpack.c.b16 %v441, %v440
  %v556 = vpack.c.b16 %v443, %v442
  %v557 = vpack.c.b16 %v445, %v444
  %v558 = vpack.c.b16 %v447, %v446
  %v559 = vpack.c.b16 %v449, %v448
  %v560 = vpack.c.b16 %v451, %v450
  %v561 = vpack.c.b16 %v453, %v452
  %v562 = vpack.c.b16 %v455, %v454
  %v563 = vpack.c.b16 %v457, %v456
  %v564 = vpack.c.b16 %v459, %v458
  %v565 = vpack.c.b16 %v461, %v460
  %v566 = vpack.c.b16 %v463, %v462
  %v567 = vpack.c.b16 %v465, %v464
  %v568 = vpack.c.b16 %v467, %v466
  %v569 = vpack.c.b16 %v469, %v468
  %v570 = vpack.c.b16 %v471, %v470
  %v571 = vpack.c.b16 %v473, %v472
  %v572 = vpack.c.b16 %v475, %v474
  %v573 = vpack.c.b16 %v477, %v476
  %v574 = vpack.c.b16 %v479, %v478
  %v575 = vpack.c.b16 %v481, %v480
  %v576 = vpack.c.b16 %v483, %v482
  %v577 = vpack.c.b16 %v485, %v484
  %v578 = vpack.c.b16 %v487, %v486
  %v579 = vpack.c.b16 %v489, %v488
  %v580 = vpack.c.b16 %v491, %v490
  %v581 = vpack.c.b16 %v493, %v492
  %v582 = vpack.c.b16 %v495, %v494
  %v583 = vpack.c.b16 %v497, %v496
  %v584 = vpack.c.b16 %v499, %v498
  %v585 = vpack.c.b16 %v501, %v500
  %v586 = vpack.c.b16 %v503, %v502
  %v587 = vpack.c.b16 %v505, %v504
  %v588 = vpack.c.b16 %v507, %v506
  %v589 = vpack.c.b16 %v509, %v508
  %v590 = vpack.c.b16 %v511, %v510
  %v591 = vpack.c.b16 %v513, %v512
  %v592 = vpack.c.b16 %v515, %v514
  %v593 = vpack.c.b16 %v517, %v516
  %v594 = vpack.c.b16 %v519, %v518
  %v595 = vpack.c.b16 %v521, %v520
  %v596 = vpack.c.b16 %v523, %v522
  %v597 = vpack.c.b16 %v525, %v524
  %670 = vmatprep.subr.bf16.mxu0 0
  %671 = vmatpush1.bf16.msra.mxu0 %v533
  %672 = vmatprep.subr.bf16.mxu0 0
  %673 = vmatpush1.bf16.msra.mxu0 %v532
  %674 = vmatprep.subr.bf16.mxu0 0
  %675 = vmatpush1.bf16.msra.mxu0 %v531
  %676 = vmatprep.subr.bf16.mxu0 0
  %677 = vmatpush1.bf16.msra.mxu0 %v530
  %678 = vmatprep.subr.bf16.mxu0 0
  %679 = vmatpush1.bf16.msra.mxu0 %v529
  %680 = vmatprep.subr.bf16.mxu0 0
  %681 = vmatpush1.bf16.msra.mxu0 %v528
  %682 = vmatprep.subr.bf16.mxu0 0
  %683 = vmatpush1.bf16.msra.mxu0 %v527
  %684 = vmatprep.subr.bf16.mxu0 0
  %685 = vmatpush1.bf16.msra.mxu0 %v526
  %686 = vmatprep.subr.bf16.mxu0 0
  %687 = vmatpush2.bf16.msra.mxu0 %v541
  %688 = vmatprep.subr.bf16.mxu0 0
  %689 = vmatpush2.bf16.msra.mxu0 %v540
  %690 = vmatprep.subr.bf16.mxu0 0
  %691 = vmatpush2.bf16.msra.mxu0 %v539
  %692 = vmatprep.subr.bf16.mxu0 0
  %693 = vmatpush2.bf16.msra.mxu0 %v538
  %694 = vmatprep.subr.bf16.mxu0 0
  %695 = vmatpush2.bf16.msra.mxu0 %v537
  %696 = vmatprep.subr.bf16.mxu0 0
  %697 = vmatpush2.bf16.msra.mxu0 %v536
  %698 = vmatprep.subr.bf16.mxu0 0
  %699 = vmatpush2.bf16.msra.mxu0 %v535
  %700 = vmatprep.subr.bf16.mxu0 0
  %701 = vmatpush2.bf16.msra.mxu0 %v534
  %702 = vmatprep.mubr.bf16.mxu0 %v203
  %703 = vmatmul.mubr.bf16.gmra.mxu0 %v189
  %v704 = vpop.f32.mrf.mxu0
  %v705 = vadd.f32 0.0, %v704
  %v706 = vpop.f32.mrf.mxu0
  %v707 = vpop.f32.mrf.mxu0
  %v708 = vpop.f32.mrf.mxu0
  %709 = vdwg.mxu0
  %710 = vmatprep.subr.bf16.mxu0 0
  %711 = vmatpush1.bf16.msra.mxu0 %v549
  %712 = vmatprep.subr.bf16.mxu0 0
  %713 = vmatpush1.bf16.msra.mxu0 %v548
  %714 = vmatprep.subr.bf16.mxu0 0
  %715 = vmatpush1.bf16.msra.mxu0 %v547
  %716 = vmatprep.subr.bf16.mxu0 0
  %717 = vmatpush1.bf16.msra.mxu0 %v546
  %718 = vmatprep.subr.bf16.mxu0 0
  %719 = vmatpush1.bf16.msra.mxu0 %v545
  %720 = vmatprep.subr.bf16.mxu0 0
  %721 = vmatpush1.bf16.msra.mxu0 %v544
  %722 = vmatprep.subr.bf16.mxu0 0
  %723 = vmatpush1.bf16.msra.mxu0 %v543
  %724 = vmatprep.subr.bf16.mxu0 0
  %725 = vmatpush1.bf16.msra.mxu0 %v542
  %726 = vmatprep.subr.bf16.mxu0 0
  %727 = vmatpush2.bf16.msra.mxu0 %v557
  %728 = vmatprep.subr.bf16.mxu0 0
  %729 = vmatpush2.bf16.msra.mxu0 %v556
  %730 = vmatprep.subr.bf16.mxu0 0
  %731 = vmatpush2.bf16.msra.mxu0 %v555
  %732 = vmatprep.subr.bf16.mxu0 0
  %733 = vmatpush2.bf16.msra.mxu0 %v554
  %734 = vmatprep.subr.bf16.mxu0 0
  %735 = vmatpush2.bf16.msra.mxu0 %v553
  %736 = vmatprep.subr.bf16.mxu0 0
  %737 = vmatpush2.bf16.msra.mxu0 %v552
  %738 = vmatprep.subr.bf16.mxu0 0
  %739 = vmatpush2.bf16.msra.mxu0 %v551
  %740 = vmatprep.subr.bf16.mxu0 0
  %741 = vmatpush2.bf16.msra.mxu0 %v550
  %742 = vmatprep.mubr.bf16.mxu0 %v213
  %743 = vmatmul.mubr.bf16.gmra.mxu0 %v211
  %v744 = vpop.f32.mrf.mxu0
  %v745 = vadd.f32 %v705, %v744
  %v746 = vpop.f32.mrf.mxu0
  %v747 = vpop.f32.mrf.mxu0
  %v748 = vpop.f32.mrf.mxu0
  %749 = vdwg.mxu0
  %750 = vmatprep.subr.bf16.mxu0 0
  %751 = vmatpush1.bf16.msra.mxu0 %v565
  %752 = vmatprep.subr.bf16.mxu0 0
  %753 = vmatpush1.bf16.msra.mxu0 %v564
  %754 = vmatprep.subr.bf16.mxu0 0
  %755 = vmatpush1.bf16.msra.mxu0 %v563
  %756 = vmatprep.subr.bf16.mxu0 0
  %757 = vmatpush1.bf16.msra.mxu0 %v562
  %758 = vmatprep.subr.bf16.mxu0 0
  %759 = vmatpush1.bf16.msra.mxu0 %v561
  %760 = vmatprep.subr.bf16.mxu0 0
  %761 = vmatpush1.bf16.msra.mxu0 %v560
  %762 = vmatprep.subr.bf16.mxu0 0
  %763 = vmatpush1.bf16.msra.mxu0 %v559
  %764 = vmatprep.subr.bf16.mxu0 0
  %765 = vmatpush1.bf16.msra.mxu0 %v558
  %766 = vmatprep.subr.bf16.mxu0 0
  %767 = vmatpush2.bf16.msra.mxu0 %v573
  %768 = vmatprep.subr.bf16.mxu0 0
  %769 = vmatpush2.bf16.msra.mxu0 %v572
  %770 = vmatprep.subr.bf16.mxu0 0
  %771 = vmatpush2.bf16.msra.mxu0 %v571
  %772 = vmatprep.subr.bf16.mxu0 0
  %773 = vmatpush2.bf16.msra.mxu0 %v570
  %774 = vmatprep.subr.bf16.mxu0 0
  %775 = vmatpush2.bf16.msra.mxu0 %v569
  %776 = vmatprep.subr.bf16.mxu0 0
  %777 = vmatpush2.bf16.msra.mxu0 %v568
  %778 = vmatprep.subr.bf16.mxu0 0
  %779 = vmatpush2.bf16.msra.mxu0 %v567
  %780 = vmatprep.subr.bf16.mxu0 0
  %781 = vmatpush2.bf16.msra.mxu0 %v566
  %782 = vmatprep.mubr.bf16.mxu0 %v210
  %783 = vmatmul.mubr.bf16.gmra.mxu0 %v196
  %v784 = vpop.f32.mrf.mxu0
  %v785 = vadd.f32 %v745, %v784
  %v786 = vpop.f32.mrf.mxu0
  %v787 = vpop.f32.mrf.mxu0
  %v788 = vpop.f32.mrf.mxu0
  %789 = vdwg.mxu0
  %790 = vmatprep.subr.bf16.mxu0 0
  %791 = vmatpush1.bf16.msra.mxu0 %v581
  %792 = vmatprep.subr.bf16.mxu0 0
  %793 = vmatpush1.bf16.msra.mxu0 %v580
  %794 = vmatprep.subr.bf16.mxu0 0
  %795 = vmatpush1.bf16.msra.mxu0 %v579
  %796 = vmatprep.subr.bf16.mxu0 0
  %797 = vmatpush1.bf16.msra.mxu0 %v578
  %798 = vmatprep.subr.bf16.mxu0 0
  %799 = vmatpush1.bf16.msra.mxu0 %v577
  %800 = vmatprep.subr.bf16.mxu0 0
  %801 = vmatpush1.bf16.msra.mxu0 %v576
  %802 = vmatprep.subr.bf16.mxu0 0
  %803 = vmatpush1.bf16.msra.mxu0 %v575
  %804 = vmatprep.subr.bf16.mxu0 0
  %805 = vmatpush1.bf16.msra.mxu0 %v574
  %806 = vmatprep.subr.bf16.mxu0 0
  %807 = vmatpush2.bf16.msra.mxu0 %v589
  %808 = vmatprep.subr.bf16.mxu0 0
  %809 = vmatpush2.bf16.msra.mxu0 %v588
  %810 = vmatprep.subr.bf16.mxu0 0
  %811 = vmatpush2.bf16.msra.mxu0 %v587
  %812 = vmatprep.subr.bf16.mxu0 0
  %813 = vmatpush2.bf16.msra.mxu0 %v586
  %814 = vmatprep.subr.bf16.mxu0 0
  %815 = vmatpush2.bf16.msra.mxu0 %v585
  %816 = vmatprep.subr.bf16.mxu0 0
  %817 = vmatpush2.bf16.msra.mxu0 %v584
  %818 = vmatprep.subr.bf16.mxu0 0
  %819 = vmatpush2.bf16.msra.mxu0 %v583
  %820 = vmatprep.subr.bf16.mxu0 0
  %821 = vmatpush2.bf16.msra.mxu0 %v582
  %822 = vmatprep.mubr.bf16.mxu0 %v214
  %823 = vmatmul.mubr.bf16.gmra.mxu0 %v212
  %v824 = vpop.f32.mrf.mxu0
  %v825 = vadd.f32 %v785, %v824
  %v826 = vpop.f32.mrf.mxu0
  %v827 = vpop.f32.mrf.mxu0
  %v828 = vpop.f32.mrf.mxu0
  %829 = vdwg.mxu0
  %830 = vmatprep.subr.bf16.mxu0 0
  %831 = vmatpush1.bf16.msra.mxu0 %v597
  %832 = vmatprep.subr.bf16.mxu0 0
  %833 = vmatpush1.bf16.msra.mxu0 %v596
  %834 = vmatprep.subr.bf16.mxu0 0
  %835 = vmatpush1.bf16.msra.mxu0 %v595
  %836 = vmatprep.subr.bf16.mxu0 0
  %837 = vmatpush1.bf16.msra.mxu0 %v594
  %838 = vmatprep.subr.bf16.mxu0 0
  %839 = vmatpush1.bf16.msra.mxu0 %v593
  %840 = vmatprep.subr.bf16.mxu0 0
  %841 = vmatpush1.bf16.msra.mxu0 %v592
  %842 = vmatprep.subr.bf16.mxu0 0
  %843 = vmatpush1.bf16.msra.mxu0 %v591
  %844 = vmatprep.subr.bf16.mxu0 0
  %845 = vmatpush1.bf16.msra.mxu0 %v590
  %846 = vmatprep.subr.bf16.mxu0 0
  %847 = vmatpush2.bf16.msra.mxu0 0
  %848 = vmatprep.subr.bf16.mxu0 0
  %849 = vmatpush2.bf16.msra.mxu0 0
  %850 = vmatprep.subr.bf16.mxu0 0
  %851 = vmatpush2.bf16.msra.mxu0 0
  %852 = vmatprep.subr.bf16.mxu0 0
  %853 = vmatpush2.bf16.msra.mxu0 0
  %854 = vmatprep.subr.bf16.mxu0 0
  %855 = vmatpush2.bf16.msra.mxu0 0
  %856 = vmatprep.subr.bf16.mxu0 0
  %857 = vmatpush2.bf16.msra.mxu0 0
  %858 = vmatprep.subr.bf16.mxu0 0
  %859 = vmatpush2.bf16.msra.mxu0 0
  %860 = vmatprep.subr.bf16.mxu0 0
  %861 = vmatpush2.bf16.msra.mxu0 0
  %862 = vmatprep.mubr.bf16.mxu0 0
  %863 = vmatmul.mubr.bf16.gmra.mxu0 %v228
  %v864 = vpop.f32.mrf.mxu0
  %v865 = vadd.f32 %v825, %v864
  %v866 = vpop.f32.mrf.mxu0
  %v867 = vpop.f32.mrf.mxu0
  %v868 = vpop.f32.mrf.mxu0
  %869 = vdwg.mxu0
  %vm870 = vcmask 1041408
  %v871 = vsel %vm870, %v865, 0.0
  %v872 = vrot.slane %v871, 4
  %v873 = vadd.f32 %v871, %v872
  %v874 = vrot.slane %v873, 2
  %v875 = vadd.f32 %v873, %v874
  %v876 = vrot.slane %v875, 1
  %v877 = vadd.f32 %v875, %v876
  %v878 = vmul.f32 %v877, 0.5
  %v879 = vsub.f32 %v865, %v878
  %v880 = vmul.f32 %v879, %v879
  %v881 = vsel %vm870, %v880, 0.0
  %v882 = vrot.slane %v881, 4
  %v883 = vadd.f32 %v881, %v882
  %v884 = vrot.slane %v883, 2
  %v885 = vadd.f32 %v883, %v884
  %v886 = vrot.slane %v885, 1
  %v887 = vadd.f32 %v885, %v886
  %v888 = vmul.f32 %v887, 0.5
  %v889 = vld [vmem:[%s2] sm:$0x1]
  %v890 = vadd.f32 %v888, 1e-05
  %v891 = vrsqrt.pop %v890
  %v892 = vmul.f32 %v889, %v891
  %v894 = vlaneseq
  %v895 = vshrl.u32 %v894, 7
  %v896 = vsub.s32 0, %v895
  %v897 = vrot.slane %v892, %v896
  %v899 = vmul.f32 %v879, %v897
  %v900 = vld [vmem:[%s3] sm:$0x1]
  %v902 = vlaneseq
  %v903 = vshrl.u32 %v902, 7
  %v904 = vsub.s32 0, %v903
  %v905 = vrot.slane %v900, %v904
  %v907 = vadd.f32 %v899, %v905
  %v908 = vmax.f32 %v907, 0.0
  %909 = vst [vmem:[%s4] sm:$0x3] %v908
  // Predicated region
  $region18: #{generator_forward.40} parent=0 // pred_check
    _
  $region19: #{generator_forward.40} parent=0 // pred_check_branch
    %911 = sbr.rel (0) target = $region21
  $region20: #{generator_forward.40} parent=0 // pred_region
    _
  $region21: #{generator_forward.40} parent=0 // pred_fallthru
    _
  // Predicated region
  $region22: #{generator_forward.40} parent=0 // pred_check
    _
  $region23: #{generator_forward.40} parent=0 // pred_check_branch
    %913 = sbr.rel (0) target = $region25
  $region24: #{generator_forward.40} parent=0 // pred_region
    _
  $region25: #{generator_forward.40} parent=0 // pred_fallthru
    _

// kernel: generator_forward.44
$region0: #{generator_forward.44}
  #allocation0 [shape = 'u32[]', space=smem, size = 0x4, offset = 0x4, fixed_abs, tag = 'smem constant byte address 0x4 - core index']
  #allocation1 [shape = 'u32[144,128]{1,0:T(1,128)}', space=vmem, size = 0x12000, scoped, tag = 'internal scratch']
  %s0 = inlined_call_operand.vmem [shape: bf16[8,64], index: 0, kind: input, shape index: {}]
  %s1 = inlined_call_operand.vmem [shape: bf16[64,128], index: 1, kind: input, shape index: {}]
  %s2 = inlined_call_operand.vmem [shape: f32[1,128], index: 2, kind: input, shape index: {}]
  %s3 = inlined_call_operand.vmem [shape: f32[8,128], index: 3, kind: output, shape index: {}]
  %s4 = sld [smem:[#allocation0]]
  $region22: #{generator_forward.44} parent=0
    _
  %s6 = ssub.s32 1, %s4
  %s7 = scalar_select 0, %s6, %s4
  // Predicated region
  $region2: #{generator_forward.44} parent=0 // pred_check
    _
  $region3: #{generator_forward.44} parent=0 // pred_check_branch
    %9 = sbr.rel (0) target = $region5
  $region4: #{generator_forward.44} parent=0 // pred_region
    _
  $region5: #{generator_forward.44} parent=0 // pred_fallthru
    _
  // Predicated region
  $region6: #{generator_forward.44} parent=0 // pred_check
    _
  $region7: #{generator_forward.44} parent=0 // pred_check_branch
    %11 = sbr.rel (0) target = $region9
  $region8: #{generator_forward.44} parent=0 // pred_region
    _
  $region9: #{generator_forward.44} parent=0 // pred_fallthru
    _
  // Predicated region
  $region10: #{generator_forward.44} parent=0 // pred_check
    _
  $region11: #{generator_forward.44} parent=0 // pred_check_branch
    %13 = sbr.rel (0) target = $region13
  $region12: #{generator_forward.44} parent=0 // pred_region
    _
  $region13: #{generator_forward.44} parent=0 // pred_fallthru
    _
  %v15 = vld [vmem:[%s0] sm:$0xf]
  %v16 = vld [vmem:[%s1] sm:$0xf]
  %v17 = vld [vmem:[%s1 + $0x4] sm:$0xf]
  %v18 = vld [vmem:[%s1 + $0x8] sm:$0xf]
  %v19 = vld [vmem:[%s1 + $0xc] sm:$0xf]
  %v20 = vld [vmem:[%s1 + $0x10] sm:$0xf]
  %v21 = vld [vmem:[%s1 + $0x14] sm:$0xf]
  %v22 = vld [vmem:[%s1 + $0x18] sm:$0xf]
  %v23 = vld [vmem:[%s1 + $0x1c] sm:$0xf]
  %v24 = vld [vmem:[%s2] sm:$0x1]
  %v26 = vlaneseq
  %v27 = vshrl.u32 %v26, 7
  %v28 = vsub.s32 0, %v27
  %v29 = vrot.slane %v24, %v28
  %v39 = vunpack.c.l.b16 %v16
  %v40 = vunpack.c.l.b16 %v17
  %v41 = vunpack.c.l.b16 %v18
  %v42 = vunpack.c.l.b16 %v19
  %v43 = vunpack.c.l.b16 %v20
  %v44 = vunpack.c.l.b16 %v21
  %v45 = vunpack.c.l.b16 %v22
  %v46 = vunpack.c.l.b16 %v23
  %v47 = vpack.c.b16 %v40, %v39
  %v48 = vpack.c.b16 %v42, %v41
  %v49 = vpack.c.b16 %v44, %v43
  %v50 = vpack.c.b16 %v46, %v45
  %vm55 = vcmask 523264
  %v57 = vsel %vm55, %v15, 0
  %59 = vmatprep.subr.bf16.mxu0 0
  %60 = vmatpush1.bf16.msra.mxu0 0
  %61 = vmatprep.subr.bf16.mxu0 0
  %62 = vmatpush1.bf16.msra.mxu0 0
  %63 = vmatprep.subr.bf16.mxu0 0
  %64 = vmatpush1.bf16.msra.mxu0 0
  %65 = vmatprep.subr.bf16.mxu0 0
  %66 = vmatpush1.bf16.msra.mxu0 0
  %67 = vmatprep.subr.bf16.mxu0 0
  %68 = vmatpush1.bf16.msra.mxu0 %v50
  %69 = vmatprep.subr.bf16.mxu0 0
  %70 = vmatpush1.bf16.msra.mxu0 %v49
  %71 = vmatprep.subr.bf16.mxu0 0
  %72 = vmatpush1.bf16.msra.mxu0 %v48
  %73 = vmatprep.subr.bf16.mxu0 0
  %74 = vmatpush1.bf16.msra.mxu0 %v47
  %75 = vmatprep.subr.bf16.mxu0 0
  %76 = vmatpush2.bf16.msra.mxu0 0
  %77 = vmatprep.subr.bf16.mxu0 0
  %78 = vmatpush2.bf16.msra.mxu0 0
  %79 = vmatprep.subr.bf16.mxu0 0
  %80 = vmatpush2.bf16.msra.mxu0 0
  %81 = vmatprep.subr.bf16.mxu0 0
  %82 = vmatpush2.bf16.msra.mxu0 0
  %83 = vmatprep.subr.bf16.mxu0 0
  %84 = vmatpush2.bf16.msra.mxu0 0
  %85 = vmatprep.subr.bf16.mxu0 0
  %86 = vmatpush2.bf16.msra.mxu0 0
  %87 = vmatprep.subr.bf16.mxu0 0
  %88 = vmatpush2.bf16.msra.mxu0 0
  %89 = vmatprep.subr.bf16.mxu0 0
  %90 = vmatpush2.bf16.msra.mxu0 0
  %91 = vmatprep.mubr.bf16.mxu0 0
  %92 = vmatmul.mubr.bf16.gmra.mxu0 %v57
  %v93 = vpop.f32.mrf.mxu0
  %v94 = vadd.f32 %v29, %v93
  %v95 = vpop.f32.mrf.mxu0
  %v96 = vpop.f32.mrf.mxu0
  %v97 = vpop.f32.mrf.mxu0
  %98 = vdwg.mxu0
  %99 = vst [vmem:[%s3] sm:$0xff] %v94
  // Predicated region
  $region14: #{generator_forward.44} parent=0 // pred_check
    _
  $region15: #{generator_forward.44} parent=0 // pred_check_branch
    %101 = sbr.rel (0) target = $region17
  $region16: #{generator_forward.44} parent=0 // pred_region
    _
  $region17: #{generator_forward.44} parent=0 // pred_fallthru
    _
  // Predicated region
  $region18: #{generator_forward.44} parent=0 // pred_check
    _
  $region19: #{generator_forward.44} parent=0 // pred_check_branch
    %103 = sbr.rel (0) target = $region21
  $region20: #{generator_forward.44} parent=0 // pred_region
    _
  $region21: #{generator_forward.44} parent=0 // pred_fallthru
    _

// kernel: generator_forward.42
$region0: #{generator_forward.42}
  #allocation0 [shape = 'u32[]', space=smem, size = 0x4, offset = 0x4, fixed_abs, tag = 'smem constant byte address 0x4 - core index']
  #allocation1 [shape = 'u32[144,128]{1,0:T(1,128)}', space=vmem, size = 0x12000, scoped, tag = 'internal scratch']
  %s0 = inlined_call_operand.vmem [shape: bf16[8,1152], index: 0, kind: input, shape index: {}]
  %s1 = inlined_call_operand.vmem [shape: bf16[1152,128], index: 1, kind: input, shape index: {}]
  %s2 = inlined_call_operand.vmem [shape: f32[1,128], index: 2, kind: input, shape index: {}]
  %s3 = inlined_call_operand.vmem [shape: f32[1,128], index: 3, kind: input, shape index: {}]
  %s4 = inlined_call_operand.vmem [shape: f32[8,128], index: 4, kind: output, shape index: {}]
  %s5 = sld [smem:[#allocation0]]
  $region26: #{generator_forward.42} parent=0
    _
  %s7 = ssub.s32 1, %s5
  %s8 = scalar_select 0, %s7, %s5
  // Predicated region
  $region2: #{generator_forward.42} parent=0 // pred_check
    _
  $region3: #{generator_forward.42} parent=0 // pred_check_branch
    %10 = sbr.rel (0) target = $region5
  $region4: #{generator_forward.42} parent=0 // pred_region
    _
  $region5: #{generator_forward.42} parent=0 // pred_fallthru
    _
  // Predicated region
  $region6: #{generator_forward.42} parent=0 // pred_check
    _
  $region7: #{generator_forward.42} parent=0 // pred_check_branch
    %12 = sbr.rel (0) target = $region9
  $region8: #{generator_forward.42} parent=0 // pred_region
    _
  $region9: #{generator_forward.42} parent=0 // pred_fallthru
    _
  // Predicated region
  $region10: #{generator_forward.42} parent=0 // pred_check
    _
  $region11: #{generator_forward.42} parent=0 // pred_check_branch
    %14 = sbr.rel (0) target = $region13
  $region12: #{generator_forward.42} parent=0 // pred_region
    _
  $region13: #{generator_forward.42} parent=0 // pred_fallthru
    _
  // Predicated region
  $region14: #{generator_forward.42} parent=0 // pred_check
    _
  $region15: #{generator_forward.42} parent=0 // pred_check_branch
    %16 = sbr.rel (0) target = $region17
  $region16: #{generator_forward.42} parent=0 // pred_region
    _
  $region17: #{generator_forward.42} parent=0 // pred_fallthru
    _
  %v18 = vld [vmem:[%s0] sm:$0xff]
  %v19 = vld [vmem:[%s0 + $0x8] sm:$0xff]
  %v20 = vld [vmem:[%s0 + $0x10] sm:$0xff]
  %v21 = vld [vmem:[%s0 + $0x18] sm:$0xff]
  %v22 = vld [vmem:[%s0 + $0x20] sm:$0xf]
  %v23 = vld [vmem:[%s1] sm:$0xf]
  %v24 = vld [vmem:[%s1 + $0x4] sm:$0xf]
  %v25 = vld [vmem:[%s1 + $0x8] sm:$0xf]
  %v26 = vld [vmem:[%s1 + $0xc] sm:$0xf]
  %v27 = vld [vmem:[%s1 + $0x10] sm:$0xf]
  %v28 = vld [vmem:[%s1 + $0x14] sm:$0xf]
  %v29 = vld [vmem:[%s1 + $0x18] sm:$0xf]
  %v30 = vld [vmem:[%s1 + $0x1c] sm:$0xf]
  %v31 = vld [vmem:[%s1 + $0x20] sm:$0xf]
  %v32 = vld [vmem:[%s1 + $0x24] sm:$0xf]
  %v33 = vld [vmem:[%s1 + $0x28] sm:$0xf]
  %v34 = vld [vmem:[%s1 + $0x2c] sm:$0xf]
  %v35 = vld [vmem:[%s1 + $0x30] sm:$0xf]
  %v36 = vld [vmem:[%s1 + $0x34] sm:$0xf]
  %v37 = vld [vmem:[%s1 + $0x38] sm:$0xf]
  %v38 = vld [vmem:[%s1 + $0x3c] sm:$0xf]
  %v39 = vld [vmem:[%s1 + $0x40] sm:$0xf]
  %v40 = vld [vmem:[%s1 + $0x44] sm:$0xf]
  %v41 = vld [vmem:[%s1 + $0x48] sm:$0xf]
  %v42 = vld [vmem:[%s1 + $0x4c] sm:$0xf]
  %v43 = vld [vmem:[%s1 + $0x50] sm:$0xf]
  %v44 = vld [vmem:[%s1 + $0x54] sm:$0xf]
  %v45 = vld [vmem:[%s1 + $0x58] sm:$0xf]
  %v46 = vld [vmem:[%s1 + $0x5c] sm:$0xf]
  %v47 = vld [vmem:[%s1 + $0x60] sm:$0xf]
  %v48 = vld [vmem:[%s1 + $0x64] sm:$0xf]
  %v49 = vld [vmem:[%s1 + $0x68] sm:$0xf]
  %v50 = vld [vmem:[%s1 + $0x6c] sm:$0xf]
  %v51 = vld [vmem:[%s1 + $0x70] sm:$0xf]
  %v52 = vld [vmem:[%s1 + $0x74] sm:$0xf]
  %v53 = vld [vmem:[%s1 + $0x78] sm:$0xf]
  %v54 = vld [vmem:[%s1 + $0x7c] sm:$0xf]
  %v55 = vld [vmem:[%s1 + $0x80] sm:$0xf]
  %v56 = vld [vmem:[%s1 + $0x84] sm:$0xf]
  %v57 = vld [vmem:[%s1 + $0x88] sm:$0xf]
  %v58 = vld [vmem:[%s1 + $0x8c] sm:$0xf]
  %v59 = vld [vmem:[%s1 + $0x90] sm:$0xf]
  %v60 = vld [vmem:[%s1 + $0x94] sm:$0xf]
  %v61 = vld [vmem:[%s1 + $0x98] sm:$0xf]
  %v62 = vld [vmem:[%s1 + $0x9c] sm:$0xf]
  %v63 = vld [vmem:[%s1 + $0xa0] sm:$0xf]
  %v64 = vld [vmem:[%s1 + $0xa4] sm:$0xf]
  %v65 = vld [vmem:[%s1 + $0xa8] sm:$0xf]
  %v66 = vld [vmem:[%s1 + $0xac] sm:$0xf]
  %v67 = vld [vmem:[%s1 + $0xb0] sm:$0xf]
  %v68 = vld [vmem:[%s1 + $0xb4] sm:$0xf]
  %v69 = vld [vmem:[%s1 + $0xb8] sm:$0xf]
  %v70 = vld [vmem:[%s1 + $0xbc] sm:$0xf]
  %v71 = vld [vmem:[%s1 + $0xc0] sm:$0xf]
  %v72 = vld [vmem:[%s1 + $0xc4] sm:$0xf]
  %v73 = vld [vmem:[%s1 + $0xc8] sm:$0xf]
  %v74 = vld [vmem:[%s1 + $0xcc] sm:$0xf]
  %v75 = vld [vmem:[%s1 + $0xd0] sm:$0xf]
  %v76 = vld [vmem:[%s1 + $0xd4] sm:$0xf]
  %v77 = vld [vmem:[%s1 + $0xd8] sm:$0xf]
  %v78 = vld [vmem:[%s1 + $0xdc] sm:$0xf]
  %v79 = vld [vmem:[%s1 + $0xe0] sm:$0xf]
  %v80 = vld [vmem:[%s1 + $0xe4] sm:$0xf]
  %v81 = vld [vmem:[%s1 + $0xe8] sm:$0xf]
  %v82 = vld [vmem:[%s1 + $0xec] sm:$0xf]
  %v83 = vld [vmem:[%s1 + $0xf0] sm:$0xf]
  %v84 = vld [vmem:[%s1 + $0xf4] sm:$0xf]
  %v85 = vld [vmem:[%s1 + $0xf8] sm:$0xf]
  %v86 = vld [vmem:[%s1 + $0xfc] sm:$0xf]
  %v87 = vld [vmem:[%s1 + $0x100] sm:$0xf]
  %v88 = vld [vmem:[%s1 + $0x104] sm:$0xf]
  %v89 = vld [vmem:[%s1 + $0x108] sm:$0xf]
  %v90 = vld [vmem:[%s1 + $0x10c] sm:$0xf]
  %v91 = vld [vmem:[%s1 + $0x110] sm:$0xf]
  %v92 = vld [vmem:[%s1 + $0x114] sm:$0xf]
  %v93 = vld [vmem:[%s1 + $0x118] sm:$0xf]
  %v94 = vld [vmem:[%s1 + $0x11c] sm:$0xf]
  %v95 = vld [vmem:[%s1 + $0x120] sm:$0xf]
  %v96 = vld [vmem:[%s1 + $0x124] sm:$0xf]
  %v97 = vld [vmem:[%s1 + $0x128] sm:$0xf]
  %v98 = vld [vmem:[%s1 + $0x12c] sm:$0xf]
  %v99 = vld [vmem:[%s1 + $0x130] sm:$0xf]
  %v100 = vld [vmem:[%s1 + $0x134] sm:$0xf]
  %v101 = vld [vmem:[%s1 + $0x138] sm:$0xf]
  %v102 = vld [vmem:[%s1 + $0x13c] sm:$0xf]
  %v103 = vld [vmem:[%s1 + $0x140] sm:$0xf]
  %v104 = vld [vmem:[%s1 + $0x144] sm:$0xf]
  %v105 = vld [vmem:[%s1 + $0x148] sm:$0xf]
  %v106 = vld [vmem:[%s1 + $0x14c] sm:$0xf]
  %v107 = vld [vmem:[%s1 + $0x150] sm:$0xf]
  %v108 = vld [vmem:[%s1 + $0x154] sm:$0xf]
  %v109 = vld [vmem:[%s1 + $0x158] sm:$0xf]
  %v110 = vld [vmem:[%s1 + $0x15c] sm:$0xf]
  %v111 = vld [vmem:[%s1 + $0x160] sm:$0xf]
  %v112 = vld [vmem:[%s1 + $0x164] sm:$0xf]
  %v113 = vld [vmem:[%s1 + $0x168] sm:$0xf]
  %v114 = vld [vmem:[%s1 + $0x16c] sm:$0xf]
  %v115 = vld [vmem:[%s1 + $0x170] sm:$0xf]
  %v116 = vld [vmem:[%s1 + $0x174] sm:$0xf]
  %v117 = vld [vmem:[%s1 + $0x178] sm:$0xf]
  %v118 = vld [vmem:[%s1 + $0x17c] sm:$0xf]
  %v119 = vld [vmem:[%s1 + $0x180] sm:$0xf]
  %v120 = vld [vmem:[%s1 + $0x184] sm:$0xf]
  %v121 = vld [vmem:[%s1 + $0x188] sm:$0xf]
  %v122 = vld [vmem:[%s1 + $0x18c] sm:$0xf]
  %v123 = vld [vmem:[%s1 + $0x190] sm:$0xf]
  %v124 = vld [vmem:[%s1 + $0x194] sm:$0xf]
  %v125 = vld [vmem:[%s1 + $0x198] sm:$0xf]
  %v126 = vld [vmem:[%s1 + $0x19c] sm:$0xf]
  %v127 = vld [vmem:[%s1 + $0x1a0] sm:$0xf]
  %v128 = vld [vmem:[%s1 + $0x1a4] sm:$0xf]
  %v129 = vld [vmem:[%s1 + $0x1a8] sm:$0xf]
  %v130 = vld [vmem:[%s1 + $0x1ac] sm:$0xf]
  %v131 = vld [vmem:[%s1 + $0x1b0] sm:$0xf]
  %v132 = vld [vmem:[%s1 + $0x1b4] sm:$0xf]
  %v133 = vld [vmem:[%s1 + $0x1b8] sm:$0xf]
  %v134 = vld [vmem:[%s1 + $0x1bc] sm:$0xf]
  %v135 = vld [vmem:[%s1 + $0x1c0] sm:$0xf]
  %v136 = vld [vmem:[%s1 + $0x1c4] sm:$0xf]
  %v137 = vld [vmem:[%s1 + $0x1c8] sm:$0xf]
  %v138 = vld [vmem:[%s1 + $0x1cc] sm:$0xf]
  %v139 = vld [vmem:[%s1 + $0x1d0] sm:$0xf]
  %v140 = vld [vmem:[%s1 + $0x1d4] sm:$0xf]
  %v141 = vld [vmem:[%s1 + $0x1d8] sm:$0xf]
  %v142 = vld [vmem:[%s1 + $0x1dc] sm:$0xf]
  %v143 = vld [vmem:[%s1 + $0x1e0] sm:$0xf]
  %v144 = vld [vmem:[%s1 + $0x1e4] sm:$0xf]
  %v145 = vld [vmem:[%s1 + $0x1e8] sm:$0xf]
  %v146 = vld [vmem:[%s1 + $0x1ec] sm:$0xf]
  %v147 = vld [vmem:[%s1 + $0x1f0] sm:$0xf]
  %v148 = vld [vmem:[%s1 + $0x1f4] sm:$0xf]
  %v149 = vld [vmem:[%s1 + $0x1f8] sm:$0xf]
  %v150 = vld [vmem:[%s1 + $0x1fc] sm:$0xf]
  %v151 = vld [vmem:[%s1 + $0x200] sm:$0xf]
  %v152 = vld [vmem:[%s1 + $0x204] sm:$0xf]
  %v153 = vld [vmem:[%s1 + $0x208] sm:$0xf]
  %v154 = vld [vmem:[%s1 + $0x20c] sm:$0xf]
  %v155 = vld [vmem:[%s1 + $0x210] sm:$0xf]
  %v156 = vld [vmem:[%s1 + $0x214] sm:$0xf]
  %v157 = vld [vmem:[%s1 + $0x218] sm:$0xf]
  %v158 = vld [vmem:[%s1 + $0x21c] sm:$0xf]
  %v159 = vld [vmem:[%s1 + $0x220] sm:$0xf]
  %v160 = vld [vmem:[%s1 + $0x224] sm:$0xf]
  %v161 = vld [vmem:[%s1 + $0x228] sm:$0xf]
  %v162 = vld [vmem:[%s1 + $0x22c] sm:$0xf]
  %v163 = vld [vmem:[%s1 + $0x230] sm:$0xf]
  %v164 = vld [vmem:[%s1 + $0x234] sm:$0xf]
  %v165 = vld [vmem:[%s1 + $0x238] sm:$0xf]
  %v166 = vld [vmem:[%s1 + $0x23c] sm:$0xf]
  %v172 = vunpack.c.l.b16 %v18
  %v173 = vunpack.c.h.b16 %v18
  %v174 = vunpack.c.l.b16 %v19
  %v175 = vunpack.c.h.b16 %v19
  %v176 = vunpack.c.l.b16 %v20
  %v177 = vunpack.c.h.b16 %v20
  %v178 = vunpack.c.l.b16 %v21
  %v179 = vunpack.c.h.b16 %v21
  %v180 = vunpack.c.l.b16 %v22
  %v181 = vpack.c.b16 %v172, %v172
  %v182 = vpack.c.b16 %v173, %v173
  %v183 = vpack.c.b16 %v174, %v174
  %v184 = vpack.c.b16 %v175, %v175
  %v185 = vpack.c.b16 %v176, %v176
  %v186 = vpack.c.b16 %v177, %v177
  %v187 = vpack.c.b16 %v178, %v178
  %v188 = vpack.c.b16 %v179, %v179
  %v189 = vpack.c.b16 %v180, %v180
  %v343 = vunpack.c.l.b16 %v23
  %v344 = vunpack.c.l.b16 %v24
  %v345 = vunpack.c.l.b16 %v25
  %v346 = vunpack.c.l.b16 %v26
  %v347 = vunpack.c.l.b16 %v27
  %v348 = vunpack.c.l.b16 %v28
  %v349 = vunpack.c.l.b16 %v29
  %v350 = vunpack.c.l.b16 %v30
  %v351 = vunpack.c.l.b16 %v31
  %v352 = vunpack.c.l.b16 %v32
  %v353 = vunpack.c.l.b16 %v33
  %v354 = vunpack.c.l.b16 %v34
  %v355 = vunpack.c.l.b16 %v35
  %v356 = vunpack.c.l.b16 %v36
  %v357 = vunpack.c.l.b16 %v37
  %v358 = vunpack.c.l.b16 %v38
  %v359 = vunpack.c.l.b16 %v39
  %v360 = vunpack.c.l.b16 %v40
  %v361 = vunpack.c.l.b16 %v41
  %v362 = vunpack.c.l.b16 %v42
  %v363 = vunpack.c.l.b16 %v43
  %v364 = vunpack.c.l.b16 %v44
  %v365 = vunpack.c.l.b16 %v45
  %v366 = vunpack.c.l.b16 %v46
  %v367 = vunpack.c.l.b16 %v47
  %v368 = vunpack.c.l.b16 %v48
  %v369 = vunpack.c.l.b16 %v49
  %v370 = vunpack.c.l.b16 %v50
  %v371 = vunpack.c.l.b16 %v51
  %v372 = vunpack.c.l.b16 %v52
  %v373 = vunpack.c.l.b16 %v53
  %v374 = vunpack.c.l.b16 %v54
  %v375 = vunpack.c.l.b16 %v55
  %v376 = vunpack.c.l.b16 %v56
  %v377 = vunpack.c.l.b16 %v57
  %v378 = vunpack.c.l.b16 %v58
  %v379 = vunpack.c.l.b16 %v59
  %v380 = vunpack.c.l.b16 %v60
  %v381 = vunpack.c.l.b16 %v61
  %v382 = vunpack.c.l.b16 %v62
  %v383 = vunpack.c.l.b16 %v63
  %v384 = vunpack.c.l.b16 %v64
  %v385 = vunpack.c.l.b16 %v65
  %v386 = vunpack.c.l.b16 %v66
  %v387 = vunpack.c.l.b16 %v67
  %v388 = vunpack.c.l.b16 %v68
  %v389 = vunpack.c.l.b16 %v69
  %v390 = vunpack.c.l.b16 %v70
  %v391 = vunpack.c.l.b16 %v71
  %v392 = vunpack.c.l.b16 %v72
  %v393 = vunpack.c.l.b16 %v73
  %v394 = vunpack.c.l.b16 %v74
  %v395 = vunpack.c.l.b16 %v75
  %v396 = vunpack.c.l.b16 %v76
  %v397 = vunpack.c.l.b16 %v77
  %v398 = vunpack.c.l.b16 %v78
  %v399 = vunpack.c.l.b16 %v79
  %v400 = vunpack.c.l.b16 %v80
  %v401 = vunpack.c.l.b16 %v81
  %v402 = vunpack.c.l.b16 %v82
  %v403 = vunpack.c.l.b16 %v83
  %v404 = vunpack.c.l.b16 %v84
  %v405 = vunpack.c.l.b16 %v85
  %v406 = vunpack.c.l.b16 %v86
  %v407 = vunpack.c.l.b16 %v87
  %v408 = vunpack.c.l.b16 %v88
  %v409 = vunpack.c.l.b16 %v89
  %v410 = vunpack.c.l.b16 %v90
  %v411 = vunpack.c.l.b16 %v91
  %v412 = vunpack.c.l.b16 %v92
  %v413 = vunpack.c.l.b16 %v93
  %v414 = vunpack.c.l.b16 %v94
  %v415 = vunpack.c.l.b16 %v95
  %v416 = vunpack.c.l.b16 %v96
  %v417 = vunpack.c.l.b16 %v97
  %v418 = vunpack.c.l.b16 %v98
  %v419 = vunpack.c.l.b16 %v99
  %v420 = vunpack.c.l.b16 %v100
  %v421 = vunpack.c.l.b16 %v101
  %v422 = vunpack.c.l.b16 %v102
  %v423 = vunpack.c.l.b16 %v103
  %v424 = vunpack.c.l.b16 %v104
  %v425 = vunpack.c.l.b16 %v105
  %v426 = vunpack.c.l.b16 %v106
  %v427 = vunpack.c.l.b16 %v107
  %v428 = vunpack.c.l.b16 %v108
  %v429 = vunpack.c.l.b16 %v109
  %v430 = vunpack.c.l.b16 %v110
  %v431 = vunpack.c.l.b16 %v111
  %v432 = vunpack.c.l.b16 %v112
  %v433 = vunpack.c.l.b16 %v113
  %v434 = vunpack.c.l.b16 %v114
  %v435 = vunpack.c.l.b16 %v115
  %v436 = vunpack.c.l.b16 %v116
  %v437 = vunpack.c.l.b16 %v117
  %v438 = vunpack.c.l.b16 %v118
  %v439 = vunpack.c.l.b16 %v119
  %v440 = vunpack.c.l.b16 %v120
  %v441 = vunpack.c.l.b16 %v121
  %v442 = vunpack.c.l.b16 %v122
  %v443 = vunpack.c.l.b16 %v123
  %v444 = vunpack.c.l.b16 %v124
  %v445 = vunpack.c.l.b16 %v125
  %v446 = vunpack.c.l.b16 %v126
  %v447 = vunpack.c.l.b16 %v127
  %v448 = vunpack.c.l.b16 %v128
  %v449 = vunpack.c.l.b16 %v129
  %v450 = vunpack.c.l.b16 %v130
  %v451 = vunpack.c.l.b16 %v131
  %v452 = vunpack.c.l.b16 %v132
  %v453 = vunpack.c.l.b16 %v133
  %v454 = vunpack.c.l.b16 %v134
  %v455 = vunpack.c.l.b16 %v135
  %v456 = vunpack.c.l.b16 %v136
  %v457 = vunpack.c.l.b16 %v137
  %v458 = vunpack.c.l.b16 %v138
  %v459 = vunpack.c.l.b16 %v139
  %v460 = vunpack.c.l.b16 %v140
  %v461 = vunpack.c.l.b16 %v141
  %v462 = vunpack.c.l.b16 %v142
  %v463 = vunpack.c.l.b16 %v143
  %v464 = vunpack.c.l.b16 %v144
  %v465 = vunpack.c.l.b16 %v145
  %v466 = vunpack.c.l.b16 %v146
  %v467 = vunpack.c.l.b16 %v147
  %v468 = vunpack.c.l.b16 %v148
  %v469 = vunpack.c.l.b16 %v149
  %v470 = vunpack.c.l.b16 %v150
  %v471 = vunpack.c.l.b16 %v151
  %v472 = vunpack.c.l.b16 %v152
  %v473 = vunpack.c.l.b16 %v153
  %v474 = vunpack.c.l.b16 %v154
  %v475 = vunpack.c.l.b16 %v155
  %v476 = vunpack.c.l.b16 %v156
  %v477 = vunpack.c.l.b16 %v157
  %v478 = vunpack.c.l.b16 %v158
  %v479 = vunpack.c.l.b16 %v159
  %v480 = vunpack.c.l.b16 %v160
  %v481 = vunpack.c.l.b16 %v161
  %v482 = vunpack.c.l.b16 %v162
  %v483 = vunpack.c.l.b16 %v163
  %v484 = vunpack.c.l.b16 %v164
  %v485 = vunpack.c.l.b16 %v165
  %v486 = vunpack.c.l.b16 %v166
  %v487 = vpack.c.b16 %v344, %v343
  %v488 = vpack.c.b16 %v346, %v345
  %v489 = vpack.c.b16 %v348, %v347
  %v490 = vpack.c.b16 %v350, %v349
  %v491 = vpack.c.b16 %v352, %v351
  %v492 = vpack.c.b16 %v354, %v353
  %v493 = vpack.c.b16 %v356, %v355
  %v494 = vpack.c.b16 %v358, %v357
  %v495 = vpack.c.b16 %v360, %v359
  %v496 = vpack.c.b16 %v362, %v361
  %v497 = vpack.c.b16 %v364, %v363
  %v498 = vpack.c.b16 %v366, %v365
  %v499 = vpack.c.b16 %v368, %v367
  %v500 = vpack.c.b16 %v370, %v369
  %v501 = vpack.c.b16 %v372, %v371
  %v502 = vpack.c.b16 %v374, %v373
  %v503 = vpack.c.b16 %v376, %v375
  %v504 = vpack.c.b16 %v378, %v377
  %v505 = vpack.c.b16 %v380, %v379
  %v506 = vpack.c.b16 %v382, %v381
  %v507 = vpack.c.b16 %v384, %v383
  %v508 = vpack.c.b16 %v386, %v385
  %v509 = vpack.c.b16 %v388, %v387
  %v510 = vpack.c.b16 %v390, %v389
  %v511 = vpack.c.b16 %v392, %v391
  %v512 = vpack.c.b16 %v394, %v393
  %v513 = vpack.c.b16 %v396, %v395
  %v514 = vpack.c.b16 %v398, %v397
  %v515 = vpack.c.b16 %v400, %v399
  %v516 = vpack.c.b16 %v402, %v401
  %v517 = vpack.c.b16 %v404, %v403
  %v518 = vpack.c.b16 %v406, %v405
  %v519 = vpack.c.b16 %v408, %v407
  %v520 = vpack.c.b16 %v410, %v409
  %v521 = vpack.c.b16 %v412, %v411
  %v522 = vpack.c.b16 %v414, %v413
  %v523 = vpack.c.b16 %v416, %v415
  %v524 = vpack.c.b16 %v418, %v417
  %v525 = vpack.c.b16 %v420, %v419
  %v526 = vpack.c.b16 %v422, %v421
  %v527 = vpack.c.b16 %v424, %v423
  %v528 = vpack.c.b16 %v426, %v425
  %v529 = vpack.c.b16 %v428, %v427
  %v530 = vpack.c.b16 %v430, %v429
  %v531 = vpack.c.b16 %v432, %v431
  %v532 = vpack.c.b16 %v434, %v433
  %v533 = vpack.c.b16 %v436, %v435
  %v534 = vpack.c.b16 %v438, %v437
  %v535 = vpack.c.b16 %v440, %v439
  %v536 = vpack.c.b16 %v442, %v441
  %v537 = vpack.c.b16 %v444, %v443
  %v538 = vpack.c.b16 %v446, %v445
  %v539 = vpack.c.b16 %v448, %v447
  %v540 = vpack.c.b16 %v450, %v449
  %v541 = vpack.c.b16 %v452, %v451
  %v542 = vpack.c.b16 %v454, %v453
  %v543 = vpack.c.b16 %v456, %v455
  %v544 = vpack.c.b16 %v458, %v457
  %v545 = vpack.c.b16 %v460, %v459
  %v546 = vpack.c.b16 %v462, %v461
  %v547 = vpack.c.b16 %v464, %v463
  %v548 = vpack.c.b16 %v466, %v465
  %v549 = vpack.c.b16 %v468, %v467
  %v550 = vpack.c.b16 %v470, %v469
  %v551 = vpack.c.b16 %v472, %v471
  %v552 = vpack.c.b16 %v474, %v473
  %v553 = vpack.c.b16 %v476, %v475
  %v554 = vpack.c.b16 %v478, %v477
  %v555 = vpack.c.b16 %v480, %v479
  %v556 = vpack.c.b16 %v482, %v481
  %v557 = vpack.c.b16 %v484, %v483
  %v558 = vpack.c.b16 %v486, %v485
  %631 = vmatprep.subr.bf16.mxu0 0
  %632 = vmatpush1.bf16.msra.mxu0 %v494
  %633 = vmatprep.subr.bf16.mxu0 0
  %634 = vmatpush1.bf16.msra.mxu0 %v493
  %635 = vmatprep.subr.bf16.mxu0 0
  %636 = vmatpush1.bf16.msra.mxu0 %v492
  %637 = vmatprep.subr.bf16.mxu0 0
  %638 = vmatpush1.bf16.msra.mxu0 %v491
  %639 = vmatprep.subr.bf16.mxu0 0
  %640 = vmatpush1.bf16.msra.mxu0 %v490
  %641 = vmatprep.subr.bf16.mxu0 0
  %642 = vmatpush1.bf16.msra.mxu0 %v489
  %643 = vmatprep.subr.bf16.mxu0 0
  %644 = vmatpush1.bf16.msra.mxu0 %v488
  %645 = vmatprep.subr.bf16.mxu0 0
  %646 = vmatpush1.bf16.msra.mxu0 %v487
  %647 = vmatprep.subr.bf16.mxu0 0
  %648 = vmatpush2.bf16.msra.mxu0 %v502
  %649 = vmatprep.subr.bf16.mxu0 0
  %650 = vmatpush2.bf16.msra.mxu0 %v501
  %651 = vmatprep.subr.bf16.mxu0 0
  %652 = vmatpush2.bf16.msra.mxu0 %v500
  %653 = vmatprep.subr.bf16.mxu0 0
  %654 = vmatpush2.bf16.msra.mxu0 %v499
  %655 = vmatprep.subr.bf16.mxu0 0
  %656 = vmatpush2.bf16.msra.mxu0 %v498
  %657 = vmatprep.subr.bf16.mxu0 0
  %658 = vmatpush2.bf16.msra.mxu0 %v497
  %659 = vmatprep.subr.bf16.mxu0 0
  %660 = vmatpush2.bf16.msra.mxu0 %v496
  %661 = vmatprep.subr.bf16.mxu0 0
  %662 = vmatpush2.bf16.msra.mxu0 %v495
  %663 = vmatprep.mubr.bf16.mxu0 %v182
  %664 = vmatmul.mubr.bf16.gmra.mxu0 %v181
  %v665 = vpop.f32.mrf.mxu0
  %v666 = vadd.f32 0.0, %v665
  %v667 = vpop.f32.mrf.mxu0
  %v668 = vpop.f32.mrf.mxu0
  %v669 = vpop.f32.mrf.mxu0
  %670 = vdwg.mxu0
  %671 = vmatprep.subr.bf16.mxu0 0
  %672 = vmatpush1.bf16.msra.mxu0 %v510
  %673 = vmatprep.subr.bf16.mxu0 0
  %674 = vmatpush1.bf16.msra.mxu0 %v509
  %675 = vmatprep.subr.bf16.mxu0 0
  %676 = vmatpush1.bf16.msra.mxu0 %v508
  %677 = vmatprep.subr.bf16.mxu0 0
  %678 = vmatpush1.bf16.msra.mxu0 %v507
  %679 = vmatprep.subr.bf16.mxu0 0
  %680 = vmatpush1.bf16.msra.mxu0 %v506
  %681 = vmatprep.subr.bf16.mxu0 0
  %682 = vmatpush1.bf16.msra.mxu0 %v505
  %683 = vmatprep.subr.bf16.mxu0 0
  %684 = vmatpush1.bf16.msra.mxu0 %v504
  %685 = vmatprep.subr.bf16.mxu0 0
  %686 = vmatpush1.bf16.msra.mxu0 %v503
  %687 = vmatprep.subr.bf16.mxu0 0
  %688 = vmatpush2.bf16.msra.mxu0 %v518
  %689 = vmatprep.subr.bf16.mxu0 0
  %690 = vmatpush2.bf16.msra.mxu0 %v517
  %691 = vmatprep.subr.bf16.mxu0 0
  %692 = vmatpush2.bf16.msra.mxu0 %v516
  %693 = vmatprep.subr.bf16.mxu0 0
  %694 = vmatpush2.bf16.msra.mxu0 %v515
  %695 = vmatprep.subr.bf16.mxu0 0
  %696 = vmatpush2.bf16.msra.mxu0 %v514
  %697 = vmatprep.subr.bf16.mxu0 0
  %698 = vmatpush2.bf16.msra.mxu0 %v513
  %699 = vmatprep.subr.bf16.mxu0 0
  %700 = vmatpush2.bf16.msra.mxu0 %v512
  %701 = vmatprep.subr.bf16.mxu0 0
  %702 = vmatpush2.bf16.msra.mxu0 %v511
  %703 = vmatprep.mubr.bf16.mxu0 %v184
  %704 = vmatmul.mubr.bf16.gmra.mxu0 %v183
  %v705 = vpop.f32.mrf.mxu0
  %v706 = vadd.f32 %v666, %v705
  %v707 = vpop.f32.mrf.mxu0
  %v708 = vpop.f32.mrf.mxu0
  %v709 = vpop.f32.mrf.mxu0
  %710 = vdwg.mxu0
  %711 = vmatprep.subr.bf16.mxu0 0
  %712 = vmatpush1.bf16.msra.mxu0 %v526
  %713 = vmatprep.subr.bf16.mxu0 0
  %714 = vmatpush1.bf16.msra.mxu0 %v525
  %715 = vmatprep.subr.bf16.mxu0 0
  %716 = vmatpush1.bf16.msra.mxu0 %v524
  %717 = vmatprep.subr.bf16.mxu0 0
  %718 = vmatpush1.bf16.msra.mxu0 %v523
  %719 = vmatprep.subr.bf16.mxu0 0
  %720 = vmatpush1.bf16.msra.mxu0 %v522
  %721 = vmatprep.subr.bf16.mxu0 0
  %722 = vmatpush1.bf16.msra.mxu0 %v521
  %723 = vmatprep.subr.bf16.mxu0 0
  %724 = vmatpush1.bf16.msra.mxu0 %v520
  %725 = vmatprep.subr.bf16.mxu0 0
  %726 = vmatpush1.bf16.msra.mxu0 %v519
  %727 = vmatprep.subr.bf16.mxu0 0
  %728 = vmatpush2.bf16.msra.mxu0 %v534
  %729 = vmatprep.subr.bf16.mxu0 0
  %730 = vmatpush2.bf16.msra.mxu0 %v533
  %731 = vmatprep.subr.bf16.mxu0 0
  %732 = vmatpush2.bf16.msra.mxu0 %v532
  %733 = vmatprep.subr.bf16.mxu0 0
  %734 = vmatpush2.bf16.msra.mxu0 %v531
  %735 = vmatprep.subr.bf16.mxu0 0
  %736 = vmatpush2.bf16.msra.mxu0 %v530
  %737 = vmatprep.subr.bf16.mxu0 0
  %738 = vmatpush2.bf16.msra.mxu0 %v529
  %739 = vmatprep.subr.bf16.mxu0 0
  %740 = vmatpush2.bf16.msra.mxu0 %v528
  %741 = vmatprep.subr.bf16.mxu0 0
  %742 = vmatpush2.bf16.msra.mxu0 %v527
  %743 = vmatprep.mubr.bf16.mxu0 %v186
  %744 = vmatmul.mubr.bf16.gmra.mxu0 %v185
  %v745 = vpop.f32.mrf.mxu0
  %v746 = vadd.f32 %v706, %v745
  %v747 = vpop.f32.mrf.mxu0
  %v748 = vpop.f32.mrf.mxu0
  %v749 = vpop.f32.mrf.mxu0
  %750 = vdwg.mxu0
  %751 = vmatprep.subr.bf16.mxu0 0
  %752 = vmatpush1.bf16.msra.mxu0 %v542
  %753 = vmatprep.subr.bf16.mxu0 0
  %754 = vmatpush1.bf16.msra.mxu0 %v541
  %755 = vmatprep.subr.bf16.mxu0 0
  %756 = vmatpush1.bf16.msra.mxu0 %v540
  %757 = vmatprep.subr.bf16.mxu0 0
  %758 = vmatpush1.bf16.msra.mxu0 %v539
  %759 = vmatprep.subr.bf16.mxu0 0
  %760 = vmatpush1.bf16.msra.mxu0 %v538
  %761 = vmatprep.subr.bf16.mxu0 0
  %762 = vmatpush1.bf16.msra.mxu0 %v537
  %763 = vmatprep.subr.bf16.mxu0 0
  %764 = vmatpush1.bf16.msra.mxu0 %v536
  %765 = vmatprep.subr.bf16.mxu0 0
  %766 = vmatpush1.bf16.msra.mxu0 %v535
  %767 = vmatprep.subr.bf16.mxu0 0
  %768 = vmatpush2.bf16.msra.mxu0 %v550
  %769 = vmatprep.subr.bf16.mxu0 0
  %770 = vmatpush2.bf16.msra.mxu0 %v549
  %771 = vmatprep.subr.bf16.mxu0 0
  %772 = vmatpush2.bf16.msra.mxu0 %v548
  %773 = vmatprep.subr.bf16.mxu0 0
  %774 = vmatpush2.bf16.msra.mxu0 %v547
  %775 = vmatprep.subr.bf16.mxu0 0
  %776 = vmatpush2.bf16.msra.mxu0 %v546
  %777 = vmatprep.subr.bf16.mxu0 0
  %778 = vmatpush2.bf16.msra.mxu0 %v545
  %779 = vmatprep.subr.bf16.mxu0 0
  %780 = vmatpush2.bf16.msra.mxu0 %v544
  %781 = vmatprep.subr.bf16.mxu0 0
  %782 = vmatpush2.bf16.msra.mxu0 %v543
  %783 = vmatprep.mubr.bf16.mxu0 %v188
  %784 = vmatmul.mubr.bf16.gmra.mxu0 %v187
  %v785 = vpop.f32.mrf.mxu0
  %v786 = vadd.f32 %v746, %v785
  %v787 = vpop.f32.mrf.mxu0
  %v788 = vpop.f32.mrf.mxu0
  %v789 = vpop.f32.mrf.mxu0
  %790 = vdwg.mxu0
  %791 = vmatprep.subr.bf16.mxu0 0
  %792 = vmatpush1.bf16.msra.mxu0 %v558
  %793 = vmatprep.subr.bf16.mxu0 0
  %794 = vmatpush1.bf16.msra.mxu0 %v557
  %795 = vmatprep.subr.bf16.mxu0 0
  %796 = vmatpush1.bf16.msra.mxu0 %v556
  %797 = vmatprep.subr.bf16.mxu0 0
  %798 = vmatpush1.bf16.msra.mxu0 %v555
  %799 = vmatprep.subr.bf16.mxu0 0
  %800 = vmatpush1.bf16.msra.mxu0 %v554
  %801 = vmatprep.subr.bf16.mxu0 0
  %802 = vmatpush1.bf16.msra.mxu0 %v553
  %803 = vmatprep.subr.bf16.mxu0 0
  %804 = vmatpush1.bf16.msra.mxu0 %v552
  %805 = vmatprep.subr.bf16.mxu0 0
  %806 = vmatpush1.bf16.msra.mxu0 %v551
  %807 = vmatprep.subr.bf16.mxu0 0
  %808 = vmatpush2.bf16.msra.mxu0 0
  %809 = vmatprep.subr.bf16.mxu0 0
  %810 = vmatpush2.bf16.msra.mxu0 0
  %811 = vmatprep.subr.bf16.mxu0 0
  %812 = vmatpush2.bf16.msra.mxu0 0
  %813 = vmatprep.subr.bf16.mxu0 0
  %814 = vmatpush2.bf16.msra.mxu0 0
  %815 = vmatprep.subr.bf16.mxu0 0
  %816 = vmatpush2.bf16.msra.mxu0 0
  %817 = vmatprep.subr.bf16.mxu0 0
  %818 = vmatpush2.bf16.msra.mxu0 0
  %819 = vmatprep.subr.bf16.mxu0 0
  %820 = vmatpush2.bf16.msra.mxu0 0
  %821 = vmatprep.subr.bf16.mxu0 0
  %822 = vmatpush2.bf16.msra.mxu0 0
  %823 = vmatprep.mubr.bf16.mxu0 0
  %824 = vmatmul.mubr.bf16.gmra.mxu0 %v189
  %v825 = vpop.f32.mrf.mxu0
  %v826 = vadd.f32 %v786, %v825
  %v827 = vpop.f32.mrf.mxu0
  %v828 = vpop.f32.mrf.mxu0
  %v829 = vpop.f32.mrf.mxu0
  %830 = vdwg.mxu0
  %v831 = vrot.slane %v826, 4
  %v832 = vadd.f32 %v826, %v831
  %v833 = vrot.slane %v832, 2
  %v834 = vadd.f32 %v832, %v833
  %v835 = vrot.slane %v834, 1
  %v836 = vadd.f32 %v834, %v835
  %v837 = vmul.f32 %v836, 0.125
  %v838 = vsub.f32 %v826, %v837
  %v839 = vmul.f32 %v838, %v838
  %v840 = vrot.slane %v839, 4
  %v841 = vadd.f32 %v839, %v840
  %v842 = vrot.slane %v841, 2
  %v843 = vadd.f32 %v841, %v842
  %v844 = vrot.slane %v843, 1
  %v845 = vadd.f32 %v843, %v844
  %v846 = vmul.f32 %v845, 0.125
  %v847 = vld [vmem:[%s2] sm:$0x1]
  %v848 = vadd.f32 %v846, 1e-05
  %v849 = vrsqrt.pop %v848
  %v850 = vmul.f32 %v847, %v849
  %v852 = vlaneseq
  %v853 = vshrl.u32 %v852, 7
  %v854 = vsub.s32 0, %v853
  %v855 = vrot.slane %v850, %v854
  %v857 = vmul.f32 %v838, %v855
  %v858 = vld [vmem:[%s3] sm:$0x1]
  %v860 = vlaneseq
  %v861 = vshrl.u32 %v860, 7
  %v862 = vsub.s32 0, %v861
  %v863 = vrot.slane %v858, %v862
  %v865 = vadd.f32 %v857, %v863
  %v866 = vmax.f32 %v865, 0.0
  %867 = vst [vmem:[%s4] sm:$0xff] %v866
  // Predicated region
  $region18: #{generator_forward.42} parent=0 // pred_check
    _
  $region19: #{generator_forward.42} parent=0 // pred_check_branch
    %869 = sbr.rel (0) target = $region21
  $region20: #{generator_forward.42} parent=0 // pred_region
    _
  $region21: #{generator_forward.42} parent=0 // pred_fallthru
    _
  // Predicated region
  $region22: #{generator_forward.42} parent=0 // pred_check
    _
  $region23: #{generator_forward.42} parent=0 // pred_check_branch
    %871 = sbr.rel (0) target = $region25
  $region24: #{generator_forward.42} parent=0 // pred_region
    _
  $region25: #{generator_forward.42} parent=0 // pred_fallthru
    _

// kernel: generator_forward.47
$region0: #{generator_forward.47}
  #allocation0 [shape = 'u32[]', space=smem, size = 0x4, offset = 0x4, fixed_abs, tag = 'smem constant byte address 0x4 - core index']
  #allocation1 [shape = 'u32[144,128]{1,0:T(1,128)}', space=vmem, size = 0x12000, scoped, tag = 'internal scratch']
  %s0 = inlined_call_operand.vmem [shape: bf16[32,32], index: 0, kind: input, shape index: {}]
  %s1 = inlined_call_operand.vmem [shape: bf16[32,128], index: 1, kind: input, shape index: {}]
  %s2 = inlined_call_operand.vmem [shape: f32[1,128], index: 2, kind: input, shape index: {}]
  %s3 = inlined_call_operand.vmem [shape: f32[32,128], index: 3, kind: output, shape index: {}]
  %s4 = sld [smem:[#allocation0]]
  $region22: #{generator_forward.47} parent=0
    _
  %s6 = ssub.s32 1, %s4
  %s7 = scalar_select 0, %s6, %s4
  // Predicated region
  $region2: #{generator_forward.47} parent=0 // pred_check
    _
  $region3: #{generator_forward.47} parent=0 // pred_check_branch
    %9 = sbr.rel (0) target = $region5
  $region4: #{generator_forward.47} parent=0 // pred_region
    _
  $region5: #{generator_forward.47} parent=0 // pred_fallthru
    _
  // Predicated region
  $region6: #{generator_forward.47} parent=0 // pred_check
    _
  $region7: #{generator_forward.47} parent=0 // pred_check_branch
    %11 = sbr.rel (0) target = $region9
  $region8: #{generator_forward.47} parent=0 // pred_region
    _
  $region9: #{generator_forward.47} parent=0 // pred_fallthru
    _
  // Predicated region
  $region10: #{generator_forward.47} parent=0 // pred_check
    _
  $region11: #{generator_forward.47} parent=0 // pred_check_branch
    %13 = sbr.rel (0) target = $region13
  $region12: #{generator_forward.47} parent=0 // pred_region
    _
  $region13: #{generator_forward.47} parent=0 // pred_fallthru
    _
  %v15 = vld [vmem:[%s0] sm:$0xf]
  %v16 = vld [vmem:[%s0 + $0x4] sm:$0xf]
  %v17 = vld [vmem:[%s0 + $0x8] sm:$0xf]
  %v18 = vld [vmem:[%s0 + $0xc] sm:$0xf]
  %v19 = vld [vmem:[%s1] sm:$0xf]
  %v20 = vld [vmem:[%s1 + $0x4] sm:$0xf]
  %v21 = vld [vmem:[%s1 + $0x8] sm:$0xf]
  %v22 = vld [vmem:[%s1 + $0xc] sm:$0xf]
  %v23 = vld [vmem:[%s2] sm:$0x1]
  %v25 = vlaneseq
  %v26 = vshrl.u32 %v25, 7
  %v27 = vsub.s32 0, %v26
  %v28 = vrot.slane %v23, %v27
  %v34 = vunpack.c.l.b16 %v15
  %v35 = vunpack.c.l.b16 %v16
  %v36 = vunpack.c.l.b16 %v17
  %v37 = vunpack.c.l.b16 %v18
  %v38 = vpack.c.b16 %v35, %v34
  %v39 = vpack.c.b16 %v37, %v36
  %v44 = vunpack.c.l.b16 %v19
  %v45 = vunpack.c.l.b16 %v20
  %v46 = vunpack.c.l.b16 %v21
  %v47 = vunpack.c.l.b16 %v22
  %v48 = vpack.c.b16 %v45, %v44
  %v49 = vpack.c.b16 %v47, %v46
  %vm52 = vcmask 261120
  %v54 = vsel %vm52, %v38, 0
  %v57 = vsel %vm52, %v39, 0
  %59 = vmatprep.subr.bf16.mxu0 0
  %60 = vmatpush1.bf16.msra.mxu0 0
  %61 = vmatprep.subr.bf16.mxu0 0
  %62 = vmatpush1.bf16.msra.mxu0 0
  %63 = vmatprep.subr.bf16.mxu0 0
  %64 = vmatpush1.bf16.msra.mxu0 0
  %65 = vmatprep.subr.bf16.mxu0 0
  %66 = vmatpush1.bf16.msra.mxu0 0
  %67 = vmatprep.subr.bf16.mxu0 0
  %68 = vmatpush1.bf16.msra.mxu0 0
  %69 = vmatprep.subr.bf16.mxu0 0
  %70 = vmatpush1.bf16.msra.mxu0 0
  %71 = vmatprep.subr.bf16.mxu0 0
  %72 = vmatpush1.bf16.msra.mxu0 %v49
  %73 = vmatprep.subr.bf16.mxu0 0
  %74 = vmatpush1.bf16.msra.mxu0 %v48
  %75 = vmatprep.subr.bf16.mxu0 0
  %76 = vmatpush2.bf16.msra.mxu0 0
  %77 = vmatprep.subr.bf16.mxu0 0
  %78 = vmatpush2.bf16.msra.mxu0 0
  %79 = vmatprep.subr.bf16.mxu0 0
  %80 = vmatpush2.bf16.msra.mxu0 0
  %81 = vmatprep.subr.bf16.mxu0 0
  %82 = vmatpush2.bf16.msra.mxu0 0
  %83 = vmatprep.subr.bf16.mxu0 0
  %84 = vmatpush2.bf16.msra.mxu0 0
  %85 = vmatprep.subr.bf16.mxu0 0
  %86 = vmatpush2.bf16.msra.mxu0 0
  %87 = vmatprep.subr.bf16.mxu0 0
  %88 = vmatpush2.bf16.msra.mxu0 0
  %89 = vmatprep.subr.bf16.mxu0 0
  %90 = vmatpush2.bf16.msra.mxu0 0
  %91 = vmatprep.mubr.bf16.mxu0 0
  %92 = vmatmul.mubr.bf16.gmra.mxu0 %v54
  %v93 = vpop.f32.mrf.mxu0
  %v94 = vadd.f32 %v28, %v93
  %v95 = vpop.f32.mrf.mxu0
  %v96 = vpop.f32.mrf.mxu0
  %v97 = vadd.f32 %v28, %v96
  %v98 = vpop.f32.mrf.mxu0
  %99 = vmatprep.mubr.bf16.mxu0 0
  %100 = vmatmul.mubr.bf16.gmra.mxu0 %v57
  %v101 = vpop.f32.mrf.mxu0
  %v102 = vadd.f32 %v28, %v101
  %v103 = vpop.f32.mrf.mxu0
  %v104 = vpop.f32.mrf.mxu0
  %v105 = vadd.f32 %v28, %v104
  %v106 = vpop.f32.mrf.mxu0
  %107 = vdwg.mxu0
  %108 = vst [vmem:[%s3] sm:$0xff] %v94
  %109 = vst [vmem:[%s3 + $0x8] sm:$0xff] %v97
  %110 = vst [vmem:[%s3 + $0x10] sm:$0xff] %v102
  %111 = vst [vmem:[%s3 + $0x18] sm:$0xff] %v105
  // Predicated region
  $region14: #{generator_forward.47} parent=0 // pred_check
    _
  $region15: #{generator_forward.47} parent=0 // pred_check_branch
    %113 = sbr.rel (0) target = $region17
  $region16: #{generator_forward.47} parent=0 // pred_region
    _
  $region17: #{generator_forward.47} parent=0 // pred_fallthru
    _
  // Predicated region
  $region18: #{generator_forward.47} parent=0 // pred_check
    _
  $region19: #{generator_forward.47} parent=0 // pred_check_branch
    %115 = sbr.rel (0) target = $region21
  $region20: #{generator_forward.47} parent=0 // pred_region
    _
  $region21: #{generator_forward.47} parent=0 // pred_fallthru
    _

// kernel: generator_forward.45
$region0: #{generator_forward.45}
  #allocation0 [shape = 'u32[]', space=smem, size = 0x4, offset = 0x4, fixed_abs, tag = 'smem constant byte address 0x4 - core index']
  #allocation1 [shape = 'u32[144,128]{1,0:T(1,128)}', space=vmem, size = 0x12000, scoped, tag = 'internal scratch']
  %s0 = inlined_call_operand.vmem [shape: bf16[32,576], index: 0, kind: input, shape index: {}]
  %s1 = inlined_call_operand.vmem [shape: bf16[576,128], index: 1, kind: input, shape index: {}]
  %s2 = inlined_call_operand.vmem [shape: f32[1,128], index: 2, kind: input, shape index: {}]
  %s3 = inlined_call_operand.vmem [shape: f32[1,128], index: 3, kind: input, shape index: {}]
  %s4 = inlined_call_operand.vmem [shape: f32[32,128], index: 4, kind: output, shape index: {}]
  %s5 = sld [smem:[#allocation0]]
  $region26: #{generator_forward.45} parent=0
    _
  %s7 = ssub.s32 1, %s5
  %s8 = scalar_select 0, %s7, %s5
  // Predicated region
  $region2: #{generator_forward.45} parent=0 // pred_check
    _
  $region3: #{generator_forward.45} parent=0 // pred_check_branch
    %10 = sbr.rel (0) target = $region5
  $region4: #{generator_forward.45} parent=0 // pred_region
    _
  $region5: #{generator_forward.45} parent=0 // pred_fallthru
    _
  // Predicated region
  $region6: #{generator_forward.45} parent=0 // pred_check
    _
  $region7: #{generator_forward.45} parent=0 // pred_check_branch
    %12 = sbr.rel (0) target = $region9
  $region8: #{generator_forward.45} parent=0 // pred_region
    _
  $region9: #{generator_forward.45} parent=0 // pred_fallthru
    _
  // Predicated region
  $region10: #{generator_forward.45} parent=0 // pred_check
    _
  $region11: #{generator_forward.45} parent=0 // pred_check_branch
    %14 = sbr.rel (0) target = $region13
  $region12: #{generator_forward.45} parent=0 // pred_region
    _
  $region13: #{generator_forward.45} parent=0 // pred_fallthru
    _
  // Predicated region
  $region14: #{generator_forward.45} parent=0 // pred_check
    _
  $region15: #{generator_forward.45} parent=0 // pred_check_branch
    %16 = sbr.rel (0) target = $region17
  $region16: #{generator_forward.45} parent=0 // pred_region
    _
  $region17: #{generator_forward.45} parent=0 // pred_fallthru
    _
  %v18 = vld [vmem:[%s0] sm:$0xff]
  %v19 = vld [vmem:[%s0 + $0x8] sm:$0xff]
  %v20 = vld [vmem:[%s0 + $0x10] sm:$0xf]
  %v21 = vld [vmem:[%s0 + $0x14] sm:$0xff]
  %v22 = vld [vmem:[%s0 + $0x1c] sm:$0xff]
  %v23 = vld [vmem:[%s0 + $0x24] sm:$0xf]
  %v24 = vld [vmem:[%s0 + $0x28] sm:$0xff]
  %v25 = vld [vmem:[%s0 + $0x30] sm:$0xff]
  %v26 = vld [vmem:[%s0 + $0x38] sm:$0xf]
  %v27 = vld [vmem:[%s0 + $0x3c] sm:$0xff]
  %v28 = vld [vmem:[%s0 + $0x44] sm:$0xff]
  %v29 = vld [vmem:[%s0 + $0x4c] sm:$0xf]
  %v30 = vld [vmem:[%s1] sm:$0xf]
  %v31 = vld [vmem:[%s1 + $0x4] sm:$0xf]
  %v32 = vld [vmem:[%s1 + $0x8] sm:$0xf]
  %v33 = vld [vmem:[%s1 + $0xc] sm:$0xf]
  %v34 = vld [vmem:[%s1 + $0x10] sm:$0xf]
  %v35 = vld [vmem:[%s1 + $0x14] sm:$0xf]
  %v36 = vld [vmem:[%s1 + $0x18] sm:$0xf]
  %v37 = vld [vmem:[%s1 + $0x1c] sm:$0xf]
  %v38 = vld [vmem:[%s1 + $0x20] sm:$0xf]
  %v39 = vld [vmem:[%s1 + $0x24] sm:$0xf]
  %v40 = vld [vmem:[%s1 + $0x28] sm:$0xf]
  %v41 = vld [vmem:[%s1 + $0x2c] sm:$0xf]
  %v42 = vld [vmem:[%s1 + $0x30] sm:$0xf]
  %v43 = vld [vmem:[%s1 + $0x34] sm:$0xf]
  %v44 = vld [vmem:[%s1 + $0x38] sm:$0xf]
  %v45 = vld [vmem:[%s1 + $0x3c] sm:$0xf]
  %v46 = vld [vmem:[%s1 + $0x40] sm:$0xf]
  %v47 = vld [vmem:[%s1 + $0x44] sm:$0xf]
  %v48 = vld [vmem:[%s1 + $0x48] sm:$0xf]
  %v49 = vld [vmem:[%s1 + $0x4c] sm:$0xf]
  %v50 = vld [vmem:[%s1 + $0x50] sm:$0xf]
  %v51 = vld [vmem:[%s1 + $0x54] sm:$0xf]
  %v52 = vld [vmem:[%s1 + $0x58] sm:$0xf]
  %v53 = vld [vmem:[%s1 + $0x5c] sm:$0xf]
  %v54 = vld [vmem:[%s1 + $0x60] sm:$0xf]
  %v55 = vld [vmem:[%s1 + $0x64] sm:$0xf]
  %v56 = vld [vmem:[%s1 + $0x68] sm:$0xf]
  %v57 = vld [vmem:[%s1 + $0x6c] sm:$0xf]
  %v58 = vld [vmem:[%s1 + $0x70] sm:$0xf]
  %v59 = vld [vmem:[%s1 + $0x74] sm:$0xf]
  %v60 = vld [vmem:[%s1 + $0x78] sm:$0xf]
  %v61 = vld [vmem:[%s1 + $0x7c] sm:$0xf]
  %v62 = vld [vmem:[%s1 + $0x80] sm:$0xf]
  %v63 = vld [vmem:[%s1 + $0x84] sm:$0xf]
  %v64 = vld [vmem:[%s1 + $0x88] sm:$0xf]
  %v65 = vld [vmem:[%s1 + $0x8c] sm:$0xf]
  %v66 = vld [vmem:[%s1 + $0x90] sm:$0xf]
  %v67 = vld [vmem:[%s1 + $0x94] sm:$0xf]
  %v68 = vld [vmem:[%s1 + $0x98] sm:$0xf]
  %v69 = vld [vmem:[%s1 + $0x9c] sm:$0xf]
  %v70 = vld [vmem:[%s1 + $0xa0] sm:$0xf]
  %v71 = vld [vmem:[%s1 + $0xa4] sm:$0xf]
  %v72 = vld [vmem:[%s1 + $0xa8] sm:$0xf]
  %v73 = vld [vmem:[%s1 + $0xac] sm:$0xf]
  %v74 = vld [vmem:[%s1 + $0xb0] sm:$0xf]
  %v75 = vld [vmem:[%s1 + $0xb4] sm:$0xf]
  %v76 = vld [vmem:[%s1 + $0xb8] sm:$0xf]
  %v77 = vld [vmem:[%s1 + $0xbc] sm:$0xf]
  %v78 = vld [vmem:[%s1 + $0xc0] sm:$0xf]
  %v79 = vld [vmem:[%s1 + $0xc4] sm:$0xf]
  %v80 = vld [vmem:[%s1 + $0xc8] sm:$0xf]
  %v81 = vld [vmem:[%s1 + $0xcc] sm:$0xf]
  %v82 = vld [vmem:[%s1 + $0xd0] sm:$0xf]
  %v83 = vld [vmem:[%s1 + $0xd4] sm:$0xf]
  %v84 = vld [vmem:[%s1 + $0xd8] sm:$0xf]
  %v85 = vld [vmem:[%s1 + $0xdc] sm:$0xf]
  %v86 = vld [vmem:[%s1 + $0xe0] sm:$0xf]
  %v87 = vld [vmem:[%s1 + $0xe4] sm:$0xf]
  %v88 = vld [vmem:[%s1 + $0xe8] sm:$0xf]
  %v89 = vld [vmem:[%s1 + $0xec] sm:$0xf]
  %v90 = vld [vmem:[%s1 + $0xf0] sm:$0xf]
  %v91 = vld [vmem:[%s1 + $0xf4] sm:$0xf]
  %v92 = vld [vmem:[%s1 + $0xf8] sm:$0xf]
  %v93 = vld [vmem:[%s1 + $0xfc] sm:$0xf]
  %v94 = vld [vmem:[%s1 + $0x100] sm:$0xf]
  %v95 = vld [vmem:[%s1 + $0x104] sm:$0xf]
  %v96 = vld [vmem:[%s1 + $0x108] sm:$0xf]
  %v97 = vld [vmem:[%s1 + $0x10c] sm:$0xf]
  %v98 = vld [vmem:[%s1 + $0x110] sm:$0xf]
  %v99 = vld [vmem:[%s1 + $0x114] sm:$0xf]
  %v100 = vld [vmem:[%s1 + $0x118] sm:$0xf]
  %v101 = vld [vmem:[%s1 + $0x11c] sm:$0xf]
  %v114 = vunpack.c.l.b16 %v18
  %v115 = vunpack.c.h.b16 %v18
  %v116 = vunpack.c.l.b16 %v19
  %v117 = vunpack.c.h.b16 %v19
  %v118 = vunpack.c.l.b16 %v20
  %v119 = vunpack.c.l.b16 %v21
  %v120 = vunpack.c.h.b16 %v21
  %v121 = vunpack.c.l.b16 %v22
  %v122 = vunpack.c.h.b16 %v22
  %v123 = vunpack.c.l.b16 %v23
  %v124 = vunpack.c.l.b16 %v24
  %v125 = vunpack.c.h.b16 %v24
  %v126 = vunpack.c.l.b16 %v25
  %v127 = vunpack.c.h.b16 %v25
  %v128 = vunpack.c.l.b16 %v26
  %v129 = vunpack.c.l.b16 %v27
  %v130 = vunpack.c.h.b16 %v27
  %v131 = vunpack.c.l.b16 %v28
  %v132 = vunpack.c.h.b16 %v28
  %v133 = vunpack.c.l.b16 %v29
  %v134 = vpack.c.b16 %v119, %v114
  %v135 = vpack.c.b16 %v120, %v115
  %v136 = vpack.c.b16 %v121, %v116
  %v137 = vpack.c.b16 %v122, %v117
  %v138 = vpack.c.b16 %v123, %v118
  %v139 = vpack.c.b16 %v129, %v124
  %v140 = vpack.c.b16 %v130, %v125
  %v141 = vpack.c.b16 %v131, %v126
  %v142 = vpack.c.b16 %v132, %v127
  %v143 = vpack.c.b16 %v133, %v128
  %v224 = vunpack.c.l.b16 %v30
  %v225 = vunpack.c.l.b16 %v31
  %v226 = vunpack.c.l.b16 %v32
  %v227 = vunpack.c.l.b16 %v33
  %v228 = vunpack.c.l.b16 %v34
  %v229 = vunpack.c.l.b16 %v35
  %v230 = vunpack.c.l.b16 %v36
  %v231 = vunpack.c.l.b16 %v37
  %v232 = vunpack.c.l.b16 %v38
  %v233 = vunpack.c.l.b16 %v39
  %v234 = vunpack.c.l.b16 %v40
  %v235 = vunpack.c.l.b16 %v41
  %v236 = vunpack.c.l.b16 %v42
  %v237 = vunpack.c.l.b16 %v43
  %v238 = vunpack.c.l.b16 %v44
  %v239 = vunpack.c.l.b16 %v45
  %v240 = vunpack.c.l.b16 %v46
  %v241 = vunpack.c.l.b16 %v47
  %v242 = vunpack.c.l.b16 %v48
  %v243 = vunpack.c.l.b16 %v49
  %v244 = vunpack.c.l.b16 %v50
  %v245 = vunpack.c.l.b16 %v51
  %v246 = vunpack.c.l.b16 %v52
  %v247 = vunpack.c.l.b16 %v53
  %v248 = vunpack.c.l.b16 %v54
  %v249 = vunpack.c.l.b16 %v55
  %v250 = vunpack.c.l.b16 %v56
  %v251 = vunpack.c.l.b16 %v57
  %v252 = vunpack.c.l.b16 %v58
  %v253 = vunpack.c.l.b16 %v59
  %v254 = vunpack.c.l.b16 %v60
  %v255 = vunpack.c.l.b16 %v61
  %v256 = vunpack.c.l.b16 %v62
  %v257 = vunpack.c.l.b16 %v63
  %v258 = vunpack.c.l.b16 %v64
  %v259 = vunpack.c.l.b16 %v65
  %v260 = vunpack.c.l.b16 %v66
  %v261 = vunpack.c.l.b16 %v67
  %v262 = vunpack.c.l.b16 %v68
  %v263 = vunpack.c.l.b16 %v69
  %v264 = vunpack.c.l.b16 %v70
  %v265 = vunpack.c.l.b16 %v71
  %v266 = vunpack.c.l.b16 %v72
  %v267 = vunpack.c.l.b16 %v73
  %v268 = vunpack.c.l.b16 %v74
  %v269 = vunpack.c.l.b16 %v75
  %v270 = vunpack.c.l.b16 %v76
  %v271 = vunpack.c.l.b16 %v77
  %v272 = vunpack.c.l.b16 %v78
  %v273 = vunpack.c.l.b16 %v79
  %v274 = vunpack.c.l.b16 %v80
  %v275 = vunpack.c.l.b16 %v81
  %v276 = vunpack.c.l.b16 %v82
  %v277 = vunpack.c.l.b16 %v83
  %v278 = vunpack.c.l.b16 %v84
  %v279 = vunpack.c.l.b16 %v85
  %v280 = vunpack.c.l.b16 %v86
  %v281 = vunpack.c.l.b16 %v87
  %v282 = vunpack.c.l.b16 %v88
  %v283 = vunpack.c.l.b16 %v89
  %v284 = vunpack.c.l.b16 %v90
  %v285 = vunpack.c.l.b16 %v91
  %v286 = vunpack.c.l.b16 %v92
  %v287 = vunpack.c.l.b16 %v93
  %v288 = vunpack.c.l.b16 %v94
  %v289 = vunpack.c.l.b16 %v95
  %v290 = vunpack.c.l.b16 %v96
  %v291 = vunpack.c.l.b16 %v97
  %v292 = vunpack.c.l.b16 %v98
  %v293 = vunpack.c.l.b16 %v99
  %v294 = vunpack.c.l.b16 %v100
  %v295 = vunpack.c.l.b16 %v101
  %v296 = vpack.c.b16 %v225, %v224
  %v297 = vpack.c.b16 %v227, %v226
  %v298 = vpack.c.b16 %v229, %v228
  %v299 = vpack.c.b16 %v231, %v230
  %v300 = vpack.c.b16 %v233, %v232
  %v301 = vpack.c.b16 %v235, %v234
  %v302 = vpack.c.b16 %v237, %v236
  %v303 = vpack.c.b16 %v239, %v238
  %v304 = vpack.c.b16 %v241, %v240
  %v305 = vpack.c.b16 %v243, %v242
  %v306 = vpack.c.b16 %v245, %v244
  %v307 = vpack.c.b16 %v247, %v246
  %v308 = vpack.c.b16 %v249, %v248
  %v309 = vpack.c.b16 %v251, %v250
  %v310 = vpack.c.b16 %v253, %v252
  %v311 = vpack.c.b16 %v255, %v254
  %v312 = vpack.c.b16 %v257, %v256
  %v313 = vpack.c.b16 %v259, %v258
  %v314 = vpack.c.b16 %v261, %v260
  %v315 = vpack.c.b16 %v263, %v262
  %v316 = vpack.c.b16 %v265, %v264
  %v317 = vpack.c.b16 %v267, %v266
  %v318 = vpack.c.b16 %v269, %v268
  %v319 = vpack.c.b16 %v271, %v270
  %v320 = vpack.c.b16 %v273, %v272
  %v321 = vpack.c.b16 %v275, %v274
  %v322 = vpack.c.b16 %v277, %v276
  %v323 = vpack.c.b16 %v279, %v278
  %v324 = vpack.c.b16 %v281, %v280
  %v325 = vpack.c.b16 %v283, %v282
  %v326 = vpack.c.b16 %v285, %v284
  %v327 = vpack.c.b16 %v287, %v286
  %v328 = vpack.c.b16 %v289, %v288
  %v329 = vpack.c.b16 %v291, %v290
  %v330 = vpack.c.b16 %v293, %v292
  %v331 = vpack.c.b16 %v295, %v294
  %vm368 = vcmask 523264
  %v370 = vsel %vm368, %v138, 0
  %v373 = vsel %vm368, %v143, 0
  %375 = vmatprep.subr.bf16.mxu0 0
  %376 = vmatpush1.bf16.msra.mxu0 %v303
  %377 = vmatprep.subr.bf16.mxu0 0
  %378 = vmatpush1.bf16.msra.mxu0 %v302
  %379 = vmatprep.subr.bf16.mxu0 0
  %380 = vmatpush1.bf16.msra.mxu0 %v301
  %381 = vmatprep.subr.bf16.mxu0 0
  %382 = vmatpush1.bf16.msra.mxu0 %v300
  %383 = vmatprep.subr.bf16.mxu0 0
  %384 = vmatpush1.bf16.msra.mxu0 %v299
  %385 = vmatprep.subr.bf16.mxu0 0
  %386 = vmatpush1.bf16.msra.mxu0 %v298
  %387 = vmatprep.subr.bf16.mxu0 0
  %388 = vmatpush1.bf16.msra.mxu0 %v297
  %389 = vmatprep.subr.bf16.mxu0 0
  %390 = vmatpush1.bf16.msra.mxu0 %v296
  %391 = vmatprep.subr.bf16.mxu0 0
  %392 = vmatpush2.bf16.msra.mxu0 %v311
  %393 = vmatprep.subr.bf16.mxu0 0
  %394 = vmatpush2.bf16.msra.mxu0 %v310
  %395 = vmatprep.subr.bf16.mxu0 0
  %396 = vmatpush2.bf16.msra.mxu0 %v309
  %397 = vmatprep.subr.bf16.mxu0 0
  %398 = vmatpush2.bf16.msra.mxu0 %v308
  %399 = vmatprep.subr.bf16.mxu0 0
  %400 = vmatpush2.bf16.msra.mxu0 %v307
  %401 = vmatprep.subr.bf16.mxu0 0
  %402 = vmatpush2.bf16.msra.mxu0 %v306
  %403 = vmatprep.subr.bf16.mxu0 0
  %404 = vmatpush2.bf16.msra.mxu0 %v305
  %405 = vmatprep.subr.bf16.mxu0 0
  %406 = vmatpush2.bf16.msra.mxu0 %v304
  %407 = vmatprep.mubr.bf16.mxu0 %v135
  %408 = vmatmul.mubr.bf16.gmra.mxu0 %v134
  %v409 = vpop.f32.mrf.mxu0
  %v410 = vadd.f32 0.0, %v409
  %v411 = vpop.f32.mrf.mxu0
  %v412 = vpop.f32.mrf.mxu0
  %v413 = vadd.f32 0.0, %v412
  %v414 = vpop.f32.mrf.mxu0
  %415 = vmatprep.mubr.bf16.mxu0 %v140
  %416 = vmatmul.mubr.bf16.gmra.mxu0 %v139
  %v417 = vpop.f32.mrf.mxu0
  %v418 = vadd.f32 0.0, %v417
  %v419 = vpop.f32.mrf.mxu0
  %v420 = vpop.f32.mrf.mxu0
  %v421 = vadd.f32 0.0, %v420
  %v422 = vpop.f32.mrf.mxu0
  %423 = vdwg.mxu0
  %424 = vmatprep.subr.bf16.mxu0 0
  %425 = vmatpush1.bf16.msra.mxu0 %v319
  %426 = vmatprep.subr.bf16.mxu0 0
  %427 = vmatpush1.bf16.msra.mxu0 %v318
  %428 = vmatprep.subr.bf16.mxu0 0
  %429 = vmatpush1.bf16.msra.mxu0 %v317
  %430 = vmatprep.subr.bf16.mxu0 0
  %431 = vmatpush1.bf16.msra.mxu0 %v316
  %432 = vmatprep.subr.bf16.mxu0 0
  %433 = vmatpush1.bf16.msra.mxu0 %v315
  %434 = vmatprep.subr.bf16.mxu0 0
  %435 = vmatpush1.bf16.msra.mxu0 %v314
  %436 = vmatprep.subr.bf16.mxu0 0
  %437 = vmatpush1.bf16.msra.mxu0 %v313
  %438 = vmatprep.subr.bf16.mxu0 0
  %439 = vmatpush1.bf16.msra.mxu0 %v312
  %440 = vmatprep.subr.bf16.mxu0 0
  %441 = vmatpush2.bf16.msra.mxu0 %v327
  %442 = vmatprep.subr.bf16.mxu0 0
  %443 = vmatpush2.bf16.msra.mxu0 %v326
  %444 = vmatprep.subr.bf16.mxu0 0
  %445 = vmatpush2.bf16.msra.mxu0 %v325
  %446 = vmatprep.subr.bf16.mxu0 0
  %447 = vmatpush2.bf16.msra.mxu0 %v324
  %448 = vmatprep.subr.bf16.mxu0 0
  %449 = vmatpush2.bf16.msra.mxu0 %v323
  %450 = vmatprep.subr.bf16.mxu0 0
  %451 = vmatpush2.bf16.msra.mxu0 %v322
  %452 = vmatprep.subr.bf16.mxu0 0
  %453 = vmatpush2.bf16.msra.mxu0 %v321
  %454 = vmatprep.subr.bf16.mxu0 0
  %455 = vmatpush2.bf16.msra.mxu0 %v320
  %456 = vmatprep.mubr.bf16.mxu0 %v137
  %457 = vmatmul.mubr.bf16.gmra.mxu0 %v136
  %v458 = vpop.f32.mrf.mxu0
  %v459 = vadd.f32 %v410, %v458
  %v460 = vpop.f32.mrf.mxu0
  %v461 = vpop.f32.mrf.mxu0
  %v462 = vadd.f32 %v413, %v461
  %v463 = vpop.f32.mrf.mxu0
  %464 = vmatprep.mubr.bf16.mxu0 %v142
  %465 = vmatmul.mubr.bf16.gmra.mxu0 %v141
  %v466 = vpop.f32.mrf.mxu0
  %v467 = vadd.f32 %v418, %v466
  %v468 = vpop.f32.mrf.mxu0
  %v469 = vpop.f32.mrf.mxu0
  %v470 = vadd.f32 %v421, %v469
  %v471 = vpop.f32.mrf.mxu0
  %472 = vdwg.mxu0
  %473 = vmatprep.subr.bf16.mxu0 0
  %474 = vmatpush1.bf16.msra.mxu0 0
  %475 = vmatprep.subr.bf16.mxu0 0
  %476 = vmatpush1.bf16.msra.mxu0 0
  %477 = vmatprep.subr.bf16.mxu0 0
  %478 = vmatpush1.bf16.msra.mxu0 0
  %479 = vmatprep.subr.bf16.mxu0 0
  %480 = vmatpush1.bf16.msra.mxu0 0
  %481 = vmatprep.subr.bf16.mxu0 0
  %482 = vmatpush1.bf16.msra.mxu0 %v331
  %483 = vmatprep.subr.bf16.mxu0 0
  %484 = vmatpush1.bf16.msra.mxu0 %v330
  %485 = vmatprep.subr.bf16.mxu0 0
  %486 = vmatpush1.bf16.msra.mxu0 %v329
  %487 = vmatprep.subr.bf16.mxu0 0
  %488 = vmatpush1.bf16.msra.mxu0 %v328
  %489 = vmatprep.subr.bf16.mxu0 0
  %490 = vmatpush2.bf16.msra.mxu0 0
  %491 = vmatprep.subr.bf16.mxu0 0
  %492 = vmatpush2.bf16.msra.mxu0 0
  %493 = vmatprep.subr.bf16.mxu0 0
  %494 = vmatpush2.bf16.msra.mxu0 0
  %495 = vmatprep.subr.bf16.mxu0 0
  %496 = vmatpush2.bf16.msra.mxu0 0
  %497 = vmatprep.subr.bf16.mxu0 0
  %498 = vmatpush2.bf16.msra.mxu0 0
  %499 = vmatprep.subr.bf16.mxu0 0
  %500 = vmatpush2.bf16.msra.mxu0 0
  %501 = vmatprep.subr.bf16.mxu0 0
  %502 = vmatpush2.bf16.msra.mxu0 0
  %503 = vmatprep.subr.bf16.mxu0 0
  %504 = vmatpush2.bf16.msra.mxu0 0
  %505 = vmatprep.mubr.bf16.mxu0 0
  %506 = vmatmul.mubr.bf16.gmra.mxu0 %v370
  %v507 = vpop.f32.mrf.mxu0
  %v508 = vadd.f32 %v459, %v507
  %v509 = vpop.f32.mrf.mxu0
  %v510 = vpop.f32.mrf.mxu0
  %v511 = vadd.f32 %v462, %v510
  %v512 = vpop.f32.mrf.mxu0
  %513 = vmatprep.mubr.bf16.mxu0 0
  %514 = vmatmul.mubr.bf16.gmra.mxu0 %v373
  %v515 = vpop.f32.mrf.mxu0
  %v516 = vadd.f32 %v467, %v515
  %v517 = vpop.f32.mrf.mxu0
  %v518 = vpop.f32.mrf.mxu0
  %v519 = vadd.f32 %v470, %v518
  %v520 = vpop.f32.mrf.mxu0
  %521 = vdwg.mxu0
  %v522 = vadd.f32 %v508, %v511
  %v523 = vadd.f32 %v522, %v516
  %v524 = vadd.f32 %v523, %v519
  %v525 = vrot.slane %v524, 4
  %v526 = vadd.f32 %v524, %v525
  %v527 = vrot.slane %v526, 2
  %v528 = vadd.f32 %v526, %v527
  %v529 = vrot.slane %v528, 1
  %v530 = vadd.f32 %v528, %v529
  %v531 = vmul.f32 %v530, 0.03125
  %v532 = vsub.f32 %v508, %v531
  %v533 = vsub.f32 %v511, %v531
  %v534 = vsub.f32 %v516, %v531
  %v535 = vsub.f32 %v519, %v531
  %v536 = vmul.f32 %v532, %v532
  %v537 = vmul.f32 %v533, %v533
  %v538 = vmul.f32 %v534, %v534
  %v539 = vmul.f32 %v535, %v535
  %v540 = vadd.f32 %v536, %v537
  %v541 = vadd.f32 %v540, %v538
  %v542 = vadd.f32 %v541, %v539
  %v543 = vrot.slane %v542, 4
  %v544 = vadd.f32 %v542, %v543
  %v545 = vrot.slane %v544, 2
  %v546 = vadd.f32 %v544, %v545
  %v547 = vrot.slane %v546, 1
  %v548 = vadd.f32 %v546, %v547
  %v549 = vmul.f32 %v548, 0.03125
  %v550 = vld [vmem:[%s2] sm:$0x1]
  %v551 = vadd.f32 %v549, 1e-05
  %v552 = vrsqrt.pop %v551
  %v553 = vmul.f32 %v550, %v552
  %v555 = vlaneseq
  %v556 = vshrl.u32 %v555, 7
  %v557 = vsub.s32 0, %v556
  %v558 = vrot.slane %v553, %v557
  %v560 = vmul.f32 %v532, %v558
  %v561 = vmul.f32 %v533, %v558
  %v562 = vmul.f32 %v534, %v558
  %v563 = vmul.f32 %v535, %v558
  %v564 = vld [vmem:[%s3] sm:$0x1]
  %v566 = vlaneseq
  %v567 = vshrl.u32 %v566, 7
  %v568 = vsub.s32 0, %v567
  %v569 = vrot.slane %v564, %v568
  %v571 = vadd.f32 %v560, %v569
  %v572 = vadd.f32 %v561, %v569
  %v573 = vadd.f32 %v562, %v569
  %v574 = vadd.f32 %v563, %v569
  %v575 = vmax.f32 %v571, 0.0
  %v576 = vmax.f32 %v572, 0.0
  %v577 = vmax.f32 %v573, 0.0
  %v578 = vmax.f32 %v574, 0.0
  %579 = vst [vmem:[%s4] sm:$0xff] %v575
  %580 = vst [vmem:[%s4 + $0x8] sm:$0xff] %v576
  %581 = vst [vmem:[%s4 + $0x10] sm:$0xff] %v577
  %582 = vst [vmem:[%s4 + $0x18] sm:$0xff] %v578
  // Predicated region
  $region18: #{generator_forward.45} parent=0 // pred_check
    _
  $region19: #{generator_forward.45} parent=0 // pred_check_branch
    %584 = sbr.rel (0) target = $region21
  $region20: #{generator_forward.45} parent=0 // pred_region
    _
  $region21: #{generator_forward.45} parent=0 // pred_fallthru
    _
  // Predicated region
  $region22: #{generator_forward.45} parent=0 // pred_check
    _
  $region23: #{generator_forward.45} parent=0 // pred_check_branch
    %586 = sbr.rel (0) target = $region25
  $region24: #{generator_forward.45} parent=0 // pred_region
    _
  $region25: #{generator_forward.45} parent=0 // pred_fallthru
    _

// kernel: generator_forward.50
$region0: #{generator_forward.50}
  #allocation0 [shape = 'u32[]', space=smem, size = 0x4, offset = 0x4, fixed_abs, tag = 'smem constant byte address 0x4 - core index']
  #allocation1 [shape = 'u32[144,128]{1,0:T(1,128)}', space=vmem, size = 0x12000, scoped, tag = 'internal scratch']
  %s0 = inlined_call_operand.vmem [shape: bf16[128,16], index: 0, kind: input, shape index: {}]
  %s1 = inlined_call_operand.vmem [shape: bf16[16,128], index: 1, kind: input, shape index: {}]
  %s2 = inlined_call_operand.vmem [shape: f32[1,128], index: 2, kind: input, shape index: {}]
  %s3 = inlined_call_operand.vmem [shape: f32[128,128], index: 3, kind: output, shape index: {}]
  %s4 = sld [smem:[#allocation0]]
  $region22: #{generator_forward.50} parent=0
    _
  %s6 = ssub.s32 1, %s4
  %s7 = scalar_select 0, %s6, %s4
  // Predicated region
  $region2: #{generator_forward.50} parent=0 // pred_check
    _
  $region3: #{generator_forward.50} parent=0 // pred_check_branch
    %9 = sbr.rel (0) target = $region5
  $region4: #{generator_forward.50} parent=0 // pred_region
    _
  $region5: #{generator_forward.50} parent=0 // pred_fallthru
    _
  // Predicated region
  $region6: #{generator_forward.50} parent=0 // pred_check
    _
  $region7: #{generator_forward.50} parent=0 // pred_check_branch
    %11 = sbr.rel (0) target = $region9
  $region8: #{generator_forward.50} parent=0 // pred_region
    _
  $region9: #{generator_forward.50} parent=0 // pred_fallthru
    _
  // Predicated region
  $region10: #{generator_forward.50} parent=0 // pred_check
    _
  $region11: #{generator_forward.50} parent=0 // pred_check_branch
    %13 = sbr.rel (0) target = $region13
  $region12: #{generator_forward.50} parent=0 // pred_region
    _
  $region13: #{generator_forward.50} parent=0 // pred_fallthru
    _
  %v15 = vld [vmem:[%s0] sm:$0xf]
  %v16 = vld [vmem:[%s0 + $0x4] sm:$0xf]
  %v17 = vld [vmem:[%s0 + $0x8] sm:$0xf]
  %v18 = vld [vmem:[%s0 + $0xc] sm:$0xf]
  %v19 = vld [vmem:[%s0 + $0x10] sm:$0xf]
  %v20 = vld [vmem:[%s0 + $0x14] sm:$0xf]
  %v21 = vld [vmem:[%s0 + $0x18] sm:$0xf]
  %v22 = vld [vmem:[%s0 + $0x1c] sm:$0xf]
  %v23 = vld [vmem:[%s0 + $0x20] sm:$0xf]
  %v24 = vld [vmem:[%s0 + $0x24] sm:$0xf]
  %v25 = vld [vmem:[%s0 + $0x28] sm:$0xf]
  %v26 = vld [vmem:[%s0 + $0x2c] sm:$0xf]
  %v27 = vld [vmem:[%s0 + $0x30] sm:$0xf]
  %v28 = vld [vmem:[%s0 + $0x34] sm:$0xf]
  %v29 = vld [vmem:[%s0 + $0x38] sm:$0xf]
  %v30 = vld [vmem:[%s0 + $0x3c] sm:$0xf]
  %v31 = vld [vmem:[%s1] sm:$0xf]
  %v32 = vld [vmem:[%s1 + $0x4] sm:$0xf]
  %v33 = vld [vmem:[%s2] sm:$0x1]
  %v35 = vlaneseq
  %v36 = vshrl.u32 %v35, 7
  %v37 = vsub.s32 0, %v36
  %v38 = vrot.slane %v33, %v37
  %v56 = vunpack.c.l.b16 %v15
  %v57 = vunpack.c.l.b16 %v16
  %v58 = vunpack.c.l.b16 %v17
  %v59 = vunpack.c.l.b16 %v18
  %v60 = vunpack.c.l.b16 %v19
  %v61 = vunpack.c.l.b16 %v20
  %v62 = vunpack.c.l.b16 %v21
  %v63 = vunpack.c.l.b16 %v22
  %v64 = vunpack.c.l.b16 %v23
  %v65 = vunpack.c.l.b16 %v24
  %v66 = vunpack.c.l.b16 %v25
  %v67 = vunpack.c.l.b16 %v26
  %v68 = vunpack.c.l.b16 %v27
  %v69 = vunpack.c.l.b16 %v28
  %v70 = vunpack.c.l.b16 %v29
  %v71 = vunpack.c.l.b16 %v30
  %v72 = vpack.c.b16 %v57, %v56
  %v73 = vpack.c.b16 %v59, %v58
  %v74 = vpack.c.b16 %v61, %v60
  %v75 = vpack.c.b16 %v63, %v62
  %v76 = vpack.c.b16 %v65, %v64
  %v77 = vpack.c.b16 %v67, %v66
  %v78 = vpack.c.b16 %v69, %v68
  %v79 = vpack.c.b16 %v71, %v70
  %v82 = vunpack.c.l.b16 %v31
  %v83 = vunpack.c.l.b16 %v32
  %v84 = vpack.c.b16 %v83, %v82
  %vm86 = vcmask 130048
  %v88 = vsel %vm86, %v72, 0
  %v91 = vsel %vm86, %v73, 0
  %v94 = vsel %vm86, %v74, 0
  %v97 = vsel %vm86, %v75, 0
  %v100 = vsel %vm86, %v76, 0
  %v103 = vsel %vm86, %v77, 0
  %v106 = vsel %vm86, %v78, 0
  %v109 = vsel %vm86, %v79, 0
  %111 = vmatprep.subr.bf16.mxu0 0
  %112 = vmatpush1.bf16.msra.mxu0 0
  %113 = vmatprep.subr.bf16.mxu0 0
  %114 = vmatpush1.bf16.msra.mxu0 0
  %115 = vmatprep.subr.bf16.mxu0 0
  %116 = vmatpush1.bf16.msra.mxu0 0
  %117 = vmatprep.subr.bf16.mxu0 0
  %118 = vmatpush1.bf16.msra.mxu0 0
  %119 = vmatprep.subr.bf16.mxu0 0
  %120 = vmatpush1.bf16.msra.mxu0 0
  %121 = vmatprep.subr.bf16.mxu0 0
  %122 = vmatpush1.bf16.msra.mxu0 0
  %123 = vmatprep.subr.bf16.mxu0 0
  %124 = vmatpush1.bf16.msra.mxu0 0
  %125 = vmatprep.subr.bf16.mxu0 0
  %126 = vmatpush1.bf16.msra.mxu0 %v84
  %127 = vmatprep.subr.bf16.mxu0 0
  %128 = vmatpush2.bf16.msra.mxu0 0
  %129 = vmatprep.subr.bf16.mxu0 0
  %130 = vmatpush2.bf16.msra.mxu0 0
  %131 = vmatprep.subr.bf16.mxu0 0
  %132 = vmatpush2.bf16.msra.mxu0 0
  %133 = vmatprep.subr.bf16.mxu0 0
  %134 = vmatpush2.bf16.msra.mxu0 0
  %135 = vmatprep.subr.bf16.mxu0 0
  %136 = vmatpush2.bf16.msra.mxu0 0
  %137 = vmatprep.subr.bf16.mxu0 0
  %138 = vmatpush2.bf16.msra.mxu0 0
  %139 = vmatprep.subr.bf16.mxu0 0
  %140 = vmatpush2.bf16.msra.mxu0 0
  %141 = vmatprep.subr.bf16.mxu0 0
  %142 = vmatpush2.bf16.msra.mxu0 0
  %143 = vmatprep.mubr.bf16.mxu0 0
  %144 = vmatmul.mubr.bf16.gmra.mxu0 %v88
  %v145 = vpop.f32.mrf.mxu0
  %v146 = vadd.f32 %v38, %v145
  %v147 = vpop.f32.mrf.mxu0
  %v148 = vpop.f32.mrf.mxu0
  %v149 = vadd.f32 %v38, %v148
  %v150 = vpop.f32.mrf.mxu0
  %151 = vmatprep.mubr.bf16.mxu0 0
  %152 = vmatmul.mubr.bf16.gmra.mxu0 %v91
  %v153 = vpop.f32.mrf.mxu0
  %v154 = vadd.f32 %v38, %v153
  %v155 = vpop.f32.mrf.mxu0
  %v156 = vpop.f32.mrf.mxu0
  %v157 = vadd.f32 %v38, %v156
  %v158 = vpop.f32.mrf.mxu0
  %159 = vmatprep.mubr.bf16.mxu0 0
  %160 = vmatmul.mubr.bf16.gmra.mxu0 %v94
  %v161 = vpop.f32.mrf.mxu0
  %v162 = vadd.f32 %v38, %v161
  %v163 = vpop.f32.mrf.mxu0
  %v164 = vpop.f32.mrf.mxu0
  %v165 = vadd.f32 %v38, %v164
  %v166 = vpop.f32.mrf.mxu0
  %167 = vmatprep.mubr.bf16.mxu0 0
  %168 = vmatmul.mubr.bf16.gmra.mxu0 %v97
  %v169 = vpop.f32.mrf.mxu0
  %v170 = vadd.f32 %v38, %v169
  %v171 = vpop.f32.mrf.mxu0
  %v172 = vpop.f32.mrf.mxu0
  %v173 = vadd.f32 %v38, %v172
  %v174 = vpop.f32.mrf.mxu0
  %175 = vmatprep.mubr.bf16.mxu0 0
  %176 = vmatmul.mubr.bf16.gmra.mxu0 %v100
  %v177 = vpop.f32.mrf.mxu0
  %v178 = vadd.f32 %v38, %v177
  %v179 = vpop.f32.mrf.mxu0
  %v180 = vpop.f32.mrf.mxu0
  %v181 = vadd.f32 %v38, %v180
  %v182 = vpop.f32.mrf.mxu0
  %183 = vmatprep.mubr.bf16.mxu0 0
  %184 = vmatmul.mubr.bf16.gmra.mxu0 %v103
  %v185 = vpop.f32.mrf.mxu0
  %v186 = vadd.f32 %v38, %v185
  %v187 = vpop.f32.mrf.mxu0
  %v188 = vpop.f32.mrf.mxu0
  %v189 = vadd.f32 %v38, %v188
  %v190 = vpop.f32.mrf.mxu0
  %191 = vmatprep.mubr.bf16.mxu0 0
  %192 = vmatmul.mubr.bf16.gmra.mxu0 %v106
  %v193 = vpop.f32.mrf.mxu0
  %v194 = vadd.f32 %v38, %v193
  %v195 = vpop.f32.mrf.mxu0
  %v196 = vpop.f32.mrf.mxu0
  %v197 = vadd.f32 %v38, %v196
  %v198 = vpop.f32.mrf.mxu0
  %199 = vmatprep.mubr.bf16.mxu0 0
  %200 = vmatmul.mubr.bf16.gmra.mxu0 %v109
  %v201 = vpop.f32.mrf.mxu0
  %v202 = vadd.f32 %v38, %v201
  %v203 = vpop.f32.mrf.mxu0
  %v204 = vpop.f32.mrf.mxu0
  %v205 = vadd.f32 %v38, %v204
  %v206 = vpop.f32.mrf.mxu0
  %207 = vdwg.mxu0
  %208 = vst [vmem:[%s3] sm:$0xff] %v146
  %209 = vst [vmem:[%s3 + $0x8] sm:$0xff] %v149
  %210 = vst [vmem:[%s3 + $0x10] sm:$0xff] %v154
  %211 = vst [vmem:[%s3 + $0x18] sm:$0xff] %v157
  %212 = vst [vmem:[%s3 + $0x20] sm:$0xff] %v162
  %213 = vst [vmem:[%s3 + $0x28] sm:$0xff] %v165
  %214 = vst [vmem:[%s3 + $0x30] sm:$0xff] %v170
  %215 = vst [vmem:[%s3 + $0x38] sm:$0xff] %v173
  %216 = vst [vmem:[%s3 + $0x40] sm:$0xff] %v178
  %217 = vst [vmem:[%s3 + $0x48] sm:$0xff] %v181
  %218 = vst [vmem:[%s3 + $0x50] sm:$0xff] %v186
  %219 = vst [vmem:[%s3 + $0x58] sm:$0xff] %v189
  %220 = vst [vmem:[%s3 + $0x60] sm:$0xff] %v194
  %221 = vst [vmem:[%s3 + $0x68] sm:$0xff] %v197
  %222 = vst [vmem:[%s3 + $0x70] sm:$0xff] %v202
  %223 = vst [vmem:[%s3 + $0x78] sm:$0xff] %v205
  // Predicated region
  $region14: #{generator_forward.50} parent=0 // pred_check
    _
  $region15: #{generator_forward.50} parent=0 // pred_check_branch
    %225 = sbr.rel (0) target = $region17
  $region16: #{generator_forward.50} parent=0 // pred_region
    _
  $region17: #{generator_forward.50} parent=0 // pred_fallthru
    _
  // Predicated region
  $region18: #{generator_forward.50} parent=0 // pred_check
    _
  $region19: #{generator_forward.50} parent=0 // pred_check_branch
    %227 = sbr.rel (0) target = $region21
  $region20: #{generator_forward.50} parent=0 // pred_region
    _
  $region21: #{generator_forward.50} parent=0 // pred_fallthru
    _

// kernel: generator_forward.48
$region0: #{generator_forward.48}
  #allocation0 [shape = 'u32[]', space=smem, size = 0x4, offset = 0x4, fixed_abs, tag = 'smem constant byte address 0x4 - core index']
  #allocation1 [shape = 'u32[144,128]{1,0:T(1,128)}', space=vmem, size = 0x12000, scoped, tag = 'internal scratch']
  %s0 = inlined_call_operand.vmem [shape: bf16[128,288], index: 0, kind: input, shape index: {}]
  %s1 = inlined_call_operand.vmem [shape: bf16[288,128], index: 1, kind: input, shape index: {}]
  %s2 = inlined_call_operand.vmem [shape: f32[1,128], index: 2, kind: input, shape index: {}]
  %s3 = inlined_call_operand.vmem [shape: f32[1,128], index: 3, kind: input, shape index: {}]
  %s4 = inlined_call_operand.vmem [shape: f32[128,128], index: 4, kind: output, shape index: {}]
  %s5 = sld [smem:[#allocation0]]
  $region26: #{generator_forward.48} parent=0
    _
  %s7 = ssub.s32 1, %s5
  %s8 = scalar_select 0, %s7, %s5
  // Predicated region
  $region2: #{generator_forward.48} parent=0 // pred_check
    _
  $region3: #{generator_forward.48} parent=0 // pred_check_branch
    %10 = sbr.rel (0) target = $region5
  $region4: #{generator_forward.48} parent=0 // pred_region
    _
  $region5: #{generator_forward.48} parent=0 // pred_fallthru
    _
  // Predicated region
  $region6: #{generator_forward.48} parent=0 // pred_check
    _
  $region7: #{generator_forward.48} parent=0 // pred_check_branch
    %12 = sbr.rel (0) target = $region9
  $region8: #{generator_forward.48} parent=0 // pred_region
    _
  $region9: #{generator_forward.48} parent=0 // pred_fallthru
    _
  // Predicated region
  $region10: #{generator_forward.48} parent=0 // pred_check
    _
  $region11: #{generator_forward.48} parent=0 // pred_check_branch
    %14 = sbr.rel (0) target = $region13
  $region12: #{generator_forward.48} parent=0 // pred_region
    _
  $region13: #{generator_forward.48} parent=0 // pred_fallthru
    _
  // Predicated region
  $region14: #{generator_forward.48} parent=0 // pred_check
    _
  $region15: #{generator_forward.48} parent=0 // pred_check_branch
    %16 = sbr.rel (0) target = $region17
  $region16: #{generator_forward.48} parent=0 // pred_region
    _
  $region17: #{generator_forward.48} parent=0 // pred_fallthru
    _
  %v18 = vld [vmem:[%s0] sm:$0xff]
  %v19 = vld [vmem:[%s0 + $0x8] sm:$0xf]
  %v20 = vld [vmem:[%s0 + $0xc] sm:$0xff]
  %v21 = vld [vmem:[%s0 + $0x14] sm:$0xf]
  %v22 = vld [vmem:[%s0 + $0x18] sm:$0xff]
  %v23 = vld [vmem:[%s0 + $0x20] sm:$0xf]
  %v24 = vld [vmem:[%s0 + $0x24] sm:$0xff]
  %v25 = vld [vmem:[%s0 + $0x2c] sm:$0xf]
  %v26 = vld [vmem:[%s0 + $0x30] sm:$0xff]
  %v27 = vld [vmem:[%s0 + $0x38] sm:$0xf]
  %v28 = vld [vmem:[%s0 + $0x3c] sm:$0xff]
  %v29 = vld [vmem:[%s0 + $0x44] sm:$0xf]
  %v30 = vld [vmem:[%s0 + $0x48] sm:$0xff]
  %v31 = vld [vmem:[%s0 + $0x50] sm:$0xf]
  %v32 = vld [vmem:[%s0 + $0x54] sm:$0xff]
  %v33 = vld [vmem:[%s0 + $0x5c] sm:$0xf]
  %v34 = vld [vmem:[%s0 + $0x60] sm:$0xff]
  %v35 = vld [vmem:[%s0 + $0x68] sm:$0xf]
  %v36 = vld [vmem:[%s0 + $0x6c] sm:$0xff]
  %v37 = vld [vmem:[%s0 + $0x74] sm:$0xf]
  %v38 = vld [vmem:[%s0 + $0x78] sm:$0xff]
  %v39 = vld [vmem:[%s0 + $0x80] sm:$0xf]
  %v40 = vld [vmem:[%s0 + $0x84] sm:$0xff]
  %v41 = vld [vmem:[%s0 + $0x8c] sm:$0xf]
  %v42 = vld [vmem:[%s0 + $0x90] sm:$0xff]
  %v43 = vld [vmem:[%s0 + $0x98] sm:$0xf]
  %v44 = vld [vmem:[%s0 + $0x9c] sm:$0xff]
  %v45 = vld [vmem:[%s0 + $0xa4] sm:$0xf]
  %v46 = vld [vmem:[%s0 + $0xa8] sm:$0xff]
  %v47 = vld [vmem:[%s0 + $0xb0] sm:$0xf]
  %v48 = vld [vmem:[%s0 + $0xb4] sm:$0xff]
  %v49 = vld [vmem:[%s0 + $0xbc] sm:$0xf]
  %v50 = vld [vmem:[%s1] sm:$0xf]
  %v51 = vld [vmem:[%s1 + $0x4] sm:$0xf]
  %v52 = vld [vmem:[%s1 + $0x8] sm:$0xf]
  %v53 = vld [vmem:[%s1 + $0xc] sm:$0xf]
  %v54 = vld [vmem:[%s1 + $0x10] sm:$0xf]
  %v55 = vld [vmem:[%s1 + $0x14] sm:$0xf]
  %v56 = vld [vmem:[%s1 + $0x18] sm:$0xf]
  %v57 = vld [vmem:[%s1 + $0x1c] sm:$0xf]
  %v58 = vld [vmem:[%s1 + $0x20] sm:$0xf]
  %v59 = vld [vmem:[%s1 + $0x24] sm:$0xf]
  %v60 = vld [vmem:[%s1 + $0x28] sm:$0xf]
  %v61 = vld [vmem:[%s1 + $0x2c] sm:$0xf]
  %v62 = vld [vmem:[%s1 + $0x30] sm:$0xf]
  %v63 = vld [vmem:[%s1 + $0x34] sm:$0xf]
  %v64 = vld [vmem:[%s1 + $0x38] sm:$0xf]
  %v65 = vld [vmem:[%s1 + $0x3c] sm:$0xf]
  %v66 = vld [vmem:[%s1 + $0x40] sm:$0xf]
  %v67 = vld [vmem:[%s1 + $0x44] sm:$0xf]
  %v68 = vld [vmem:[%s1 + $0x48] sm:$0xf]
  %v69 = vld [vmem:[%s1 + $0x4c] sm:$0xf]
  %v70 = vld [vmem:[%s1 + $0x50] sm:$0xf]
  %v71 = vld [vmem:[%s1 + $0x54] sm:$0xf]
  %v72 = vld [vmem:[%s1 + $0x58] sm:$0xf]
  %v73 = vld [vmem:[%s1 + $0x5c] sm:$0xf]
  %v74 = vld [vmem:[%s1 + $0x60] sm:$0xf]
  %v75 = vld [vmem:[%s1 + $0x64] sm:$0xf]
  %v76 = vld [vmem:[%s1 + $0x68] sm:$0xf]
  %v77 = vld [vmem:[%s1 + $0x6c] sm:$0xf]
  %v78 = vld [vmem:[%s1 + $0x70] sm:$0xf]
  %v79 = vld [vmem:[%s1 + $0x74] sm:$0xf]
  %v80 = vld [vmem:[%s1 + $0x78] sm:$0xf]
  %v81 = vld [vmem:[%s1 + $0x7c] sm:$0xf]
  %v82 = vld [vmem:[%s1 + $0x80] sm:$0xf]
  %v83 = vld [vmem:[%s1 + $0x84] sm:$0xf]
  %v84 = vld [vmem:[%s1 + $0x88] sm:$0xf]
  %v85 = vld [vmem:[%s1 + $0x8c] sm:$0xf]
  %v118 = vunpack.c.l.b16 %v18
  %v119 = vunpack.c.h.b16 %v18
  %v120 = vunpack.c.l.b16 %v19
  %v121 = vunpack.c.l.b16 %v20
  %v122 = vunpack.c.h.b16 %v20
  %v123 = vunpack.c.l.b16 %v21
  %v124 = vunpack.c.l.b16 %v22
  %v125 = vunpack.c.h.b16 %v22
  %v126 = vunpack.c.l.b16 %v23
  %v127 = vunpack.c.l.b16 %v24
  %v128 = vunpack.c.h.b16 %v24
  %v129 = vunpack.c.l.b16 %v25
  %v130 = vunpack.c.l.b16 %v26
  %v131 = vunpack.c.h.b16 %v26
  %v132 = vunpack.c.l.b16 %v27
  %v133 = vunpack.c.l.b16 %v28
  %v134 = vunpack.c.h.b16 %v28
  %v135 = vunpack.c.l.b16 %v29
  %v136 = vunpack.c.l.b16 %v30
  %v137 = vunpack.c.h.b16 %v30
  %v138 = vunpack.c.l.b16 %v31
  %v139 = vunpack.c.l.b16 %v32
  %v140 = vunpack.c.h.b16 %v32
  %v141 = vunpack.c.l.b16 %v33
  %v142 = vunpack.c.l.b16 %v34
  %v143 = vunpack.c.h.b16 %v34
  %v144 = vunpack.c.l.b16 %v35
  %v145 = vunpack.c.l.b16 %v36
  %v146 = vunpack.c.h.b16 %v36
  %v147 = vunpack.c.l.b16 %v37
  %v148 = vunpack.c.l.b16 %v38
  %v149 = vunpack.c.h.b16 %v38
  %v150 = vunpack.c.l.b16 %v39
  %v151 = vunpack.c.l.b16 %v40
  %v152 = vunpack.c.h.b16 %v40
  %v153 = vunpack.c.l.b16 %v41
  %v154 = vunpack.c.l.b16 %v42
  %v155 = vunpack.c.h.b16 %v42
  %v156 = vunpack.c.l.b16 %v43
  %v157 = vunpack.c.l.b16 %v44
  %v158 = vunpack.c.h.b16 %v44
  %v159 = vunpack.c.l.b16 %v45
  %v160 = vunpack.c.l.b16 %v46
  %v161 = vunpack.c.h.b16 %v46
  %v162 = vunpack.c.l.b16 %v47
  %v163 = vunpack.c.l.b16 %v48
  %v164 = vunpack.c.h.b16 %v48
  %v165 = vunpack.c.l.b16 %v49
  %v166 = vpack.c.b16 %v121, %v118
  %v167 = vpack.c.b16 %v122, %v119
  %v168 = vpack.c.b16 %v123, %v120
  %v169 = vpack.c.b16 %v127, %v124
  %v170 = vpack.c.b16 %v128, %v125
  %v171 = vpack.c.b16 %v129, %v126
  %v172 = vpack.c.b16 %v133, %v130
  %v173 = vpack.c.b16 %v134, %v131
  %v174 = vpack.c.b16 %v135, %v132
  %v175 = vpack.c.b16 %v139, %v136
  %v176 = vpack.c.b16 %v140, %v137
  %v177 = vpack.c.b16 %v141, %v138
  %v178 = vpack.c.b16 %v145, %v142
  %v179 = vpack.c.b16 %v146, %v143
  %v180 = vpack.c.b16 %v147, %v144
  %v181 = vpack.c.b16 %v151, %v148
  %v182 = vpack.c.b16 %v152, %v149
  %v183 = vpack.c.b16 %v153, %v150
  %v184 = vpack.c.b16 %v157, %v154
  %v185 = vpack.c.b16 %v158, %v155
  %v186 = vpack.c.b16 %v159, %v156
  %v187 = vpack.c.b16 %v163, %v160
  %v188 = vpack.c.b16 %v164, %v161
  %v189 = vpack.c.b16 %v165, %v162
  %v242 = vunpack.c.l.b16 %v50
  %v243 = vunpack.c.l.b16 %v51
  %v244 = vunpack.c.l.b16 %v52
  %v245 = vunpack.c.l.b16 %v53
  %v246 = vunpack.c.l.b16 %v54
  %v247 = vunpack.c.l.b16 %v55
  %v248 = vunpack.c.l.b16 %v56
  %v249 = vunpack.c.l.b16 %v57
  %v250 = vunpack.c.l.b16 %v58
  %v251 = vunpack.c.l.b16 %v59
  %v252 = vunpack.c.l.b16 %v60
  %v253 = vunpack.c.l.b16 %v61
  %v254 = vunpack.c.l.b16 %v62
  %v255 = vunpack.c.l.b16 %v63
  %v256 = vunpack.c.l.b16 %v64
  %v257 = vunpack.c.l.b16 %v65
  %v258 = vunpack.c.l.b16 %v66
  %v259 = vunpack.c.l.b16 %v67
  %v260 = vunpack.c.l.b16 %v68
  %v261 = vunpack.c.l.b16 %v69
  %v262 = vunpack.c.l.b16 %v70
  %v263 = vunpack.c.l.b16 %v71
  %v264 = vunpack.c.l.b16 %v72
  %v265 = vunpack.c.l.b16 %v73
  %v266 = vunpack.c.l.b16 %v74
  %v267 = vunpack.c.l.b16 %v75
  %v268 = vunpack.c.l.b16 %v76
  %v269 = vunpack.c.l.b16 %v77
  %v270 = vunpack.c.l.b16 %v78
  %v271 = vunpack.c.l.b16 %v79
  %v272 = vunpack.c.l.b16 %v80
  %v273 = vunpack.c.l.b16 %v81
  %v274 = vunpack.c.l.b16 %v82
  %v275 = vunpack.c.l.b16 %v83
  %v276 = vunpack.c.l.b16 %v84
  %v277 = vunpack.c.l.b16 %v85
  %v278 = vpack.c.b16 %v243, %v242
  %v279 = vpack.c.b16 %v245, %v244
  %v280 = vpack.c.b16 %v247, %v246
  %v281 = vpack.c.b16 %v249, %v248
  %v282 = vpack.c.b16 %v251, %v250
  %v283 = vpack.c.b16 %v253, %v252
  %v284 = vpack.c.b16 %v255, %v254
  %v285 = vpack.c.b16 %v257, %v256
  %v286 = vpack.c.b16 %v259, %v258
  %v287 = vpack.c.b16 %v261, %v260
  %v288 = vpack.c.b16 %v263, %v262
  %v289 = vpack.c.b16 %v265, %v264
  %v290 = vpack.c.b16 %v267, %v266
  %v291 = vpack.c.b16 %v269, %v268
  %v292 = vpack.c.b16 %v271, %v270
  %v293 = vpack.c.b16 %v273, %v272
  %v294 = vpack.c.b16 %v275, %v274
  %v295 = vpack.c.b16 %v277, %v276
  %vm314 = vcmask 261120
  %v316 = vsel %vm314, %v168, 0
  %v319 = vsel %vm314, %v171, 0
  %v322 = vsel %vm314, %v174, 0
  %v325 = vsel %vm314, %v177, 0
  %v328 = vsel %vm314, %v180, 0
  %v331 = vsel %vm314, %v183, 0
  %v334 = vsel %vm314, %v186, 0
  %v337 = vsel %vm314, %v189, 0
  %339 = vmatprep.subr.bf16.mxu0 0
  %340 = vmatpush1.bf16.msra.mxu0 %v285
  %341 = vmatprep.subr.bf16.mxu0 0
  %342 = vmatpush1.bf16.msra.mxu0 %v284
  %343 = vmatprep.subr.bf16.mxu0 0
  %344 = vmatpush1.bf16.msra.mxu0 %v283
  %345 = vmatprep.subr.bf16.mxu0 0
  %346 = vmatpush1.bf16.msra.mxu0 %v282
  %347 = vmatprep.subr.bf16.mxu0 0
  %348 = vmatpush1.bf16.msra.mxu0 %v281
  %349 = vmatprep.subr.bf16.mxu0 0
  %350 = vmatpush1.bf16.msra.mxu0 %v280
  %351 = vmatprep.subr.bf16.mxu0 0
  %352 = vmatpush1.bf16.msra.mxu0 %v279
  %353 = vmatprep.subr.bf16.mxu0 0
  %354 = vmatpush1.bf16.msra.mxu0 %v278
  %355 = vmatprep.subr.bf16.mxu0 0
  %356 = vmatpush2.bf16.msra.mxu0 %v293
  %357 = vmatprep.subr.bf16.mxu0 0
  %358 = vmatpush2.bf16.msra.mxu0 %v292
  %359 = vmatprep.subr.bf16.mxu0 0
  %360 = vmatpush2.bf16.msra.mxu0 %v291
  %361 = vmatprep.subr.bf16.mxu0 0
  %362 = vmatpush2.bf16.msra.mxu0 %v290
  %363 = vmatprep.subr.bf16.mxu0 0
  %364 = vmatpush2.bf16.msra.mxu0 %v289
  %365 = vmatprep.subr.bf16.mxu0 0
  %366 = vmatpush2.bf16.msra.mxu0 %v288
  %367 = vmatprep.subr.bf16.mxu0 0
  %368 = vmatpush2.bf16.msra.mxu0 %v287
  %369 = vmatprep.subr.bf16.mxu0 0
  %370 = vmatpush2.bf16.msra.mxu0 %v286
  %371 = vmatprep.mubr.bf16.mxu0 %v167
  %372 = vmatmul.mubr.bf16.gmra.mxu0 %v166
  %v373 = vpop.f32.mrf.mxu0
  %v374 = vadd.f32 0.0, %v373
  %v375 = vpop.f32.mrf.mxu0
  %v376 = vpop.f32.mrf.mxu0
  %v377 = vadd.f32 0.0, %v376
  %v378 = vpop.f32.mrf.mxu0
  %379 = vmatprep.mubr.bf16.mxu0 %v170
  %380 = vmatmul.mubr.bf16.gmra.mxu0 %v169
  %v381 = vpop.f32.mrf.mxu0
  %v382 = vadd.f32 0.0, %v381
  %v383 = vpop.f32.mrf.mxu0
  %v384 = vpop.f32.mrf.mxu0
  %v385 = vadd.f32 0.0, %v384
  %v386 = vpop.f32.mrf.mxu0
  %387 = vmatprep.mubr.bf16.mxu0 %v173
  %388 = vmatmul.mubr.bf16.gmra.mxu0 %v172
  %v389 = vpop.f32.mrf.mxu0
  %v390 = vadd.f32 0.0, %v389
  %v391 = vpop.f32.mrf.mxu0
  %v392 = vpop.f32.mrf.mxu0
  %v393 = vadd.f32 0.0, %v392
  %v394 = vpop.f32.mrf.mxu0
  %395 = vmatprep.mubr.bf16.mxu0 %v176
  %396 = vmatmul.mubr.bf16.gmra.mxu0 %v175
  %v397 = vpop.f32.mrf.mxu0
  %v398 = vadd.f32 0.0, %v397
  %v399 = vpop.f32.mrf.mxu0
  %v400 = vpop.f32.mrf.mxu0
  %v401 = vadd.f32 0.0, %v400
  %v402 = vpop.f32.mrf.mxu0
  %403 = vmatprep.mubr.bf16.mxu0 %v179
  %404 = vmatmul.mubr.bf16.gmra.mxu0 %v178
  %v405 = vpop.f32.mrf.mxu0
  %v406 = vadd.f32 0.0, %v405
  %v407 = vpop.f32.mrf.mxu0
  %v408 = vpop.f32.mrf.mxu0
  %v409 = vadd.f32 0.0, %v408
  %v410 = vpop.f32.mrf.mxu0
  %411 = vmatprep.mubr.bf16.mxu0 %v182
  %412 = vmatmul.mubr.bf16.gmra.mxu0 %v181
  %v413 = vpop.f32.mrf.mxu0
  %v414 = vadd.f32 0.0, %v413
  %v415 = vpop.f32.mrf.mxu0
  %v416 = vpop.f32.mrf.mxu0
  %v417 = vadd.f32 0.0, %v416
  %v418 = vpop.f32.mrf.mxu0
  %419 = vmatprep.mubr.bf16.mxu0 %v185
  %420 = vmatmul.mubr.bf16.gmra.mxu0 %v184
  %v421 = vpop.f32.mrf.mxu0
  %v422 = vadd.f32 0.0, %v421
  %v423 = vpop.f32.mrf.mxu0
  %v424 = vpop.f32.mrf.mxu0
  %v425 = vadd.f32 0.0, %v424
  %v426 = vpop.f32.mrf.mxu0
  %427 = vmatprep.mubr.bf16.mxu0 %v188
  %428 = vmatmul.mubr.bf16.gmra.mxu0 %v187
  %v429 = vpop.f32.mrf.mxu0
  %v430 = vadd.f32 0.0, %v429
  %v431 = vpop.f32.mrf.mxu0
  %v432 = vpop.f32.mrf.mxu0
  %v433 = vadd.f32 0.0, %v432
  %v434 = vpop.f32.mrf.mxu0
  %435 = vdwg.mxu0
  %436 = vmatprep.subr.bf16.mxu0 0
  %437 = vmatpush1.bf16.msra.mxu0 0
  %438 = vmatprep.subr.bf16.mxu0 0
  %439 = vmatpush1.bf16.msra.mxu0 0
  %440 = vmatprep.subr.bf16.mxu0 0
  %441 = vmatpush1.bf16.msra.mxu0 0
  %442 = vmatprep.subr.bf16.mxu0 0
  %443 = vmatpush1.bf16.msra.mxu0 0
  %444 = vmatprep.subr.bf16.mxu0 0
  %445 = vmatpush1.bf16.msra.mxu0 0
  %446 = vmatprep.subr.bf16.mxu0 0
  %447 = vmatpush1.bf16.msra.mxu0 0
  %448 = vmatprep.subr.bf16.mxu0 0
  %449 = vmatpush1.bf16.msra.mxu0 %v295
  %450 = vmatprep.subr.bf16.mxu0 0
  %451 = vmatpush1.bf16.msra.mxu0 %v294
  %452 = vmatprep.subr.bf16.mxu0 0
  %453 = vmatpush2.bf16.msra.mxu0 0
  %454 = vmatprep.subr.bf16.mxu0 0
  %455 = vmatpush2.bf16.msra.mxu0 0
  %456 = vmatprep.subr.bf16.mxu0 0
  %457 = vmatpush2.bf16.msra.mxu0 0
  %458 = vmatprep.subr.bf16.mxu0 0
  %459 = vmatpush2.bf16.msra.mxu0 0
  %460 = vmatprep.subr.bf16.mxu0 0
  %461 = vmatpush2.bf16.msra.mxu0 0
  %462 = vmatprep.subr.bf16.mxu0 0
  %463 = vmatpush2.bf16.msra.mxu0 0
  %464 = vmatprep.subr.bf16.mxu0 0
  %465 = vmatpush2.bf16.msra.mxu0 0
  %466 = vmatprep.subr.bf16.mxu0 0
  %467 = vmatpush2.bf16.msra.mxu0 0
  %468 = vmatprep.mubr.bf16.mxu0 0
  %469 = vmatmul.mubr.bf16.gmra.mxu0 %v316
  %v470 = vpop.f32.mrf.mxu0
  %v471 = vadd.f32 %v374, %v470
  %v472 = vpop.f32.mrf.mxu0
  %v473 = vpop.f32.mrf.mxu0
  %v474 = vadd.f32 %v377, %v473
  %v475 = vpop.f32.mrf.mxu0
  %476 = vmatprep.mubr.bf16.mxu0 0
  %477 = vmatmul.mubr.bf16.gmra.mxu0 %v319
  %v478 = vpop.f32.mrf.mxu0
  %v479 = vadd.f32 %v382, %v478
  %v480 = vpop.f32.mrf.mxu0
  %v481 = vpop.f32.mrf.mxu0
  %v482 = vadd.f32 %v385, %v481
  %v483 = vpop.f32.mrf.mxu0
  %484 = vmatprep.mubr.bf16.mxu0 0
  %485 = vmatmul.mubr.bf16.gmra.mxu0 %v322
  %v486 = vpop.f32.mrf.mxu0
  %v487 = vadd.f32 %v390, %v486
  %v488 = vpop.f32.mrf.mxu0
  %v489 = vpop.f32.mrf.mxu0
  %v490 = vadd.f32 %v393, %v489
  %v491 = vpop.f32.mrf.mxu0
  %492 = vmatprep.mubr.bf16.mxu0 0
  %493 = vmatmul.mubr.bf16.gmra.mxu0 %v325
  %v494 = vpop.f32.mrf.mxu0
  %v495 = vadd.f32 %v398, %v494
  %v496 = vpop.f32.mrf.mxu0
  %v497 = vpop.f32.mrf.mxu0
  %v498 = vadd.f32 %v401, %v497
  %v499 = vpop.f32.mrf.mxu0
  %500 = vmatprep.mubr.bf16.mxu0 0
  %501 = vmatmul.mubr.bf16.gmra.mxu0 %v328
  %v502 = vpop.f32.mrf.mxu0
  %v503 = vadd.f32 %v406, %v502
  %v504 = vpop.f32.mrf.mxu0
  %v505 = vpop.f32.mrf.mxu0
  %v506 = vadd.f32 %v409, %v505
  %v507 = vpop.f32.mrf.mxu0
  %508 = vmatprep.mubr.bf16.mxu0 0
  %509 = vmatmul.mubr.bf16.gmra.mxu0 %v331
  %v510 = vpop.f32.mrf.mxu0
  %v511 = vadd.f32 %v414, %v510
  %v512 = vpop.f32.mrf.mxu0
  %v513 = vpop.f32.mrf.mxu0
  %v514 = vadd.f32 %v417, %v513
  %v515 = vpop.f32.mrf.mxu0
  %516 = vmatprep.mubr.bf16.mxu0 0
  %517 = vmatmul.mubr.bf16.gmra.mxu0 %v334
  %v518 = vpop.f32.mrf.mxu0
  %v519 = vadd.f32 %v422, %v518
  %v520 = vpop.f32.mrf.mxu0
  %v521 = vpop.f32.mrf.mxu0
  %v522 = vadd.f32 %v425, %v521
  %v523 = vpop.f32.mrf.mxu0
  %524 = vmatprep.mubr.bf16.mxu0 0
  %525 = vmatmul.mubr.bf16.gmra.mxu0 %v337
  %v526 = vpop.f32.mrf.mxu0
  %v527 = vadd.f32 %v430, %v526
  %v528 = vpop.f32.mrf.mxu0
  %v529 = vpop.f32.mrf.mxu0
  %v530 = vadd.f32 %v433, %v529
  %v531 = vpop.f32.mrf.mxu0
  %532 = vdwg.mxu0
  %v533 = vadd.f32 %v471, %v474
  %v534 = vadd.f32 %v533, %v479
  %v535 = vadd.f32 %v534, %v482
  %v536 = vadd.f32 %v535, %v487
  %v537 = vadd.f32 %v536, %v490
  %v538 = vadd.f32 %v537, %v495
  %v539 = vadd.f32 %v538, %v498
  %v540 = vadd.f32 %v539, %v503
  %v541 = vadd.f32 %v540, %v506
  %v542 = vadd.f32 %v541, %v511
  %v543 = vadd.f32 %v542, %v514
  %v544 = vadd.f32 %v543, %v519
  %v545 = vadd.f32 %v544, %v522
  %v546 = vadd.f32 %v545, %v527
  %v547 = vadd.f32 %v546, %v530
  %v548 = vrot.slane %v547, 4
  %v549 = vadd.f32 %v547, %v548
  %v550 = vrot.slane %v549, 2
  %v551 = vadd.f32 %v549, %v550
  %v552 = vrot.slane %v551, 1
  %v553 = vadd.f32 %v551, %v552
  %v554 = vmul.f32 %v553, 0.0078125
  %v555 = vsub.f32 %v471, %v554
  %v556 = vsub.f32 %v474, %v554
  %v557 = vsub.f32 %v479, %v554
  %v558 = vsub.f32 %v482, %v554
  %v559 = vsub.f32 %v487, %v554
  %v560 = vsub.f32 %v490, %v554
  %v561 = vsub.f32 %v495, %v554
  %v562 = vsub.f32 %v498, %v554
  %v563 = vsub.f32 %v503, %v554
  %v564 = vsub.f32 %v506, %v554
  %v565 = vsub.f32 %v511, %v554
  %v566 = vsub.f32 %v514, %v554
  %v567 = vsub.f32 %v519, %v554
  %v568 = vsub.f32 %v522, %v554
  %v569 = vsub.f32 %v527, %v554
  %v570 = vsub.f32 %v530, %v554
  %v571 = vmul.f32 %v555, %v555
  %v572 = vmul.f32 %v556, %v556
  %v573 = vmul.f32 %v557, %v557
  %v574 = vmul.f32 %v558, %v558
  %v575 = vmul.f32 %v559, %v559
  %v576 = vmul.f32 %v560, %v560
  %v577 = vmul.f32 %v561, %v561
  %v578 = vmul.f32 %v562, %v562
  %v579 = vmul.f32 %v563, %v563
  %v580 = vmul.f32 %v564, %v564
  %v581 = vmul.f32 %v565, %v565
  %v582 = vmul.f32 %v566, %v566
  %v583 = vmul.f32 %v567, %v567
  %v584 = vmul.f32 %v568, %v568
  %v585 = vmul.f32 %v569, %v569
  %v586 = vmul.f32 %v570, %v570
  %v587 = vadd.f32 %v571, %v572
  %v588 = vadd.f32 %v587, %v573
  %v589 = vadd.f32 %v588, %v574
  %v590 = vadd.f32 %v589, %v575
  %v591 = vadd.f32 %v590, %v576
  %v592 = vadd.f32 %v591, %v577
  %v593 = vadd.f32 %v592, %v578
  %v594 = vadd.f32 %v593, %v579
  %v595 = vadd.f32 %v594, %v580
  %v596 = vadd.f32 %v595, %v581
  %v597 = vadd.f32 %v596, %v582
  %v598 = vadd.f32 %v597, %v583
  %v599 = vadd.f32 %v598, %v584
  %v600 = vadd.f32 %v599, %v585
  %v601 = vadd.f32 %v600, %v586
  %v602 = vrot.slane %v601, 4
  %v603 = vadd.f32 %v601, %v602
  %v604 = vrot.slane %v603, 2
  %v605 = vadd.f32 %v603, %v604
  %v606 = vrot.slane %v605, 1
  %v607 = vadd.f32 %v605, %v606
  %v608 = vmul.f32 %v607, 0.0078125
  %v609 = vld [vmem:[%s2] sm:$0x1]
  %v610 = vadd.f32 %v608, 1e-05
  %v611 = vrsqrt.pop %v610
  %v612 = vmul.f32 %v609, %v611
  %v614 = vlaneseq
  %v615 = vshrl.u32 %v614, 7
  %v616 = vsub.s32 0, %v615
  %v617 = vrot.slane %v612, %v616
  %v619 = vmul.f32 %v555, %v617
  %v620 = vmul.f32 %v556, %v617
  %v621 = vmul.f32 %v557, %v617
  %v622 = vmul.f32 %v558, %v617
  %v623 = vmul.f32 %v559, %v617
  %v624 = vmul.f32 %v560, %v617
  %v625 = vmul.f32 %v561, %v617
  %v626 = vmul.f32 %v562, %v617
  %v627 = vmul.f32 %v563, %v617
  %v628 = vmul.f32 %v564, %v617
  %v629 = vmul.f32 %v565, %v617
  %v630 = vmul.f32 %v566, %v617
  %v631 = vmul.f32 %v567, %v617
  %v632 = vmul.f32 %v568, %v617
  %v633 = vmul.f32 %v569, %v617
  %v634 = vmul.f32 %v570, %v617
  %v635 = vld [vmem:[%s3] sm:$0x1]
  %v637 = vlaneseq
  %v638 = vshrl.u32 %v637, 7
  %v639 = vsub.s32 0, %v638
  %v640 = vrot.slane %v635, %v639
  %v642 = vadd.f32 %v619, %v640
  %v643 = vadd.f32 %v620, %v640
  %v644 = vadd.f32 %v621, %v640
  %v645 = vadd.f32 %v622, %v640
  %v646 = vadd.f32 %v623, %v640
  %v647 = vadd.f32 %v624, %v640
  %v648 = vadd.f32 %v625, %v640
  %v649 = vadd.f32 %v626, %v640
  %v650 = vadd.f32 %v627, %v640
  %v651 = vadd.f32 %v628, %v640
  %v652 = vadd.f32 %v629, %v640
  %v653 = vadd.f32 %v630, %v640
  %v654 = vadd.f32 %v631, %v640
  %v655 = vadd.f32 %v632, %v640
  %v656 = vadd.f32 %v633, %v640
  %v657 = vadd.f32 %v634, %v640
  %v658 = vmax.f32 %v642, 0.0
  %v659 = vmax.f32 %v643, 0.0
  %v660 = vmax.f32 %v644, 0.0
  %v661 = vmax.f32 %v645, 0.0
  %v662 = vmax.f32 %v646, 0.0
  %v663 = vmax.f32 %v647, 0.0
  %v664 = vmax.f32 %v648, 0.0
  %v665 = vmax.f32 %v649, 0.0
  %v666 = vmax.f32 %v650, 0.0
  %v667 = vmax.f32 %v651, 0.0
  %v668 = vmax.f32 %v652, 0.0
  %v669 = vmax.f32 %v653, 0.0
  %v670 = vmax.f32 %v654, 0.0
  %v671 = vmax.f32 %v655, 0.0
  %v672 = vmax.f32 %v656, 0.0
  %v673 = vmax.f32 %v657, 0.0
  %674 = vst [vmem:[%s4] sm:$0xff] %v658
  %675 = vst [vmem:[%s4 + $0x8] sm:$0xff] %v659
  %676 = vst [vmem:[%s4 + $0x10] sm:$0xff] %v660
  %677 = vst [vmem:[%s4 + $0x18] sm:$0xff] %v661
  %678 = vst [vmem:[%s4 + $0x20] sm:$0xff] %v662
  %679 = vst [vmem:[%s4 + $0x28] sm:$0xff] %v663
  %680 = vst [vmem:[%s4 + $0x30] sm:$0xff] %v664
  %681 = vst [vmem:[%s4 + $0x38] sm:$0xff] %v665
  %682 = vst [vmem:[%s4 + $0x40] sm:$0xff] %v666
  %683 = vst [vmem:[%s4 + $0x48] sm:$0xff] %v667
  %684 = vst [vmem:[%s4 + $0x50] sm:$0xff] %v668
  %685 = vst [vmem:[%s4 + $0x58] sm:$0xff] %v669
  %686 = vst [vmem:[%s4 + $0x60] sm:$0xff] %v670
  %687 = vst [vmem:[%s4 + $0x68] sm:$0xff] %v671
  %688 = vst [vmem:[%s4 + $0x70] sm:$0xff] %v672
  %689 = vst [vmem:[%s4 + $0x78] sm:$0xff] %v673
  // Predicated region
  $region18: #{generator_forward.48} parent=0 // pred_check
    _
  $region19: #{generator_forward.48} parent=0 // pred_check_branch
    %691 = sbr.rel (0) target = $region21
  $region20: #{generator_forward.48} parent=0 // pred_region
    _
  $region21: #{generator_forward.48} parent=0 // pred_fallthru
    _
  // Predicated region
  $region22: #{generator_forward.48} parent=0 // pred_check
    _
  $region23: #{generator_forward.48} parent=0 // pred_check_branch
    %693 = sbr.rel (0) target = $region25
  $region24: #{generator_forward.48} parent=0 // pred_region
    _
  $region25: #{generator_forward.48} parent=0 // pred_fallthru
    _

// kernel: generator_forward.51
$region0: #{generator_forward.51}
  #allocation0 [shape = 'u32[]', space=smem, size = 0x4, offset = 0x4, fixed_abs, tag = 'smem constant byte address 0x4 - core index']
  #allocation1 [shape = 'u32[144,128]{1,0:T(1,128)}', space=vmem, size = 0x12000, scoped, tag = 'internal scratch']
  %s0 = inlined_call_operand.vmem [shape: bf16[512,144], index: 0, kind: input, shape index: {}]
  %s1 = inlined_call_operand.vmem [shape: bf16[144,128], index: 1, kind: input, shape index: {}]
  %s2 = inlined_call_operand.vmem [shape: f32[1,128], index: 2, kind: input, shape index: {}]
  %s3 = inlined_call_operand.vmem [shape: f32[1,128], index: 3, kind: input, shape index: {}]
  %s4 = inlined_call_operand.vmem [shape: f32[512,128], index: 4, kind: output, shape index: {}]
  %s5 = sld [smem:[#allocation0]]
  $region26: #{generator_forward.51} parent=0
    _
  %s7 = ssub.s32 1, %s5
  %s8 = scalar_select 0, %s7, %s5
  // Predicated region
  $region2: #{generator_forward.51} parent=0 // pred_check
    _
  $region3: #{generator_forward.51} parent=0 // pred_check_branch
    %10 = sbr.rel (0) target = $region5
  $region4: #{generator_forward.51} parent=0 // pred_region
    _
  $region5: #{generator_forward.51} parent=0 // pred_fallthru
    _
  // Predicated region
  $region6: #{generator_forward.51} parent=0 // pred_check
    _
  $region7: #{generator_forward.51} parent=0 // pred_check_branch
    %12 = sbr.rel (0) target = $region9
  $region8: #{generator_forward.51} parent=0 // pred_region
    _
  $region9: #{generator_forward.51} parent=0 // pred_fallthru
    _
  // Predicated region
  $region10: #{generator_forward.51} parent=0 // pred_check
    _
  $region11: #{generator_forward.51} parent=0 // pred_check_branch
    %14 = sbr.rel (0) target = $region13
  $region12: #{generator_forward.51} parent=0 // pred_region
    _
  $region13: #{generator_forward.51} parent=0 // pred_fallthru
    _
  // Predicated region
  $region14: #{generator_forward.51} parent=0 // pred_check
    _
  $region15: #{generator_forward.51} parent=0 // pred_check_branch
    %16 = sbr.rel (0) target = $region17
  $region16: #{generator_forward.51} parent=0 // pred_region
    _
  $region17: #{generator_forward.51} parent=0 // pred_fallthru
    _
  %v18 = vld [vmem:[%s0] sm:$0xff]
  %v19 = vld [vmem:[%s0 + $0x8] sm:$0xff]
  %v20 = vld [vmem:[%s0 + $0x10] sm:$0xff]
  %v21 = vld [vmem:[%s0 + $0x18] sm:$0xff]
  %v22 = vld [vmem:[%s0 + $0x20] sm:$0xff]
  %v23 = vld [vmem:[%s0 + $0x28] sm:$0xff]
  %v24 = vld [vmem:[%s0 + $0x30] sm:$0xff]
  %v25 = vld [vmem:[%s0 + $0x38] sm:$0xff]
  %v26 = vld [vmem:[%s0 + $0x40] sm:$0xff]
  %v27 = vld [vmem:[%s0 + $0x48] sm:$0xff]
  %v28 = vld [vmem:[%s0 + $0x50] sm:$0xff]
  %v29 = vld [vmem:[%s0 + $0x58] sm:$0xff]
  %v30 = vld [vmem:[%s0 + $0x60] sm:$0xff]
  %v31 = vld [vmem:[%s0 + $0x68] sm:$0xff]
  %v32 = vld [vmem:[%s0 + $0x70] sm:$0xff]
  %v33 = vld [vmem:[%s0 + $0x78] sm:$0xff]
  %v34 = vld [vmem:[%s0 + $0x80] sm:$0xff]
  %v35 = vld [vmem:[%s0 + $0x88] sm:$0xff]
  %v36 = vld [vmem:[%s0 + $0x90] sm:$0xff]
  %v37 = vld [vmem:[%s0 + $0x98] sm:$0xff]
  %v38 = vld [vmem:[%s0 + $0xa0] sm:$0xff]
  %v39 = vld [vmem:[%s0 + $0xa8] sm:$0xff]
  %v40 = vld [vmem:[%s0 + $0xb0] sm:$0xff]
  %v41 = vld [vmem:[%s0 + $0xb8] sm:$0xff]
  %v42 = vld [vmem:[%s0 + $0xc0] sm:$0xff]
  %v43 = vld [vmem:[%s0 + $0xc8] sm:$0xff]
  %v44 = vld [vmem:[%s0 + $0xd0] sm:$0xff]
  %v45 = vld [vmem:[%s0 + $0xd8] sm:$0xff]
  %v46 = vld [vmem:[%s0 + $0xe0] sm:$0xff]
  %v47 = vld [vmem:[%s0 + $0xe8] sm:$0xff]
  %v48 = vld [vmem:[%s0 + $0xf0] sm:$0xff]
  %v49 = vld [vmem:[%s0 + $0xf8] sm:$0xff]
  %v50 = vld [vmem:[%s0 + $0x100] sm:$0xff]
  %v51 = vld [vmem:[%s0 + $0x108] sm:$0xff]
  %v52 = vld [vmem:[%s0 + $0x110] sm:$0xff]
  %v53 = vld [vmem:[%s0 + $0x118] sm:$0xff]
  %v54 = vld [vmem:[%s0 + $0x120] sm:$0xff]
  %v55 = vld [vmem:[%s0 + $0x128] sm:$0xff]
  %v56 = vld [vmem:[%s0 + $0x130] sm:$0xff]
  %v57 = vld [vmem:[%s0 + $0x138] sm:$0xff]
  %v58 = vld [vmem:[%s0 + $0x140] sm:$0xff]
  %v59 = vld [vmem:[%s0 + $0x148] sm:$0xff]
  %v60 = vld [vmem:[%s0 + $0x150] sm:$0xff]
  %v61 = vld [vmem:[%s0 + $0x158] sm:$0xff]
  %v62 = vld [vmem:[%s0 + $0x160] sm:$0xff]
  %v63 = vld [vmem:[%s0 + $0x168] sm:$0xff]
  %v64 = vld [vmem:[%s0 + $0x170] sm:$0xff]
  %v65 = vld [vmem:[%s0 + $0x178] sm:$0xff]
  %v66 = vld [vmem:[%s0 + $0x180] sm:$0xff]
  %v67 = vld [vmem:[%s0 + $0x188] sm:$0xff]
  %v68 = vld [vmem:[%s0 + $0x190] sm:$0xff]
  %v69 = vld [vmem:[%s0 + $0x198] sm:$0xff]
  %v70 = vld [vmem:[%s0 + $0x1a0] sm:$0xff]
  %v71 = vld [vmem:[%s0 + $0x1a8] sm:$0xff]
  %v72 = vld [vmem:[%s0 + $0x1b0] sm:$0xff]
  %v73 = vld [vmem:[%s0 + $0x1b8] sm:$0xff]
  %v74 = vld [vmem:[%s0 + $0x1c0] sm:$0xff]
  %v75 = vld [vmem:[%s0 + $0x1c8] sm:$0xff]
  %v76 = vld [vmem:[%s0 + $0x1d0] sm:$0xff]
  %v77 = vld [vmem:[%s0 + $0x1d8] sm:$0xff]
  %v78 = vld [vmem:[%s0 + $0x1e0] sm:$0xff]
  %v79 = vld [vmem:[%s0 + $0x1e8] sm:$0xff]
  %v80 = vld [vmem:[%s0 + $0x1f0] sm:$0xff]
  %v81 = vld [vmem:[%s0 + $0x1f8] sm:$0xff]
  %v82 = vld [vmem:[%s1] sm:$0xf]
  %v83 = vld [vmem:[%s1 + $0x4] sm:$0xf]
  %v84 = vld [vmem:[%s1 + $0x8] sm:$0xf]
  %v85 = vld [vmem:[%s1 + $0xc] sm:$0xf]
  %v86 = vld [vmem:[%s1 + $0x10] sm:$0xf]
  %v87 = vld [vmem:[%s1 + $0x14] sm:$0xf]
  %v88 = vld [vmem:[%s1 + $0x18] sm:$0xf]
  %v89 = vld [vmem:[%s1 + $0x1c] sm:$0xf]
  %v90 = vld [vmem:[%s1 + $0x20] sm:$0xf]
  %v91 = vld [vmem:[%s1 + $0x24] sm:$0xf]
  %v92 = vld [vmem:[%s1 + $0x28] sm:$0xf]
  %v93 = vld [vmem:[%s1 + $0x2c] sm:$0xf]
  %v94 = vld [vmem:[%s1 + $0x30] sm:$0xf]
  %v95 = vld [vmem:[%s1 + $0x34] sm:$0xf]
  %v96 = vld [vmem:[%s1 + $0x38] sm:$0xf]
  %v97 = vld [vmem:[%s1 + $0x3c] sm:$0xf]
  %v98 = vld [vmem:[%s1 + $0x40] sm:$0xf]
  %v99 = vld [vmem:[%s1 + $0x44] sm:$0xf]
  %v164 = vunpack.c.l.b16 %v18
  %v165 = vunpack.c.h.b16 %v18
  %v166 = vunpack.c.l.b16 %v19
  %v167 = vunpack.c.h.b16 %v19
  %v168 = vunpack.c.l.b16 %v20
  %v169 = vunpack.c.h.b16 %v20
  %v170 = vunpack.c.l.b16 %v21
  %v171 = vunpack.c.h.b16 %v21
  %v172 = vunpack.c.l.b16 %v22
  %v173 = vunpack.c.h.b16 %v22
  %v174 = vunpack.c.l.b16 %v23
  %v175 = vunpack.c.h.b16 %v23
  %v176 = vunpack.c.l.b16 %v24
  %v177 = vunpack.c.h.b16 %v24
  %v178 = vunpack.c.l.b16 %v25
  %v179 = vunpack.c.h.b16 %v25
  %v180 = vunpack.c.l.b16 %v26
  %v181 = vunpack.c.h.b16 %v26
  %v182 = vunpack.c.l.b16 %v27
  %v183 = vunpack.c.h.b16 %v27
  %v184 = vunpack.c.l.b16 %v28
  %v185 = vunpack.c.h.b16 %v28
  %v186 = vunpack.c.l.b16 %v29
  %v187 = vunpack.c.h.b16 %v29
  %v188 = vunpack.c.l.b16 %v30
  %v189 = vunpack.c.h.b16 %v30
  %v190 = vunpack.c.l.b16 %v31
  %v191 = vunpack.c.h.b16 %v31
  %v192 = vunpack.c.l.b16 %v32
  %v193 = vunpack.c.h.b16 %v32
  %v194 = vunpack.c.l.b16 %v33
  %v195 = vunpack.c.h.b16 %v33
  %v196 = vunpack.c.l.b16 %v34
  %v197 = vunpack.c.h.b16 %v34
  %v198 = vunpack.c.l.b16 %v35
  %v199 = vunpack.c.h.b16 %v35
  %v200 = vunpack.c.l.b16 %v36
  %v201 = vunpack.c.h.b16 %v36
  %v202 = vunpack.c.l.b16 %v37
  %v203 = vunpack.c.h.b16 %v37
  %v204 = vunpack.c.l.b16 %v38
  %v205 = vunpack.c.h.b16 %v38
  %v206 = vunpack.c.l.b16 %v39
  %v207 = vunpack.c.h.b16 %v39
  %v208 = vunpack.c.l.b16 %v40
  %v209 = vunpack.c.h.b16 %v40
  %v210 = vunpack.c.l.b16 %v41
  %v211 = vunpack.c.h.b16 %v41
  %v212 = vunpack.c.l.b16 %v42
  %v213 = vunpack.c.h.b16 %v42
  %v214 = vunpack.c.l.b16 %v43
  %v215 = vunpack.c.h.b16 %v43
  %v216 = vunpack.c.l.b16 %v44
  %v217 = vunpack.c.h.b16 %v44
  %v218 = vunpack.c.l.b16 %v45
  %v219 = vunpack.c.h.b16 %v45
  %v220 = vunpack.c.l.b16 %v46
  %v221 = vunpack.c.h.b16 %v46
  %v222 = vunpack.c.l.b16 %v47
  %v223 = vunpack.c.h.b16 %v47
  %v224 = vunpack.c.l.b16 %v48
  %v225 = vunpack.c.h.b16 %v48
  %v226 = vunpack.c.l.b16 %v49
  %v227 = vunpack.c.h.b16 %v49
  %v228 = vunpack.c.l.b16 %v50
  %v229 = vunpack.c.h.b16 %v50
  %v230 = vunpack.c.l.b16 %v51
  %v231 = vunpack.c.h.b16 %v51
  %v232 = vunpack.c.l.b16 %v52
  %v233 = vunpack.c.h.b16 %v52
  %v234 = vunpack.c.l.b16 %v53
  %v235 = vunpack.c.h.b16 %v53
  %v236 = vunpack.c.l.b16 %v54
  %v237 = vunpack.c.h.b16 %v54
  %v238 = vunpack.c.l.b16 %v55
  %v239 = vunpack.c.h.b16 %v55
  %v240 = vunpack.c.l.b16 %v56
  %v241 = vunpack.c.h.b16 %v56
  %v242 = vunpack.c.l.b16 %v57
  %v243 = vunpack.c.h.b16 %v57
  %v244 = vunpack.c.l.b16 %v58
  %v245 = vunpack.c.h.b16 %v58
  %v246 = vunpack.c.l.b16 %v59
  %v247 = vunpack.c.h.b16 %v59
  %v248 = vunpack.c.l.b16 %v60
  %v249 = vunpack.c.h.b16 %v60
  %v250 = vunpack.c.l.b16 %v61
  %v251 = vunpack.c.h.b16 %v61
  %v252 = vunpack.c.l.b16 %v62
  %v253 = vunpack.c.h.b16 %v62
  %v254 = vunpack.c.l.b16 %v63
  %v255 = vunpack.c.h.b16 %v63
  %v256 = vunpack.c.l.b16 %v64
  %v257 = vunpack.c.h.b16 %v64
  %v258 = vunpack.c.l.b16 %v65
  %v259 = vunpack.c.h.b16 %v65
  %v260 = vunpack.c.l.b16 %v66
  %v261 = vunpack.c.h.b16 %v66
  %v262 = vunpack.c.l.b16 %v67
  %v263 = vunpack.c.h.b16 %v67
  %v264 = vunpack.c.l.b16 %v68
  %v265 = vunpack.c.h.b16 %v68
  %v266 = vunpack.c.l.b16 %v69
  %v267 = vunpack.c.h.b16 %v69
  %v268 = vunpack.c.l.b16 %v70
  %v269 = vunpack.c.h.b16 %v70
  %v270 = vunpack.c.l.b16 %v71
  %v271 = vunpack.c.h.b16 %v71
  %v272 = vunpack.c.l.b16 %v72
  %v273 = vunpack.c.h.b16 %v72
  %v274 = vunpack.c.l.b16 %v73
  %v275 = vunpack.c.h.b16 %v73
  %v276 = vunpack.c.l.b16 %v74
  %v277 = vunpack.c.h.b16 %v74
  %v278 = vunpack.c.l.b16 %v75
  %v279 = vunpack.c.h.b16 %v75
  %v280 = vunpack.c.l.b16 %v76
  %v281 = vunpack.c.h.b16 %v76
  %v282 = vunpack.c.l.b16 %v77
  %v283 = vunpack.c.h.b16 %v77
  %v284 = vunpack.c.l.b16 %v78
  %v285 = vunpack.c.h.b16 %v78
  %v286 = vunpack.c.l.b16 %v79
  %v287 = vunpack.c.h.b16 %v79
  %v288 = vunpack.c.l.b16 %v80
  %v289 = vunpack.c.h.b16 %v80
  %v290 = vunpack.c.l.b16 %v81
  %v291 = vunpack.c.h.b16 %v81
  %v292 = vpack.c.b16 %v166, %v164
  %v293 = vpack.c.b16 %v167, %v165
  %v294 = vpack.c.b16 %v170, %v168
  %v295 = vpack.c.b16 %v171, %v169
  %v296 = vpack.c.b16 %v174, %v172
  %v297 = vpack.c.b16 %v175, %v173
  %v298 = vpack.c.b16 %v178, %v176
  %v299 = vpack.c.b16 %v179, %v177
  %v300 = vpack.c.b16 %v182, %v180
  %v301 = vpack.c.b16 %v183, %v181
  %v302 = vpack.c.b16 %v186, %v184
  %v303 = vpack.c.b16 %v187, %v185
  %v304 = vpack.c.b16 %v190, %v188
  %v305 = vpack.c.b16 %v191, %v189
  %v306 = vpack.c.b16 %v194, %v192
  %v307 = vpack.c.b16 %v195, %v193
  %v308 = vpack.c.b16 %v198, %v196
  %v309 = vpack.c.b16 %v199, %v197
  %v310 = vpack.c.b16 %v202, %v200
  %v311 = vpack.c.b16 %v203, %v201
  %v312 = vpack.c.b16 %v206, %v204
  %v313 = vpack.c.b16 %v207, %v205
  %v314 = vpack.c.b16 %v210, %v208
  %v315 = vpack.c.b16 %v211, %v209
  %v316 = vpack.c.b16 %v214, %v212
  %v317 = vpack.c.b16 %v215, %v213
  %v318 = vpack.c.b16 %v218, %v216
  %v319 = vpack.c.b16 %v219, %v217
  %v320 = vpack.c.b16 %v222, %v220
  %v321 = vpack.c.b16 %v223, %v221
  %v322 = vpack.c.b16 %v226, %v224
  %v323 = vpack.c.b16 %v227, %v225
  %v324 = vpack.c.b16 %v230, %v228
  %v325 = vpack.c.b16 %v231, %v229
  %v326 = vpack.c.b16 %v234, %v232
  %v327 = vpack.c.b16 %v235, %v233
  %v328 = vpack.c.b16 %v238, %v236
  %v329 = vpack.c.b16 %v239, %v237
  %v330 = vpack.c.b16 %v242, %v240
  %v331 = vpack.c.b16 %v243, %v241
  %v332 = vpack.c.b16 %v246, %v244
  %v333 = vpack.c.b16 %v247, %v245
  %v334 = vpack.c.b16 %v250, %v248
  %v335 = vpack.c.b16 %v251, %v249
  %v336 = vpack.c.b16 %v254, %v252
  %v337 = vpack.c.b16 %v255, %v253
  %v338 = vpack.c.b16 %v258, %v256
  %v339 = vpack.c.b16 %v259, %v257
  %v340 = vpack.c.b16 %v262, %v260
  %v341 = vpack.c.b16 %v263, %v261
  %v342 = vpack.c.b16 %v266, %v264
  %v343 = vpack.c.b16 %v267, %v265
  %v344 = vpack.c.b16 %v270, %v268
  %v345 = vpack.c.b16 %v271, %v269
  %v346 = vpack.c.b16 %v274, %v272
  %v347 = vpack.c.b16 %v275, %v273
  %v348 = vpack.c.b16 %v278, %v276
  %v349 = vpack.c.b16 %v279, %v277
  %v350 = vpack.c.b16 %v282, %v280
  %v351 = vpack.c.b16 %v283, %v281
  %v352 = vpack.c.b16 %v286, %v284
  %v353 = vpack.c.b16 %v287, %v285
  %v354 = vpack.c.b16 %v290, %v288
  %v355 = vpack.c.b16 %v291, %v289
  %v406 = vunpack.c.l.b16 %v82
  %v407 = vunpack.c.l.b16 %v83
  %v408 = vunpack.c.l.b16 %v84
  %v409 = vunpack.c.l.b16 %v85
  %v410 = vunpack.c.l.b16 %v86
  %v411 = vunpack.c.l.b16 %v87
  %v412 = vunpack.c.l.b16 %v88
  %v413 = vunpack.c.l.b16 %v89
  %v414 = vunpack.c.l.b16 %v90
  %v415 = vunpack.c.l.b16 %v91
  %v416 = vunpack.c.l.b16 %v92
  %v417 = vunpack.c.l.b16 %v93
  %v418 = vunpack.c.l.b16 %v94
  %v419 = vunpack.c.l.b16 %v95
  %v420 = vunpack.c.l.b16 %v96
  %v421 = vunpack.c.l.b16 %v97
  %v422 = vunpack.c.l.b16 %v98
  %v423 = vunpack.c.l.b16 %v99
  %v424 = vpack.c.b16 %v407, %v406
  %v425 = vpack.c.b16 %v409, %v408
  %v426 = vpack.c.b16 %v411, %v410
  %v427 = vpack.c.b16 %v413, %v412
  %v428 = vpack.c.b16 %v415, %v414
  %v429 = vpack.c.b16 %v417, %v416
  %v430 = vpack.c.b16 %v419, %v418
  %v431 = vpack.c.b16 %v421, %v420
  %v432 = vpack.c.b16 %v423, %v422
  %vm442 = vcmask 130048
  %v444 = vsel %vm442, %v293, 0
  %v447 = vsel %vm442, %v295, 0
  %v450 = vsel %vm442, %v297, 0
  %v453 = vsel %vm442, %v299, 0
  %v456 = vsel %vm442, %v301, 0
  %v459 = vsel %vm442, %v303, 0
  %v462 = vsel %vm442, %v305, 0
  %v465 = vsel %vm442, %v307, 0
  %v468 = vsel %vm442, %v309, 0
  %v471 = vsel %vm442, %v311, 0
  %v474 = vsel %vm442, %v313, 0
  %v477 = vsel %vm442, %v315, 0
  %v480 = vsel %vm442, %v317, 0
  %v483 = vsel %vm442, %v319, 0
  %v486 = vsel %vm442, %v321, 0
  %v489 = vsel %vm442, %v323, 0
  %v492 = vsel %vm442, %v325, 0
  %v495 = vsel %vm442, %v327, 0
  %v498 = vsel %vm442, %v329, 0
  %v501 = vsel %vm442, %v331, 0
  %v504 = vsel %vm442, %v333, 0
  %v507 = vsel %vm442, %v335, 0
  %v510 = vsel %vm442, %v337, 0
  %v513 = vsel %vm442, %v339, 0
  %v516 = vsel %vm442, %v341, 0
  %v519 = vsel %vm442, %v343, 0
  %v522 = vsel %vm442, %v345, 0
  %v525 = vsel %vm442, %v347, 0
  %v528 = vsel %vm442, %v349, 0
  %v531 = vsel %vm442, %v351, 0
  %v534 = vsel %vm442, %v353, 0
  %v537 = vsel %vm442, %v355, 0
  %539 = vmatprep.subr.bf16.mxu0 0
  %540 = vmatpush1.bf16.msra.mxu0 %v431
  %541 = vmatprep.subr.bf16.mxu0 0
  %542 = vmatpush1.bf16.msra.mxu0 %v430
  %543 = vmatprep.subr.bf16.mxu0 0
  %544 = vmatpush1.bf16.msra.mxu0 %v429
  %545 = vmatprep.subr.bf16.mxu0 0
  %546 = vmatpush1.bf16.msra.mxu0 %v428
  %547 = vmatprep.subr.bf16.mxu0 0
  %548 = vmatpush1.bf16.msra.mxu0 %v427
  %549 = vmatprep.subr.bf16.mxu0 0
  %550 = vmatpush1.bf16.msra.mxu0 %v426
  %551 = vmatprep.subr.bf16.mxu0 0
  %552 = vmatpush1.bf16.msra.mxu0 %v425
  %553 = vmatprep.subr.bf16.mxu0 0
  %554 = vmatpush1.bf16.msra.mxu0 %v424
  %555 = vmatprep.subr.bf16.mxu0 0
  %556 = vmatpush2.bf16.msra.mxu0 0
  %557 = vmatprep.subr.bf16.mxu0 0
  %558 = vmatpush2.bf16.msra.mxu0 0
  %559 = vmatprep.subr.bf16.mxu0 0
  %560 = vmatpush2.bf16.msra.mxu0 0
  %561 = vmatprep.subr.bf16.mxu0 0
  %562 = vmatpush2.bf16.msra.mxu0 0
  %563 = vmatprep.subr.bf16.mxu0 0
  %564 = vmatpush2.bf16.msra.mxu0 0
  %565 = vmatprep.subr.bf16.mxu0 0
  %566 = vmatpush2.bf16.msra.mxu0 0
  %567 = vmatprep.subr.bf16.mxu0 0
  %568 = vmatpush2.bf16.msra.mxu0 0
  %569 = vmatprep.subr.bf16.mxu0 0
  %570 = vmatpush2.bf16.msra.mxu0 %v432
  %571 = vmatprep.mubr.bf16.mxu0 %v444
  %572 = vmatmul.mubr.bf16.gmra.mxu0 %v292
  %v573 = vpop.f32.mrf.mxu0
  %v574 = vadd.f32 0.0, %v573
  %v575 = vpop.f32.mrf.mxu0
  %v576 = vpop.f32.mrf.mxu0
  %v577 = vadd.f32 0.0, %v576
  %v578 = vpop.f32.mrf.mxu0
  %579 = vmatprep.mubr.bf16.mxu0 %v447
  %580 = vmatmul.mubr.bf16.gmra.mxu0 %v294
  %v581 = vpop.f32.mrf.mxu0
  %v582 = vadd.f32 0.0, %v581
  %v583 = vpop.f32.mrf.mxu0
  %v584 = vpop.f32.mrf.mxu0
  %v585 = vadd.f32 0.0, %v584
  %v586 = vpop.f32.mrf.mxu0
  %587 = vmatprep.mubr.bf16.mxu0 %v450
  %588 = vmatmul.mubr.bf16.gmra.mxu0 %v296
  %v589 = vpop.f32.mrf.mxu0
  %v590 = vadd.f32 0.0, %v589
  %v591 = vpop.f32.mrf.mxu0
  %v592 = vpop.f32.mrf.mxu0
  %v593 = vadd.f32 0.0, %v592
  %v594 = vpop.f32.mrf.mxu0
  %595 = vmatprep.mubr.bf16.mxu0 %v453
  %596 = vmatmul.mubr.bf16.gmra.mxu0 %v298
  %v597 = vpop.f32.mrf.mxu0
  %v598 = vadd.f32 0.0, %v597
  %v599 = vpop.f32.mrf.mxu0
  %v600 = vpop.f32.mrf.mxu0
  %v601 = vadd.f32 0.0, %v600
  %v602 = vpop.f32.mrf.mxu0
  %603 = vmatprep.mubr.bf16.mxu0 %v456
  %604 = vmatmul.mubr.bf16.gmra.mxu0 %v300
  %v605 = vpop.f32.mrf.mxu0
  %v606 = vadd.f32 0.0, %v605
  %v607 = vpop.f32.mrf.mxu0
  %v608 = vpop.f32.mrf.mxu0
  %v609 = vadd.f32 0.0, %v608
  %v610 = vpop.f32.mrf.mxu0
  %611 = vmatprep.mubr.bf16.mxu0 %v459
  %612 = vmatmul.mubr.bf16.gmra.mxu0 %v302
  %v613 = vpop.f32.mrf.mxu0
  %v614 = vadd.f32 0.0, %v613
  %v615 = vpop.f32.mrf.mxu0
  %v616 = vpop.f32.mrf.mxu0
  %v617 = vadd.f32 0.0, %v616
  %v618 = vpop.f32.mrf.mxu0
  %619 = vmatprep.mubr.bf16.mxu0 %v462
  %620 = vmatmul.mubr.bf16.gmra.mxu0 %v304
  %v621 = vpop.f32.mrf.mxu0
  %v622 = vadd.f32 0.0, %v621
  %v623 = vpop.f32.mrf.mxu0
  %v624 = vpop.f32.mrf.mxu0
  %v625 = vadd.f32 0.0, %v624
  %v626 = vpop.f32.mrf.mxu0
  %627 = vmatprep.mubr.bf16.mxu0 %v465
  %628 = vmatmul.mubr.bf16.gmra.mxu0 %v306
  %v629 = vpop.f32.mrf.mxu0
  %v630 = vadd.f32 0.0, %v629
  %v631 = vpop.f32.mrf.mxu0
  %v632 = vpop.f32.mrf.mxu0
  %v633 = vadd.f32 0.0, %v632
  %v634 = vpop.f32.mrf.mxu0
  %635 = vmatprep.mubr.bf16.mxu0 %v468
  %636 = vmatmul.mubr.bf16.gmra.mxu0 %v308
  %v637 = vpop.f32.mrf.mxu0
  %v638 = vadd.f32 0.0, %v637
  %v639 = vpop.f32.mrf.mxu0
  %v640 = vpop.f32.mrf.mxu0
  %v641 = vadd.f32 0.0, %v640
  %v642 = vpop.f32.mrf.mxu0
  %643 = vmatprep.mubr.bf16.mxu0 %v471
  %644 = vmatmul.mubr.bf16.gmra.mxu0 %v310
  %v645 = vpop.f32.mrf.mxu0
  %v646 = vadd.f32 0.0, %v645
  %v647 = vpop.f32.mrf.mxu0
  %v648 = vpop.f32.mrf.mxu0
  %v649 = vadd.f32 0.0, %v648
  %v650 = vpop.f32.mrf.mxu0
  %651 = vmatprep.mubr.bf16.mxu0 %v474
  %652 = vmatmul.mubr.bf16.gmra.mxu0 %v312
  %v653 = vpop.f32.mrf.mxu0
  %v654 = vadd.f32 0.0, %v653
  %v655 = vpop.f32.mrf.mxu0
  %v656 = vpop.f32.mrf.mxu0
  %v657 = vadd.f32 0.0, %v656
  %v658 = vpop.f32.mrf.mxu0
  %659 = vmatprep.mubr.bf16.mxu0 %v477
  %660 = vmatmul.mubr.bf16.gmra.mxu0 %v314
  %v661 = vpop.f32.mrf.mxu0
  %v662 = vadd.f32 0.0, %v661
  %v663 = vpop.f32.mrf.mxu0
  %v664 = vpop.f32.mrf.mxu0
  %v665 = vadd.f32 0.0, %v664
  %v666 = vpop.f32.mrf.mxu0
  %667 = vmatprep.mubr.bf16.mxu0 %v480
  %668 = vmatmul.mubr.bf16.gmra.mxu0 %v316
  %v669 = vpop.f32.mrf.mxu0
  %v670 = vadd.f32 0.0, %v669
  %v671 = vpop.f32.mrf.mxu0
  %v672 = vpop.f32.mrf.mxu0
  %v673 = vadd.f32 0.0, %v672
  %v674 = vpop.f32.mrf.mxu0
  %675 = vmatprep.mubr.bf16.mxu0 %v483
  %676 = vmatmul.mubr.bf16.gmra.mxu0 %v318
  %v677 = vpop.f32.mrf.mxu0
  %v678 = vadd.f32 0.0, %v677
  %v679 = vpop.f32.mrf.mxu0
  %v680 = vpop.f32.mrf.mxu0
  %v681 = vadd.f32 0.0, %v680
  %v682 = vpop.f32.mrf.mxu0
  %683 = vmatprep.mubr.bf16.mxu0 %v486
  %684 = vmatmul.mubr.bf16.gmra.mxu0 %v320
  %v685 = vpop.f32.mrf.mxu0
  %v686 = vadd.f32 0.0, %v685
  %v687 = vpop.f32.mrf.mxu0
  %v688 = vpop.f32.mrf.mxu0
  %v689 = vadd.f32 0.0, %v688
  %v690 = vpop.f32.mrf.mxu0
  %691 = vmatprep.mubr.bf16.mxu0 %v489
  %692 = vmatmul.mubr.bf16.gmra.mxu0 %v322
  %v693 = vpop.f32.mrf.mxu0
  %v694 = vadd.f32 0.0, %v693
  %v695 = vpop.f32.mrf.mxu0
  %v696 = vpop.f32.mrf.mxu0
  %v697 = vadd.f32 0.0, %v696
  %v698 = vpop.f32.mrf.mxu0
  %699 = vmatprep.mubr.bf16.mxu0 %v492
  %700 = vmatmul.mubr.bf16.gmra.mxu0 %v324
  %v701 = vpop.f32.mrf.mxu0
  %v702 = vadd.f32 0.0, %v701
  %v703 = vpop.f32.mrf.mxu0
  %v704 = vpop.f32.mrf.mxu0
  %v705 = vadd.f32 0.0, %v704
  %v706 = vpop.f32.mrf.mxu0
  %707 = vmatprep.mubr.bf16.mxu0 %v495
  %708 = vmatmul.mubr.bf16.gmra.mxu0 %v326
  %v709 = vpop.f32.mrf.mxu0
  %v710 = vadd.f32 0.0, %v709
  %v711 = vpop.f32.mrf.mxu0
  %v712 = vpop.f32.mrf.mxu0
  %v713 = vadd.f32 0.0, %v712
  %v714 = vpop.f32.mrf.mxu0
  %715 = vmatprep.mubr.bf16.mxu0 %v498
  %716 = vmatmul.mubr.bf16.gmra.mxu0 %v328
  %v717 = vpop.f32.mrf.mxu0
  %v718 = vadd.f32 0.0, %v717
  %v719 = vpop.f32.mrf.mxu0
  %v720 = vpop.f32.mrf.mxu0
  %v721 = vadd.f32 0.0, %v720
  %v722 = vpop.f32.mrf.mxu0
  %723 = vmatprep.mubr.bf16.mxu0 %v501
  %724 = vmatmul.mubr.bf16.gmra.mxu0 %v330
  %v725 = vpop.f32.mrf.mxu0
  %v726 = vadd.f32 0.0, %v725
  %v727 = vpop.f32.mrf.mxu0
  %v728 = vpop.f32.mrf.mxu0
  %v729 = vadd.f32 0.0, %v728
  %v730 = vpop.f32.mrf.mxu0
  %731 = vmatprep.mubr.bf16.mxu0 %v504
  %732 = vmatmul.mubr.bf16.gmra.mxu0 %v332
  %v733 = vpop.f32.mrf.mxu0
  %v734 = vadd.f32 0.0, %v733
  %v735 = vpop.f32.mrf.mxu0
  %v736 = vpop.f32.mrf.mxu0
  %v737 = vadd.f32 0.0, %v736
  %v738 = vpop.f32.mrf.mxu0
  %739 = vmatprep.mubr.bf16.mxu0 %v507
  %740 = vmatmul.mubr.bf16.gmra.mxu0 %v334
  %v741 = vpop.f32.mrf.mxu0
  %v742 = vadd.f32 0.0, %v741
  %v743 = vpop.f32.mrf.mxu0
  %v744 = vpop.f32.mrf.mxu0
  %v745 = vadd.f32 0.0, %v744
  %v746 = vpop.f32.mrf.mxu0
  %747 = vmatprep.mubr.bf16.mxu0 %v510
  %748 = vmatmul.mubr.bf16.gmra.mxu0 %v336
  %v749 = vpop.f32.mrf.mxu0
  %v750 = vadd.f32 0.0, %v749
  %v751 = vpop.f32.mrf.mxu0
  %v752 = vpop.f32.mrf.mxu0
  %v753 = vadd.f32 0.0, %v752
  %v754 = vpop.f32.mrf.mxu0
  %755 = vmatprep.mubr.bf16.mxu0 %v513
  %756 = vmatmul.mubr.bf16.gmra.mxu0 %v338
  %v757 = vpop.f32.mrf.mxu0
  %v758 = vadd.f32 0.0, %v757
  %v759 = vpop.f32.mrf.mxu0
  %v760 = vpop.f32.mrf.mxu0
  %v761 = vadd.f32 0.0, %v760
  %v762 = vpop.f32.mrf.mxu0
  %763 = vmatprep.mubr.bf16.mxu0 %v516
  %764 = vmatmul.mubr.bf16.gmra.mxu0 %v340
  %v765 = vpop.f32.mrf.mxu0
  %v766 = vadd.f32 0.0, %v765
  %v767 = vpop.f32.mrf.mxu0
  %v768 = vpop.f32.mrf.mxu0
  %v769 = vadd.f32 0.0, %v768
  %v770 = vpop.f32.mrf.mxu0
  %771 = vmatprep.mubr.bf16.mxu0 %v519
  %772 = vmatmul.mubr.bf16.gmra.mxu0 %v342
  %v773 = vpop.f32.mrf.mxu0
  %v774 = vadd.f32 0.0, %v773
  %v775 = vpop.f32.mrf.mxu0
  %v776 = vpop.f32.mrf.mxu0
  %v777 = vadd.f32 0.0, %v776
  %v778 = vpop.f32.mrf.mxu0
  %779 = vmatprep.mubr.bf16.mxu0 %v522
  %780 = vmatmul.mubr.bf16.gmra.mxu0 %v344
  %v781 = vpop.f32.mrf.mxu0
  %v782 = vadd.f32 0.0, %v781
  %v783 = vpop.f32.mrf.mxu0
  %v784 = vpop.f32.mrf.mxu0
  %v785 = vadd.f32 0.0, %v784
  %v786 = vpop.f32.mrf.mxu0
  %787 = vmatprep.mubr.bf16.mxu0 %v525
  %788 = vmatmul.mubr.bf16.gmra.mxu0 %v346
  %v789 = vpop.f32.mrf.mxu0
  %v790 = vadd.f32 0.0, %v789
  %v791 = vpop.f32.mrf.mxu0
  %v792 = vpop.f32.mrf.mxu0
  %v793 = vadd.f32 0.0, %v792
  %v794 = vpop.f32.mrf.mxu0
  %795 = vmatprep.mubr.bf16.mxu0 %v528
  %796 = vmatmul.mubr.bf16.gmra.mxu0 %v348
  %v797 = vpop.f32.mrf.mxu0
  %v798 = vadd.f32 0.0, %v797
  %v799 = vpop.f32.mrf.mxu0
  %v800 = vpop.f32.mrf.mxu0
  %v801 = vadd.f32 0.0, %v800
  %v802 = vpop.f32.mrf.mxu0
  %803 = vmatprep.mubr.bf16.mxu0 %v531
  %804 = vmatmul.mubr.bf16.gmra.mxu0 %v350
  %v805 = vpop.f32.mrf.mxu0
  %v806 = vadd.f32 0.0, %v805
  %v807 = vpop.f32.mrf.mxu0
  %v808 = vpop.f32.mrf.mxu0
  %v809 = vadd.f32 0.0, %v808
  %v810 = vpop.f32.mrf.mxu0
  %811 = vmatprep.mubr.bf16.mxu0 %v534
  %812 = vmatmul.mubr.bf16.gmra.mxu0 %v352
  %v813 = vpop.f32.mrf.mxu0
  %v814 = vadd.f32 0.0, %v813
  %v815 = vpop.f32.mrf.mxu0
  %v816 = vpop.f32.mrf.mxu0
  %v817 = vadd.f32 0.0, %v816
  %v818 = vpop.f32.mrf.mxu0
  %819 = vmatprep.mubr.bf16.mxu0 %v537
  %820 = vmatmul.mubr.bf16.gmra.mxu0 %v354
  %v821 = vpop.f32.mrf.mxu0
  %v822 = vadd.f32 0.0, %v821
  %v823 = vpop.f32.mrf.mxu0
  %v824 = vpop.f32.mrf.mxu0
  %v825 = vadd.f32 0.0, %v824
  %v826 = vpop.f32.mrf.mxu0
  %827 = vdwg.mxu0
  %v828 = vadd.f32 %v574, %v577
  %v829 = vadd.f32 %v828, %v582
  %v830 = vadd.f32 %v829, %v585
  %v831 = vadd.f32 %v830, %v590
  %v832 = vadd.f32 %v831, %v593
  %v833 = vadd.f32 %v832, %v598
  %v834 = vadd.f32 %v833, %v601
  %v835 = vadd.f32 %v834, %v606
  %v836 = vadd.f32 %v835, %v609
  %v837 = vadd.f32 %v836, %v614
  %v838 = vadd.f32 %v837, %v617
  %v839 = vadd.f32 %v838, %v622
  %v840 = vadd.f32 %v839, %v625
  %v841 = vadd.f32 %v840, %v630
  %v842 = vadd.f32 %v841, %v633
  %v843 = vadd.f32 %v842, %v638
  %v844 = vadd.f32 %v843, %v641
  %v845 = vadd.f32 %v844, %v646
  %v846 = vadd.f32 %v845, %v649
  %v847 = vadd.f32 %v846, %v654
  %v848 = vadd.f32 %v847, %v657
  %v849 = vadd.f32 %v848, %v662
  %v850 = vadd.f32 %v849, %v665
  %v851 = vadd.f32 %v850, %v670
  %v852 = vadd.f32 %v851, %v673
  %v853 = vadd.f32 %v852, %v678
  %v854 = vadd.f32 %v853, %v681
  %v855 = vadd.f32 %v854, %v686
  %v856 = vadd.f32 %v855, %v689
  %v857 = vadd.f32 %v856, %v694
  %v858 = vadd.f32 %v857, %v697
  %v859 = vadd.f32 %v858, %v702
  %v860 = vadd.f32 %v859, %v705
  %v861 = vadd.f32 %v860, %v710
  %v862 = vadd.f32 %v861, %v713
  %v863 = vadd.f32 %v862, %v718
  %v864 = vadd.f32 %v863, %v721
  %v865 = vadd.f32 %v864, %v726
  %v866 = vadd.f32 %v865, %v729
  %v867 = vadd.f32 %v866, %v734
  %v868 = vadd.f32 %v867, %v737
  %v869 = vadd.f32 %v868, %v742
  %v870 = vadd.f32 %v869, %v745
  %v871 = vadd.f32 %v870, %v750
  %v872 = vadd.f32 %v871, %v753
  %v873 = vadd.f32 %v872, %v758
  %v874 = vadd.f32 %v873, %v761
  %v875 = vadd.f32 %v874, %v766
  %v876 = vadd.f32 %v875, %v769
  %v877 = vadd.f32 %v876, %v774
  %v878 = vadd.f32 %v877, %v777
  %v879 = vadd.f32 %v878, %v782
  %v880 = vadd.f32 %v879, %v785
  %v881 = vadd.f32 %v880, %v790
  %v882 = vadd.f32 %v881, %v793
  %v883 = vadd.f32 %v882, %v798
  %v884 = vadd.f32 %v883, %v801
  %v885 = vadd.f32 %v884, %v806
  %v886 = vadd.f32 %v885, %v809
  %v887 = vadd.f32 %v886, %v814
  %v888 = vadd.f32 %v887, %v817
  %v889 = vadd.f32 %v888, %v822
  %v890 = vadd.f32 %v889, %v825
  %v891 = vrot.slane %v890, 4
  %v892 = vadd.f32 %v890, %v891
  %v893 = vrot.slane %v892, 2
  %v894 = vadd.f32 %v892, %v893
  %v895 = vrot.slane %v894, 1
  %v896 = vadd.f32 %v894, %v895
  %v897 = vmul.f32 %v896, 0.001953125
  %v898 = vsub.f32 %v574, %v897
  %v899 = vsub.f32 %v577, %v897
  %v900 = vsub.f32 %v582, %v897
  %v901 = vsub.f32 %v585, %v897
  %v902 = vsub.f32 %v590, %v897
  %v903 = vsub.f32 %v593, %v897
  %v904 = vsub.f32 %v598, %v897
  %v905 = vsub.f32 %v601, %v897
  %v906 = vsub.f32 %v606, %v897
  %v907 = vsub.f32 %v609, %v897
  %v908 = vsub.f32 %v614, %v897
  %v909 = vsub.f32 %v617, %v897
  %v910 = vsub.f32 %v622, %v897
  %v911 = vsub.f32 %v625, %v897
  %v912 = vsub.f32 %v630, %v897
  %v913 = vsub.f32 %v633, %v897
  %v914 = vsub.f32 %v638, %v897
  %v915 = vsub.f32 %v641, %v897
  %v916 = vsub.f32 %v646, %v897
  %v917 = vsub.f32 %v649, %v897
  %v918 = vsub.f32 %v654, %v897
  %v919 = vsub.f32 %v657, %v897
  %v920 = vsub.f32 %v662, %v897
  %v921 = vsub.f32 %v665, %v897
  %v922 = vsub.f32 %v670, %v897
  %v923 = vsub.f32 %v673, %v897
  %v924 = vsub.f32 %v678, %v897
  %v925 = vsub.f32 %v681, %v897
  %v926 = vsub.f32 %v686, %v897
  %v927 = vsub.f32 %v689, %v897
  %v928 = vsub.f32 %v694, %v897
  %v929 = vsub.f32 %v697, %v897
  %v930 = vsub.f32 %v702, %v897
  %v931 = vsub.f32 %v705, %v897
  %v932 = vsub.f32 %v710, %v897
  %v933 = vsub.f32 %v713, %v897
  %v934 = vsub.f32 %v718, %v897
  %v935 = vsub.f32 %v721, %v897
  %v936 = vsub.f32 %v726, %v897
  %v937 = vsub.f32 %v729, %v897
  %v938 = vsub.f32 %v734, %v897
  %v939 = vsub.f32 %v737, %v897
  %v940 = vsub.f32 %v742, %v897
  %v941 = vsub.f32 %v745, %v897
  %v942 = vsub.f32 %v750, %v897
  %v943 = vsub.f32 %v753, %v897
  %v944 = vsub.f32 %v758, %v897
  %v945 = vsub.f32 %v761, %v897
  %v946 = vsub.f32 %v766, %v897
  %v947 = vsub.f32 %v769, %v897
  %v948 = vsub.f32 %v774, %v897
  %v949 = vsub.f32 %v777, %v897
  %v950 = vsub.f32 %v782, %v897
  %v951 = vsub.f32 %v785, %v897
  %v952 = vsub.f32 %v790, %v897
  %v953 = vsub.f32 %v793, %v897
  %v954 = vsub.f32 %v798, %v897
  %v955 = vsub.f32 %v801, %v897
  %v956 = vsub.f32 %v806, %v897
  %v957 = vsub.f32 %v809, %v897
  %v958 = vsub.f32 %v814, %v897
  %v959 = vsub.f32 %v817, %v897
  %v960 = vsub.f32 %v822, %v897
  %v961 = vsub.f32 %v825, %v897
  %v962 = vmul.f32 %v898, %v898
  %v963 = vmul.f32 %v899, %v899
  %v964 = vmul.f32 %v900, %v900
  %v965 = vmul.f32 %v901, %v901
  %v966 = vmul.f32 %v902, %v902
  %v967 = vmul.f32 %v903, %v903
  %v968 = vmul.f32 %v904, %v904
  %v969 = vmul.f32 %v905, %v905
  %v970 = vmul.f32 %v906, %v906
  %v971 = vmul.f32 %v907, %v907
  %v972 = vmul.f32 %v908, %v908
  %v973 = vmul.f32 %v909, %v909
  %v974 = vmul.f32 %v910, %v910
  %v975 = vmul.f32 %v911, %v911
  %v976 = vmul.f32 %v912, %v912
  %v977 = vmul.f32 %v913, %v913
  %v978 = vmul.f32 %v914, %v914
  %v979 = vmul.f32 %v915, %v915
  %v980 = vmul.f32 %v916, %v916
  %v981 = vmul.f32 %v917, %v917
  %v982 = vmul.f32 %v918, %v918
  %v983 = vmul.f32 %v919, %v919
  %v984 = vmul.f32 %v920, %v920
  %v985 = vmul.f32 %v921, %v921
  %v986 = vmul.f32 %v922, %v922
  %v987 = vmul.f32 %v923, %v923
  %v988 = vmul.f32 %v924, %v924
  %v989 = vmul.f32 %v925, %v925
  %v990 = vmul.f32 %v926, %v926
  %v991 = vmul.f32 %v927, %v927
  %v992 = vmul.f32 %v928, %v928
  %v993 = vmul.f32 %v929, %v929
  %v994 = vmul.f32 %v930, %v930
  %v995 = vmul.f32 %v931, %v931
  %v996 = vmul.f32 %v932, %v932
  %v997 = vmul.f32 %v933, %v933
  %v998 = vmul.f32 %v934, %v934
  %v999 = vmul.f32 %v935, %v935
  %v1000 = vmul.f32 %v936, %v936
  %v1001 = vmul.f32 %v937, %v937
  %v1002 = vmul.f32 %v938, %v938
  %v1003 = vmul.f32 %v939, %v939
  %v1004 = vmul.f32 %v940, %v940
  %v1005 = vmul.f32 %v941, %v941
  %v1006 = vmul.f32 %v942, %v942
  %v1007 = vmul.f32 %v943, %v943
  %v1008 = vmul.f32 %v944, %v944
  %v1009 = vmul.f32 %v945, %v945
  %v1010 = vmul.f32 %v946, %v946
  %v1011 = vmul.f32 %v947, %v947
  %v1012 = vmul.f32 %v948, %v948
  %v1013 = vmul.f32 %v949, %v949
  %v1014 = vmul.f32 %v950, %v950
  %v1015 = vmul.f32 %v951, %v951
  %v1016 = vmul.f32 %v952, %v952
  %v1017 = vmul.f32 %v953, %v953
  %v1018 = vmul.f32 %v954, %v954
  %v1019 = vmul.f32 %v955, %v955
  %v1020 = vmul.f32 %v956, %v956
  %v1021 = vmul.f32 %v957, %v957
  %v1022 = vmul.f32 %v958, %v958
  %v1023 = vmul.f32 %v959, %v959
  %v1024 = vmul.f32 %v960, %v960
  %v1025 = vmul.f32 %v961, %v961
  %v1026 = vadd.f32 %v962, %v963
  %v1027 = vadd.f32 %v1026, %v964
  %v1028 = vadd.f32 %v1027, %v965
  %v1029 = vadd.f32 %v1028, %v966
  %v1030 = vadd.f32 %v1029, %v967
  %v1031 = vadd.f32 %v1030, %v968
  %v1032 = vadd.f32 %v1031, %v969
  %v1033 = vadd.f32 %v1032, %v970
  %v1034 = vadd.f32 %v1033, %v971
  %v1035 = vadd.f32 %v1034, %v972
  %v1036 = vadd.f32 %v1035, %v973
  %v1037 = vadd.f32 %v1036, %v974
  %v1038 = vadd.f32 %v1037, %v975
  %v1039 = vadd.f32 %v1038, %v976
  %v1040 = vadd.f32 %v1039, %v977
  %v1041 = vadd.f32 %v1040, %v978
  %v1042 = vadd.f32 %v1041, %v979
  %v1043 = vadd.f32 %v1042, %v980
  %v1044 = vadd.f32 %v1043, %v981
  %v1045 = vadd.f32 %v1044, %v982
  %v1046 = vadd.f32 %v1045, %v983
  %v1047 = vadd.f32 %v1046, %v984
  %v1048 = vadd.f32 %v1047, %v985
  %v1049 = vadd.f32 %v1048, %v986
  %v1050 = vadd.f32 %v1049, %v987
  %v1051 = vadd.f32 %v1050, %v988
  %v1052 = vadd.f32 %v1051, %v989
  %v1053 = vadd.f32 %v1052, %v990
  %v1054 = vadd.f32 %v1053, %v991
  %v1055 = vadd.f32 %v1054, %v992
  %v1056 = vadd.f32 %v1055, %v993
  %v1057 = vadd.f32 %v1056, %v994
  %v1058 = vadd.f32 %v1057, %v995
  %v1059 = vadd.f32 %v1058, %v996
  %v1060 = vadd.f32 %v1059, %v997
  %v1061 = vadd.f32 %v1060, %v998
  %v1062 = vadd.f32 %v1061, %v999
  %v1063 = vadd.f32 %v1062, %v1000
  %v1064 = vadd.f32 %v1063, %v1001
  %v1065 = vadd.f32 %v1064, %v1002
  %v1066 = vadd.f32 %v1065, %v1003
  %v1067 = vadd.f32 %v1066, %v1004
  %v1068 = vadd.f32 %v1067, %v1005
  %v1069 = vadd.f32 %v1068, %v1006
  %v1070 = vadd.f32 %v1069, %v1007
  %v1071 = vadd.f32 %v1070, %v1008
  %v1072 = vadd.f32 %v1071, %v1009
  %v1073 = vadd.f32 %v1072, %v1010
  %v1074 = vadd.f32 %v1073, %v1011
  %v1075 = vadd.f32 %v1074, %v1012
  %v1076 = vadd.f32 %v1075, %v1013
  %v1077 = vadd.f32 %v1076, %v1014
  %v1078 = vadd.f32 %v1077, %v1015
  %v1079 = vadd.f32 %v1078, %v1016
  %v1080 = vadd.f32 %v1079, %v1017
  %v1081 = vadd.f32 %v1080, %v1018
  %v1082 = vadd.f32 %v1081, %v1019
  %v1083 = vadd.f32 %v1082, %v1020
  %v1084 = vadd.f32 %v1083, %v1021
  %v1085 = vadd.f32 %v1084, %v1022
  %v1086 = vadd.f32 %v1085, %v1023
  %v1087 = vadd.f32 %v1086, %v1024
  %v1088 = vadd.f32 %v1087, %v1025
  %v1089 = vrot.slane %v1088, 4
  %v1090 = vadd.f32 %v1088, %v1089
  %v1091 = vrot.slane %v1090, 2
  %v1092 = vadd.f32 %v1090, %v1091
  %v1093 = vrot.slane %v1092, 1
  %v1094 = vadd.f32 %v1092, %v1093
  %v1095 = vmul.f32 %v1094, 0.001953125
  %v1096 = vld [vmem:[%s2] sm:$0x1]
  %v1097 = vadd.f32 %v1095, 1e-05
  %v1098 = vrsqrt.pop %v1097
  %v1099 = vmul.f32 %v1096, %v1098
  %v1101 = vlaneseq
  %v1102 = vshrl.u32 %v1101, 7
  %v1103 = vsub.s32 0, %v1102
  %v1104 = vrot.slane %v1099, %v1103
  %v1106 = vmul.f32 %v898, %v1104
  %v1107 = vmul.f32 %v899, %v1104
  %v1108 = vmul.f32 %v900, %v1104
  %v1109 = vmul.f32 %v901, %v1104
  %v1110 = vmul.f32 %v902, %v1104
  %v1111 = vmul.f32 %v903, %v1104
  %v1112 = vmul.f32 %v904, %v1104
  %v1113 = vmul.f32 %v905, %v1104
  %v1114 = vmul.f32 %v906, %v1104
  %v1115 = vmul.f32 %v907, %v1104
  %v1116 = vmul.f32 %v908, %v1104
  %v1117 = vmul.f32 %v909, %v1104
  %v1118 = vmul.f32 %v910, %v1104
  %v1119 = vmul.f32 %v911, %v1104
  %v1120 = vmul.f32 %v912, %v1104
  %v1121 = vmul.f32 %v913, %v1104
  %v1122 = vmul.f32 %v914, %v1104
  %v1123 = vmul.f32 %v915, %v1104
  %v1124 = vmul.f32 %v916, %v1104
  %v1125 = vmul.f32 %v917, %v1104
  %v1126 = vmul.f32 %v918, %v1104
  %v1127 = vmul.f32 %v919, %v1104
  %v1128 = vmul.f32 %v920, %v1104
  %v1129 = vmul.f32 %v921, %v1104
  %v1130 = vmul.f32 %v922, %v1104
  %v1131 = vmul.f32 %v923, %v1104
  %v1132 = vmul.f32 %v924, %v1104
  %v1133 = vmul.f32 %v925, %v1104
  %v1134 = vmul.f32 %v926, %v1104
  %v1135 = vmul.f32 %v927, %v1104
  %v1136 = vmul.f32 %v928, %v1104
  %v1137 = vmul.f32 %v929, %v1104
  %v1138 = vmul.f32 %v930, %v1104
  %v1139 = vmul.f32 %v931, %v1104
  %v1140 = vmul.f32 %v932, %v1104
  %v1141 = vmul.f32 %v933, %v1104
  %v1142 = vmul.f32 %v934, %v1104
  %v1143 = vmul.f32 %v935, %v1104
  %v1144 = vmul.f32 %v936, %v1104
  %v1145 = vmul.f32 %v937, %v1104
  %v1146 = vmul.f32 %v938, %v1104
  %v1147 = vmul.f32 %v939, %v1104
  %v1148 = vmul.f32 %v940, %v1104
  %v1149 = vmul.f32 %v941, %v1104
  %v1150 = vmul.f32 %v942, %v1104
  %v1151 = vmul.f32 %v943, %v1104
  %v1152 = vmul.f32 %v944, %v1104
  %v1153 = vmul.f32 %v945, %v1104
  %v1154 = vmul.f32 %v946, %v1104
  %v1155 = vmul.f32 %v947, %v1104
  %v1156 = vmul.f32 %v948, %v1104
  %v1157 = vmul.f32 %v949, %v1104
  %v1158 = vmul.f32 %v950, %v1104
  %v1159 = vmul.f32 %v951, %v1104
  %v1160 = vmul.f32 %v952, %v1104
  %v1161 = vmul.f32 %v953, %v1104
  %v1162 = vmul.f32 %v954, %v1104
  %v1163 = vmul.f32 %v955, %v1104
  %v1164 = vmul.f32 %v956, %v1104
  %v1165 = vmul.f32 %v957, %v1104
  %v1166 = vmul.f32 %v958, %v1104
  %v1167 = vmul.f32 %v959, %v1104
  %v1168 = vmul.f32 %v960, %v1104
  %v1169 = vmul.f32 %v961, %v1104
  %v1170 = vld [vmem:[%s3] sm:$0x1]
  %v1172 = vlaneseq
  %v1173 = vshrl.u32 %v1172, 7
  %v1174 = vsub.s32 0, %v1173
  %v1175 = vrot.slane %v1170, %v1174
  %v1177 = vadd.f32 %v1106, %v1175
  %v1178 = vadd.f32 %v1107, %v1175
  %v1179 = vadd.f32 %v1108, %v1175
  %v1180 = vadd.f32 %v1109, %v1175
  %v1181 = vadd.f32 %v1110, %v1175
  %v1182 = vadd.f32 %v1111, %v1175
  %v1183 = vadd.f32 %v1112, %v1175
  %v1184 = vadd.f32 %v1113, %v1175
  %v1185 = vadd.f32 %v1114, %v1175
  %v1186 = vadd.f32 %v1115, %v1175
  %v1187 = vadd.f32 %v1116, %v1175
  %v1188 = vadd.f32 %v1117, %v1175
  %v1189 = vadd.f32 %v1118, %v1175
  %v1190 = vadd.f32 %v1119, %v1175
  %v1191 = vadd.f32 %v1120, %v1175
  %v1192 = vadd.f32 %v1121, %v1175
  %v1193 = vadd.f32 %v1122, %v1175
  %v1194 = vadd.f32 %v1123, %v1175
  %v1195 = vadd.f32 %v1124, %v1175
  %v1196 = vadd.f32 %v1125, %v1175
  %v1197 = vadd.f32 %v1126, %v1175
  %v1198 = vadd.f32 %v1127, %v1175
  %v1199 = vadd.f32 %v1128, %v1175
  %v1200 = vadd.f32 %v1129, %v1175
  %v1201 = vadd.f32 %v1130, %v1175
  %v1202 = vadd.f32 %v1131, %v1175
  %v1203 = vadd.f32 %v1132, %v1175
  %v1204 = vadd.f32 %v1133, %v1175
  %v1205 = vadd.f32 %v1134, %v1175
  %v1206 = vadd.f32 %v1135, %v1175
  %v1207 = vadd.f32 %v1136, %v1175
  %v1208 = vadd.f32 %v1137, %v1175
  %v1209 = vadd.f32 %v1138, %v1175
  %v1210 = vadd.f32 %v1139, %v1175
  %v1211 = vadd.f32 %v1140, %v1175
  %v1212 = vadd.f32 %v1141, %v1175
  %v1213 = vadd.f32 %v1142, %v1175
  %v1214 = vadd.f32 %v1143, %v1175
  %v1215 = vadd.f32 %v1144, %v1175
  %v1216 = vadd.f32 %v1145, %v1175
  %v1217 = vadd.f32 %v1146, %v1175
  %v1218 = vadd.f32 %v1147, %v1175
  %v1219 = vadd.f32 %v1148, %v1175
  %v1220 = vadd.f32 %v1149, %v1175
  %v1221 = vadd.f32 %v1150, %v1175
  %v1222 = vadd.f32 %v1151, %v1175
  %v1223 = vadd.f32 %v1152, %v1175
  %v1224 = vadd.f32 %v1153, %v1175
  %v1225 = vadd.f32 %v1154, %v1175
  %v1226 = vadd.f32 %v1155, %v1175
  %v1227 = vadd.f32 %v1156, %v1175
  %v1228 = vadd.f32 %v1157, %v1175
  %v1229 = vadd.f32 %v1158, %v1175
  %v1230 = vadd.f32 %v1159, %v1175
  %v1231 = vadd.f32 %v1160, %v1175
  %v1232 = vadd.f32 %v1161, %v1175
  %v1233 = vadd.f32 %v1162, %v1175
  %v1234 = vadd.f32 %v1163, %v1175
  %v1235 = vadd.f32 %v1164, %v1175
  %v1236 = vadd.f32 %v1165, %v1175
  %v1237 = vadd.f32 %v1166, %v1175
  %v1238 = vadd.f32 %v1167, %v1175
  %v1239 = vadd.f32 %v1168, %v1175
  %v1240 = vadd.f32 %v1169, %v1175
  %v1241 = vmax.f32 %v1177, 0.0
  %v1242 = vmax.f32 %v1178, 0.0
  %v1243 = vmax.f32 %v1179, 0.0
  %v1244 = vmax.f32 %v1180, 0.0
  %v1245 = vmax.f32 %v1181, 0.0
  %v1246 = vmax.f32 %v1182, 0.0
  %v1247 = vmax.f32 %v1183, 0.0
  %v1248 = vmax.f32 %v1184, 0.0
  %v1249 = vmax.f32 %v1185, 0.0
  %v1250 = vmax.f32 %v1186, 0.0
  %v1251 = vmax.f32 %v1187, 0.0
  %v1252 = vmax.f32 %v1188, 0.0
  %v1253 = vmax.f32 %v1189, 0.0
  %v1254 = vmax.f32 %v1190, 0.0
  %v1255 = vmax.f32 %v1191, 0.0
  %v1256 = vmax.f32 %v1192, 0.0
  %v1257 = vmax.f32 %v1193, 0.0
  %v1258 = vmax.f32 %v1194, 0.0
  %v1259 = vmax.f32 %v1195, 0.0
  %v1260 = vmax.f32 %v1196, 0.0
  %v1261 = vmax.f32 %v1197, 0.0
  %v1262 = vmax.f32 %v1198, 0.0
  %v1263 = vmax.f32 %v1199, 0.0
  %v1264 = vmax.f32 %v1200, 0.0
  %v1265 = vmax.f32 %v1201, 0.0
  %v1266 = vmax.f32 %v1202, 0.0
  %v1267 = vmax.f32 %v1203, 0.0
  %v1268 = vmax.f32 %v1204, 0.0
  %v1269 = vmax.f32 %v1205, 0.0
  %v1270 = vmax.f32 %v1206, 0.0
  %v1271 = vmax.f32 %v1207, 0.0
  %v1272 = vmax.f32 %v1208, 0.0
  %v1273 = vmax.f32 %v1209, 0.0
  %v1274 = vmax.f32 %v1210, 0.0
  %v1275 = vmax.f32 %v1211, 0.0
  %v1276 = vmax.f32 %v1212, 0.0
  %v1277 = vmax.f32 %v1213, 0.0
  %v1278 = vmax.f32 %v1214, 0.0
  %v1279 = vmax.f32 %v1215, 0.0
  %v1280 = vmax.f32 %v1216, 0.0
  %v1281 = vmax.f32 %v1217, 0.0
  %v1282 = vmax.f32 %v1218, 0.0
  %v1283 = vmax.f32 %v1219, 0.0
  %v1284 = vmax.f32 %v1220, 0.0
  %v1285 = vmax.f32 %v1221, 0.0
  %v1286 = vmax.f32 %v1222, 0.0
  %v1287 = vmax.f32 %v1223, 0.0
  %v1288 = vmax.f32 %v1224, 0.0
  %v1289 = vmax.f32 %v1225, 0.0
  %v1290 = vmax.f32 %v1226, 0.0
  %v1291 = vmax.f32 %v1227, 0.0
  %v1292 = vmax.f32 %v1228, 0.0
  %v1293 = vmax.f32 %v1229, 0.0
  %v1294 = vmax.f32 %v1230, 0.0
  %v1295 = vmax.f32 %v1231, 0.0
  %v1296 = vmax.f32 %v1232, 0.0
  %v1297 = vmax.f32 %v1233, 0.0
  %v1298 = vmax.f32 %v1234, 0.0
  %v1299 = vmax.f32 %v1235, 0.0
  %v1300 = vmax.f32 %v1236, 0.0
  %v1301 = vmax.f32 %v1237, 0.0
  %v1302 = vmax.f32 %v1238, 0.0
  %v1303 = vmax.f32 %v1239, 0.0
  %v1304 = vmax.f32 %v1240, 0.0
  %1305 = vst [vmem:[%s4] sm:$0xff] %v1241
  %1306 = vst [vmem:[%s4 + $0x8] sm:$0xff] %v1242
  %1307 = vst [vmem:[%s4 + $0x10] sm:$0xff] %v1243
  %1308 = vst [vmem:[%s4 + $0x18] sm:$0xff] %v1244
  %1309 = vst [vmem:[%s4 + $0x20] sm:$0xff] %v1245
  %1310 = vst [vmem:[%s4 + $0x28] sm:$0xff] %v1246
  %1311 = vst [vmem:[%s4 + $0x30] sm:$0xff] %v1247
  %1312 = vst [vmem:[%s4 + $0x38] sm:$0xff] %v1248
  %1313 = vst [vmem:[%s4 + $0x40] sm:$0xff] %v1249
  %1314 = vst [vmem:[%s4 + $0x48] sm:$0xff] %v1250
  %1315 = vst [vmem:[%s4 + $0x50] sm:$0xff] %v1251
  %1316 = vst [vmem:[%s4 + $0x58] sm:$0xff] %v1252
  %1317 = vst [vmem:[%s4 + $0x60] sm:$0xff] %v1253
  %1318 = vst [vmem:[%s4 + $0x68] sm:$0xff] %v1254
  %1319 = vst [vmem:[%s4 + $0x70] sm:$0xff] %v1255
  %1320 = vst [vmem:[%s4 + $0x78] sm:$0xff] %v1256
  %1321 = vst [vmem:[%s4 + $0x80] sm:$0xff] %v1257
  %1322 = vst [vmem:[%s4 + $0x88] sm:$0xff] %v1258
  %1323 = vst [vmem:[%s4 + $0x90] sm:$0xff] %v1259
  %1324 = vst [vmem:[%s4 + $0x98] sm:$0xff] %v1260
  %1325 = vst [vmem:[%s4 + $0xa0] sm:$0xff] %v1261
  %1326 = vst [vmem:[%s4 + $0xa8] sm:$0xff] %v1262
  %1327 = vst [vmem:[%s4 + $0xb0] sm:$0xff] %v1263
  %1328 = vst [vmem:[%s4 + $0xb8] sm:$0xff] %v1264
  %1329 = vst [vmem:[%s4 + $0xc0] sm:$0xff] %v1265
  %1330 = vst [vmem:[%s4 + $0xc8] sm:$0xff] %v1266
  %1331 = vst [vmem:[%s4 + $0xd0] sm:$0xff] %v1267
  %1332 = vst [vmem:[%s4 + $0xd8] sm:$0xff] %v1268
  %1333 = vst [vmem:[%s4 + $0xe0] sm:$0xff] %v1269
  %1334 = vst [vmem:[%s4 + $0xe8] sm:$0xff] %v1270
  %1335 = vst [vmem:[%s4 + $0xf0] sm:$0xff] %v1271
  %1336 = vst [vmem:[%s4 + $0xf8] sm:$0xff] %v1272
  %1337 = vst [vmem:[%s4 + $0x100] sm:$0xff] %v1273
  %1338 = vst [vmem:[%s4 + $0x108] sm:$0xff] %v1274
  %1339 = vst [vmem:[%s4 + $0x110] sm:$0xff] %v1275
  %1340 = vst [vmem:[%s4 + $0x118] sm:$0xff] %v1276
  %1341 = vst [vmem:[%s4 + $0x120] sm:$0xff] %v1277
  %1342 = vst [vmem:[%s4 + $0x128] sm:$0xff] %v1278
  %1343 = vst [vmem:[%s4 + $0x130] sm:$0xff] %v1279
  %1344 = vst [vmem:[%s4 + $0x138] sm:$0xff] %v1280
  %1345 = vst [vmem:[%s4 + $0x140] sm:$0xff] %v1281
  %1346 = vst [vmem:[%s4 + $0x148] sm:$0xff] %v1282
  %1347 = vst [vmem:[%s4 + $0x150] sm:$0xff] %v1283
  %1348 = vst [vmem:[%s4 + $0x158] sm:$0xff] %v1284
  %1349 = vst [vmem:[%s4 + $0x160] sm:$0xff] %v1285
  %1350 = vst [vmem:[%s4 + $0x168] sm:$0xff] %v1286
  %1351 = vst [vmem:[%s4 + $0x170] sm:$0xff] %v1287
  %1352 = vst [vmem:[%s4 + $0x178] sm:$0xff] %v1288
  %1353 = vst [vmem:[%s4 + $0x180] sm:$0xff] %v1289
  %1354 = vst [vmem:[%s4 + $0x188] sm:$0xff] %v1290
  %1355 = vst [vmem:[%s4 + $0x190] sm:$0xff] %v1291
  %1356 = vst [vmem:[%s4 + $0x198] sm:$0xff] %v1292
  %1357 = vst [vmem:[%s4 + $0x1a0] sm:$0xff] %v1293
  %1358 = vst [vmem:[%s4 + $0x1a8] sm:$0xff] %v1294
  %1359 = vst [vmem:[%s4 + $0x1b0] sm:$0xff] %v1295
  %1360 = vst [vmem:[%s4 + $0x1b8] sm:$0xff] %v1296
  %1361 = vst [vmem:[%s4 + $0x1c0] sm:$0xff] %v1297
  %1362 = vst [vmem:[%s4 + $0x1c8] sm:$0xff] %v1298
  %1363 = vst [vmem:[%s4 + $0x1d0] sm:$0xff] %v1299
  %1364 = vst [vmem:[%s4 + $0x1d8] sm:$0xff] %v1300
  %1365 = vst [vmem:[%s4 + $0x1e0] sm:$0xff] %v1301
  %1366 = vst [vmem:[%s4 + $0x1e8] sm:$0xff] %v1302
  %1367 = vst [vmem:[%s4 + $0x1f0] sm:$0xff] %v1303
  %1368 = vst [vmem:[%s4 + $0x1f8] sm:$0xff] %v1304
  // Predicated region
  $region18: #{generator_forward.51} parent=0 // pred_check
    _
  $region19: #{generator_forward.51} parent=0 // pred_check_branch
    %1370 = sbr.rel (0) target = $region21
  $region20: #{generator_forward.51} parent=0 // pred_region
    _
  $region21: #{generator_forward.51} parent=0 // pred_fallthru
    _
  // Predicated region
  $region22: #{generator_forward.51} parent=0 // pred_check
    _
  $region23: #{generator_forward.51} parent=0 // pred_check_branch
    %1372 = sbr.rel (0) target = $region25
  $region24: #{generator_forward.51} parent=0 // pred_region
    _
  $region25: #{generator_forward.51} parent=0 // pred_fallthru
    _

// kernel: generator_forward.53
$region0: #{generator_forward.53}
  #allocation0 [shape = 'u32[]', space=smem, size = 0x4, offset = 0x4, fixed_abs, tag = 'smem constant byte address 0x4 - core index']
  #allocation1 [shape = 'u32[144,128]{1,0:T(1,128)}', space=vmem, size = 0x12000, scoped, tag = 'internal scratch']
  %s0 = inlined_call_operand.vmem [shape: bf16[512,8], index: 0, kind: input, shape index: {}]
  %s1 = inlined_call_operand.vmem [shape: bf16[8,128], index: 1, kind: input, shape index: {}]
  %s2 = inlined_call_operand.vmem [shape: f32[1,128], index: 2, kind: input, shape index: {}]
  %s3 = inlined_call_operand.vmem [shape: f32[512,128], index: 3, kind: output, shape index: {}]
  %s4 = sld [smem:[#allocation0]]
  $region22: #{generator_forward.53} parent=0
    _
  %s6 = ssub.s32 1, %s4
  %s7 = scalar_select 0, %s6, %s4
  // Predicated region
  $region2: #{generator_forward.53} parent=0 // pred_check
    _
  $region3: #{generator_forward.53} parent=0 // pred_check_branch
    %9 = sbr.rel (0) target = $region5
  $region4: #{generator_forward.53} parent=0 // pred_region
    _
  $region5: #{generator_forward.53} parent=0 // pred_fallthru
    _
  // Predicated region
  $region6: #{generator_forward.53} parent=0 // pred_check
    _
  $region7: #{generator_forward.53} parent=0 // pred_check_branch
    %11 = sbr.rel (0) target = $region9
  $region8: #{generator_forward.53} parent=0 // pred_region
    _
  $region9: #{generator_forward.53} parent=0 // pred_fallthru
    _
  // Predicated region
  $region10: #{generator_forward.53} parent=0 // pred_check
    _
  $region11: #{generator_forward.53} parent=0 // pred_check_branch
    %13 = sbr.rel (0) target = $region13
  $region12: #{generator_forward.53} parent=0 // pred_region
    _
  $region13: #{generator_forward.53} parent=0 // pred_fallthru
    _
  %v15 = vld [vmem:[%s0] sm:$0xf]
  %v16 = vld [vmem:[%s0 + $0x4] sm:$0xf]
  %v17 = vld [vmem:[%s0 + $0x8] sm:$0xf]
  %v18 = vld [vmem:[%s0 + $0xc] sm:$0xf]
  %v19 = vld [vmem:[%s0 + $0x10] sm:$0xf]
  %v20 = vld [vmem:[%s0 + $0x14] sm:$0xf]
  %v21 = vld [vmem:[%s0 + $0x18] sm:$0xf]
  %v22 = vld [vmem:[%s0 + $0x1c] sm:$0xf]
  %v23 = vld [vmem:[%s0 + $0x20] sm:$0xf]
  %v24 = vld [vmem:[%s0 + $0x24] sm:$0xf]
  %v25 = vld [vmem:[%s0 + $0x28] sm:$0xf]
  %v26 = vld [vmem:[%s0 + $0x2c] sm:$0xf]
  %v27 = vld [vmem:[%s0 + $0x30] sm:$0xf]
  %v28 = vld [vmem:[%s0 + $0x34] sm:$0xf]
  %v29 = vld [vmem:[%s0 + $0x38] sm:$0xf]
  %v30 = vld [vmem:[%s0 + $0x3c] sm:$0xf]
  %v31 = vld [vmem:[%s0 + $0x40] sm:$0xf]
  %v32 = vld [vmem:[%s0 + $0x44] sm:$0xf]
  %v33 = vld [vmem:[%s0 + $0x48] sm:$0xf]
  %v34 = vld [vmem:[%s0 + $0x4c] sm:$0xf]
  %v35 = vld [vmem:[%s0 + $0x50] sm:$0xf]
  %v36 = vld [vmem:[%s0 + $0x54] sm:$0xf]
  %v37 = vld [vmem:[%s0 + $0x58] sm:$0xf]
  %v38 = vld [vmem:[%s0 + $0x5c] sm:$0xf]
  %v39 = vld [vmem:[%s0 + $0x60] sm:$0xf]
  %v40 = vld [vmem:[%s0 + $0x64] sm:$0xf]
  %v41 = vld [vmem:[%s0 + $0x68] sm:$0xf]
  %v42 = vld [vmem:[%s0 + $0x6c] sm:$0xf]
  %v43 = vld [vmem:[%s0 + $0x70] sm:$0xf]
  %v44 = vld [vmem:[%s0 + $0x74] sm:$0xf]
  %v45 = vld [vmem:[%s0 + $0x78] sm:$0xf]
  %v46 = vld [vmem:[%s0 + $0x7c] sm:$0xf]
  %v47 = vld [vmem:[%s0 + $0x80] sm:$0xf]
  %v48 = vld [vmem:[%s0 + $0x84] sm:$0xf]
  %v49 = vld [vmem:[%s0 + $0x88] sm:$0xf]
  %v50 = vld [vmem:[%s0 + $0x8c] sm:$0xf]
  %v51 = vld [vmem:[%s0 + $0x90] sm:$0xf]
  %v52 = vld [vmem:[%s0 + $0x94] sm:$0xf]
  %v53 = vld [vmem:[%s0 + $0x98] sm:$0xf]
  %v54 = vld [vmem:[%s0 + $0x9c] sm:$0xf]
  %v55 = vld [vmem:[%s0 + $0xa0] sm:$0xf]
  %v56 = vld [vmem:[%s0 + $0xa4] sm:$0xf]
  %v57 = vld [vmem:[%s0 + $0xa8] sm:$0xf]
  %v58 = vld [vmem:[%s0 + $0xac] sm:$0xf]
  %v59 = vld [vmem:[%s0 + $0xb0] sm:$0xf]
  %v60 = vld [vmem:[%s0 + $0xb4] sm:$0xf]
  %v61 = vld [vmem:[%s0 + $0xb8] sm:$0xf]
  %v62 = vld [vmem:[%s0 + $0xbc] sm:$0xf]
  %v63 = vld [vmem:[%s0 + $0xc0] sm:$0xf]
  %v64 = vld [vmem:[%s0 + $0xc4] sm:$0xf]
  %v65 = vld [vmem:[%s0 + $0xc8] sm:$0xf]
  %v66 = vld [vmem:[%s0 + $0xcc] sm:$0xf]
  %v67 = vld [vmem:[%s0 + $0xd0] sm:$0xf]
  %v68 = vld [vmem:[%s0 + $0xd4] sm:$0xf]
  %v69 = vld [vmem:[%s0 + $0xd8] sm:$0xf]
  %v70 = vld [vmem:[%s0 + $0xdc] sm:$0xf]
  %v71 = vld [vmem:[%s0 + $0xe0] sm:$0xf]
  %v72 = vld [vmem:[%s0 + $0xe4] sm:$0xf]
  %v73 = vld [vmem:[%s0 + $0xe8] sm:$0xf]
  %v74 = vld [vmem:[%s0 + $0xec] sm:$0xf]
  %v75 = vld [vmem:[%s0 + $0xf0] sm:$0xf]
  %v76 = vld [vmem:[%s0 + $0xf4] sm:$0xf]
  %v77 = vld [vmem:[%s0 + $0xf8] sm:$0xf]
  %v78 = vld [vmem:[%s0 + $0xfc] sm:$0xf]
  %v79 = vld [vmem:[%s1] sm:$0xf]
  %v80 = vld [vmem:[%s2] sm:$0x1]
  %v82 = vlaneseq
  %v83 = vshrl.u32 %v82, 7
  %v84 = vsub.s32 0, %v83
  %v85 = vrot.slane %v80, %v84
  %v151 = vunpack.c.l.b16 %v15
  %v152 = vunpack.c.l.b16 %v16
  %v153 = vunpack.c.l.b16 %v17
  %v154 = vunpack.c.l.b16 %v18
  %v155 = vunpack.c.l.b16 %v19
  %v156 = vunpack.c.l.b16 %v20
  %v157 = vunpack.c.l.b16 %v21
  %v158 = vunpack.c.l.b16 %v22
  %v159 = vunpack.c.l.b16 %v23
  %v160 = vunpack.c.l.b16 %v24
  %v161 = vunpack.c.l.b16 %v25
  %v162 = vunpack.c.l.b16 %v26
  %v163 = vunpack.c.l.b16 %v27
  %v164 = vunpack.c.l.b16 %v28
  %v165 = vunpack.c.l.b16 %v29
  %v166 = vunpack.c.l.b16 %v30
  %v167 = vunpack.c.l.b16 %v31
  %v168 = vunpack.c.l.b16 %v32
  %v169 = vunpack.c.l.b16 %v33
  %v170 = vunpack.c.l.b16 %v34
  %v171 = vunpack.c.l.b16 %v35
  %v172 = vunpack.c.l.b16 %v36
  %v173 = vunpack.c.l.b16 %v37
  %v174 = vunpack.c.l.b16 %v38
  %v175 = vunpack.c.l.b16 %v39
  %v176 = vunpack.c.l.b16 %v40
  %v177 = vunpack.c.l.b16 %v41
  %v178 = vunpack.c.l.b16 %v42
  %v179 = vunpack.c.l.b16 %v43
  %v180 = vunpack.c.l.b16 %v44
  %v181 = vunpack.c.l.b16 %v45
  %v182 = vunpack.c.l.b16 %v46
  %v183 = vunpack.c.l.b16 %v47
  %v184 = vunpack.c.l.b16 %v48
  %v185 = vunpack.c.l.b16 %v49
  %v186 = vunpack.c.l.b16 %v50
  %v187 = vunpack.c.l.b16 %v51
  %v188 = vunpack.c.l.b16 %v52
  %v189 = vunpack.c.l.b16 %v53
  %v190 = vunpack.c.l.b16 %v54
  %v191 = vunpack.c.l.b16 %v55
  %v192 = vunpack.c.l.b16 %v56
  %v193 = vunpack.c.l.b16 %v57
  %v194 = vunpack.c.l.b16 %v58
  %v195 = vunpack.c.l.b16 %v59
  %v196 = vunpack.c.l.b16 %v60
  %v197 = vunpack.c.l.b16 %v61
  %v198 = vunpack.c.l.b16 %v62
  %v199 = vunpack.c.l.b16 %v63
  %v200 = vunpack.c.l.b16 %v64
  %v201 = vunpack.c.l.b16 %v65
  %v202 = vunpack.c.l.b16 %v66
  %v203 = vunpack.c.l.b16 %v67
  %v204 = vunpack.c.l.b16 %v68
  %v205 = vunpack.c.l.b16 %v69
  %v206 = vunpack.c.l.b16 %v70
  %v207 = vunpack.c.l.b16 %v71
  %v208 = vunpack.c.l.b16 %v72
  %v209 = vunpack.c.l.b16 %v73
  %v210 = vunpack.c.l.b16 %v74
  %v211 = vunpack.c.l.b16 %v75
  %v212 = vunpack.c.l.b16 %v76
  %v213 = vunpack.c.l.b16 %v77
  %v214 = vunpack.c.l.b16 %v78
  %v215 = vpack.c.b16 %v152, %v151
  %v216 = vpack.c.b16 %v154, %v153
  %v217 = vpack.c.b16 %v156, %v155
  %v218 = vpack.c.b16 %v158, %v157
  %v219 = vpack.c.b16 %v160, %v159
  %v220 = vpack.c.b16 %v162, %v161
  %v221 = vpack.c.b16 %v164, %v163
  %v222 = vpack.c.b16 %v166, %v165
  %v223 = vpack.c.b16 %v168, %v167
  %v224 = vpack.c.b16 %v170, %v169
  %v225 = vpack.c.b16 %v172, %v171
  %v226 = vpack.c.b16 %v174, %v173
  %v227 = vpack.c.b16 %v176, %v175
  %v228 = vpack.c.b16 %v178, %v177
  %v229 = vpack.c.b16 %v180, %v179
  %v230 = vpack.c.b16 %v182, %v181
  %v231 = vpack.c.b16 %v184, %v183
  %v232 = vpack.c.b16 %v186, %v185
  %v233 = vpack.c.b16 %v188, %v187
  %v234 = vpack.c.b16 %v190, %v189
  %v235 = vpack.c.b16 %v192, %v191
  %v236 = vpack.c.b16 %v194, %v193
  %v237 = vpack.c.b16 %v196, %v195
  %v238 = vpack.c.b16 %v198, %v197
  %v239 = vpack.c.b16 %v200, %v199
  %v240 = vpack.c.b16 %v202, %v201
  %v241 = vpack.c.b16 %v204, %v203
  %v242 = vpack.c.b16 %v206, %v205
  %v243 = vpack.c.b16 %v208, %v207
  %v244 = vpack.c.b16 %v210, %v209
  %v245 = vpack.c.b16 %v212, %v211
  %v246 = vpack.c.b16 %v214, %v213
  %vm247 = vcmask 64512
  %v249 = vsel %vm247, %v215, 0
  %v252 = vsel %vm247, %v216, 0
  %v255 = vsel %vm247, %v217, 0
  %v258 = vsel %vm247, %v218, 0
  %v261 = vsel %vm247, %v219, 0
  %v264 = vsel %vm247, %v220, 0
  %v267 = vsel %vm247, %v221, 0
  %v270 = vsel %vm247, %v222, 0
  %v273 = vsel %vm247, %v223, 0
  %v276 = vsel %vm247, %v224, 0
  %v279 = vsel %vm247, %v225, 0
  %v282 = vsel %vm247, %v226, 0
  %v285 = vsel %vm247, %v227, 0
  %v288 = vsel %vm247, %v228, 0
  %v291 = vsel %vm247, %v229, 0
  %v294 = vsel %vm247, %v230, 0
  %v297 = vsel %vm247, %v231, 0
  %v300 = vsel %vm247, %v232, 0
  %v303 = vsel %vm247, %v233, 0
  %v306 = vsel %vm247, %v234, 0
  %v309 = vsel %vm247, %v235, 0
  %v312 = vsel %vm247, %v236, 0
  %v315 = vsel %vm247, %v237, 0
  %v318 = vsel %vm247, %v238, 0
  %v321 = vsel %vm247, %v239, 0
  %v324 = vsel %vm247, %v240, 0
  %v327 = vsel %vm247, %v241, 0
  %v330 = vsel %vm247, %v242, 0
  %v333 = vsel %vm247, %v243, 0
  %v336 = vsel %vm247, %v244, 0
  %v339 = vsel %vm247, %v245, 0
  %v342 = vsel %vm247, %v246, 0
  %vm344 = vcmask 1043456
  %v346 = vsel %vm344, %v79, 0
  %348 = vmatprep.subr.bf16.mxu0 0
  %349 = vmatpush1.bf16.msra.mxu0 0
  %350 = vmatprep.subr.bf16.mxu0 0
  %351 = vmatpush1.bf16.msra.mxu0 0
  %352 = vmatprep.subr.bf16.mxu0 0
  %353 = vmatpush1.bf16.msra.mxu0 0
  %354 = vmatprep.subr.bf16.mxu0 0
  %355 = vmatpush1.bf16.msra.mxu0 0
  %356 = vmatprep.subr.bf16.mxu0 0
  %357 = vmatpush1.bf16.msra.mxu0 0
  %358 = vmatprep.subr.bf16.mxu0 0
  %359 = vmatpush1.bf16.msra.mxu0 0
  %360 = vmatprep.subr.bf16.mxu0 0
  %361 = vmatpush1.bf16.msra.mxu0 0
  %362 = vmatprep.subr.bf16.mxu0 0
  %363 = vmatpush1.bf16.msra.mxu0 %v346
  %364 = vmatprep.subr.bf16.mxu0 0
  %365 = vmatpush2.bf16.msra.mxu0 0
  %366 = vmatprep.subr.bf16.mxu0 0
  %367 = vmatpush2.bf16.msra.mxu0 0
  %368 = vmatprep.subr.bf16.mxu0 0
  %369 = vmatpush2.bf16.msra.mxu0 0
  %370 = vmatprep.subr.bf16.mxu0 0
  %371 = vmatpush2.bf16.msra.mxu0 0
  %372 = vmatprep.subr.bf16.mxu0 0
  %373 = vmatpush2.bf16.msra.mxu0 0
  %374 = vmatprep.subr.bf16.mxu0 0
  %375 = vmatpush2.bf16.msra.mxu0 0
  %376 = vmatprep.subr.bf16.mxu0 0
  %377 = vmatpush2.bf16.msra.mxu0 0
  %378 = vmatprep.subr.bf16.mxu0 0
  %379 = vmatpush2.bf16.msra.mxu0 0
  %380 = vmatprep.mubr.bf16.mxu0 0
  %381 = vmatmul.mubr.bf16.gmra.mxu0 %v249
  %v382 = vpop.f32.mrf.mxu0
  %v383 = vadd.f32 %v85, %v382
  %v384 = vpop.f32.mrf.mxu0
  %v385 = vpop.f32.mrf.mxu0
  %v386 = vadd.f32 %v85, %v385
  %v387 = vpop.f32.mrf.mxu0
  %388 = vmatprep.mubr.bf16.mxu0 0
  %389 = vmatmul.mubr.bf16.gmra.mxu0 %v252
  %v390 = vpop.f32.mrf.mxu0
  %v391 = vadd.f32 %v85, %v390
  %v392 = vpop.f32.mrf.mxu0
  %v393 = vpop.f32.mrf.mxu0
  %v394 = vadd.f32 %v85, %v393
  %v395 = vpop.f32.mrf.mxu0
  %396 = vmatprep.mubr.bf16.mxu0 0
  %397 = vmatmul.mubr.bf16.gmra.mxu0 %v255
  %v398 = vpop.f32.mrf.mxu0
  %v399 = vadd.f32 %v85, %v398
  %v400 = vpop.f32.mrf.mxu0
  %v401 = vpop.f32.mrf.mxu0
  %v402 = vadd.f32 %v85, %v401
  %v403 = vpop.f32.mrf.mxu0
  %404 = vmatprep.mubr.bf16.mxu0 0
  %405 = vmatmul.mubr.bf16.gmra.mxu0 %v258
  %v406 = vpop.f32.mrf.mxu0
  %v407 = vadd.f32 %v85, %v406
  %v408 = vpop.f32.mrf.mxu0
  %v409 = vpop.f32.mrf.mxu0
  %v410 = vadd.f32 %v85, %v409
  %v411 = vpop.f32.mrf.mxu0
  %412 = vmatprep.mubr.bf16.mxu0 0
  %413 = vmatmul.mubr.bf16.gmra.mxu0 %v261
  %v414 = vpop.f32.mrf.mxu0
  %v415 = vadd.f32 %v85, %v414
  %v416 = vpop.f32.mrf.mxu0
  %v417 = vpop.f32.mrf.mxu0
  %v418 = vadd.f32 %v85, %v417
  %v419 = vpop.f32.mrf.mxu0
  %420 = vmatprep.mubr.bf16.mxu0 0
  %421 = vmatmul.mubr.bf16.gmra.mxu0 %v264
  %v422 = vpop.f32.mrf.mxu0
  %v423 = vadd.f32 %v85, %v422
  %v424 = vpop.f32.mrf.mxu0
  %v425 = vpop.f32.mrf.mxu0
  %v426 = vadd.f32 %v85, %v425
  %v427 = vpop.f32.mrf.mxu0
  %428 = vmatprep.mubr.bf16.mxu0 0
  %429 = vmatmul.mubr.bf16.gmra.mxu0 %v267
  %v430 = vpop.f32.mrf.mxu0
  %v431 = vadd.f32 %v85, %v430
  %v432 = vpop.f32.mrf.mxu0
  %v433 = vpop.f32.mrf.mxu0
  %v434 = vadd.f32 %v85, %v433
  %v435 = vpop.f32.mrf.mxu0
  %436 = vmatprep.mubr.bf16.mxu0 0
  %437 = vmatmul.mubr.bf16.gmra.mxu0 %v270
  %v438 = vpop.f32.mrf.mxu0
  %v439 = vadd.f32 %v85, %v438
  %v440 = vpop.f32.mrf.mxu0
  %v441 = vpop.f32.mrf.mxu0
  %v442 = vadd.f32 %v85, %v441
  %v443 = vpop.f32.mrf.mxu0
  %444 = vmatprep.mubr.bf16.mxu0 0
  %445 = vmatmul.mubr.bf16.gmra.mxu0 %v273
  %v446 = vpop.f32.mrf.mxu0
  %v447 = vadd.f32 %v85, %v446
  %v448 = vpop.f32.mrf.mxu0
  %v449 = vpop.f32.mrf.mxu0
  %v450 = vadd.f32 %v85, %v449
  %v451 = vpop.f32.mrf.mxu0
  %452 = vmatprep.mubr.bf16.mxu0 0
  %453 = vmatmul.mubr.bf16.gmra.mxu0 %v276
  %v454 = vpop.f32.mrf.mxu0
  %v455 = vadd.f32 %v85, %v454
  %v456 = vpop.f32.mrf.mxu0
  %v457 = vpop.f32.mrf.mxu0
  %v458 = vadd.f32 %v85, %v457
  %v459 = vpop.f32.mrf.mxu0
  %460 = vmatprep.mubr.bf16.mxu0 0
  %461 = vmatmul.mubr.bf16.gmra.mxu0 %v279
  %v462 = vpop.f32.mrf.mxu0
  %v463 = vadd.f32 %v85, %v462
  %v464 = vpop.f32.mrf.mxu0
  %v465 = vpop.f32.mrf.mxu0
  %v466 = vadd.f32 %v85, %v465
  %v467 = vpop.f32.mrf.mxu0
  %468 = vmatprep.mubr.bf16.mxu0 0
  %469 = vmatmul.mubr.bf16.gmra.mxu0 %v282
  %v470 = vpop.f32.mrf.mxu0
  %v471 = vadd.f32 %v85, %v470
  %v472 = vpop.f32.mrf.mxu0
  %v473 = vpop.f32.mrf.mxu0
  %v474 = vadd.f32 %v85, %v473
  %v475 = vpop.f32.mrf.mxu0
  %476 = vmatprep.mubr.bf16.mxu0 0
  %477 = vmatmul.mubr.bf16.gmra.mxu0 %v285
  %v478 = vpop.f32.mrf.mxu0
  %v479 = vadd.f32 %v85, %v478
  %v480 = vpop.f32.mrf.mxu0
  %v481 = vpop.f32.mrf.mxu0
  %v482 = vadd.f32 %v85, %v481
  %v483 = vpop.f32.mrf.mxu0
  %484 = vmatprep.mubr.bf16.mxu0 0
  %485 = vmatmul.mubr.bf16.gmra.mxu0 %v288
  %v486 = vpop.f32.mrf.mxu0
  %v487 = vadd.f32 %v85, %v486
  %v488 = vpop.f32.mrf.mxu0
  %v489 = vpop.f32.mrf.mxu0
  %v490 = vadd.f32 %v85, %v489
  %v491 = vpop.f32.mrf.mxu0
  %492 = vmatprep.mubr.bf16.mxu0 0
  %493 = vmatmul.mubr.bf16.gmra.mxu0 %v291
  %v494 = vpop.f32.mrf.mxu0
  %v495 = vadd.f32 %v85, %v494
  %v496 = vpop.f32.mrf.mxu0
  %v497 = vpop.f32.mrf.mxu0
  %v498 = vadd.f32 %v85, %v497
  %v499 = vpop.f32.mrf.mxu0
  %500 = vmatprep.mubr.bf16.mxu0 0
  %501 = vmatmul.mubr.bf16.gmra.mxu0 %v294
  %v502 = vpop.f32.mrf.mxu0
  %v503 = vadd.f32 %v85, %v502
  %v504 = vpop.f32.mrf.mxu0
  %v505 = vpop.f32.mrf.mxu0
  %v506 = vadd.f32 %v85, %v505
  %v507 = vpop.f32.mrf.mxu0
  %508 = vmatprep.mubr.bf16.mxu0 0
  %509 = vmatmul.mubr.bf16.gmra.mxu0 %v297
  %v510 = vpop.f32.mrf.mxu0
  %v511 = vadd.f32 %v85, %v510
  %v512 = vpop.f32.mrf.mxu0
  %v513 = vpop.f32.mrf.mxu0
  %v514 = vadd.f32 %v85, %v513
  %v515 = vpop.f32.mrf.mxu0
  %516 = vmatprep.mubr.bf16.mxu0 0
  %517 = vmatmul.mubr.bf16.gmra.mxu0 %v300
  %v518 = vpop.f32.mrf.mxu0
  %v519 = vadd.f32 %v85, %v518
  %v520 = vpop.f32.mrf.mxu0
  %v521 = vpop.f32.mrf.mxu0
  %v522 = vadd.f32 %v85, %v521
  %v523 = vpop.f32.mrf.mxu0
  %524 = vmatprep.mubr.bf16.mxu0 0
  %525 = vmatmul.mubr.bf16.gmra.mxu0 %v303
  %v526 = vpop.f32.mrf.mxu0
  %v527 = vadd.f32 %v85, %v526
  %v528 = vpop.f32.mrf.mxu0
  %v529 = vpop.f32.mrf.mxu0
  %v530 = vadd.f32 %v85, %v529
  %v531 = vpop.f32.mrf.mxu0
  %532 = vmatprep.mubr.bf16.mxu0 0
  %533 = vmatmul.mubr.bf16.gmra.mxu0 %v306
  %v534 = vpop.f32.mrf.mxu0
  %v535 = vadd.f32 %v85, %v534
  %v536 = vpop.f32.mrf.mxu0
  %v537 = vpop.f32.mrf.mxu0
  %v538 = vadd.f32 %v85, %v537
  %v539 = vpop.f32.mrf.mxu0
  %540 = vmatprep.mubr.bf16.mxu0 0
  %541 = vmatmul.mubr.bf16.gmra.mxu0 %v309
  %v542 = vpop.f32.mrf.mxu0
  %v543 = vadd.f32 %v85, %v542
  %v544 = vpop.f32.mrf.mxu0
  %v545 = vpop.f32.mrf.mxu0
  %v546 = vadd.f32 %v85, %v545
  %v547 = vpop.f32.mrf.mxu0
  %548 = vmatprep.mubr.bf16.mxu0 0
  %549 = vmatmul.mubr.bf16.gmra.mxu0 %v312
  %v550 = vpop.f32.mrf.mxu0
  %v551 = vadd.f32 %v85, %v550
  %v552 = vpop.f32.mrf.mxu0
  %v553 = vpop.f32.mrf.mxu0
  %v554 = vadd.f32 %v85, %v553
  %v555 = vpop.f32.mrf.mxu0
  %556 = vmatprep.mubr.bf16.mxu0 0
  %557 = vmatmul.mubr.bf16.gmra.mxu0 %v315
  %v558 = vpop.f32.mrf.mxu0
  %v559 = vadd.f32 %v85, %v558
  %v560 = vpop.f32.mrf.mxu0
  %v561 = vpop.f32.mrf.mxu0
  %v562 = vadd.f32 %v85, %v561
  %v563 = vpop.f32.mrf.mxu0
  %564 = vmatprep.mubr.bf16.mxu0 0
  %565 = vmatmul.mubr.bf16.gmra.mxu0 %v318
  %v566 = vpop.f32.mrf.mxu0
  %v567 = vadd.f32 %v85, %v566
  %v568 = vpop.f32.mrf.mxu0
  %v569 = vpop.f32.mrf.mxu0
  %v570 = vadd.f32 %v85, %v569
  %v571 = vpop.f32.mrf.mxu0
  %572 = vmatprep.mubr.bf16.mxu0 0
  %573 = vmatmul.mubr.bf16.gmra.mxu0 %v321
  %v574 = vpop.f32.mrf.mxu0
  %v575 = vadd.f32 %v85, %v574
  %v576 = vpop.f32.mrf.mxu0
  %v577 = vpop.f32.mrf.mxu0
  %v578 = vadd.f32 %v85, %v577
  %v579 = vpop.f32.mrf.mxu0
  %580 = vmatprep.mubr.bf16.mxu0 0
  %581 = vmatmul.mubr.bf16.gmra.mxu0 %v324
  %v582 = vpop.f32.mrf.mxu0
  %v583 = vadd.f32 %v85, %v582
  %v584 = vpop.f32.mrf.mxu0
  %v585 = vpop.f32.mrf.mxu0
  %v586 = vadd.f32 %v85, %v585
  %v587 = vpop.f32.mrf.mxu0
  %588 = vmatprep.mubr.bf16.mxu0 0
  %589 = vmatmul.mubr.bf16.gmra.mxu0 %v327
  %v590 = vpop.f32.mrf.mxu0
  %v591 = vadd.f32 %v85, %v590
  %v592 = vpop.f32.mrf.mxu0
  %v593 = vpop.f32.mrf.mxu0
  %v594 = vadd.f32 %v85, %v593
  %v595 = vpop.f32.mrf.mxu0
  %596 = vmatprep.mubr.bf16.mxu0 0
  %597 = vmatmul.mubr.bf16.gmra.mxu0 %v330
  %v598 = vpop.f32.mrf.mxu0
  %v599 = vadd.f32 %v85, %v598
  %v600 = vpop.f32.mrf.mxu0
  %v601 = vpop.f32.mrf.mxu0
  %v602 = vadd.f32 %v85, %v601
  %v603 = vpop.f32.mrf.mxu0
  %604 = vmatprep.mubr.bf16.mxu0 0
  %605 = vmatmul.mubr.bf16.gmra.mxu0 %v333
  %v606 = vpop.f32.mrf.mxu0
  %v607 = vadd.f32 %v85, %v606
  %v608 = vpop.f32.mrf.mxu0
  %v609 = vpop.f32.mrf.mxu0
  %v610 = vadd.f32 %v85, %v609
  %v611 = vpop.f32.mrf.mxu0
  %612 = vmatprep.mubr.bf16.mxu0 0
  %613 = vmatmul.mubr.bf16.gmra.mxu0 %v336
  %v614 = vpop.f32.mrf.mxu0
  %v615 = vadd.f32 %v85, %v614
  %v616 = vpop.f32.mrf.mxu0
  %v617 = vpop.f32.mrf.mxu0
  %v618 = vadd.f32 %v85, %v617
  %v619 = vpop.f32.mrf.mxu0
  %620 = vmatprep.mubr.bf16.mxu0 0
  %621 = vmatmul.mubr.bf16.gmra.mxu0 %v339
  %v622 = vpop.f32.mrf.mxu0
  %v623 = vadd.f32 %v85, %v622
  %v624 = vpop.f32.mrf.mxu0
  %v625 = vpop.f32.mrf.mxu0
  %v626 = vadd.f32 %v85, %v625
  %v627 = vpop.f32.mrf.mxu0
  %628 = vmatprep.mubr.bf16.mxu0 0
  %629 = vmatmul.mubr.bf16.gmra.mxu0 %v342
  %v630 = vpop.f32.mrf.mxu0
  %v631 = vadd.f32 %v85, %v630
  %v632 = vpop.f32.mrf.mxu0
  %v633 = vpop.f32.mrf.mxu0
  %v634 = vadd.f32 %v85, %v633
  %v635 = vpop.f32.mrf.mxu0
  %636 = vdwg.mxu0
  %637 = vst [vmem:[%s3] sm:$0xff] %v383
  %638 = vst [vmem:[%s3 + $0x8] sm:$0xff] %v386
  %639 = vst [vmem:[%s3 + $0x10] sm:$0xff] %v391
  %640 = vst [vmem:[%s3 + $0x18] sm:$0xff] %v394
  %641 = vst [vmem:[%s3 + $0x20] sm:$0xff] %v399
  %642 = vst [vmem:[%s3 + $0x28] sm:$0xff] %v402
  %643 = vst [vmem:[%s3 + $0x30] sm:$0xff] %v407
  %644 = vst [vmem:[%s3 + $0x38] sm:$0xff] %v410
  %645 = vst [vmem:[%s3 + $0x40] sm:$0xff] %v415
  %646 = vst [vmem:[%s3 + $0x48] sm:$0xff] %v418
  %647 = vst [vmem:[%s3 + $0x50] sm:$0xff] %v423
  %648 = vst [vmem:[%s3 + $0x58] sm:$0xff] %v426
  %649 = vst [vmem:[%s3 + $0x60] sm:$0xff] %v431
  %650 = vst [vmem:[%s3 + $0x68] sm:$0xff] %v434
  %651 = vst [vmem:[%s3 + $0x70] sm:$0xff] %v439
  %652 = vst [vmem:[%s3 + $0x78] sm:$0xff] %v442
  %653 = vst [vmem:[%s3 + $0x80] sm:$0xff] %v447
  %654 = vst [vmem:[%s3 + $0x88] sm:$0xff] %v450
  %655 = vst [vmem:[%s3 + $0x90] sm:$0xff] %v455
  %656 = vst [vmem:[%s3 + $0x98] sm:$0xff] %v458
  %657 = vst [vmem:[%s3 + $0xa0] sm:$0xff] %v463
  %658 = vst [vmem:[%s3 + $0xa8] sm:$0xff] %v466
  %659 = vst [vmem:[%s3 + $0xb0] sm:$0xff] %v471
  %660 = vst [vmem:[%s3 + $0xb8] sm:$0xff] %v474
  %661 = vst [vmem:[%s3 + $0xc0] sm:$0xff] %v479
  %662 = vst [vmem:[%s3 + $0xc8] sm:$0xff] %v482
  %663 = vst [vmem:[%s3 + $0xd0] sm:$0xff] %v487
  %664 = vst [vmem:[%s3 + $0xd8] sm:$0xff] %v490
  %665 = vst [vmem:[%s3 + $0xe0] sm:$0xff] %v495
  %666 = vst [vmem:[%s3 + $0xe8] sm:$0xff] %v498
  %667 = vst [vmem:[%s3 + $0xf0] sm:$0xff] %v503
  %668 = vst [vmem:[%s3 + $0xf8] sm:$0xff] %v506
  %669 = vst [vmem:[%s3 + $0x100] sm:$0xff] %v511
  %670 = vst [vmem:[%s3 + $0x108] sm:$0xff] %v514
  %671 = vst [vmem:[%s3 + $0x110] sm:$0xff] %v519
  %672 = vst [vmem:[%s3 + $0x118] sm:$0xff] %v522
  %673 = vst [vmem:[%s3 + $0x120] sm:$0xff] %v527
  %674 = vst [vmem:[%s3 + $0x128] sm:$0xff] %v530
  %675 = vst [vmem:[%s3 + $0x130] sm:$0xff] %v535
  %676 = vst [vmem:[%s3 + $0x138] sm:$0xff] %v538
  %677 = vst [vmem:[%s3 + $0x140] sm:$0xff] %v543
  %678 = vst [vmem:[%s3 + $0x148] sm:$0xff] %v546
  %679 = vst [vmem:[%s3 + $0x150] sm:$0xff] %v551
  %680 = vst [vmem:[%s3 + $0x158] sm:$0xff] %v554
  %681 = vst [vmem:[%s3 + $0x160] sm:$0xff] %v559
  %682 = vst [vmem:[%s3 + $0x168] sm:$0xff] %v562
  %683 = vst [vmem:[%s3 + $0x170] sm:$0xff] %v567
  %684 = vst [vmem:[%s3 + $0x178] sm:$0xff] %v570
  %685 = vst [vmem:[%s3 + $0x180] sm:$0xff] %v575
  %686 = vst [vmem:[%s3 + $0x188] sm:$0xff] %v578
  %687 = vst [vmem:[%s3 + $0x190] sm:$0xff] %v583
  %688 = vst [vmem:[%s3 + $0x198] sm:$0xff] %v586
  %689 = vst [vmem:[%s3 + $0x1a0] sm:$0xff] %v591
  %690 = vst [vmem:[%s3 + $0x1a8] sm:$0xff] %v594
  %691 = vst [vmem:[%s3 + $0x1b0] sm:$0xff] %v599
  %692 = vst [vmem:[%s3 + $0x1b8] sm:$0xff] %v602
  %693 = vst [vmem:[%s3 + $0x1c0] sm:$0xff] %v607
  %694 = vst [vmem:[%s3 + $0x1c8] sm:$0xff] %v610
  %695 = vst [vmem:[%s3 + $0x1d0] sm:$0xff] %v615
  %696 = vst [vmem:[%s3 + $0x1d8] sm:$0xff] %v618
  %697 = vst [vmem:[%s3 + $0x1e0] sm:$0xff] %v623
  %698 = vst [vmem:[%s3 + $0x1e8] sm:$0xff] %v626
  %699 = vst [vmem:[%s3 + $0x1f0] sm:$0xff] %v631
  %700 = vst [vmem:[%s3 + $0x1f8] sm:$0xff] %v634
  // Predicated region
  $region14: #{generator_forward.53} parent=0 // pred_check
    _
  $region15: #{generator_forward.53} parent=0 // pred_check_branch
    %702 = sbr.rel (0) target = $region17
  $region16: #{generator_forward.53} parent=0 // pred_region
    _
  $region17: #{generator_forward.53} parent=0 // pred_fallthru
    _
  // Predicated region
  $region18: #{generator_forward.53} parent=0 // pred_check
    _
  $region19: #{generator_forward.53} parent=0 // pred_check_branch
    %704 = sbr.rel (0) target = $region21
  $region20: #{generator_forward.53} parent=0 // pred_region
    _
  $region21: #{generator_forward.53} parent=0 // pred_fallthru
    _

</llo_original>
